<compile_context>
chip_gen: v7x
topology: tpu7x:2x2x1
jax: 0.10.0
libtpu: 0.0.40
codegen_flags: <defaults>
</compile_context>

<pallas_src>
import jax
import jax.numpy as jnp
from jax.experimental import pallas as pl
from jax.experimental.pallas import tpu as pltpu

EPS = 1e-5

try:
    _VMEM_CAP = int(pltpu.get_tpu_info().vmem_capacity_bytes)
except Exception:  # conservative fallback if the query is unavailable
    _VMEM_CAP = 64 * 1024 * 1024
# ~48 MiB on v7x (64 MiB physical), 96 MiB on v5e/v6e (128 MiB physical).
VMEM_LIMIT_BYTES = int(min(96 * 1024 * 1024, (_VMEM_CAP * 3) // 4))


def _round_up(x, m):
    return ((x + m - 1) // m) * m


def _pick_rows_per_block(H, W):
    """Largest divisor R of H with R*W <= 512 (MXU-friendly M), preferring >=2 blocks."""
    best = 1
    for r in range(1, H + 1):
        if H % r == 0 and r * W <= 512:
            best = r
    if best == H and H % 2 == 0 and (H // 2) * W >= 128:
        best = H // 2        # keep at least two row blocks when M stays >= 128
    return best


# --------------------------------------------------------------------------- #
# Stage A: x2-nearest upsample + conv3_1 (sub-pixel decomposition) + conv1_1
# skip, partial BN1 statistics.  Grid point (n, i) produces original-resolution
# rows [i*R, (i+1)*R) of image n in the packed (N, H, 2, W, 2*Cp) layout
# (row phase a in dim 2, column phase b in lane block b).
# --------------------------------------------------------------------------- #
def _stage_a_kernel(xb_ref, w2_ref, w1_ref, b3a_ref, b1_ref,
                    conv1_ref, skip_ref, stats_ref):
    R = conv1_ref.shape[1]
    W = conv1_ref.shape[3]
    Cp = conv1_ref.shape[4] // 2
    M = R * W

    b3a = b3a_ref[...]                                   # (1, Cp) f32
    b1 = b1_ref[...]                                     # (1, Cp) f32

    # Dedup: only 9 distinct (row-offset, col-offset) windows exist for the
    # 4 phases x 4 taps.  Each is loaded once (already bf16) and flattened to M rows.
    win = {}
    for ro in range(3):
        for co in range(3):
            v = xb_ref[0, 0, pl.ds(ro, R), pl.ds(co, W), :]      # (R, W, Cin_p) bf16
            win[(ro, co)] = v.reshape(M, v.shape[-1])

    # 1x1 skip conv on the centre window -- stored ONCE (not replicated per phase).
    skip = jnp.dot(win[(1, 1)], w1_ref[...],
                   preferred_element_type=jnp.float32) + b1       # (M, Cp) f32
    skip_ref[0, :, :, :] = skip.reshape(R, W, Cp).astype(skip_ref.dtype)

    s_sum = jnp.zeros((1, Cp), jnp.float32)
    s_sq = jnp.zeros((1, Cp), jnp.float32)

    for a in range(2):            # upsampled-row phase
        for b in range(2):        # upsampled-col phase
            # K-fuse the 4 sub-pixel taps: one (M, 4*Cin_p) @ (4*Cin_p, Cp) matmul.
            xcat = jnp.concatenate(
                [win[(a, b)], win[(a, b + 1)], win[(a + 1, b)], win[(a + 1, b + 1)]],
                axis=1)
            raw = jnp.dot(xcat, w2_ref[a * 2 + b],
                          preferred_element_type=jnp.float32)     # (M, Cp) f32
            # BN1 partial stats on the bias-free values (shifted-data trick: the
            # per-channel bias is re-added to the mean in the wrapper, variance
            # is unchanged) -- reduces E[x^2]-E[x]^2 cancellation.
            s_sum = s_sum + jnp.sum(raw, axis=0, keepdims=True)
            s_sq = s_sq + jnp.sum(raw * raw, axis=0, keepdims=True)
            out = (raw + b3a).reshape(R, W, Cp).astype(conv1_ref.dtype)
            conv1_ref[0, :, a, :, pl.ds(b * Cp, Cp)] = out

    stats_ref[0, 0, :, :] = jnp.concatenate([s_sum, s_sq], axis=1)


# --------------------------------------------------------------------------- #
# Stage B: BN1 normalize + ReLU (fused) + conv3_2 + skip add, partial BN2 stats.
# The 3x3 halo is a single row above / below the block, read via two tiny
# shifted BlockSpecs on the same conv1 array (conv1 itself is read once).
# --------------------------------------------------------------------------- #
def _stage_b_kernel(conv1_ref, htop_ref, hbot_ref, skip_ref, sc1_ref, sh1_ref,
                    w3b_ref, b3b_ref, spre_ref, stats_ref):
    i = pl.program_id(1)
    nb = pl.num_programs(1)
    R = spre_ref.shape[1]
    W = spre_ref.shape[3]
    Cp = spre_ref.shape[4] // 2
    M = R * W

    sc1v = sc1_ref[...]                                  # (1, 2*Cp) f32
    sh1v = sh1_ref[...]
    b3b = b3b_ref[...]                                   # (1, Cp) f32

    def bn_relu(v):
        sc = sc1v.reshape((1,) * (v.ndim - 1) + (2 * Cp,))
        sh = sh1v.reshape((1,) * (v.ndim - 1) + (2 * Cp,))
        return jnp.maximum(v.astype(jnp.float32) * sc + sh, 0.0)

    prev_ok = (i > 0).astype(jnp.float32)
    next_ok = (i < nb - 1).astype(jnp.float32)

    y_main = bn_relu(conv1_ref[0])                       # (R, 2, W, 2Cp) f32
    y_top = bn_relu(htop_ref[0, 0]) * prev_ok            # (1, W, 2Cp): upsampled row 2iR-1
    y_bot = bn_relu(hbot_ref[0, 0]) * next_ok            # (1, W, 2Cp): upsampled row 2iR+2R

    # The 4 distinct input-row cases: case v is upsampled row 2*r + v - 1
    # for output row-pair r (halo rows are zero outside the image = conv padding).
    if R > 1:
        rows = [
            jnp.concatenate([y_top, y_main[:R - 1, 1]], axis=0),   # v=0: pair r-1, phase 1
            y_main[:, 0],                                          # v=1
            y_main[:, 1],                                          # v=2
            jnp.concatenate([y_main[1:, 0], y_bot], axis=0),       # v=3: pair r+1, phase 0
        ]
    else:
        rows = [y_top, y_main[:, 0], y_main[:, 1], y_bot]

    # Hoisted column-boundary masks (built once, reused for all shifted operands).
    col = jax.lax.broadcasted_iota(jnp.int32, (1, W, 1), 1)
    m_l = col >= 1
    m_r = col < W - 1

    def col_op(rows_v, e):
        # Column operand for upsampled column offset e in {-1,0,1,2}: lane block
        # e%2, width shift via XLU roll, zero fill at the image border.
        blk = e % 2
        v = rows_v[:, :, blk * Cp:(blk + 1) * Cp]        # (R, W, Cp) f32
        s = (1, 0, 0, -1)[e + 1]
        if s == 1:
            v = jnp.where(m_l, pltpu.roll(v, shift=1, axis=1), 0.0)
        elif s == -1:
            v = jnp.where(m_r, pltpu.roll(v, shift=W - 1, axis=1), 0.0)
        return v.astype(jnp.bfloat16).reshape(M, Cp)

    ops = {(v, e): col_op(rows[v], e) for v in range(4) for e in (-1, 0, 1, 2)}

    skipv = skip_ref[0].astype(jnp.float32).reshape(M, Cp)   # broadcast over 4 phases

    s_sum = jnp.zeros((1, Cp), jnp.float32)
    s_sq = jnp.zeros((1, Cp), jnp.float32)

    for a in range(2):
        for b in range(2):
            acc = jnp.zeros((M, Cp), jnp.float32)
            for ky in range(3):
                # K-fuse the 3 column taps: (M, 3*Cp) @ (3*Cp, Cp).
                xcat = jnp.concatenate(
                    [ops[(a + ky, b - 1)], ops[(a + ky, b)], ops[(a + ky, b + 1)]],
                    axis=1)
                acc = acc + jnp.dot(xcat, w3b_ref[ky],
                                    preferred_element_type=jnp.float32)
            val = acc + skipv
            # BN2 partial stats on the bias-free sum (bias re-added to the mean later).
            s_sum = s_sum + jnp.sum(val, axis=0, keepdims=True)
            s_sq = s_sq + jnp.sum(val * val, axis=0, keepdims=True)
            spre_ref[0, :, a, :, pl.ds(b * Cp, Cp)] = (
                (val + b3b).reshape(R, W, Cp).astype(spre_ref.dtype))

    stats_ref[0, 0, :, :] = jnp.concatenate([s_sum, s_sq], axis=1)


# --------------------------------------------------------------------------- #
# Wrapper
# --------------------------------------------------------------------------- #
def _bn_affine(stats, gamma_row, beta_row, bias_row, count, cp):
    """Fold per-block (sum | sumsq) of the bias-free values into per-channel
    scale/shift (mean gets the per-channel bias re-added)."""
    s = jnp.sum(stats, axis=(0, 1))                       # (1, 2*cp)
    mean_raw = s[:, :cp] * (1.0 / count)
    var = jnp.maximum(s[:, cp:] * (1.0 / count) - mean_raw * mean_raw, 0.0)
    scale = gamma_row * jax.lax.rsqrt(var + EPS)
    shift = beta_row - (mean_raw + bias_row) * scale
    return scale, shift


@jax.jit
def deconv_res_block_forward(x_nchw, params):
    (w1, b1, w3a, b3a, w3b, b3b, g1, beta1, g2, beta2) = params
    N, Cin, H, W = x_nchw.shape
    Cout = w1.shape[1]
    CINP = _round_up(Cin, 128)
    COUTP = _round_up(Cout, 128)
    Hu, Wu = 2 * H, 2 * W
    count = float(N * Hu * Wu)

    R = _pick_rows_per_block(H, W)       # row-pairs per grid step -> M = R*W per matmul
    Hb = H // R

    # NCHW -> NHWC, 1-pixel zero pad (the conv padding at original resolution),
    # channel pad to a lane-dense 128 multiple, pre-cast to bf16 for the MXU.
    x = jnp.transpose(x_nchw, (0, 2, 3, 1)).astype(jnp.float32)
    x_pad = jnp.pad(x, ((0, 0), (1, 1), (1, 1), (0, CINP - Cin))).astype(jnp.bfloat16)
    # Pre-gather each row block together with its 1-row halo on each side so stage A
    # only holds O(R) rows in VMEM instead of the whole image (x is the small tensor,
    # so the (R+2)/R duplication is cheap).
    xb = jnp.stack([x_pad[:, i * R:i * R + R + 2] for i in range(Hb)], axis=1)

    # Fold nearest-x2 upsample + 3x3 conv into 4 sub-pixel phases of 2x2 taps,
    # then K-fuse the 4 taps:  w2cat[phase] is (4*Cin_p, Cout_p).
    A = jnp.array([[[1., 0., 0.], [0., 1., 1.]],
                   [[1., 1., 0.], [0., 0., 1.]]], jnp.float32)            # (2,2,3)
    w3a_p = jnp.pad(w3a, ((0, 0), (0, 0), (0, CINP - Cin), (0, COUTP - Cout)))
    w2 = jnp.einsum('apy,bqx,yxio->abpqio', A, A, w3a_p)
    w2cat = w2.reshape(4, 4 * CINP, COUTP).astype(jnp.bfloat16)
    w1_p = jnp.pad(w1, ((0, CINP - Cin), (0, COUTP - Cout))).astype(jnp.bfloat16)
    w3b_p = jnp.pad(w3b, ((0, 0), (0, 0), (0, COUTP - Cout), (0, COUTP - Cout)))
    w3bcat = w3b_p.reshape(3, 3 * COUTP, COUTP).astype(jnp.bfloat16)      # K-fused dx taps

    rowp = lambda v: jnp.pad(v, (0, COUTP - Cout)).reshape(1, COUTP).astype(jnp.float32)
    b1_r, b3a_r, b3b_r = rowp(b1), rowp(b3a), rowp(b3b)
    g1_r, be1_r, g2_r, be2_r = rowp(g1), rowp(beta1), rowp(g2), rowp(beta2)

    spec_pix = pl.BlockSpec((1, R, 2, W, 2 * COUTP), lambda n, i: (n, i, 0, 0, 0))
    spec_skip = pl.BlockSpec((1, R, W, COUTP), lambda n, i: (n, i, 0, 0))
    spec_stat = pl.BlockSpec((1, 1, 1, 2 * COUTP), lambda n, i: (n, i, 0, 0))
    spec_row = pl.BlockSpec((1, COUTP), lambda n, i: (0, 0))
    spec_row2 = pl.BlockSpec((1, 2 * COUTP), lambda n, i: (0, 0))
    comp = pltpu.CompilerParams(dimension_semantics=("parallel", "parallel"),
                                vmem_limit_bytes=VMEM_LIMIT_BYTES)

    pix_bytes = N * H * 2 * W * 2 * COUTP * 2          # bf16 conv1 / spre
    skip_bytes = N * H * W * COUTP * 2

    # ---- Stage A: upsampled conv3_1 + conv1_1 skip + partial BN1 stats -------- #
    conv1, skip, st1 = pl.pallas_call(
        _stage_a_kernel,
        grid_spec=pltpu.PrefetchScalarGridSpec(
            num_scalar_prefetch=0,
            grid=(N, Hb),
            in_specs=[
                pl.BlockSpec((1, 1, R + 2, W + 2, CINP), lambda n, i: (n, i, 0, 0, 0)),
                pl.BlockSpec((4, 4 * CINP, COUTP), lambda n, i: (0, 0, 0)),
                pl.BlockSpec((CINP, COUTP), lambda n, i: (0, 0)),
                spec_row, spec_row,
            ],
            out_specs=(spec_pix, spec_skip, spec_stat)),
        out_shape=(
            jax.ShapeDtypeStruct((N, H, 2, W, 2 * COUTP), jnp.bfloat16),  # conv3_1 (+bias)
            jax.ShapeDtypeStruct((N, H, W, COUTP), jnp.bfloat16),         # skip (once / pixel)
            jax.ShapeDtypeStruct((N, Hb, 1, 2 * COUTP), jnp.float32),     # [sum | sumsq]
        ),
        compiler_params=comp,
        cost_estimate=pl.CostEstimate(
            flops=2 * 17 * N * H * W * CINP * COUTP,
            transcendentals=0,
            bytes_accessed=xb.size * 2 + w2cat.size * 2 + pix_bytes + skip_bytes),
    )(xb, w2cat, w1_p, b3a_r, b1_r)

    sc1, sh1 = _bn_affine(st1, g1_r, be1_r, b3a_r, count, COUTP)
    sc1_2 = jnp.concatenate([sc1, sc1], axis=1)          # x2 for the packed lane layout
    sh1_2 = jnp.concatenate([sh1, sh1], axis=1)

    # ---- Stage B: BN1+ReLU fused into conv3_2 + skip add + partial BN2 stats -- #
    spec_halo_top = pl.BlockSpec(
        (1, 1, 1, W, 2 * COUTP),
        lambda n, i: (n, jnp.maximum(i * R - 1, 0), 1, 0, 0))
    spec_halo_bot = pl.BlockSpec(
        (1, 1, 1, W, 2 * COUTP),
        lambda n, i: (n, jnp.minimum((i + 1) * R, H - 1), 0, 0, 0))

    spre, st2 = pl.pallas_call(
        _stage_b_kernel,
        grid_spec=pltpu.PrefetchScalarGridSpec(
            num_scalar_prefetch=0,
            grid=(N, Hb),
            in_specs=[
                spec_pix,                 # conv1 main block (read once per step)
                spec_halo_top,            # single halo row above
                spec_halo_bot,            # single halo row below
                spec_skip,                # un-replicated skip
                spec_row2, spec_row2,     # BN1 scale / shift
                pl.BlockSpec((3, 3 * COUTP, COUTP), lambda n, i: (0, 0, 0)),
                spec_row,                 # conv3_2 bias
            ],
            out_specs=(spec_pix, spec_stat)),
        out_shape=(
            jax.ShapeDtypeStruct((N, H, 2, W, 2 * COUTP), jnp.bfloat16),  # pre-BN2 sum
            jax.ShapeDtypeStruct((N, Hb, 1, 2 * COUTP), jnp.float32),
        ),
        compiler_params=comp,
        cost_estimate=pl.CostEstimate(
            flops=2 * 36 * N * H * W * COUTP * COUTP,
            transcendentals=0,
            bytes_accessed=2 * pix_bytes + skip_bytes + w3bcat.size * 2),
    )(conv1, conv1, conv1, skip, sc1_2, sh1_2, w3bcat, b3b_r)

    # ---- BN2 + ReLU epilogue in plain jnp: XLA fuses it with the channel slice
    # and the NCHW transpose (no extra Pallas pass, no masked sub-128 lane stores). #
    sc2, sh2 = _bn_affine(st2, g2_r, be2_r, b3b_r, count, COUTP)
    y = spre.reshape(N, Hu, Wu, COUTP)[..., :Cout].astype(jnp.float32)
    out = jnp.maximum(y * sc2[0, :Cout] + sh2[0, :Cout], 0.0)
    return jnp.transpose(out, (0, 3, 1, 2))              # back to NCHW


# ------------------------- pure-JAX reference ------------------------------ #
def _upsample2_nearest(x_nhwc):
    return jnp.repeat(jnp.repeat(x_nhwc, 2, axis=1), 2, axis=2)


def _bn_ref(x, g, b):
    mean = jnp.mean(x, axis=(0, 1, 2), keepdims=True)
    var = jnp.mean((x - mean) ** 2, axis=(0, 1, 2), keepdims=True)
    return (x - mean) * jax.lax.rsqrt(var + EPS) * g + b


def _ref_forward(x_nchw, params):
    (w1, b1, w3a, b3a, w3b, b3b, g1, beta1, g2, beta2) = params
    x = jnp.transpose(x_nchw, (0, 2, 3, 1)).astype(jnp.float32)
    xu = _upsample2_nearest(x)
    hi = jax.lax.Precision.HIGHEST
    conv3 = lambda v, w: jax.lax.conv_general_dilated(
        v, w, (1, 1), 'SAME', dimension_numbers=('NHWC', 'HWIO', 'NHWC'),
        precision=hi)
    skip = jnp.einsum('nhwc,co->nhwo', xu, w1, precision=hi) + b1
    out = conv3(xu, w3a) + b3a
    out = jnp.maximum(_bn_ref(out, g1, beta1), 0.0)
    out = conv3(out, w3b) + b3b
    out = out + skip
    out = jnp.maximum(_bn_ref(out, g2, beta2), 0.0)
    return jnp.transpose(out, (0, 3, 1, 2))


# --------------------------------- main ------------------------------------ #
def _make_params(key, cin, cout):
    ks = jax.random.split(key, 10)
    w1 = jax.random.normal(ks[0], (cin, cout), jnp.float32) * 0.2         # conv1_1 (Cin,Cout)
    b1 = jax.random.normal(ks[1], (cout,), jnp.float32) * 0.1
    w3a = jax.random.normal(ks[2], (3, 3, cin, cout), jnp.float32) * 0.2  # conv3_1 HWIO
    b3a = jax.random.normal(ks[3], (cout,), jnp.float32) * 0.1
    w3b = jax.random.normal(ks[4], (3, 3, cout, cout), jnp.float32) * 0.2 # conv3_2 HWIO
    b3b = jax.random.normal(ks[5], (cout,), jnp.float32) * 0.1
    g1 = 1.0 + 0.1 * jax.random.normal(ks[6], (cout,), jnp.float32)
    beta1 = 0.1 * jax.random.normal(ks[7], (cout,), jnp.float32)
    g2 = 1.0 + 0.1 * jax.random.normal(ks[8], (cout,), jnp.float32)
    beta2 = 0.1 * jax.random.normal(ks[9], (cout,), jnp.float32)
    return (w1, b1, w3a, b3a, w3b, b3b, g1, beta1, g2, beta2)


if __name__ == "__main__":
    # TODO(synk): BatchNorm running-stat buffer updates (training side effect) are
    # not modeled; forward uses batch statistics exactly like PyTorch train-mode.
    # TODO(synk): constant-index weight blocks could be single-buffered
    # (pipeline_mode=pl.Buffered(1)) to reclaim VMEM for a larger row batch.
    N, Cin, Cout, H, W = 2, 4, 8, 16, 16
    key = jax.random.PRNGKey(0)
    kx, kp = jax.random.split(key)
    x = jax.random.normal(kx, (N, Cin, H, W), jnp.float32)
    params = _make_params(kp, Cin, Cout)

    out = jax.block_until_ready(deconv_res_block_forward(x, params))
    assert out.shape == (N, Cout, 2 * H, 2 * W), out.shape

    ref = jax.block_until_ready(_ref_forward(x, params))
    # Tolerance accounts for bf16 intermediate storage + bf16 MXU matmuls vs the
    # f32 HIGHEST-precision reference.
    if not jnp.allclose(out, ref, rtol=5e-2, atol=5e-2):
        raise AssertionError(
            "Pallas output mismatch vs reference, max abs err "
            f"{float(jnp.max(jnp.abs(out - ref)))}")

    print("KERNEL_OK")
</pallas_src>

<mosaic_0001>
module attributes {stable_mosaic.version = 11 : i64} {
  func.func @_stage_a_kernel(%arg0: i32, %arg1: i32, %arg2: memref<1x1x10x18x128xbf16, #tpu.memory_space<vmem>>, %arg3: memref<4x512x128xbf16, #tpu.memory_space<vmem>>, %arg4: memref<128x128xbf16, #tpu.memory_space<vmem>>, %arg5: memref<1x128xf32, #tpu.memory_space<vmem>>, %arg6: memref<1x128xf32, #tpu.memory_space<vmem>>, %arg7: memref<1x8x2x16x256xbf16, #tpu.memory_space<vmem>>, %arg8: memref<1x8x16x128xbf16, #tpu.memory_space<vmem>>, %arg9: memref<1x1x1x256xf32, #tpu.memory_space<vmem>>) attributes {dimension_semantics = [#tpu.dimension_semantics<parallel>, #tpu.dimension_semantics<parallel>], iteration_bounds = array<i64: 2, 2>, scalar_prefetch = 0 : i64, scratch_operands = 0 : i64, tpu.core_type = #tpu.core_type<tc>, window_params = [{transform_indices = @transform_0, window_bounds = array<i64: 1, 1, 10, 18, 128>}, {pipeline_mode = #tpu.pipeline_mode<synchronous>, transform_indices = @transform_1, window_bounds = array<i64: 4, 512, 128>}, {pipeline_mode = #tpu.pipeline_mode<synchronous>, transform_indices = @transform_2, window_bounds = array<i64: 128, 128>}, {pipeline_mode = #tpu.pipeline_mode<synchronous>, transform_indices = @transform_3, window_bounds = array<i64: 1, 128>}, {pipeline_mode = #tpu.pipeline_mode<synchronous>, transform_indices = @transform_4, window_bounds = array<i64: 1, 128>}, {transform_indices = @transform_5, window_bounds = array<i64: 1, 8, 2, 16, 256>}, {transform_indices = @transform_6, window_bounds = array<i64: 1, 8, 16, 128>}, {transform_indices = @transform_7, window_bounds = array<i64: 1, 1, 1, 256>}]} {
    %c0 = arith.constant 0 : index
    %c0_0 = arith.constant 0 : index
    %0 = vector.load %arg5[%c0, %c0_0] : memref<1x128xf32, #tpu.memory_space<vmem>>, vector<1x128xf32>
    %c0_1 = arith.constant 0 : index
    %c0_2 = arith.constant 0 : index
    %1 = vector.load %arg6[%c0_1, %c0_2] : memref<1x128xf32, #tpu.memory_space<vmem>>, vector<1x128xf32>
    %c0_3 = arith.constant 0 : index
    %c0_4 = arith.constant 0 : index
    %c0_5 = arith.constant 0 : index
    %c0_6 = arith.constant 0 : index
    %c0_7 = arith.constant 0 : index
    %2 = vector.load %arg2[%c0_3, %c0_4, %c0_5, %c0_6, %c0_7] : memref<1x1x10x18x128xbf16, #tpu.memory_space<vmem>>, vector<1x1x8x16x128xbf16>
    %3 = vector.shape_cast %2 : vector<1x1x8x16x128xbf16> to vector<8x16x128xbf16>
    %4 = vector.shape_cast %3 : vector<8x16x128xbf16> to vector<128x128xbf16>
    %c0_8 = arith.constant 0 : index
    %c0_9 = arith.constant 0 : index
    %c0_10 = arith.constant 0 : index
    %c1 = arith.constant 1 : index
    %c0_11 = arith.constant 0 : index
    %5 = vector.load %arg2[%c0_8, %c0_9, %c0_10, %c1, %c0_11] : memref<1x1x10x18x128xbf16, #tpu.memory_space<vmem>>, vector<1x1x8x16x128xbf16>
    %6 = vector.shape_cast %5 : vector<1x1x8x16x128xbf16> to vector<8x16x128xbf16>
    %7 = vector.shape_cast %6 : vector<8x16x128xbf16> to vector<128x128xbf16>
    %c0_12 = arith.constant 0 : index
    %c0_13 = arith.constant 0 : index
    %c0_14 = arith.constant 0 : index
    %c2 = arith.constant 2 : index
    %c0_15 = arith.constant 0 : index
    %8 = vector.load %arg2[%c0_12, %c0_13, %c0_14, %c2, %c0_15] : memref<1x1x10x18x128xbf16, #tpu.memory_space<vmem>>, vector<1x1x8x16x128xbf16>
    %9 = vector.shape_cast %8 : vector<1x1x8x16x128xbf16> to vector<8x16x128xbf16>
    %10 = vector.shape_cast %9 : vector<8x16x128xbf16> to vector<128x128xbf16>
    %c0_16 = arith.constant 0 : index
    %c0_17 = arith.constant 0 : index
    %c1_18 = arith.constant 1 : index
    %c0_19 = arith.constant 0 : index
    %c0_20 = arith.constant 0 : index
    %11 = vector.load %arg2[%c0_16, %c0_17, %c1_18, %c0_19, %c0_20] : memref<1x1x10x18x128xbf16, #tpu.memory_space<vmem>>, vector<1x1x8x16x128xbf16>
    %12 = vector.shape_cast %11 : vector<1x1x8x16x128xbf16> to vector<8x16x128xbf16>
    %13 = vector.shape_cast %12 : vector<8x16x128xbf16> to vector<128x128xbf16>
    %c0_21 = arith.constant 0 : index
    %c0_22 = arith.constant 0 : index
    %c1_23 = arith.constant 1 : index
    %c1_24 = arith.constant 1 : index
    %c0_25 = arith.constant 0 : index
    %14 = vector.load %arg2[%c0_21, %c0_22, %c1_23, %c1_24, %c0_25] : memref<1x1x10x18x128xbf16, #tpu.memory_space<vmem>>, vector<1x1x8x16x128xbf16>
    %15 = vector.shape_cast %14 : vector<1x1x8x16x128xbf16> to vector<8x16x128xbf16>
    %16 = vector.shape_cast %15 : vector<8x16x128xbf16> to vector<128x128xbf16>
    %c0_26 = arith.constant 0 : index
    %c0_27 = arith.constant 0 : index
    %c1_28 = arith.constant 1 : index
    %c2_29 = arith.constant 2 : index
    %c0_30 = arith.constant 0 : index
    %17 = vector.load %arg2[%c0_26, %c0_27, %c1_28, %c2_29, %c0_30] : memref<1x1x10x18x128xbf16, #tpu.memory_space<vmem>>, vector<1x1x8x16x128xbf16>
    %18 = vector.shape_cast %17 : vector<1x1x8x16x128xbf16> to vector<8x16x128xbf16>
    %19 = vector.shape_cast %18 : vector<8x16x128xbf16> to vector<128x128xbf16>
    %c0_31 = arith.constant 0 : index
    %c0_32 = arith.constant 0 : index
    %c2_33 = arith.constant 2 : index
    %c0_34 = arith.constant 0 : index
    %c0_35 = arith.constant 0 : index
    %20 = vector.load %arg2[%c0_31, %c0_32, %c2_33, %c0_34, %c0_35] : memref<1x1x10x18x128xbf16, #tpu.memory_space<vmem>>, vector<1x1x8x16x128xbf16>
    %21 = vector.shape_cast %20 : vector<1x1x8x16x128xbf16> to vector<8x16x128xbf16>
    %22 = vector.shape_cast %21 : vector<8x16x128xbf16> to vector<128x128xbf16>
    %c0_36 = arith.constant 0 : index
    %c0_37 = arith.constant 0 : index
    %c2_38 = arith.constant 2 : index
    %c1_39 = arith.constant 1 : index
    %c0_40 = arith.constant 0 : index
    %23 = vector.load %arg2[%c0_36, %c0_37, %c2_38, %c1_39, %c0_40] : memref<1x1x10x18x128xbf16, #tpu.memory_space<vmem>>, vector<1x1x8x16x128xbf16>
    %24 = vector.shape_cast %23 : vector<1x1x8x16x128xbf16> to vector<8x16x128xbf16>
    %25 = vector.shape_cast %24 : vector<8x16x128xbf16> to vector<128x128xbf16>
    %c0_41 = arith.constant 0 : index
    %c0_42 = arith.constant 0 : index
    %c2_43 = arith.constant 2 : index
    %c2_44 = arith.constant 2 : index
    %c0_45 = arith.constant 0 : index
    %26 = vector.load %arg2[%c0_41, %c0_42, %c2_43, %c2_44, %c0_45] : memref<1x1x10x18x128xbf16, #tpu.memory_space<vmem>>, vector<1x1x8x16x128xbf16>
    %27 = vector.shape_cast %26 : vector<1x1x8x16x128xbf16> to vector<8x16x128xbf16>
    %28 = vector.shape_cast %27 : vector<8x16x128xbf16> to vector<128x128xbf16>
    %c0_46 = arith.constant 0 : index
    %c0_47 = arith.constant 0 : index
    %29 = vector.load %arg4[%c0_46, %c0_47] : memref<128x128xbf16, #tpu.memory_space<vmem>>, vector<128x128xbf16>
    %cst = arith.constant dense<0.000000e+00> : vector<128x128xf32>
    %30 = tpu.matmul %16, %29, %cst {dimension_numbers = #tpu.dot_dimension_numbers<[1], [0], [0], [1], [0, 0, 1, 1], [], []>} : vector<128x128xbf16>, vector<128x128xbf16>, vector<128x128xf32> -> vector<128x128xf32>
    %31 = vector.broadcast %1 : vector<1x128xf32> to vector<128x128xf32>
    %32 = arith.addf %30, %31 : vector<128x128xf32>
    %33 = vector.shape_cast %32 : vector<128x128xf32> to vector<8x16x128xf32>
    %34 = arith.truncf %33 : vector<8x16x128xf32> to vector<8x16x128xbf16>
    %c0_48 = arith.constant 0 : index
    %c0_49 = arith.constant 0 : index
    %c0_50 = arith.constant 0 : index
    %c0_51 = arith.constant 0 : index
    %35 = vector.load %arg8[%c0_48, %c0_49, %c0_50, %c0_51] : memref<1x8x16x128xbf16, #tpu.memory_space<vmem>>, vector<1x8x16x128xbf16>
    %36 = vector.shape_cast %35 : vector<1x8x16x128xbf16> to vector<8x16x128xbf16>
    %37 = vector.shape_cast %34 : vector<8x16x128xbf16> to vector<1x8x16x128xbf16>
    tpu.vector_store %arg8[%c0_48, %c0_49, %c0_50, %c0_51], %37 {strides = array<i32>} : memref<1x8x16x128xbf16, #tpu.memory_space<vmem>>, vector<1x8x16x128xbf16>,
    %cst_52 = arith.constant 0.000000e+00 : f32
    %38 = vector.broadcast %cst_52 : f32 to vector<1x128xf32>
    %cst_53 = arith.constant 0.000000e+00 : f32
    %39 = vector.broadcast %cst_53 : f32 to vector<1x128xf32>
    %40 = tpu.concatenate %4, %7, %13, %16 in 1 : vector<128x128xbf16>, vector<128x128xbf16>, vector<128x128xbf16>, vector<128x128xbf16> -> vector<128x512xbf16>
    %c0_54 = arith.constant 0 : index
    %c0_55 = arith.constant 0 : index
    %c0_56 = arith.constant 0 : index
    %41 = vector.load %arg3[%c0_54, %c0_55, %c0_56] : memref<4x512x128xbf16, #tpu.memory_space<vmem>>, vector<1x512x128xbf16>
    %42 = vector.shape_cast %41 : vector<1x512x128xbf16> to vector<512x128xbf16>
    %cst_57 = arith.constant dense<0.000000e+00> : vector<128x128xf32>
    %43 = tpu.matmul %40, %42, %cst_57 {dimension_numbers = #tpu.dot_dimension_numbers<[1], [0], [0], [1], [0, 0, 1, 1], [], []>} : vector<128x512xbf16>, vector<512x128xbf16>, vector<128x128xf32> -> vector<128x128xf32>
    %cst_58 = arith.constant dense<0.000000e+00> : vector<128xf32>
    %44 = vector.multi_reduction <add>, %43, %cst_58 [0] : vector<128x128xf32> to vector<128xf32>
    %45 = vector.shape_cast %44 : vector<128xf32> to vector<1x128xf32>
    %46 = arith.addf %38, %45 : vector<1x128xf32>
    %47 = arith.mulf %43, %43 : vector<128x128xf32>
    %cst_59 = arith.constant dense<0.000000e+00> : vector<128xf32>
    %48 = vector.multi_reduction <add>, %47, %cst_59 [0] : vector<128x128xf32> to vector<128xf32>
    %49 = vector.shape_cast %48 : vector<128xf32> to vector<1x128xf32>
    %50 = arith.addf %39, %49 : vector<1x128xf32>
    %51 = vector.broadcast %0 : vector<1x128xf32> to vector<128x128xf32>
    %52 = arith.addf %43, %51 : vector<128x128xf32>
    %53 = vector.shape_cast %52 : vector<128x128xf32> to vector<8x16x128xf32>
    %54 = arith.truncf %53 : vector<8x16x128xf32> to vector<8x16x128xbf16>
    %c0_60 = arith.constant 0 : index
    %c0_61 = arith.constant 0 : index
    %c0_62 = arith.constant 0 : index
    %c0_63 = arith.constant 0 : index
    %c0_64 = arith.constant 0 : index
    %55 = vector.load %arg7[%c0_60, %c0_61, %c0_62, %c0_63, %c0_64] : memref<1x8x2x16x256xbf16, #tpu.memory_space<vmem>>, vector<1x8x1x16x128xbf16>
    %56 = vector.shape_cast %55 : vector<1x8x1x16x128xbf16> to vector<8x16x128xbf16>
    %57 = vector.shape_cast %54 : vector<8x16x128xbf16> to vector<1x8x1x16x128xbf16>
    tpu.vector_store %arg7[%c0_60, %c0_61, %c0_62, %c0_63, %c0_64], %57 {strides = array<i32>} : memref<1x8x2x16x256xbf16, #tpu.memory_space<vmem>>, vector<1x8x1x16x128xbf16>,
    %58 = tpu.concatenate %7, %10, %16, %19 in 1 : vector<128x128xbf16>, vector<128x128xbf16>, vector<128x128xbf16>, vector<128x128xbf16> -> vector<128x512xbf16>
    %c1_65 = arith.constant 1 : index
    %c0_66 = arith.constant 0 : index
    %c0_67 = arith.constant 0 : index
    %59 = vector.load %arg3[%c1_65, %c0_66, %c0_67] : memref<4x512x128xbf16, #tpu.memory_space<vmem>>, vector<1x512x128xbf16>
    %60 = vector.shape_cast %59 : vector<1x512x128xbf16> to vector<512x128xbf16>
    %cst_68 = arith.constant dense<0.000000e+00> : vector<128x128xf32>
    %61 = tpu.matmul %58, %60, %cst_68 {dimension_numbers = #tpu.dot_dimension_numbers<[1], [0], [0], [1], [0, 0, 1, 1], [], []>} : vector<128x512xbf16>, vector<512x128xbf16>, vector<128x128xf32> -> vector<128x128xf32>
    %cst_69 = arith.constant dense<0.000000e+00> : vector<128xf32>
    %62 = vector.multi_reduction <add>, %61, %cst_69 [0] : vector<128x128xf32> to vector<128xf32>
    %63 = vector.shape_cast %62 : vector<128xf32> to vector<1x128xf32>
    %64 = arith.addf %46, %63 : vector<1x128xf32>
    %65 = arith.mulf %61, %61 : vector<128x128xf32>
    %cst_70 = arith.constant dense<0.000000e+00> : vector<128xf32>
    %66 = vector.multi_reduction <add>, %65, %cst_70 [0] : vector<128x128xf32> to vector<128xf32>
    %67 = vector.shape_cast %66 : vector<128xf32> to vector<1x128xf32>
    %68 = arith.addf %50, %67 : vector<1x128xf32>
    %69 = vector.broadcast %0 : vector<1x128xf32> to vector<128x128xf32>
    %70 = arith.addf %61, %69 : vector<128x128xf32>
    %71 = vector.shape_cast %70 : vector<128x128xf32> to vector<8x16x128xf32>
    %72 = arith.truncf %71 : vector<8x16x128xf32> to vector<8x16x128xbf16>
    %c0_71 = arith.constant 0 : index
    %c0_72 = arith.constant 0 : index
    %c0_73 = arith.constant 0 : index
    %c0_74 = arith.constant 0 : index
    %c128 = arith.constant 128 : index
    %73 = vector.load %arg7[%c0_71, %c0_72, %c0_73, %c0_74, %c128] : memref<1x8x2x16x256xbf16, #tpu.memory_space<vmem>>, vector<1x8x1x16x128xbf16>
    %74 = vector.shape_cast %73 : vector<1x8x1x16x128xbf16> to vector<8x16x128xbf16>
    %75 = vector.shape_cast %72 : vector<8x16x128xbf16> to vector<1x8x1x16x128xbf16>
    tpu.vector_store %arg7[%c0_71, %c0_72, %c0_73, %c0_74, %c128], %75 {strides = array<i32>} : memref<1x8x2x16x256xbf16, #tpu.memory_space<vmem>>, vector<1x8x1x16x128xbf16>,
    %76 = tpu.concatenate %13, %16, %22, %25 in 1 : vector<128x128xbf16>, vector<128x128xbf16>, vector<128x128xbf16>, vector<128x128xbf16> -> vector<128x512xbf16>
    %c2_75 = arith.constant 2 : index
    %c0_76 = arith.constant 0 : index
    %c0_77 = arith.constant 0 : index
    %77 = vector.load %arg3[%c2_75, %c0_76, %c0_77] : memref<4x512x128xbf16, #tpu.memory_space<vmem>>, vector<1x512x128xbf16>
    %78 = vector.shape_cast %77 : vector<1x512x128xbf16> to vector<512x128xbf16>
    %cst_78 = arith.constant dense<0.000000e+00> : vector<128x128xf32>
    %79 = tpu.matmul %76, %78, %cst_78 {dimension_numbers = #tpu.dot_dimension_numbers<[1], [0], [0], [1], [0, 0, 1, 1], [], []>} : vector<128x512xbf16>, vector<512x128xbf16>, vector<128x128xf32> -> vector<128x128xf32>
    %cst_79 = arith.constant dense<0.000000e+00> : vector<128xf32>
    %80 = vector.multi_reduction <add>, %79, %cst_79 [0] : vector<128x128xf32> to vector<128xf32>
    %81 = vector.shape_cast %80 : vector<128xf32> to vector<1x128xf32>
    %82 = arith.addf %64, %81 : vector<1x128xf32>
    %83 = arith.mulf %79, %79 : vector<128x128xf32>
    %cst_80 = arith.constant dense<0.000000e+00> : vector<128xf32>
    %84 = vector.multi_reduction <add>, %83, %cst_80 [0] : vector<128x128xf32> to vector<128xf32>
    %85 = vector.shape_cast %84 : vector<128xf32> to vector<1x128xf32>
    %86 = arith.addf %68, %85 : vector<1x128xf32>
    %87 = vector.broadcast %0 : vector<1x128xf32> to vector<128x128xf32>
    %88 = arith.addf %79, %87 : vector<128x128xf32>
    %89 = vector.shape_cast %88 : vector<128x128xf32> to vector<8x16x128xf32>
    %90 = arith.truncf %89 : vector<8x16x128xf32> to vector<8x16x128xbf16>
    %c0_81 = arith.constant 0 : index
    %c0_82 = arith.constant 0 : index
    %c1_83 = arith.constant 1 : index
    %c0_84 = arith.constant 0 : index
    %c0_85 = arith.constant 0 : index
    %91 = vector.load %arg7[%c0_81, %c0_82, %c1_83, %c0_84, %c0_85] : memref<1x8x2x16x256xbf16, #tpu.memory_space<vmem>>, vector<1x8x1x16x128xbf16>
    %92 = vector.shape_cast %91 : vector<1x8x1x16x128xbf16> to vector<8x16x128xbf16>
    %93 = vector.shape_cast %90 : vector<8x16x128xbf16> to vector<1x8x1x16x128xbf16>
    tpu.vector_store %arg7[%c0_81, %c0_82, %c1_83, %c0_84, %c0_85], %93 {strides = array<i32>} : memref<1x8x2x16x256xbf16, #tpu.memory_space<vmem>>, vector<1x8x1x16x128xbf16>,
    %94 = tpu.concatenate %16, %19, %25, %28 in 1 : vector<128x128xbf16>, vector<128x128xbf16>, vector<128x128xbf16>, vector<128x128xbf16> -> vector<128x512xbf16>
    %c3 = arith.constant 3 : index
    %c0_86 = arith.constant 0 : index
    %c0_87 = arith.constant 0 : index
    %95 = vector.load %arg3[%c3, %c0_86, %c0_87] : memref<4x512x128xbf16, #tpu.memory_space<vmem>>, vector<1x512x128xbf16>
    %96 = vector.shape_cast %95 : vector<1x512x128xbf16> to vector<512x128xbf16>
    %cst_88 = arith.constant dense<0.000000e+00> : vector<128x128xf32>
    %97 = tpu.matmul %94, %96, %cst_88 {dimension_numbers = #tpu.dot_dimension_numbers<[1], [0], [0], [1], [0, 0, 1, 1], [], []>} : vector<128x512xbf16>, vector<512x128xbf16>, vector<128x128xf32> -> vector<128x128xf32>
    %cst_89 = arith.constant dense<0.000000e+00> : vector<128xf32>
    %98 = vector.multi_reduction <add>, %97, %cst_89 [0] : vector<128x128xf32> to vector<128xf32>
    %99 = vector.shape_cast %98 : vector<128xf32> to vector<1x128xf32>
    %100 = arith.addf %82, %99 : vector<1x128xf32>
    %101 = arith.mulf %97, %97 : vector<128x128xf32>
    %cst_90 = arith.constant dense<0.000000e+00> : vector<128xf32>
    %102 = vector.multi_reduction <add>, %101, %cst_90 [0] : vector<128x128xf32> to vector<128xf32>
    %103 = vector.shape_cast %102 : vector<128xf32> to vector<1x128xf32>
    %104 = arith.addf %86, %103 : vector<1x128xf32>
    %105 = vector.broadcast %0 : vector<1x128xf32> to vector<128x128xf32>
    %106 = arith.addf %97, %105 : vector<128x128xf32>
    %107 = vector.shape_cast %106 : vector<128x128xf32> to vector<8x16x128xf32>
    %108 = arith.truncf %107 : vector<8x16x128xf32> to vector<8x16x128xbf16>
    %c0_91 = arith.constant 0 : index
    %c0_92 = arith.constant 0 : index
    %c1_93 = arith.constant 1 : index
    %c0_94 = arith.constant 0 : index
    %c128_95 = arith.constant 128 : index
    %109 = vector.load %arg7[%c0_91, %c0_92, %c1_93, %c0_94, %c128_95] : memref<1x8x2x16x256xbf16, #tpu.memory_space<vmem>>, vector<1x8x1x16x128xbf16>
    %110 = vector.shape_cast %109 : vector<1x8x1x16x128xbf16> to vector<8x16x128xbf16>
    %111 = vector.shape_cast %108 : vector<8x16x128xbf16> to vector<1x8x1x16x128xbf16>
    tpu.vector_store %arg7[%c0_91, %c0_92, %c1_93, %c0_94, %c128_95], %111 {strides = array<i32>} : memref<1x8x2x16x256xbf16, #tpu.memory_space<vmem>>, vector<1x8x1x16x128xbf16>,
    %112 = tpu.concatenate %100, %104 in 1 : vector<1x128xf32>, vector<1x128xf32> -> vector<1x256xf32>
    %c0_96 = arith.constant 0 : index
    %c0_97 = arith.constant 0 : index
    %c0_98 = arith.constant 0 : index
    %c0_99 = arith.constant 0 : index
    %113 = vector.load %arg9[%c0_96, %c0_97, %c0_98, %c0_99] : memref<1x1x1x256xf32, #tpu.memory_space<vmem>>, vector<1x1x1x256xf32>
    %114 = vector.shape_cast %113 : vector<1x1x1x256xf32> to vector<1x256xf32>
    %115 = vector.shape_cast %112 : vector<1x256xf32> to vector<1x1x1x256xf32>
    tpu.vector_store %arg9[%c0_96, %c0_97, %c0_98, %c0_99], %115 {strides = array<i32>} : memref<1x1x1x256xf32, #tpu.memory_space<vmem>>, vector<1x1x1x256xf32>,
    return
  }
  func.func @transform_0(%arg0: i32, %arg1: i32) -> (i32, i32, i32, i32, i32) {
    %c0_i32 = arith.constant 0 : i32
    %c0_i32_0 = arith.constant 0 : i32
    %c0_i32_1 = arith.constant 0 : i32
    %c0_i32_2 = arith.constant 0 : i32
    return %arg0, %arg1, %c0_i32, %c0_i32_0, %c0_i32_1 : i32, i32, i32, i32, i32
  }
  func.func @transform_1(%arg0: i32, %arg1: i32) -> (i32, i32, i32) {
    %c0_i32 = arith.constant 0 : i32
    %c0_i32_0 = arith.constant 0 : i32
    %c0_i32_1 = arith.constant 0 : i32
    %c0_i32_2 = arith.constant 0 : i32
    return %c0_i32, %c0_i32_0, %c0_i32_1 : i32, i32, i32
  }
  func.func @transform_2(%arg0: i32, %arg1: i32) -> (i32, i32) {
    %c0_i32 = arith.constant 0 : i32
    %c0_i32_0 = arith.constant 0 : i32
    %c0_i32_1 = arith.constant 0 : i32
    return %c0_i32, %c0_i32_0 : i32, i32
  }
  func.func @transform_3(%arg0: i32, %arg1: i32) -> (i32, i32) {
    %c0_i32 = arith.constant 0 : i32
    %c0_i32_0 = arith.constant 0 : i32
    %c0_i32_1 = arith.constant 0 : i32
    return %c0_i32, %c0_i32_0 : i32, i32
  }
  func.func @transform_4(%arg0: i32, %arg1: i32) -> (i32, i32) {
    %c0_i32 = arith.constant 0 : i32
    %c0_i32_0 = arith.constant 0 : i32
    %c0_i32_1 = arith.constant 0 : i32
    return %c0_i32, %c0_i32_0 : i32, i32
  }
  func.func @transform_5(%arg0: i32, %arg1: i32) -> (i32, i32, i32, i32, i32) {
    %c0_i32 = arith.constant 0 : i32
    %c0_i32_0 = arith.constant 0 : i32
    %c0_i32_1 = arith.constant 0 : i32
    %c0_i32_2 = arith.constant 0 : i32
    return %arg0, %arg1, %c0_i32, %c0_i32_0, %c0_i32_1 : i32, i32, i32, i32, i32
  }
  func.func @transform_6(%arg0: i32, %arg1: i32) -> (i32, i32, i32, i32) {
    %c0_i32 = arith.constant 0 : i32
    %c0_i32_0 = arith.constant 0 : i32
    %c0_i32_1 = arith.constant 0 : i32
    return %arg0, %arg1, %c0_i32, %c0_i32_0 : i32, i32, i32, i32
  }
  func.func @transform_7(%arg0: i32, %arg1: i32) -> (i32, i32, i32, i32) {
    %c0_i32 = arith.constant 0 : i32
    %c0_i32_0 = arith.constant 0 : i32
    %c0_i32_1 = arith.constant 0 : i32
    return %arg0, %arg1, %c0_i32, %c0_i32_0 : i32, i32, i32, i32
  }
}

module attributes {stable_mosaic.version = 11 : i64} {
  func.func @_stage_b_kernel(%arg0: i32, %arg1: i32, %arg2: memref<1x8x2x16x256xbf16, #tpu.memory_space<vmem>>, %arg3: memref<1x1x1x16x256xbf16, #tpu.memory_space<vmem>>, %arg4: memref<1x1x1x16x256xbf16, #tpu.memory_space<vmem>>, %arg5: memref<1x8x16x128xbf16, #tpu.memory_space<vmem>>, %arg6: memref<1x256xf32, #tpu.memory_space<vmem>>, %arg7: memref<1x256xf32, #tpu.memory_space<vmem>>, %arg8: memref<3x384x128xbf16, #tpu.memory_space<vmem>>, %arg9: memref<1x128xf32, #tpu.memory_space<vmem>>, %arg10: memref<1x8x2x16x256xbf16, #tpu.memory_space<vmem>>, %arg11: memref<1x1x1x256xf32, #tpu.memory_space<vmem>>) attributes {dimension_semantics = [#tpu.dimension_semantics<parallel>, #tpu.dimension_semantics<parallel>], iteration_bounds = array<i64: 2, 2>, scalar_prefetch = 0 : i64, scratch_operands = 0 : i64, tpu.core_type = #tpu.core_type<tc>, window_params = [{transform_indices = @transform_0, window_bounds = array<i64: 1, 8, 2, 16, 256>}, {transform_indices = @transform_1, window_bounds = array<i64: 1, 1, 1, 16, 256>}, {transform_indices = @transform_2, window_bounds = array<i64: 1, 1, 1, 16, 256>}, {transform_indices = @transform_3, window_bounds = array<i64: 1, 8, 16, 128>}, {pipeline_mode = #tpu.pipeline_mode<synchronous>, transform_indices = @transform_4, window_bounds = array<i64: 1, 256>}, {pipeline_mode = #tpu.pipeline_mode<synchronous>, transform_indices = @transform_5, window_bounds = array<i64: 1, 256>}, {pipeline_mode = #tpu.pipeline_mode<synchronous>, transform_indices = @transform_6, window_bounds = array<i64: 3, 384, 128>}, {pipeline_mode = #tpu.pipeline_mode<synchronous>, transform_indices = @transform_7, window_bounds = array<i64: 1, 128>}, {transform_indices = @transform_8, window_bounds = array<i64: 1, 8, 2, 16, 256>}, {transform_indices = @transform_9, window_bounds = array<i64: 1, 1, 1, 256>}]} {
    %c0 = arith.constant 0 : index
    %c0_0 = arith.constant 0 : index
    %0 = vector.load %arg6[%c0, %c0_0] : memref<1x256xf32, #tpu.memory_space<vmem>>, vector<1x256xf32>
    %c0_1 = arith.constant 0 : index
    %c0_2 = arith.constant 0 : index
    %1 = vector.load %arg7[%c0_1, %c0_2] : memref<1x256xf32, #tpu.memory_space<vmem>>, vector<1x256xf32>
    %c0_3 = arith.constant 0 : index
    %c0_4 = arith.constant 0 : index
    %2 = vector.load %arg9[%c0_3, %c0_4] : memref<1x128xf32, #tpu.memory_space<vmem>>, vector<1x128xf32>
    %c0_i32 = arith.constant 0 : i32
    %3 = arith.cmpi sgt, %arg1, %c0_i32 : i32
    %4 = arith.extui %3 : i1 to i32
    %5 = arith.sitofp %4 : i32 to f32
    %c1_i32 = arith.constant 1 : i32
    %6 = arith.cmpi slt, %arg1, %c1_i32 : i32
    %7 = arith.extui %6 : i1 to i32
    %8 = arith.sitofp %7 : i32 to f32
    %c0_5 = arith.constant 0 : index
    %c0_6 = arith.constant 0 : index
    %c0_7 = arith.constant 0 : index
    %c0_8 = arith.constant 0 : index
    %c0_9 = arith.constant 0 : index
    %9 = vector.load %arg2[%c0_5, %c0_6, %c0_7, %c0_8, %c0_9] : memref<1x8x2x16x256xbf16, #tpu.memory_space<vmem>>, vector<1x8x2x16x256xbf16>
    %10 = vector.shape_cast %9 : vector<1x8x2x16x256xbf16> to vector<8x2x16x256xbf16>
    %11 = vector.shape_cast %0 : vector<1x256xf32> to vector<1x1x1x256xf32>
    %12 = vector.shape_cast %1 : vector<1x256xf32> to vector<1x1x1x256xf32>
    %13 = arith.extf %10 : vector<8x2x16x256xbf16> to vector<8x2x16x256xf32>
    %14 = vector.broadcast %11 : vector<1x1x1x256xf32> to vector<8x2x16x256xf32>
    %15 = arith.mulf %13, %14 : vector<8x2x16x256xf32>
    %16 = vector.broadcast %12 : vector<1x1x1x256xf32> to vector<8x2x16x256xf32>
    %17 = arith.addf %15, %16 : vector<8x2x16x256xf32>
    %cst = arith.constant 0.000000e+00 : f32
    %18 = vector.broadcast %cst : f32 to vector<8x2x16x256xf32>
    %19 = arith.maximumf %17, %18 : vector<8x2x16x256xf32>
    %c0_10 = arith.constant 0 : index
    %c0_11 = arith.constant 0 : index
    %c0_12 = arith.constant 0 : index
    %c0_13 = arith.constant 0 : index
    %c0_14 = arith.constant 0 : index
    %20 = vector.load %arg3[%c0_10, %c0_11, %c0_12, %c0_13, %c0_14] : memref<1x1x1x16x256xbf16, #tpu.memory_space<vmem>>, vector<1x1x1x16x256xbf16>
    %21 = vector.shape_cast %20 : vector<1x1x1x16x256xbf16> to vector<1x16x256xbf16>
    %22 = vector.shape_cast %0 : vector<1x256xf32> to vector<1x1x256xf32>
    %23 = vector.shape_cast %1 : vector<1x256xf32> to vector<1x1x256xf32>
    %24 = arith.extf %21 : vector<1x16x256xbf16> to vector<1x16x256xf32>
    %25 = vector.broadcast %22 : vector<1x1x256xf32> to vector<1x16x256xf32>
    %26 = arith.mulf %24, %25 : vector<1x16x256xf32>
    %27 = vector.broadcast %23 : vector<1x1x256xf32> to vector<1x16x256xf32>
    %28 = arith.addf %26, %27 : vector<1x16x256xf32>
    %cst_15 = arith.constant 0.000000e+00 : f32
    %29 = vector.broadcast %cst_15 : f32 to vector<1x16x256xf32>
    %30 = arith.maximumf %28, %29 : vector<1x16x256xf32>
    %31 = vector.broadcast %5 : f32 to vector<1x16x256xf32>
    %32 = arith.mulf %30, %31 : vector<1x16x256xf32>
    %c0_16 = arith.constant 0 : index
    %c0_17 = arith.constant 0 : index
    %c0_18 = arith.constant 0 : index
    %c0_19 = arith.constant 0 : index
    %c0_20 = arith.constant 0 : index
    %33 = vector.load %arg4[%c0_16, %c0_17, %c0_18, %c0_19, %c0_20] : memref<1x1x1x16x256xbf16, #tpu.memory_space<vmem>>, vector<1x1x1x16x256xbf16>
    %34 = vector.shape_cast %33 : vector<1x1x1x16x256xbf16> to vector<1x16x256xbf16>
    %35 = vector.shape_cast %0 : vector<1x256xf32> to vector<1x1x256xf32>
    %36 = vector.shape_cast %1 : vector<1x256xf32> to vector<1x1x256xf32>
    %37 = arith.extf %34 : vector<1x16x256xbf16> to vector<1x16x256xf32>
    %38 = vector.broadcast %35 : vector<1x1x256xf32> to vector<1x16x256xf32>
    %39 = arith.mulf %37, %38 : vector<1x16x256xf32>
    %40 = vector.broadcast %36 : vector<1x1x256xf32> to vector<1x16x256xf32>
    %41 = arith.addf %39, %40 : vector<1x16x256xf32>
    %cst_21 = arith.constant 0.000000e+00 : f32
    %42 = vector.broadcast %cst_21 : f32 to vector<1x16x256xf32>
    %43 = arith.maximumf %41, %42 : vector<1x16x256xf32>
    %44 = vector.broadcast %8 : f32 to vector<1x16x256xf32>
    %45 = arith.mulf %43, %44 : vector<1x16x256xf32>
    %46 = vector.extract_strided_slice %19 {offsets = [0, 1, 0, 0], sizes = [7, 1, 16, 256], strides = [1, 1, 1, 1]} : vector<8x2x16x256xf32> to vector<7x1x16x256xf32>
    %47 = vector.shape_cast %46 : vector<7x1x16x256xf32> to vector<7x16x256xf32>
    %48 = tpu.concatenate %32, %47 in 0 : vector<1x16x256xf32>, vector<7x16x256xf32> -> vector<8x16x256xf32>
    %49 = vector.extract_strided_slice %19 {offsets = [0, 0, 0, 0], sizes = [8, 1, 16, 256], strides = [1, 1, 1, 1]} : vector<8x2x16x256xf32> to vector<8x1x16x256xf32>
    %50 = vector.shape_cast %49 : vector<8x1x16x256xf32> to vector<8x16x256xf32>
    %51 = vector.extract_strided_slice %19 {offsets = [0, 1, 0, 0], sizes = [8, 1, 16, 256], strides = [1, 1, 1, 1]} : vector<8x2x16x256xf32> to vector<8x1x16x256xf32>
    %52 = vector.shape_cast %51 : vector<8x1x16x256xf32> to vector<8x16x256xf32>
    %53 = vector.extract_strided_slice %19 {offsets = [1, 0, 0, 0], sizes = [7, 1, 16, 256], strides = [1, 1, 1, 1]} : vector<8x2x16x256xf32> to vector<7x1x16x256xf32>
    %54 = vector.shape_cast %53 : vector<7x1x16x256xf32> to vector<7x16x256xf32>
    %55 = tpu.concatenate %54, %45 in 0 : vector<7x16x256xf32>, vector<1x16x256xf32> -> vector<8x16x256xf32>
    %56 = tpu.iota {dimensions = array<i32: 1>} : vector<1x16x1xi32>
    %c1_i32_22 = arith.constant 1 : i32
    %57 = vector.broadcast %c1_i32_22 : i32 to vector<1x16x1xi32>
    %58 = arith.cmpi sge, %56, %57 : vector<1x16x1xi32>
    %c15_i32 = arith.constant 15 : i32
    %59 = vector.broadcast %c15_i32 : i32 to vector<1x16x1xi32>
    %60 = arith.cmpi slt, %56, %59 : vector<1x16x1xi32>
    %61 = vector.extract_strided_slice %48 {offsets = [0, 0, 128], sizes = [8, 16, 128], strides = [1, 1, 1]} : vector<8x16x256xf32> to vector<8x16x128xf32>
    %c1_i32_23 = arith.constant 1 : i32
    %62 = tpu.dynamic_rotate %61 by %c1_i32_23 dim 1 : vector<8x16x128xf32>, i32 -> vector<8x16x128xf32>
    %cst_24 = arith.constant 0.000000e+00 : f32
    %63 = vector.shape_cast %58 : vector<1x16x1xi1> to vector<1x16x1xi1>
    %64 = vector.broadcast %63 : vector<1x16x1xi1> to vector<8x16x128xi1>
    %65 = vector.broadcast %cst_24 : f32 to vector<8x16x128xf32>
    %66 = arith.select %64, %62, %65 : vector<8x16x128xi1>, vector<8x16x128xf32>
    %67 = arith.truncf %66 : vector<8x16x128xf32> to vector<8x16x128xbf16>
    %68 = vector.shape_cast %67 : vector<8x16x128xbf16> to vector<128x128xbf16>
    %69 = vector.extract_strided_slice %48 {offsets = [0, 0, 0], sizes = [8, 16, 128], strides = [1, 1, 1]} : vector<8x16x256xf32> to vector<8x16x128xf32>
    %70 = arith.truncf %69 : vector<8x16x128xf32> to vector<8x16x128xbf16>
    %71 = vector.shape_cast %70 : vector<8x16x128xbf16> to vector<128x128xbf16>
    %72 = vector.extract_strided_slice %48 {offsets = [0, 0, 128], sizes = [8, 16, 128], strides = [1, 1, 1]} : vector<8x16x256xf32> to vector<8x16x128xf32>
    %73 = arith.truncf %72 : vector<8x16x128xf32> to vector<8x16x128xbf16>
    %74 = vector.shape_cast %73 : vector<8x16x128xbf16> to vector<128x128xbf16>
    %75 = vector.extract_strided_slice %48 {offsets = [0, 0, 0], sizes = [8, 16, 128], strides = [1, 1, 1]} : vector<8x16x256xf32> to vector<8x16x128xf32>
    %c15_i32_25 = arith.constant 15 : i32
    %76 = tpu.dynamic_rotate %75 by %c15_i32_25 dim 1 : vector<8x16x128xf32>, i32 -> vector<8x16x128xf32>
    %cst_26 = arith.constant 0.000000e+00 : f32
    %77 = vector.shape_cast %60 : vector<1x16x1xi1> to vector<1x16x1xi1>
    %78 = vector.broadcast %77 : vector<1x16x1xi1> to vector<8x16x128xi1>
    %79 = vector.broadcast %cst_26 : f32 to vector<8x16x128xf32>
    %80 = arith.select %78, %76, %79 : vector<8x16x128xi1>, vector<8x16x128xf32>
    %81 = arith.truncf %80 : vector<8x16x128xf32> to vector<8x16x128xbf16>
    %82 = vector.shape_cast %81 : vector<8x16x128xbf16> to vector<128x128xbf16>
    %83 = vector.extract_strided_slice %50 {offsets = [0, 0, 128], sizes = [8, 16, 128], strides = [1, 1, 1]} : vector<8x16x256xf32> to vector<8x16x128xf32>
    %c1_i32_27 = arith.constant 1 : i32
    %84 = tpu.dynamic_rotate %83 by %c1_i32_27 dim 1 : vector<8x16x128xf32>, i32 -> vector<8x16x128xf32>
    %cst_28 = arith.constant 0.000000e+00 : f32
    %85 = vector.shape_cast %58 : vector<1x16x1xi1> to vector<1x16x1xi1>
    %86 = vector.broadcast %85 : vector<1x16x1xi1> to vector<8x16x128xi1>
    %87 = vector.broadcast %cst_28 : f32 to vector<8x16x128xf32>
    %88 = arith.select %86, %84, %87 : vector<8x16x128xi1>, vector<8x16x128xf32>
    %89 = arith.truncf %88 : vector<8x16x128xf32> to vector<8x16x128xbf16>
    %90 = vector.shape_cast %89 : vector<8x16x128xbf16> to vector<128x128xbf16>
    %91 = vector.extract_strided_slice %50 {offsets = [0, 0, 0], sizes = [8, 16, 128], strides = [1, 1, 1]} : vector<8x16x256xf32> to vector<8x16x128xf32>
    %92 = arith.truncf %91 : vector<8x16x128xf32> to vector<8x16x128xbf16>
    %93 = vector.shape_cast %92 : vector<8x16x128xbf16> to vector<128x128xbf16>
    %94 = vector.extract_strided_slice %50 {offsets = [0, 0, 128], sizes = [8, 16, 128], strides = [1, 1, 1]} : vector<8x16x256xf32> to vector<8x16x128xf32>
    %95 = arith.truncf %94 : vector<8x16x128xf32> to vector<8x16x128xbf16>
    %96 = vector.shape_cast %95 : vector<8x16x128xbf16> to vector<128x128xbf16>
    %97 = vector.extract_strided_slice %50 {offsets = [0, 0, 0], sizes = [8, 16, 128], strides = [1, 1, 1]} : vector<8x16x256xf32> to vector<8x16x128xf32>
    %c15_i32_29 = arith.constant 15 : i32
    %98 = tpu.dynamic_rotate %97 by %c15_i32_29 dim 1 : vector<8x16x128xf32>, i32 -> vector<8x16x128xf32>
    %cst_30 = arith.constant 0.000000e+00 : f32
    %99 = vector.shape_cast %60 : vector<1x16x1xi1> to vector<1x16x1xi1>
    %100 = vector.broadcast %99 : vector<1x16x1xi1> to vector<8x16x128xi1>
    %101 = vector.broadcast %cst_30 : f32 to vector<8x16x128xf32>
    %102 = arith.select %100, %98, %101 : vector<8x16x128xi1>, vector<8x16x128xf32>
    %103 = arith.truncf %102 : vector<8x16x128xf32> to vector<8x16x128xbf16>
    %104 = vector.shape_cast %103 : vector<8x16x128xbf16> to vector<128x128xbf16>
    %105 = vector.extract_strided_slice %52 {offsets = [0, 0, 128], sizes = [8, 16, 128], strides = [1, 1, 1]} : vector<8x16x256xf32> to vector<8x16x128xf32>
    %c1_i32_31 = arith.constant 1 : i32
    %106 = tpu.dynamic_rotate %105 by %c1_i32_31 dim 1 : vector<8x16x128xf32>, i32 -> vector<8x16x128xf32>
    %cst_32 = arith.constant 0.000000e+00 : f32
    %107 = vector.shape_cast %58 : vector<1x16x1xi1> to vector<1x16x1xi1>
    %108 = vector.broadcast %107 : vector<1x16x1xi1> to vector<8x16x128xi1>
    %109 = vector.broadcast %cst_32 : f32 to vector<8x16x128xf32>
    %110 = arith.select %108, %106, %109 : vector<8x16x128xi1>, vector<8x16x128xf32>
    %111 = arith.truncf %110 : vector<8x16x128xf32> to vector<8x16x128xbf16>
    %112 = vector.shape_cast %111 : vector<8x16x128xbf16> to vector<128x128xbf16>
    %113 = vector.extract_strided_slice %52 {offsets = [0, 0, 0], sizes = [8, 16, 128], strides = [1, 1, 1]} : vector<8x16x256xf32> to vector<8x16x128xf32>
    %114 = arith.truncf %113 : vector<8x16x128xf32> to vector<8x16x128xbf16>
    %115 = vector.shape_cast %114 : vector<8x16x128xbf16> to vector<128x128xbf16>
    %116 = vector.extract_strided_slice %52 {offsets = [0, 0, 128], sizes = [8, 16, 128], strides = [1, 1, 1]} : vector<8x16x256xf32> to vector<8x16x128xf32>
    %117 = arith.truncf %116 : vector<8x16x128xf32> to vector<8x16x128xbf16>
    %118 = vector.shape_cast %117 : vector<8x16x128xbf16> to vector<128x128xbf16>
    %119 = vector.extract_strided_slice %52 {offsets = [0, 0, 0], sizes = [8, 16, 128], strides = [1, 1, 1]} : vector<8x16x256xf32> to vector<8x16x128xf32>
    %c15_i32_33 = arith.constant 15 : i32
    %120 = tpu.dynamic_rotate %119 by %c15_i32_33 dim 1 : vector<8x16x128xf32>, i32 -> vector<8x16x128xf32>
    %cst_34 = arith.constant 0.000000e+00 : f32
    %121 = vector.shape_cast %60 : vector<1x16x1xi1> to vector<1x16x1xi1>
    %122 = vector.broadcast %121 : vector<1x16x1xi1> to vector<8x16x128xi1>
    %123 = vector.broadcast %cst_34 : f32 to vector<8x16x128xf32>
    %124 = arith.select %122, %120, %123 : vector<8x16x128xi1>, vector<8x16x128xf32>
    %125 = arith.truncf %124 : vector<8x16x128xf32> to vector<8x16x128xbf16>
    %126 = vector.shape_cast %125 : vector<8x16x128xbf16> to vector<128x128xbf16>
    %127 = vector.extract_strided_slice %55 {offsets = [0, 0, 128], sizes = [8, 16, 128], strides = [1, 1, 1]} : vector<8x16x256xf32> to vector<8x16x128xf32>
    %c1_i32_35 = arith.constant 1 : i32
    %128 = tpu.dynamic_rotate %127 by %c1_i32_35 dim 1 : vector<8x16x128xf32>, i32 -> vector<8x16x128xf32>
    %cst_36 = arith.constant 0.000000e+00 : f32
    %129 = vector.shape_cast %58 : vector<1x16x1xi1> to vector<1x16x1xi1>
    %130 = vector.broadcast %129 : vector<1x16x1xi1> to vector<8x16x128xi1>
    %131 = vector.broadcast %cst_36 : f32 to vector<8x16x128xf32>
    %132 = arith.select %130, %128, %131 : vector<8x16x128xi1>, vector<8x16x128xf32>
    %133 = arith.truncf %132 : vector<8x16x128xf32> to vector<8x16x128xbf16>
    %134 = vector.shape_cast %133 : vector<8x16x128xbf16> to vector<128x128xbf16>
    %135 = vector.extract_strided_slice %55 {offsets = [0, 0, 0], sizes = [8, 16, 128], strides = [1, 1, 1]} : vector<8x16x256xf32> to vector<8x16x128xf32>
    %136 = arith.truncf %135 : vector<8x16x128xf32> to vector<8x16x128xbf16>
    %137 = vector.shape_cast %136 : vector<8x16x128xbf16> to vector<128x128xbf16>
    %138 = vector.extract_strided_slice %55 {offsets = [0, 0, 128], sizes = [8, 16, 128], strides = [1, 1, 1]} : vector<8x16x256xf32> to vector<8x16x128xf32>
    %139 = arith.truncf %138 : vector<8x16x128xf32> to vector<8x16x128xbf16>
    %140 = vector.shape_cast %139 : vector<8x16x128xbf16> to vector<128x128xbf16>
    %141 = vector.extract_strided_slice %55 {offsets = [0, 0, 0], sizes = [8, 16, 128], strides = [1, 1, 1]} : vector<8x16x256xf32> to vector<8x16x128xf32>
    %c15_i32_37 = arith.constant 15 : i32
    %142 = tpu.dynamic_rotate %141 by %c15_i32_37 dim 1 : vector<8x16x128xf32>, i32 -> vector<8x16x128xf32>
    %cst_38 = arith.constant 0.000000e+00 : f32
    %143 = vector.shape_cast %60 : vector<1x16x1xi1> to vector<1x16x1xi1>
    %144 = vector.broadcast %143 : vector<1x16x1xi1> to vector<8x16x128xi1>
    %145 = vector.broadcast %cst_38 : f32 to vector<8x16x128xf32>
    %146 = arith.select %144, %142, %145 : vector<8x16x128xi1>, vector<8x16x128xf32>
    %147 = arith.truncf %146 : vector<8x16x128xf32> to vector<8x16x128xbf16>
    %148 = vector.shape_cast %147 : vector<8x16x128xbf16> to vector<128x128xbf16>
    %c0_39 = arith.constant 0 : index
    %c0_40 = arith.constant 0 : index
    %c0_41 = arith.constant 0 : index
    %c0_42 = arith.constant 0 : index
    %149 = vector.load %arg5[%c0_39, %c0_40, %c0_41, %c0_42] : memref<1x8x16x128xbf16, #tpu.memory_space<vmem>>, vector<1x8x16x128xbf16>
    %150 = vector.shape_cast %149 : vector<1x8x16x128xbf16> to vector<8x16x128xbf16>
    %151 = arith.extf %150 : vector<8x16x128xbf16> to vector<8x16x128xf32>
    %152 = vector.shape_cast %151 : vector<8x16x128xf32> to vector<128x128xf32>
    %cst_43 = arith.constant 0.000000e+00 : f32
    %153 = vector.broadcast %cst_43 : f32 to vector<1x128xf32>
    %cst_44 = arith.constant 0.000000e+00 : f32
    %154 = vector.broadcast %cst_44 : f32 to vector<1x128xf32>
    %cst_45 = arith.constant 0.000000e+00 : f32
    %155 = vector.broadcast %cst_45 : f32 to vector<128x128xf32>
    %156 = tpu.concatenate %68, %71, %74 in 1 : vector<128x128xbf16>, vector<128x128xbf16>, vector<128x128xbf16> -> vector<128x384xbf16>
    %c0_46 = arith.constant 0 : index
    %c0_47 = arith.constant 0 : index
    %c0_48 = arith.constant 0 : index
    %157 = vector.load %arg8[%c0_46, %c0_47, %c0_48] : memref<3x384x128xbf16, #tpu.memory_space<vmem>>, vector<1x384x128xbf16>
    %158 = vector.shape_cast %157 : vector<1x384x128xbf16> to vector<384x128xbf16>
    %cst_49 = arith.constant dense<0.000000e+00> : vector<128x128xf32>
    %159 = tpu.matmul %156, %158, %cst_49 {dimension_numbers = #tpu.dot_dimension_numbers<[1], [0], [0], [1], [0, 0, 1, 1], [], []>} : vector<128x384xbf16>, vector<384x128xbf16>, vector<128x128xf32> -> vector<128x128xf32>
    %160 = arith.addf %155, %159 : vector<128x128xf32>
    %161 = tpu.concatenate %90, %93, %96 in 1 : vector<128x128xbf16>, vector<128x128xbf16>, vector<128x128xbf16> -> vector<128x384xbf16>
    %c1 = arith.constant 1 : index
    %c0_50 = arith.constant 0 : index
    %c0_51 = arith.constant 0 : index
    %162 = vector.load %arg8[%c1, %c0_50, %c0_51] : memref<3x384x128xbf16, #tpu.memory_space<vmem>>, vector<1x384x128xbf16>
    %163 = vector.shape_cast %162 : vector<1x384x128xbf16> to vector<384x128xbf16>
    %cst_52 = arith.constant dense<0.000000e+00> : vector<128x128xf32>
    %164 = tpu.matmul %161, %163, %cst_52 {dimension_numbers = #tpu.dot_dimension_numbers<[1], [0], [0], [1], [0, 0, 1, 1], [], []>} : vector<128x384xbf16>, vector<384x128xbf16>, vector<128x128xf32> -> vector<128x128xf32>
    %165 = arith.addf %160, %164 : vector<128x128xf32>
    %166 = tpu.concatenate %112, %115, %118 in 1 : vector<128x128xbf16>, vector<128x128xbf16>, vector<128x128xbf16> -> vector<128x384xbf16>
    %c2 = arith.constant 2 : index
    %c0_53 = arith.constant 0 : index
    %c0_54 = arith.constant 0 : index
    %167 = vector.load %arg8[%c2, %c0_53, %c0_54] : memref<3x384x128xbf16, #tpu.memory_space<vmem>>, vector<1x384x128xbf16>
    %168 = vector.shape_cast %167 : vector<1x384x128xbf16> to vector<384x128xbf16>
    %cst_55 = arith.constant dense<0.000000e+00> : vector<128x128xf32>
    %169 = tpu.matmul %166, %168, %cst_55 {dimension_numbers = #tpu.dot_dimension_numbers<[1], [0], [0], [1], [0, 0, 1, 1], [], []>} : vector<128x384xbf16>, vector<384x128xbf16>, vector<128x128xf32> -> vector<128x128xf32>
    %170 = arith.addf %165, %169 : vector<128x128xf32>
    %171 = arith.addf %170, %152 : vector<128x128xf32>
    %cst_56 = arith.constant dense<0.000000e+00> : vector<128xf32>
    %172 = vector.multi_reduction <add>, %171, %cst_56 [0] : vector<128x128xf32> to vector<128xf32>
    %173 = vector.shape_cast %172 : vector<128xf32> to vector<1x128xf32>
    %174 = arith.addf %153, %173 : vector<1x128xf32>
    %175 = arith.mulf %171, %171 : vector<128x128xf32>
    %cst_57 = arith.constant dense<0.000000e+00> : vector<128xf32>
    %176 = vector.multi_reduction <add>, %175, %cst_57 [0] : vector<128x128xf32> to vector<128xf32>
    %177 = vector.shape_cast %176 : vector<128xf32> to vector<1x128xf32>
    %178 = arith.addf %154, %177 : vector<1x128xf32>
    %179 = vector.broadcast %2 : vector<1x128xf32> to vector<128x128xf32>
    %180 = arith.addf %171, %179 : vector<128x128xf32>
    %181 = vector.shape_cast %180 : vector<128x128xf32> to vector<8x16x128xf32>
    %182 = arith.truncf %181 : vector<8x16x128xf32> to vector<8x16x128xbf16>
    %c0_58 = arith.constant 0 : index
    %c0_59 = arith.constant 0 : index
    %c0_60 = arith.constant 0 : index
    %c0_61 = arith.constant 0 : index
    %c0_62 = arith.constant 0 : index
    %183 = vector.load %arg10[%c0_58, %c0_59, %c0_60, %c0_61, %c0_62] : memref<1x8x2x16x256xbf16, #tpu.memory_space<vmem>>, vector<1x8x1x16x128xbf16>
    %184 = vector.shape_cast %183 : vector<1x8x1x16x128xbf16> to vector<8x16x128xbf16>
    %185 = vector.shape_cast %182 : vector<8x16x128xbf16> to vector<1x8x1x16x128xbf16>
    tpu.vector_store %arg10[%c0_58, %c0_59, %c0_60, %c0_61, %c0_62], %185 {strides = array<i32>} : memref<1x8x2x16x256xbf16, #tpu.memory_space<vmem>>, vector<1x8x1x16x128xbf16>,
    %cst_63 = arith.constant 0.000000e+00 : f32
    %186 = vector.broadcast %cst_63 : f32 to vector<128x128xf32>
    %187 = tpu.concatenate %71, %74, %82 in 1 : vector<128x128xbf16>, vector<128x128xbf16>, vector<128x128xbf16> -> vector<128x384xbf16>
    %c0_64 = arith.constant 0 : index
    %c0_65 = arith.constant 0 : index
    %c0_66 = arith.constant 0 : index
    %188 = vector.load %arg8[%c0_64, %c0_65, %c0_66] : memref<3x384x128xbf16, #tpu.memory_space<vmem>>, vector<1x384x128xbf16>
    %189 = vector.shape_cast %188 : vector<1x384x128xbf16> to vector<384x128xbf16>
    %cst_67 = arith.constant dense<0.000000e+00> : vector<128x128xf32>
    %190 = tpu.matmul %187, %189, %cst_67 {dimension_numbers = #tpu.dot_dimension_numbers<[1], [0], [0], [1], [0, 0, 1, 1], [], []>} : vector<128x384xbf16>, vector<384x128xbf16>, vector<128x128xf32> -> vector<128x128xf32>
    %191 = arith.addf %186, %190 : vector<128x128xf32>
    %192 = tpu.concatenate %93, %96, %104 in 1 : vector<128x128xbf16>, vector<128x128xbf16>, vector<128x128xbf16> -> vector<128x384xbf16>
    %c1_68 = arith.constant 1 : index
    %c0_69 = arith.constant 0 : index
    %c0_70 = arith.constant 0 : index
    %193 = vector.load %arg8[%c1_68, %c0_69, %c0_70] : memref<3x384x128xbf16, #tpu.memory_space<vmem>>, vector<1x384x128xbf16>
    %194 = vector.shape_cast %193 : vector<1x384x128xbf16> to vector<384x128xbf16>
    %cst_71 = arith.constant dense<0.000000e+00> : vector<128x128xf32>
    %195 = tpu.matmul %192, %194, %cst_71 {dimension_numbers = #tpu.dot_dimension_numbers<[1], [0], [0], [1], [0, 0, 1, 1], [], []>} : vector<128x384xbf16>, vector<384x128xbf16>, vector<128x128xf32> -> vector<128x128xf32>
    %196 = arith.addf %191, %195 : vector<128x128xf32>
    %197 = tpu.concatenate %115, %118, %126 in 1 : vector<128x128xbf16>, vector<128x128xbf16>, vector<128x128xbf16> -> vector<128x384xbf16>
    %c2_72 = arith.constant 2 : index
    %c0_73 = arith.constant 0 : index
    %c0_74 = arith.constant 0 : index
    %198 = vector.load %arg8[%c2_72, %c0_73, %c0_74] : memref<3x384x128xbf16, #tpu.memory_space<vmem>>, vector<1x384x128xbf16>
    %199 = vector.shape_cast %198 : vector<1x384x128xbf16> to vector<384x128xbf16>
    %cst_75 = arith.constant dense<0.000000e+00> : vector<128x128xf32>
    %200 = tpu.matmul %197, %199, %cst_75 {dimension_numbers = #tpu.dot_dimension_numbers<[1], [0], [0], [1], [0, 0, 1, 1], [], []>} : vector<128x384xbf16>, vector<384x128xbf16>, vector<128x128xf32> -> vector<128x128xf32>
    %201 = arith.addf %196, %200 : vector<128x128xf32>
    %202 = arith.addf %201, %152 : vector<128x128xf32>
    %cst_76 = arith.constant dense<0.000000e+00> : vector<128xf32>
    %203 = vector.multi_reduction <add>, %202, %cst_76 [0] : vector<128x128xf32> to vector<128xf32>
    %204 = vector.shape_cast %203 : vector<128xf32> to vector<1x128xf32>
    %205 = arith.addf %174, %204 : vector<1x128xf32>
    %206 = arith.mulf %202, %202 : vector<128x128xf32>
    %cst_77 = arith.constant dense<0.000000e+00> : vector<128xf32>
    %207 = vector.multi_reduction <add>, %206, %cst_77 [0] : vector<128x128xf32> to vector<128xf32>
    %208 = vector.shape_cast %207 : vector<128xf32> to vector<1x128xf32>
    %209 = arith.addf %178, %208 : vector<1x128xf32>
    %210 = vector.broadcast %2 : vector<1x128xf32> to vector<128x128xf32>
    %211 = arith.addf %202, %210 : vector<128x128xf32>
    %212 = vector.shape_cast %211 : vector<128x128xf32> to vector<8x16x128xf32>
    %213 = arith.truncf %212 : vector<8x16x128xf32> to vector<8x16x128xbf16>
    %c0_78 = arith.constant 0 : index
    %c0_79 = arith.constant 0 : index
    %c0_80 = arith.constant 0 : index
    %c0_81 = arith.constant 0 : index
    %c128 = arith.constant 128 : index
    %214 = vector.load %arg10[%c0_78, %c0_79, %c0_80, %c0_81, %c128] : memref<1x8x2x16x256xbf16, #tpu.memory_space<vmem>>, vector<1x8x1x16x128xbf16>
    %215 = vector.shape_cast %214 : vector<1x8x1x16x128xbf16> to vector<8x16x128xbf16>
    %216 = vector.shape_cast %213 : vector<8x16x128xbf16> to vector<1x8x1x16x128xbf16>
    tpu.vector_store %arg10[%c0_78, %c0_79, %c0_80, %c0_81, %c128], %216 {strides = array<i32>} : memref<1x8x2x16x256xbf16, #tpu.memory_space<vmem>>, vector<1x8x1x16x128xbf16>,
    %cst_82 = arith.constant 0.000000e+00 : f32
    %217 = vector.broadcast %cst_82 : f32 to vector<128x128xf32>
    %218 = tpu.concatenate %90, %93, %96 in 1 : vector<128x128xbf16>, vector<128x128xbf16>, vector<128x128xbf16> -> vector<128x384xbf16>
    %c0_83 = arith.constant 0 : index
    %c0_84 = arith.constant 0 : index
    %c0_85 = arith.constant 0 : index
    %219 = vector.load %arg8[%c0_83, %c0_84, %c0_85] : memref<3x384x128xbf16, #tpu.memory_space<vmem>>, vector<1x384x128xbf16>
    %220 = vector.shape_cast %219 : vector<1x384x128xbf16> to vector<384x128xbf16>
    %cst_86 = arith.constant dense<0.000000e+00> : vector<128x128xf32>
    %221 = tpu.matmul %218, %220, %cst_86 {dimension_numbers = #tpu.dot_dimension_numbers<[1], [0], [0], [1], [0, 0, 1, 1], [], []>} : vector<128x384xbf16>, vector<384x128xbf16>, vector<128x128xf32> -> vector<128x128xf32>
    %222 = arith.addf %217, %221 : vector<128x128xf32>
    %223 = tpu.concatenate %112, %115, %118 in 1 : vector<128x128xbf16>, vector<128x128xbf16>, vector<128x128xbf16> -> vector<128x384xbf16>
    %c1_87 = arith.constant 1 : index
    %c0_88 = arith.constant 0 : index
    %c0_89 = arith.constant 0 : index
    %224 = vector.load %arg8[%c1_87, %c0_88, %c0_89] : memref<3x384x128xbf16, #tpu.memory_space<vmem>>, vector<1x384x128xbf16>
    %225 = vector.shape_cast %224 : vector<1x384x128xbf16> to vector<384x128xbf16>
    %cst_90 = arith.constant dense<0.000000e+00> : vector<128x128xf32>
    %226 = tpu.matmul %223, %225, %cst_90 {dimension_numbers = #tpu.dot_dimension_numbers<[1], [0], [0], [1], [0, 0, 1, 1], [], []>} : vector<128x384xbf16>, vector<384x128xbf16>, vector<128x128xf32> -> vector<128x128xf32>
    %227 = arith.addf %222, %226 : vector<128x128xf32>
    %228 = tpu.concatenate %134, %137, %140 in 1 : vector<128x128xbf16>, vector<128x128xbf16>, vector<128x128xbf16> -> vector<128x384xbf16>
    %c2_91 = arith.constant 2 : index
    %c0_92 = arith.constant 0 : index
    %c0_93 = arith.constant 0 : index
    %229 = vector.load %arg8[%c2_91, %c0_92, %c0_93] : memref<3x384x128xbf16, #tpu.memory_space<vmem>>, vector<1x384x128xbf16>
    %230 = vector.shape_cast %229 : vector<1x384x128xbf16> to vector<384x128xbf16>
    %cst_94 = arith.constant dense<0.000000e+00> : vector<128x128xf32>
    %231 = tpu.matmul %228, %230, %cst_94 {dimension_numbers = #tpu.dot_dimension_numbers<[1], [0], [0], [1], [0, 0, 1, 1], [], []>} : vector<128x384xbf16>, vector<384x128xbf16>, vector<128x128xf32> -> vector<128x128xf32>
    %232 = arith.addf %227, %231 : vector<128x128xf32>
    %233 = arith.addf %232, %152 : vector<128x128xf32>
    %cst_95 = arith.constant dense<0.000000e+00> : vector<128xf32>
    %234 = vector.multi_reduction <add>, %233, %cst_95 [0] : vector<128x128xf32> to vector<128xf32>
    %235 = vector.shape_cast %234 : vector<128xf32> to vector<1x128xf32>
    %236 = arith.addf %205, %235 : vector<1x128xf32>
    %237 = arith.mulf %233, %233 : vector<128x128xf32>
    %cst_96 = arith.constant dense<0.000000e+00> : vector<128xf32>
    %238 = vector.multi_reduction <add>, %237, %cst_96 [0] : vector<128x128xf32> to vector<128xf32>
    %239 = vector.shape_cast %238 : vector<128xf32> to vector<1x128xf32>
    %240 = arith.addf %209, %239 : vector<1x128xf32>
    %241 = vector.broadcast %2 : vector<1x128xf32> to vector<128x128xf32>
    %242 = arith.addf %233, %241 : vector<128x128xf32>
    %243 = vector.shape_cast %242 : vector<128x128xf32> to vector<8x16x128xf32>
    %244 = arith.truncf %243 : vector<8x16x128xf32> to vector<8x16x128xbf16>
    %c0_97 = arith.constant 0 : index
    %c0_98 = arith.constant 0 : index
    %c1_99 = arith.constant 1 : index
    %c0_100 = arith.constant 0 : index
    %c0_101 = arith.constant 0 : index
    %245 = vector.load %arg10[%c0_97, %c0_98, %c1_99, %c0_100, %c0_101] : memref<1x8x2x16x256xbf16, #tpu.memory_space<vmem>>, vector<1x8x1x16x128xbf16>
    %246 = vector.shape_cast %245 : vector<1x8x1x16x128xbf16> to vector<8x16x128xbf16>
    %247 = vector.shape_cast %244 : vector<8x16x128xbf16> to vector<1x8x1x16x128xbf16>
    tpu.vector_store %arg10[%c0_97, %c0_98, %c1_99, %c0_100, %c0_101], %247 {strides = array<i32>} : memref<1x8x2x16x256xbf16, #tpu.memory_space<vmem>>, vector<1x8x1x16x128xbf16>,
    %cst_102 = arith.constant 0.000000e+00 : f32
    %248 = vector.broadcast %cst_102 : f32 to vector<128x128xf32>
    %249 = tpu.concatenate %93, %96, %104 in 1 : vector<128x128xbf16>, vector<128x128xbf16>, vector<128x128xbf16> -> vector<128x384xbf16>
    %c0_103 = arith.constant 0 : index
    %c0_104 = arith.constant 0 : index
    %c0_105 = arith.constant 0 : index
    %250 = vector.load %arg8[%c0_103, %c0_104, %c0_105] : memref<3x384x128xbf16, #tpu.memory_space<vmem>>, vector<1x384x128xbf16>
    %251 = vector.shape_cast %250 : vector<1x384x128xbf16> to vector<384x128xbf16>
    %cst_106 = arith.constant dense<0.000000e+00> : vector<128x128xf32>
    %252 = tpu.matmul %249, %251, %cst_106 {dimension_numbers = #tpu.dot_dimension_numbers<[1], [0], [0], [1], [0, 0, 1, 1], [], []>} : vector<128x384xbf16>, vector<384x128xbf16>, vector<128x128xf32> -> vector<128x128xf32>
    %253 = arith.addf %248, %252 : vector<128x128xf32>
    %254 = tpu.concatenate %115, %118, %126 in 1 : vector<128x128xbf16>, vector<128x128xbf16>, vector<128x128xbf16> -> vector<128x384xbf16>
    %c1_107 = arith.constant 1 : index
    %c0_108 = arith.constant 0 : index
    %c0_109 = arith.constant 0 : index
    %255 = vector.load %arg8[%c1_107, %c0_108, %c0_109] : memref<3x384x128xbf16, #tpu.memory_space<vmem>>, vector<1x384x128xbf16>
    %256 = vector.shape_cast %255 : vector<1x384x128xbf16> to vector<384x128xbf16>
    %cst_110 = arith.constant dense<0.000000e+00> : vector<128x128xf32>
    %257 = tpu.matmul %254, %256, %cst_110 {dimension_numbers = #tpu.dot_dimension_numbers<[1], [0], [0], [1], [0, 0, 1, 1], [], []>} : vector<128x384xbf16>, vector<384x128xbf16>, vector<128x128xf32> -> vector<128x128xf32>
    %258 = arith.addf %253, %257 : vector<128x128xf32>
    %259 = tpu.concatenate %137, %140, %148 in 1 : vector<128x128xbf16>, vector<128x128xbf16>, vector<128x128xbf16> -> vector<128x384xbf16>
    %c2_111 = arith.constant 2 : index
    %c0_112 = arith.constant 0 : index
    %c0_113 = arith.constant 0 : index
    %260 = vector.load %arg8[%c2_111, %c0_112, %c0_113] : memref<3x384x128xbf16, #tpu.memory_space<vmem>>, vector<1x384x128xbf16>
    %261 = vector.shape_cast %260 : vector<1x384x128xbf16> to vector<384x128xbf16>
    %cst_114 = arith.constant dense<0.000000e+00> : vector<128x128xf32>
    %262 = tpu.matmul %259, %261, %cst_114 {dimension_numbers = #tpu.dot_dimension_numbers<[1], [0], [0], [1], [0, 0, 1, 1], [], []>} : vector<128x384xbf16>, vector<384x128xbf16>, vector<128x128xf32> -> vector<128x128xf32>
    %263 = arith.addf %258, %262 : vector<128x128xf32>
    %264 = arith.addf %263, %152 : vector<128x128xf32>
    %cst_115 = arith.constant dense<0.000000e+00> : vector<128xf32>
    %265 = vector.multi_reduction <add>, %264, %cst_115 [0] : vector<128x128xf32> to vector<128xf32>
    %266 = vector.shape_cast %265 : vector<128xf32> to vector<1x128xf32>
    %267 = arith.addf %236, %266 : vector<1x128xf32>
    %268 = arith.mulf %264, %264 : vector<128x128xf32>
    %cst_116 = arith.constant dense<0.000000e+00> : vector<128xf32>
    %269 = vector.multi_reduction <add>, %268, %cst_116 [0] : vector<128x128xf32> to vector<128xf32>
    %270 = vector.shape_cast %269 : vector<128xf32> to vector<1x128xf32>
    %271 = arith.addf %240, %270 : vector<1x128xf32>
    %272 = vector.broadcast %2 : vector<1x128xf32> to vector<128x128xf32>
    %273 = arith.addf %264, %272 : vector<128x128xf32>
    %274 = vector.shape_cast %273 : vector<128x128xf32> to vector<8x16x128xf32>
    %275 = arith.truncf %274 : vector<8x16x128xf32> to vector<8x16x128xbf16>
    %c0_117 = arith.constant 0 : index
    %c0_118 = arith.constant 0 : index
    %c1_119 = arith.constant 1 : index
    %c0_120 = arith.constant 0 : index
    %c128_121 = arith.constant 128 : index
    %276 = vector.load %arg10[%c0_117, %c0_118, %c1_119, %c0_120, %c128_121] : memref<1x8x2x16x256xbf16, #tpu.memory_space<vmem>>, vector<1x8x1x16x128xbf16>
    %277 = vector.shape_cast %276 : vector<1x8x1x16x128xbf16> to vector<8x16x128xbf16>
    %278 = vector.shape_cast %275 : vector<8x16x128xbf16> to vector<1x8x1x16x128xbf16>
    tpu.vector_store %arg10[%c0_117, %c0_118, %c1_119, %c0_120, %c128_121], %278 {strides = array<i32>} : memref<1x8x2x16x256xbf16, #tpu.memory_space<vmem>>, vector<1x8x1x16x128xbf16>,
    %279 = tpu.concatenate %267, %271 in 1 : vector<1x128xf32>, vector<1x128xf32> -> vector<1x256xf32>
    %c0_122 = arith.constant 0 : index
    %c0_123 = arith.constant 0 : index
    %c0_124 = arith.constant 0 : index
    %c0_125 = arith.constant 0 : index
    %280 = vector.load %arg11[%c0_122, %c0_123, %c0_124, %c0_125] : memref<1x1x1x256xf32, #tpu.memory_space<vmem>>, vector<1x1x1x256xf32>
    %281 = vector.shape_cast %280 : vector<1x1x1x256xf32> to vector<1x256xf32>
    %282 = vector.shape_cast %279 : vector<1x256xf32> to vector<1x1x1x256xf32>
    tpu.vector_store %arg11[%c0_122, %c0_123, %c0_124, %c0_125], %282 {strides = array<i32>} : memref<1x1x1x256xf32, #tpu.memory_space<vmem>>, vector<1x1x1x256xf32>,
    return
  }
  func.func @transform_0(%arg0: i32, %arg1: i32) -> (i32, i32, i32, i32, i32) {
    %c0_i32 = arith.constant 0 : i32
    %c0_i32_0 = arith.constant 0 : i32
    %c0_i32_1 = arith.constant 0 : i32
    %c0_i32_2 = arith.constant 0 : i32
    return %arg0, %arg1, %c0_i32, %c0_i32_0, %c0_i32_1 : i32, i32, i32, i32, i32
  }
  func.func @transform_1(%arg0: i32, %arg1: i32) -> (i32, i32, i32, i32, i32) {
    %c8_i32 = arith.constant 8 : i32
    %0 = arith.muli %arg1, %c8_i32 : i32
    %c1_i32 = arith.constant 1 : i32
    %1 = arith.subi %0, %c1_i32 : i32
    %c0_i32 = arith.constant 0 : i32
    %2 = arith.maxsi %1, %c0_i32 : i32
    %c1_i32_0 = arith.constant 1 : i32
    %c0_i32_1 = arith.constant 0 : i32
    %c0_i32_2 = arith.constant 0 : i32
    %c0_i32_3 = arith.constant 0 : i32
    return %arg0, %2, %c1_i32_0, %c0_i32_1, %c0_i32_2 : i32, i32, i32, i32, i32
  }
  func.func @transform_2(%arg0: i32, %arg1: i32) -> (i32, i32, i32, i32, i32) {
    %c1_i32 = arith.constant 1 : i32
    %0 = arith.addi %arg1, %c1_i32 : i32
    %c8_i32 = arith.constant 8 : i32
    %1 = arith.muli %0, %c8_i32 : i32
    %c15_i32 = arith.constant 15 : i32
    %2 = arith.minsi %1, %c15_i32 : i32
    %c0_i32 = arith.constant 0 : i32
    %c0_i32_0 = arith.constant 0 : i32
    %c0_i32_1 = arith.constant 0 : i32
    %c0_i32_2 = arith.constant 0 : i32
    return %arg0, %2, %c0_i32, %c0_i32_0, %c0_i32_1 : i32, i32, i32, i32, i32
  }
  func.func @transform_3(%arg0: i32, %arg1: i32) -> (i32, i32, i32, i32) {
    %c0_i32 = arith.constant 0 : i32
    %c0_i32_0 = arith.constant 0 : i32
    %c0_i32_1 = arith.constant 0 : i32
    return %arg0, %arg1, %c0_i32, %c0_i32_0 : i32, i32, i32, i32
  }
  func.func @transform_4(%arg0: i32, %arg1: i32) -> (i32, i32) {
    %c0_i32 = arith.constant 0 : i32
    %c0_i32_0 = arith.constant 0 : i32
    %c0_i32_1 = arith.constant 0 : i32
    return %c0_i32, %c0_i32_0 : i32, i32
  }
  func.func @transform_5(%arg0: i32, %arg1: i32) -> (i32, i32) {
    %c0_i32 = arith.constant 0 : i32
    %c0_i32_0 = arith.constant 0 : i32
    %c0_i32_1 = arith.constant 0 : i32
    return %c0_i32, %c0_i32_0 : i32, i32
  }
  func.func @transform_6(%arg0: i32, %arg1: i32) -> (i32, i32, i32) {
    %c0_i32 = arith.constant 0 : i32
    %c0_i32_0 = arith.constant 0 : i32
    %c0_i32_1 = arith.constant 0 : i32
    %c0_i32_2 = arith.constant 0 : i32
    return %c0_i32, %c0_i32_0, %c0_i32_1 : i32, i32, i32
  }
  func.func @transform_7(%arg0: i32, %arg1: i32) -> (i32, i32) {
    %c0_i32 = arith.constant 0 : i32
    %c0_i32_0 = arith.constant 0 : i32
    %c0_i32_1 = arith.constant 0 : i32
    return %c0_i32, %c0_i32_0 : i32, i32
  }
  func.func @transform_8(%arg0: i32, %arg1: i32) -> (i32, i32, i32, i32, i32) {
    %c0_i32 = arith.constant 0 : i32
    %c0_i32_0 = arith.constant 0 : i32
    %c0_i32_1 = arith.constant 0 : i32
    %c0_i32_2 = arith.constant 0 : i32
    return %arg0, %arg1, %c0_i32, %c0_i32_0, %c0_i32_1 : i32, i32, i32, i32, i32
  }
  func.func @transform_9(%arg0: i32, %arg1: i32) -> (i32, i32, i32, i32) {
    %c0_i32 = arith.constant 0 : i32
    %c0_i32_0 = arith.constant 0 : i32
    %c0_i32_1 = arith.constant 0 : i32
    return %arg0, %arg1, %c0_i32, %c0_i32_0 : i32, i32, i32, i32
  }
}

</mosaic_0001>

<llo_original>
// kernel: deconv_res_block_forward.2
$region0: #{deconv_res_block_forward.2}
  #allocation0 [shape = 'u32[]', space=smem, size = 0x4, offset = 0x4, fixed_abs, tag = 'smem constant byte address 0x4 - core index']
  #allocation1 [shape = 'u32[144,128]{1,0:T(1,128)}', space=vmem, size = 0x12000, scoped, tag = 'internal scratch']
  %s0 = inlined_call_operand.vmem [shape: bf16[2,2,10,18,128], index: 0, kind: input, shape index: {}]
  %s1 = inlined_call_operand.vmem [shape: bf16[4,512,128], index: 1, kind: input, shape index: {}]
  %s2 = inlined_call_operand.vmem [shape: bf16[128,128], index: 2, kind: input, shape index: {}]
  %s3 = inlined_call_operand.vmem [shape: f32[1,128], index: 3, kind: input, shape index: {}]
  %s4 = inlined_call_operand.vmem [shape: f32[1,128], index: 4, kind: input, shape index: {}]
  %s5 = inlined_call_operand.vmem [shape: bf16[2,16,2,16,256], index: 5, kind: output, shape index: {0}]
  %s6 = inlined_call_operand.vmem [shape: bf16[2,16,16,128], index: 6, kind: output, shape index: {1}]
  %s7 = inlined_call_operand.vmem [shape: f32[2,2,1,256], index: 7, kind: output, shape index: {2}]
  %8 = xla_tuple %s5, %s6, %s7
  %s9 = sld [smem:[#allocation0]]
  $region69: #{deconv_res_block_forward.2} parent=0
    _
  %s11 = ssub.s32 1, %s9
  %s12 = scalar_select 0, %s11, %s9
  loop: start=0, step=1, limit=6
  $region2: #{deconv_res_block_forward.2} parent=0 // loop_pre_header
    _
  $region3: #{deconv_res_block_forward.2} parent=0 // loop_header
    %s14 = sphi 0, %s18
    %p15 = scmp.ge.s32.totalorder %s14, 6
    %s21 = sphi 0, %s33
    %s22 = sphi 0, %s29
    %s23 = sphi 0, %s21
    %s24 = sphi 0, %s22
    %s25 = sphi 0, %s23
    %s26 = sphi 0, %s24
    %s38 = sphi 0, %s40
    %s41 = sphi 0, %s38
    %s42 = sphi 0, %s41
    %s58 = sphi 0, %s42
    %s62 = sphi 0, %s62
    %s64 = sphi 0, %s62
    %s65 = sphi 0, %s64
    %s79 = sphi 0, %s65
    %s83 = sphi 0, %s83
    %s85 = sphi 0, %s83
    %s86 = sphi 0, %s85
    %s100 = sphi 0, %s86
    %s104 = sphi 0, %s104
    %s106 = sphi 0, %s104
    %s107 = sphi 0, %s106
    %s121 = sphi 0, %s107
    %s125 = sphi 0, %s125
    %s127 = sphi 0, %s125
    %s128 = sphi 0, %s127
    %s142 = sphi 0, %s128
    %s150 = sphi 0, %s152
    %s153 = sphi 0, %s150
    %s154 = sphi 0, %s153
    %s170 = sphi 0, %s154
    %s178 = sphi 0, %s180
    %s181 = sphi 0, %s178
    %s182 = sphi 0, %s181
    %s198 = sphi 0, %s182
    %s206 = sphi 0, %s208
    %s209 = sphi 0, %s206
    %s210 = sphi 0, %s209
    %s226 = sphi 0, %s210
  $region4: #{deconv_res_block_forward.2} parent=0 // loop_header_branch
    %17 = sbr.rel (%p15) target = $region8
  $region5: #{deconv_res_block_forward.2} parent=0 // loop_body
    %s19 = ssub.s32 %s14, 1
    %s20 = ssub.s32 %s14, 2
    %s27 = sadd.s32 1, %s22
    %p28 = scmp.ge.s32.totalorder %s27, 2
    %s29 = scalar_select %p28, 0, %s27
    %s30 = sadd.s32 1, %s21
    %s31 = scalar_select %p28, %s30, %s21
    %p32 = scmp.ge.s32.totalorder %s31, 2
    %s33 = scalar_select %p32, 0, %s31
    %s34 = ssub.s32 %s21, %s33
    %s35 = ssub.s32 %s22, %s29
    %s36 = sor.u32 %s34, %s35
    %p37 = scmp.eq.s32.totalorder %s36, 0
    %s39 = sadd.s32 %s38, 1
    %s40 = scalar_select %p37, %s38, %s39
    %p43 = pneg %p37
    %p44 = scmp.eq.s32.totalorder %s14, 3
    %p45 = por %p43, %p44
    %p46 = scmp.ne.s32.totalorder %s38, %s41
    %p47 = scmp.eq.s32.totalorder %s14, 0
    %p48 = por %p46, %p47
    %p49 = scmp.ne.s32.totalorder %s38, %s41
    %p50 = scmp.eq.s32.totalorder %s19, 3
    %p51 = por %p49, %p50
    %p52 = scmp.ne.s32.totalorder %s41, %s42
    %p53 = scmp.eq.s32.totalorder %s19, 0
    %p54 = por %p52, %p53
    %p55 = scmp.ne.s32.totalorder %s41, %s42
    %p56 = scmp.eq.s32.totalorder %s20, 3
    %p57 = por %p55, %p56
    %p59 = scmp.ne.s32.totalorder %s42, %s58
    %p60 = scmp.eq.s32.totalorder %s20, 0
    %p61 = por %p59, %p60
    %s63 = sadd.s32 %s62, 1
    %p66 = scmp.eq.s32.totalorder %s14, 3
    %p67 = scmp.ne.s32.totalorder %s62, %s64
    %p68 = scmp.eq.s32.totalorder %s14, 0
    %p69 = por %p67, %p68
    %p70 = scmp.ne.s32.totalorder %s62, %s64
    %p71 = scmp.eq.s32.totalorder %s19, 3
    %p72 = por %p70, %p71
    %p73 = scmp.ne.s32.totalorder %s64, %s65
    %p74 = scmp.eq.s32.totalorder %s19, 0
    %p75 = por %p73, %p74
    %p76 = scmp.ne.s32.totalorder %s64, %s65
    %p77 = scmp.eq.s32.totalorder %s20, 3
    %p78 = por %p76, %p77
    %p80 = scmp.ne.s32.totalorder %s65, %s79
    %p81 = scmp.eq.s32.totalorder %s20, 0
    %p82 = por %p80, %p81
    %s84 = sadd.s32 %s83, 1
    %p87 = scmp.eq.s32.totalorder %s14, 3
    %p88 = scmp.ne.s32.totalorder %s83, %s85
    %p89 = scmp.eq.s32.totalorder %s14, 0
    %p90 = por %p88, %p89
    %p91 = scmp.ne.s32.totalorder %s83, %s85
    %p92 = scmp.eq.s32.totalorder %s19, 3
    %p93 = por %p91, %p92
    %p94 = scmp.ne.s32.totalorder %s85, %s86
    %p95 = scmp.eq.s32.totalorder %s19, 0
    %p96 = por %p94, %p95
    %p97 = scmp.ne.s32.totalorder %s85, %s86
    %p98 = scmp.eq.s32.totalorder %s20, 3
    %p99 = por %p97, %p98
    %p101 = scmp.ne.s32.totalorder %s86, %s100
    %p102 = scmp.eq.s32.totalorder %s20, 0
    %p103 = por %p101, %p102
    %s105 = sadd.s32 %s104, 1
    %p108 = scmp.eq.s32.totalorder %s14, 3
    %p109 = scmp.ne.s32.totalorder %s104, %s106
    %p110 = scmp.eq.s32.totalorder %s14, 0
    %p111 = por %p109, %p110
    %p112 = scmp.ne.s32.totalorder %s104, %s106
    %p113 = scmp.eq.s32.totalorder %s19, 3
    %p114 = por %p112, %p113
    %p115 = scmp.ne.s32.totalorder %s106, %s107
    %p116 = scmp.eq.s32.totalorder %s19, 0
    %p117 = por %p115, %p116
    %p118 = scmp.ne.s32.totalorder %s106, %s107
    %p119 = scmp.eq.s32.totalorder %s20, 3
    %p120 = por %p118, %p119
    %p122 = scmp.ne.s32.totalorder %s107, %s121
    %p123 = scmp.eq.s32.totalorder %s20, 0
    %p124 = por %p122, %p123
    %s126 = sadd.s32 %s125, 1
    %p129 = scmp.eq.s32.totalorder %s14, 3
    %p130 = scmp.ne.s32.totalorder %s125, %s127
    %p131 = scmp.eq.s32.totalorder %s14, 0
    %p132 = por %p130, %p131
    %p133 = scmp.ne.s32.totalorder %s125, %s127
    %p134 = scmp.eq.s32.totalorder %s19, 3
    %p135 = por %p133, %p134
    %p136 = scmp.ne.s32.totalorder %s127, %s128
    %p137 = scmp.eq.s32.totalorder %s19, 0
    %p138 = por %p136, %p137
    %p139 = scmp.ne.s32.totalorder %s127, %s128
    %p140 = scmp.eq.s32.totalorder %s20, 3
    %p141 = por %p139, %p140
    %p143 = scmp.ne.s32.totalorder %s128, %s142
    %p144 = scmp.eq.s32.totalorder %s20, 0
    %p145 = por %p143, %p144
    %s146 = ssub.s32 %s21, %s33
    %s147 = ssub.s32 %s22, %s29
    %s148 = sor.u32 %s146, %s147
    %p149 = scmp.eq.s32.totalorder %s148, 0
    %s151 = sadd.s32 %s150, 1
    %s152 = scalar_select %p149, %s150, %s151
    %p155 = pneg %p149
    %p156 = scmp.eq.s32.totalorder %s14, 3
    %p157 = por %p155, %p156
    %p158 = scmp.ne.s32.totalorder %s150, %s153
    %p159 = scmp.eq.s32.totalorder %s14, 0
    %p160 = por %p158, %p159
    %p161 = scmp.ne.s32.totalorder %s150, %s153
    %p162 = scmp.eq.s32.totalorder %s19, 3
    %p163 = por %p161, %p162
    %p164 = scmp.ne.s32.totalorder %s153, %s154
    %p165 = scmp.eq.s32.totalorder %s19, 0
    %p166 = por %p164, %p165
    %p167 = scmp.ne.s32.totalorder %s153, %s154
    %p168 = scmp.eq.s32.totalorder %s20, 3
    %p169 = por %p167, %p168
    %p171 = scmp.ne.s32.totalorder %s154, %s170
    %p172 = scmp.eq.s32.totalorder %s20, 0
    %p173 = por %p171, %p172
    %s174 = ssub.s32 %s21, %s33
    %s175 = ssub.s32 %s22, %s29
    %s176 = sor.u32 %s174, %s175
    %p177 = scmp.eq.s32.totalorder %s176, 0
    %s179 = sadd.s32 %s178, 1
    %s180 = scalar_select %p177, %s178, %s179
    %p183 = pneg %p177
    %p184 = scmp.eq.s32.totalorder %s14, 3
    %p185 = por %p183, %p184
    %p186 = scmp.ne.s32.totalorder %s178, %s181
    %p187 = scmp.eq.s32.totalorder %s14, 0
    %p188 = por %p186, %p187
    %p189 = scmp.ne.s32.totalorder %s178, %s181
    %p190 = scmp.eq.s32.totalorder %s19, 3
    %p191 = por %p189, %p190
    %p192 = scmp.ne.s32.totalorder %s181, %s182
    %p193 = scmp.eq.s32.totalorder %s19, 0
    %p194 = por %p192, %p193
    %p195 = scmp.ne.s32.totalorder %s181, %s182
    %p196 = scmp.eq.s32.totalorder %s20, 3
    %p197 = por %p195, %p196
    %p199 = scmp.ne.s32.totalorder %s182, %s198
    %p200 = scmp.eq.s32.totalorder %s20, 0
    %p201 = por %p199, %p200
    %s202 = ssub.s32 %s21, %s33
    %s203 = ssub.s32 %s22, %s29
    %s204 = sor.u32 %s202, %s203
    %p205 = scmp.eq.s32.totalorder %s204, 0
    %s207 = sadd.s32 %s206, 1
    %s208 = scalar_select %p205, %s206, %s207
    %p211 = pneg %p205
    %p212 = scmp.eq.s32.totalorder %s14, 3
    %p213 = por %p211, %p212
    %p214 = scmp.ne.s32.totalorder %s206, %s209
    %p215 = scmp.eq.s32.totalorder %s14, 0
    %p216 = por %p214, %p215
    %p217 = scmp.ne.s32.totalorder %s206, %s209
    %p218 = scmp.eq.s32.totalorder %s19, 3
    %p219 = por %p217, %p218
    %p220 = scmp.ne.s32.totalorder %s209, %s210
    %p221 = scmp.eq.s32.totalorder %s19, 0
    %p222 = por %p220, %p221
    %p223 = scmp.ne.s32.totalorder %s209, %s210
    %p224 = scmp.eq.s32.totalorder %s20, 3
    %p225 = por %p223, %p224
    %p227 = scmp.ne.s32.totalorder %s210, %s226
    %p228 = scmp.eq.s32.totalorder %s20, 0
    %p229 = por %p227, %p228
    %p230 = scmp.le.s32.totalorder 1, %s14
    %p231 = scmp.lt.s32.totalorder %s14, 5
    %p232 = pnand %p230, %p231
    %p233 = pneg %p232
    // Predicated region
    $region9: #{deconv_res_block_forward.2} parent=5 // pred_check
      _
    $region10: #{deconv_res_block_forward.2} parent=5 // pred_check_branch
      %235 = sbr.rel (%p232) target = $region12
    $region11: #{deconv_res_block_forward.2} parent=5 // pred_region
      %s236 = ssub.s32 %s14, 1
      // Predicated region
      $region13: #{deconv_res_block_forward.2} parent=11 // pred_check
        %p237 = pneg %p75
      $region14: #{deconv_res_block_forward.2} parent=11 // pred_check_branch
        %239 = sbr.rel (%p237) target = $region16
      $region15: #{deconv_res_block_forward.2} parent=11 // pred_region
        _
      $region16: #{deconv_res_block_forward.2} parent=11 // pred_fallthru
        _
      // Predicated region
      $region17: #{deconv_res_block_forward.2} parent=11 // pred_check
        %p240 = pneg %p96
      $region18: #{deconv_res_block_forward.2} parent=11 // pred_check_branch
        %242 = sbr.rel (%p240) target = $region20
      $region19: #{deconv_res_block_forward.2} parent=11 // pred_region
        _
      $region20: #{deconv_res_block_forward.2} parent=11 // pred_fallthru
        _
      // Predicated region
      $region21: #{deconv_res_block_forward.2} parent=11 // pred_check
        %p243 = pneg %p117
      $region22: #{deconv_res_block_forward.2} parent=11 // pred_check_branch
        %245 = sbr.rel (%p243) target = $region24
      $region23: #{deconv_res_block_forward.2} parent=11 // pred_region
        _
      $region24: #{deconv_res_block_forward.2} parent=11 // pred_fallthru
        _
      // Predicated region
      $region25: #{deconv_res_block_forward.2} parent=11 // pred_check
        %p246 = pneg %p138
      $region26: #{deconv_res_block_forward.2} parent=11 // pred_check_branch
        %248 = sbr.rel (%p246) target = $region28
      $region27: #{deconv_res_block_forward.2} parent=11 // pred_region
        _
      $region28: #{deconv_res_block_forward.2} parent=11 // pred_fallthru
        _
    $region12: #{deconv_res_block_forward.2} parent=5 // pred_fallthru
      _
    %p249 = scmp.lt.s32.totalorder %s14, 4
    // Predicated region
    $region29: #{deconv_res_block_forward.2} parent=5 // pred_check
      %p250 = pneg %p249
    $region30: #{deconv_res_block_forward.2} parent=5 // pred_check_branch
      %252 = sbr.rel (%p250) target = $region32
    $region31: #{deconv_res_block_forward.2} parent=5 // pred_region
      // Predicated region
      $region33: #{deconv_res_block_forward.2} parent=31 // pred_check
        %p253 = pneg %p48
      $region34: #{deconv_res_block_forward.2} parent=31 // pred_check_branch
        %255 = sbr.rel (%p253) target = $region36
      $region35: #{deconv_res_block_forward.2} parent=31 // pred_region
        %p256 = scmp.lt.s32.totalorder %s21, 1
        %s257 = scalar_select %p256, %s21, 1
        %p258 = scmp.lt.s32.totalorder %s22, 1
        %s259 = scalar_select %p258, %s22, 1
        %s260 = smul.addr %s259, 30
        %s261 = smul.addr %s257, 60
        %s262 = sadd.s32 %s260, %s261
        %s263 = smul.addr %s262, 4
        %s264 = scalar_lea.vmem %s0, %s263
      $region36: #{deconv_res_block_forward.2} parent=31 // pred_fallthru
        _
    $region32: #{deconv_res_block_forward.2} parent=5 // pred_fallthru
      _
    %p265 = scmp.le.s32.totalorder 1, %s14
    %p266 = scmp.lt.s32.totalorder %s14, 5
    %p267 = pnand %p265, %p266
    %p268 = pneg %p267
    // Predicated region
    $region37: #{deconv_res_block_forward.2} parent=5 // pred_check
      _
    $region38: #{deconv_res_block_forward.2} parent=5 // pred_check_branch
      %270 = sbr.rel (%p267) target = $region40
    $region39: #{deconv_res_block_forward.2} parent=5 // pred_region
      %s271 = ssub.s32 %s14, 1
      %p272 = scmp.lt.s32.totalorder %s23, 1
      %s273 = scalar_select %p272, %s23, 1
      %p274 = scmp.lt.s32.totalorder %s24, 1
      %s275 = scalar_select %p274, %s24, 1
      %s276 = smul.addr %s275, 30
      %s277 = smul.addr %s273, 60
      %s278 = sadd.s32 %s276, %s277
      %s279 = smul.addr %s278, 4
      %s280 = scalar_lea.vmem %s0, %s279
      %p281 = pneg %p54
      %p282 = pneg %p51
      %p283 = pneg %p75
      %p284 = pneg %p72
      %p285 = pneg %p96
      %p286 = pneg %p93
      %p287 = pneg %p117
      %p288 = pneg %p114
      %p289 = pneg %p138
      %p290 = pneg %p135
      %p291 = pneg %p166
      %p292 = pneg %p163
      %s293 = smul.u32 8, %s24
      %p294 = scmp.lt.s32.totalorder %s23, 1
      %s295 = scalar_select %p294, %s23, 1
      %p296 = scmp.lt.s32.totalorder %s293, 15
      %s297 = scalar_select %p296, %s293, 15
      %s298 = smul.addr %s297, 8
      %s299 = smul.addr %s295, 128
      %s300 = sadd.s32 %s298, %s299
      %s301 = smul.addr %s300, 4
      %s302 = scalar_lea.vmem %s5, %s301
      %p303 = pneg %p194
      %p304 = pneg %p191
      %s305 = smul.u32 8, %s24
      %p306 = scmp.lt.s32.totalorder %s23, 1
      %s307 = scalar_select %p306, %s23, 1
      %p308 = scmp.lt.s32.totalorder %s305, 15
      %s309 = scalar_select %p308, %s305, 15
      %s310 = smul.addr %s309, 2
      %s311 = smul.addr %s307, 32
      %s312 = sadd.s32 %s310, %s311
      %s313 = smul.addr %s312, 4
      %s314 = scalar_lea.vmem %s6, %s313
      %p315 = pneg %p222
      %p316 = pneg %p219
      %p317 = scmp.lt.s32.totalorder %s23, 1
      %s318 = scalar_select %p317, %s23, 1
      %p319 = scmp.lt.s32.totalorder %s24, 1
      %s320 = scalar_select %p319, %s24, 1
      %s321 = smul.addr %s320, 2
      %s322 = smul.addr %s318, 4
      %s323 = sadd.s32 %s321, %s322
      %s324 = scalar_lea.vmem %s7, %s323
      %p325 = scmp.lt.s32.totalorder %s23, 1
      %s326 = scalar_select %p325, %s23, 1
      %p327 = scmp.lt.s32.totalorder %s24, 1
      %s328 = scalar_select %p327, %s24, 1
      %s329 = smul.addr %s328, 30
      %s330 = smul.addr %s326, 60
      %s331 = sadd.s32 %s329, %s330
      %s332 = smul.addr %s331, 4
      %s333 = scalar_lea.vmem %s0, %s332
      %s334 = smul.u32 8, %s24
      %p335 = scmp.lt.s32.totalorder %s23, 1
      %s336 = scalar_select %p335, %s23, 1
      %p337 = scmp.lt.s32.totalorder %s334, 15
      %s338 = scalar_select %p337, %s334, 15
      %s339 = smul.addr %s338, 8
      %s340 = smul.addr %s336, 128
      %s341 = sadd.s32 %s339, %s340
      %s342 = smul.addr %s341, 4
      %s343 = scalar_lea.vmem %s5, %s342
      %s344 = smul.u32 8, %s24
      %s345 = smul.u32 8, %s24
      %p346 = scmp.lt.s32.totalorder %s23, 1
      %s347 = scalar_select %p346, %s23, 1
      %p348 = scmp.lt.s32.totalorder %s345, 15
      %s349 = scalar_select %p348, %s345, 15
      %s350 = smul.addr %s349, 2
      %s351 = smul.addr %s347, 32
      %s352 = sadd.s32 %s350, %s351
      %s353 = smul.addr %s352, 4
      %s354 = scalar_lea.vmem %s6, %s353
      %s355 = smul.u32 8, %s24
      %p356 = scmp.lt.s32.totalorder %s23, 1
      %s357 = scalar_select %p356, %s23, 1
      %p358 = scmp.lt.s32.totalorder %s24, 1
      %s359 = scalar_select %p358, %s24, 1
      %s360 = smul.addr %s359, 2
      %s361 = smul.addr %s357, 4
      %s362 = sadd.s32 %s360, %s361
      %s363 = scalar_lea.vmem %s7, %s362
      %v365 = vld [vmem:[%s3] sm:$0x1]
      %v366 = vld [vmem:[%s4] sm:$0x1]
      %v367 = vld [vmem:[%s333] sm:$0xf]
      %v368 = vld [vmem:[%s333 + $0x4] sm:$0xf]
      %v369 = vld [vmem:[%s333 + $0xc] sm:$0xf]
      %v370 = vld [vmem:[%s333 + $0x10] sm:$0xf]
      %v371 = vld [vmem:[%s333 + $0x18] sm:$0xf]
      %v372 = vld [vmem:[%s333 + $0x1c] sm:$0xf]
      %v373 = vld [vmem:[%s333 + $0x24] sm:$0xf]
      %v374 = vld [vmem:[%s333 + $0x28] sm:$0xf]
      %v375 = vld [vmem:[%s333 + $0x30] sm:$0xf]
      %v376 = vld [vmem:[%s333 + $0x34] sm:$0xf]
      %v377 = vld [vmem:[%s333 + $0x3c] sm:$0xf]
      %v378 = vld [vmem:[%s333 + $0x40] sm:$0xf]
      %v379 = vld [vmem:[%s333 + $0x48] sm:$0xf]
      %v380 = vld [vmem:[%s333 + $0x4c] sm:$0xf]
      %v381 = vld [vmem:[%s333 + $0x54] sm:$0xf]
      %v382 = vld [vmem:[%s333 + $0x58] sm:$0xf]
      %v383 = vld [vmem:[%s333 + $0x8] sm:$0x1]
      %v384 = vld [vmem:[%s333 + $0x14] sm:$0x1]
      %v385 = vld [vmem:[%s333 + $0x20] sm:$0x1]
      %v386 = vld [vmem:[%s333 + $0x2c] sm:$0x1]
      %v387 = vld [vmem:[%s333 + $0x38] sm:$0x1]
      %v388 = vld [vmem:[%s333 + $0x44] sm:$0x1]
      %v389 = vld [vmem:[%s333 + $0x50] sm:$0x1]
      %v390 = vld [vmem:[%s333 + $0x5c] sm:$0x1]
      %vm391 = vsmask.f32 3328
      %vm392 = vsmask.f32 7440
      %vm393 = vmor %vm391, %vm392
      %v395 = vshrl.u32 %v367, 16
      %v397 = vrot.slane %v395, 4
      %v398 = vshll.u32 %v367, 16
      %v400 = vrot.slane %v398, 5
      %v401 = vor.u32 %v397, %v400
      %v402 = vrot.slane %v401, 4
      %v404 = vshll.u32 %v368, 16
      %v406 = vrot.slane %v404, 5
      %v407 = vsel %vm393, %v402, %v406
      %v408 = vshrl.u32 %v368, 16
      %v410 = vrot.slane %v408, 4
      %v411 = vor.u32 %v410, %v406
      %v412 = vrot.slane %v411, 4
      %v414 = vshll.u32 %v383, 16
      %v416 = vrot.slane %v414, 5
      %v417 = vsel %vm393, %v412, %v416
      %v419 = vshrl.u32 %v369, 16
      %v421 = vrot.slane %v419, 4
      %v422 = vshll.u32 %v369, 16
      %v424 = vrot.slane %v422, 5
      %v425 = vor.u32 %v421, %v424
      %v426 = vrot.slane %v425, 4
      %v428 = vshll.u32 %v370, 16
      %v430 = vrot.slane %v428, 5
      %v431 = vsel %vm393, %v426, %v430
      %v432 = vshrl.u32 %v370, 16
      %v434 = vrot.slane %v432, 4
      %v435 = vor.u32 %v434, %v430
      %v436 = vrot.slane %v435, 4
      %v438 = vshll.u32 %v384, 16
      %v440 = vrot.slane %v438, 5
      %v441 = vsel %vm393, %v436, %v440
      %v443 = vshrl.u32 %v371, 16
      %v445 = vrot.slane %v443, 4
      %v446 = vshll.u32 %v371, 16
      %v448 = vrot.slane %v446, 5
      %v449 = vor.u32 %v445, %v448
      %v450 = vrot.slane %v449, 4
      %v452 = vshll.u32 %v372, 16
      %v454 = vrot.slane %v452, 5
      %v455 = vsel %vm393, %v450, %v454
      %v456 = vshrl.u32 %v372, 16
      %v458 = vrot.slane %v456, 4
      %v459 = vor.u32 %v458, %v454
      %v460 = vrot.slane %v459, 4
      %v462 = vshll.u32 %v385, 16
      %v464 = vrot.slane %v462, 5
      %v465 = vsel %vm393, %v460, %v464
      %v467 = vshrl.u32 %v373, 16
      %v469 = vrot.slane %v467, 4
      %v470 = vshll.u32 %v373, 16
      %v472 = vrot.slane %v470, 5
      %v473 = vor.u32 %v469, %v472
      %v474 = vrot.slane %v473, 4
      %v476 = vshll.u32 %v374, 16
      %v478 = vrot.slane %v476, 5
      %v479 = vsel %vm393, %v474, %v478
      %v480 = vshrl.u32 %v374, 16
      %v482 = vrot.slane %v480, 4
      %v483 = vor.u32 %v482, %v478
      %v484 = vrot.slane %v483, 4
      %v486 = vshll.u32 %v386, 16
      %v488 = vrot.slane %v486, 5
      %v489 = vsel %vm393, %v484, %v488
      %v491 = vshrl.u32 %v375, 16
      %v493 = vrot.slane %v491, 4
      %v494 = vshll.u32 %v375, 16
      %v496 = vrot.slane %v494, 5
      %v497 = vor.u32 %v493, %v496
      %v498 = vrot.slane %v497, 4
      %v500 = vshll.u32 %v376, 16
      %v502 = vrot.slane %v500, 5
      %v503 = vsel %vm393, %v498, %v502
      %v504 = vshrl.u32 %v376, 16
      %v506 = vrot.slane %v504, 4
      %v507 = vor.u32 %v506, %v502
      %v508 = vrot.slane %v507, 4
      %v510 = vshll.u32 %v387, 16
      %v512 = vrot.slane %v510, 5
      %v513 = vsel %vm393, %v508, %v512
      %v515 = vshrl.u32 %v377, 16
      %v517 = vrot.slane %v515, 4
      %v518 = vshll.u32 %v377, 16
      %v520 = vrot.slane %v518, 5
      %v521 = vor.u32 %v517, %v520
      %v522 = vrot.slane %v521, 4
      %v524 = vshll.u32 %v378, 16
      %v526 = vrot.slane %v524, 5
      %v527 = vsel %vm393, %v522, %v526
      %v528 = vshrl.u32 %v378, 16
      %v530 = vrot.slane %v528, 4
      %v531 = vor.u32 %v530, %v526
      %v532 = vrot.slane %v531, 4
      %v534 = vshll.u32 %v388, 16
      %v536 = vrot.slane %v534, 5
      %v537 = vsel %vm393, %v532, %v536
      %v539 = vshrl.u32 %v379, 16
      %v541 = vrot.slane %v539, 4
      %v542 = vshll.u32 %v379, 16
      %v544 = vrot.slane %v542, 5
      %v545 = vor.u32 %v541, %v544
      %v546 = vrot.slane %v545, 4
      %v548 = vshll.u32 %v380, 16
      %v550 = vrot.slane %v548, 5
      %v551 = vsel %vm393, %v546, %v550
      %v552 = vshrl.u32 %v380, 16
      %v554 = vrot.slane %v552, 4
      %v555 = vor.u32 %v554, %v550
      %v556 = vrot.slane %v555, 4
      %v558 = vshll.u32 %v389, 16
      %v560 = vrot.slane %v558, 5
      %v561 = vsel %vm393, %v556, %v560
      %v563 = vshrl.u32 %v381, 16
      %v565 = vrot.slane %v563, 4
      %v566 = vshll.u32 %v381, 16
      %v568 = vrot.slane %v566, 5
      %v569 = vor.u32 %v565, %v568
      %v570 = vrot.slane %v569, 4
      %v572 = vshll.u32 %v382, 16
      %v574 = vrot.slane %v572, 5
      %v575 = vsel %vm393, %v570, %v574
      %v576 = vshrl.u32 %v382, 16
      %v578 = vrot.slane %v576, 4
      %v579 = vor.u32 %v578, %v574
      %v580 = vrot.slane %v579, 4
      %v582 = vshll.u32 %v390, 16
      %v584 = vrot.slane %v582, 5
      %v585 = vsel %vm393, %v580, %v584
      %v586 = vld [vmem:[%s333] sm:$0xe]
      %v587 = vld [vmem:[%s333 + $0xc] sm:$0xe]
      %v588 = vld [vmem:[%s333 + $0x18] sm:$0xe]
      %v589 = vld [vmem:[%s333 + $0x24] sm:$0xe]
      %v590 = vld [vmem:[%s333 + $0x30] sm:$0xe]
      %v591 = vld [vmem:[%s333 + $0x3c] sm:$0xe]
      %v592 = vld [vmem:[%s333 + $0x48] sm:$0xe]
      %v593 = vld [vmem:[%s333 + $0x54] sm:$0xe]
      %vm618 = vcmask 1042432
      %vm619 = vcmask 1046532
      %vm620 = vmor %vm618, %vm619
      %v621 = vrot.slane %v586, 5
      %v622 = vrot.slane %v621, 4
      %v623 = vrot.slane %v368, 5
      %v624 = vsel %vm620, %v622, %v623
      %v625 = vrot.slane %v623, 4
      %v626 = vrot.slane %v383, 5
      %v627 = vsel %vm620, %v625, %v626
      %v628 = vrot.slane %v587, 5
      %v629 = vrot.slane %v628, 4
      %v630 = vrot.slane %v370, 5
      %v631 = vsel %vm620, %v629, %v630
      %v632 = vrot.slane %v630, 4
      %v633 = vrot.slane %v384, 5
      %v634 = vsel %vm620, %v632, %v633
      %v635 = vrot.slane %v588, 5
      %v636 = vrot.slane %v635, 4
      %v637 = vrot.slane %v372, 5
      %v638 = vsel %vm620, %v636, %v637
      %v639 = vrot.slane %v637, 4
      %v640 = vrot.slane %v385, 5
      %v641 = vsel %vm620, %v639, %v640
      %v642 = vrot.slane %v589, 5
      %v643 = vrot.slane %v642, 4
      %v644 = vrot.slane %v374, 5
      %v645 = vsel %vm620, %v643, %v644
      %v646 = vrot.slane %v644, 4
      %v647 = vrot.slane %v386, 5
      %v648 = vsel %vm620, %v646, %v647
      %v649 = vrot.slane %v590, 5
      %v650 = vrot.slane %v649, 4
      %v651 = vrot.slane %v376, 5
      %v652 = vsel %vm620, %v650, %v651
      %v653 = vrot.slane %v651, 4
      %v654 = vrot.slane %v387, 5
      %v655 = vsel %vm620, %v653, %v654
      %v656 = vrot.slane %v591, 5
      %v657 = vrot.slane %v656, 4
      %v658 = vrot.slane %v378, 5
      %v659 = vsel %vm620, %v657, %v658
      %v660 = vrot.slane %v658, 4
      %v661 = vrot.slane %v388, 5
      %v662 = vsel %vm620, %v660, %v661
      %v663 = vrot.slane %v592, 5
      %v664 = vrot.slane %v663, 4
      %v665 = vrot.slane %v380, 5
      %v666 = vsel %vm620, %v664, %v665
      %v667 = vrot.slane %v665, 4
      %v668 = vrot.slane %v389, 5
      %v669 = vsel %vm620, %v667, %v668
      %v670 = vrot.slane %v593, 5
      %v671 = vrot.slane %v670, 4
      %v672 = vrot.slane %v382, 5
      %v673 = vsel %vm620, %v671, %v672
      %v674 = vrot.slane %v672, 4
      %v675 = vrot.slane %v390, 5
      %v676 = vsel %vm620, %v674, %v675
      %s677 = scalar_lea.vmem %s333, 12
      %v678 = vld [vmem:[%s677] sm:$0xf]
      %v679 = vld [vmem:[%s677 + $0x4] sm:$0xf]
      %v680 = vld [vmem:[%s677 + $0xc] sm:$0xf]
      %v681 = vld [vmem:[%s677 + $0x10] sm:$0xf]
      %v682 = vld [vmem:[%s677 + $0x18] sm:$0xf]
      %v683 = vld [vmem:[%s677 + $0x1c] sm:$0xf]
      %v684 = vld [vmem:[%s677 + $0x24] sm:$0xf]
      %v685 = vld [vmem:[%s677 + $0x28] sm:$0xf]
      %v686 = vld [vmem:[%s677 + $0x30] sm:$0xf]
      %v687 = vld [vmem:[%s677 + $0x34] sm:$0xf]
      %v688 = vld [vmem:[%s677 + $0x3c] sm:$0xf]
      %v689 = vld [vmem:[%s677 + $0x40] sm:$0xf]
      %v690 = vld [vmem:[%s677 + $0x48] sm:$0xf]
      %v691 = vld [vmem:[%s677 + $0x4c] sm:$0xf]
      %v692 = vld [vmem:[%s677 + $0x54] sm:$0xf]
      %v693 = vld [vmem:[%s677 + $0x58] sm:$0xf]
      %v694 = vld [vmem:[%s677 + $0x8] sm:$0x1]
      %v695 = vld [vmem:[%s677 + $0x14] sm:$0x1]
      %v696 = vld [vmem:[%s677 + $0x20] sm:$0x1]
      %v697 = vld [vmem:[%s677 + $0x2c] sm:$0x1]
      %v698 = vld [vmem:[%s677 + $0x38] sm:$0x1]
      %v699 = vld [vmem:[%s677 + $0x44] sm:$0x1]
      %v700 = vld [vmem:[%s677 + $0x50] sm:$0x1]
      %v701 = vld [vmem:[%s677 + $0x5c] sm:$0x1]
      %v703 = vshrl.u32 %v678, 16
      %v705 = vrot.slane %v703, 4
      %v706 = vshll.u32 %v678, 16
      %v708 = vrot.slane %v706, 5
      %v709 = vor.u32 %v705, %v708
      %v710 = vrot.slane %v709, 4
      %v712 = vshll.u32 %v679, 16
      %v714 = vrot.slane %v712, 5
      %v715 = vsel %vm393, %v710, %v714
      %v716 = vshrl.u32 %v679, 16
      %v718 = vrot.slane %v716, 4
      %v719 = vor.u32 %v718, %v714
      %v720 = vrot.slane %v719, 4
      %v722 = vshll.u32 %v694, 16
      %v724 = vrot.slane %v722, 5
      %v725 = vsel %vm393, %v720, %v724
      %v727 = vshrl.u32 %v680, 16
      %v729 = vrot.slane %v727, 4
      %v730 = vshll.u32 %v680, 16
      %v732 = vrot.slane %v730, 5
      %v733 = vor.u32 %v729, %v732
      %v734 = vrot.slane %v733, 4
      %v736 = vshll.u32 %v681, 16
      %v738 = vrot.slane %v736, 5
      %v739 = vsel %vm393, %v734, %v738
      %v740 = vshrl.u32 %v681, 16
      %v742 = vrot.slane %v740, 4
      %v743 = vor.u32 %v742, %v738
      %v744 = vrot.slane %v743, 4
      %v746 = vshll.u32 %v695, 16
      %v748 = vrot.slane %v746, 5
      %v749 = vsel %vm393, %v744, %v748
      %v751 = vshrl.u32 %v682, 16
      %v753 = vrot.slane %v751, 4
      %v754 = vshll.u32 %v682, 16
      %v756 = vrot.slane %v754, 5
      %v757 = vor.u32 %v753, %v756
      %v758 = vrot.slane %v757, 4
      %v760 = vshll.u32 %v683, 16
      %v762 = vrot.slane %v760, 5
      %v763 = vsel %vm393, %v758, %v762
      %v764 = vshrl.u32 %v683, 16
      %v766 = vrot.slane %v764, 4
      %v767 = vor.u32 %v766, %v762
      %v768 = vrot.slane %v767, 4
      %v770 = vshll.u32 %v696, 16
      %v772 = vrot.slane %v770, 5
      %v773 = vsel %vm393, %v768, %v772
      %v775 = vshrl.u32 %v684, 16
      %v777 = vrot.slane %v775, 4
      %v778 = vshll.u32 %v684, 16
      %v780 = vrot.slane %v778, 5
      %v781 = vor.u32 %v777, %v780
      %v782 = vrot.slane %v781, 4
      %v784 = vshll.u32 %v685, 16
      %v786 = vrot.slane %v784, 5
      %v787 = vsel %vm393, %v782, %v786
      %v788 = vshrl.u32 %v685, 16
      %v790 = vrot.slane %v788, 4
      %v791 = vor.u32 %v790, %v786
      %v792 = vrot.slane %v791, 4
      %v794 = vshll.u32 %v697, 16
      %v796 = vrot.slane %v794, 5
      %v797 = vsel %vm393, %v792, %v796
      %v799 = vshrl.u32 %v686, 16
      %v801 = vrot.slane %v799, 4
      %v802 = vshll.u32 %v686, 16
      %v804 = vrot.slane %v802, 5
      %v805 = vor.u32 %v801, %v804
      %v806 = vrot.slane %v805, 4
      %v808 = vshll.u32 %v687, 16
      %v810 = vrot.slane %v808, 5
      %v811 = vsel %vm393, %v806, %v810
      %v812 = vshrl.u32 %v687, 16
      %v814 = vrot.slane %v812, 4
      %v815 = vor.u32 %v814, %v810
      %v816 = vrot.slane %v815, 4
      %v818 = vshll.u32 %v698, 16
      %v820 = vrot.slane %v818, 5
      %v821 = vsel %vm393, %v816, %v820
      %v823 = vshrl.u32 %v688, 16
      %v825 = vrot.slane %v823, 4
      %v826 = vshll.u32 %v688, 16
      %v828 = vrot.slane %v826, 5
      %v829 = vor.u32 %v825, %v828
      %v830 = vrot.slane %v829, 4
      %v832 = vshll.u32 %v689, 16
      %v834 = vrot.slane %v832, 5
      %v835 = vsel %vm393, %v830, %v834
      %v836 = vshrl.u32 %v689, 16
      %v838 = vrot.slane %v836, 4
      %v839 = vor.u32 %v838, %v834
      %v840 = vrot.slane %v839, 4
      %v842 = vshll.u32 %v699, 16
      %v844 = vrot.slane %v842, 5
      %v845 = vsel %vm393, %v840, %v844
      %v847 = vshrl.u32 %v690, 16
      %v849 = vrot.slane %v847, 4
      %v850 = vshll.u32 %v690, 16
      %v852 = vrot.slane %v850, 5
      %v853 = vor.u32 %v849, %v852
      %v854 = vrot.slane %v853, 4
      %v856 = vshll.u32 %v691, 16
      %v858 = vrot.slane %v856, 5
      %v859 = vsel %vm393, %v854, %v858
      %v860 = vshrl.u32 %v691, 16
      %v862 = vrot.slane %v860, 4
      %v863 = vor.u32 %v862, %v858
      %v864 = vrot.slane %v863, 4
      %v866 = vshll.u32 %v700, 16
      %v868 = vrot.slane %v866, 5
      %v869 = vsel %vm393, %v864, %v868
      %v871 = vshrl.u32 %v692, 16
      %v873 = vrot.slane %v871, 4
      %v874 = vshll.u32 %v692, 16
      %v876 = vrot.slane %v874, 5
      %v877 = vor.u32 %v873, %v876
      %v878 = vrot.slane %v877, 4
      %v880 = vshll.u32 %v693, 16
      %v882 = vrot.slane %v880, 5
      %v883 = vsel %vm393, %v878, %v882
      %v884 = vshrl.u32 %v693, 16
      %v886 = vrot.slane %v884, 4
      %v887 = vor.u32 %v886, %v882
      %v888 = vrot.slane %v887, 4
      %v890 = vshll.u32 %v701, 16
      %v892 = vrot.slane %v890, 5
      %v893 = vsel %vm393, %v888, %v892
      %v894 = vld [vmem:[%s677] sm:$0xe]
      %v895 = vld [vmem:[%s677 + $0xc] sm:$0xe]
      %v896 = vld [vmem:[%s677 + $0x18] sm:$0xe]
      %v897 = vld [vmem:[%s677 + $0x24] sm:$0xe]
      %v898 = vld [vmem:[%s677 + $0x30] sm:$0xe]
      %v899 = vld [vmem:[%s677 + $0x3c] sm:$0xe]
      %v900 = vld [vmem:[%s677 + $0x48] sm:$0xe]
      %v901 = vld [vmem:[%s677 + $0x54] sm:$0xe]
      %v926 = vrot.slane %v894, 5
      %v927 = vrot.slane %v926, 4
      %v928 = vrot.slane %v679, 5
      %v929 = vsel %vm620, %v927, %v928
      %v930 = vrot.slane %v928, 4
      %v931 = vrot.slane %v694, 5
      %v932 = vsel %vm620, %v930, %v931
      %v933 = vrot.slane %v895, 5
      %v934 = vrot.slane %v933, 4
      %v935 = vrot.slane %v681, 5
      %v936 = vsel %vm620, %v934, %v935
      %v937 = vrot.slane %v935, 4
      %v938 = vrot.slane %v695, 5
      %v939 = vsel %vm620, %v937, %v938
      %v940 = vrot.slane %v896, 5
      %v941 = vrot.slane %v940, 4
      %v942 = vrot.slane %v683, 5
      %v943 = vsel %vm620, %v941, %v942
      %v944 = vrot.slane %v942, 4
      %v945 = vrot.slane %v696, 5
      %v946 = vsel %vm620, %v944, %v945
      %v947 = vrot.slane %v897, 5
      %v948 = vrot.slane %v947, 4
      %v949 = vrot.slane %v685, 5
      %v950 = vsel %vm620, %v948, %v949
      %v951 = vrot.slane %v949, 4
      %v952 = vrot.slane %v697, 5
      %v953 = vsel %vm620, %v951, %v952
      %v954 = vrot.slane %v898, 5
      %v955 = vrot.slane %v954, 4
      %v956 = vrot.slane %v687, 5
      %v957 = vsel %vm620, %v955, %v956
      %v958 = vrot.slane %v956, 4
      %v959 = vrot.slane %v698, 5
      %v960 = vsel %vm620, %v958, %v959
      %v961 = vrot.slane %v899, 5
      %v962 = vrot.slane %v961, 4
      %v963 = vrot.slane %v689, 5
      %v964 = vsel %vm620, %v962, %v963
      %v965 = vrot.slane %v963, 4
      %v966 = vrot.slane %v699, 5
      %v967 = vsel %vm620, %v965, %v966
      %v968 = vrot.slane %v900, 5
      %v969 = vrot.slane %v968, 4
      %v970 = vrot.slane %v691, 5
      %v971 = vsel %vm620, %v969, %v970
      %v972 = vrot.slane %v970, 4
      %v973 = vrot.slane %v700, 5
      %v974 = vsel %vm620, %v972, %v973
      %v975 = vrot.slane %v901, 5
      %v976 = vrot.slane %v975, 4
      %v977 = vrot.slane %v693, 5
      %v978 = vsel %vm620, %v976, %v977
      %v979 = vrot.slane %v977, 4
      %v980 = vrot.slane %v701, 5
      %v981 = vsel %vm620, %v979, %v980
      %s982 = scalar_lea.vmem %s333, 24
      %v983 = vld [vmem:[%s982] sm:$0xf]
      %v984 = vld [vmem:[%s982 + $0x4] sm:$0xf]
      %v985 = vld [vmem:[%s982 + $0xc] sm:$0xf]
      %v986 = vld [vmem:[%s982 + $0x10] sm:$0xf]
      %v987 = vld [vmem:[%s982 + $0x18] sm:$0xf]
      %v988 = vld [vmem:[%s982 + $0x1c] sm:$0xf]
      %v989 = vld [vmem:[%s982 + $0x24] sm:$0xf]
      %v990 = vld [vmem:[%s982 + $0x28] sm:$0xf]
      %v991 = vld [vmem:[%s982 + $0x30] sm:$0xf]
      %v992 = vld [vmem:[%s982 + $0x34] sm:$0xf]
      %v993 = vld [vmem:[%s982 + $0x3c] sm:$0xf]
      %v994 = vld [vmem:[%s982 + $0x40] sm:$0xf]
      %v995 = vld [vmem:[%s982 + $0x48] sm:$0xf]
      %v996 = vld [vmem:[%s982 + $0x4c] sm:$0xf]
      %v997 = vld [vmem:[%s982 + $0x54] sm:$0xf]
      %v998 = vld [vmem:[%s982 + $0x58] sm:$0xf]
      %v999 = vld [vmem:[%s982 + $0x8] sm:$0x1]
      %v1000 = vld [vmem:[%s982 + $0x14] sm:$0x1]
      %v1001 = vld [vmem:[%s982 + $0x20] sm:$0x1]
      %v1002 = vld [vmem:[%s982 + $0x2c] sm:$0x1]
      %v1003 = vld [vmem:[%s982 + $0x38] sm:$0x1]
      %v1004 = vld [vmem:[%s982 + $0x44] sm:$0x1]
      %v1005 = vld [vmem:[%s982 + $0x50] sm:$0x1]
      %v1006 = vld [vmem:[%s982 + $0x5c] sm:$0x1]
      %v1008 = vshrl.u32 %v983, 16
      %v1010 = vrot.slane %v1008, 4
      %v1011 = vshll.u32 %v983, 16
      %v1013 = vrot.slane %v1011, 5
      %v1014 = vor.u32 %v1010, %v1013
      %v1015 = vrot.slane %v1014, 4
      %v1017 = vshll.u32 %v984, 16
      %v1019 = vrot.slane %v1017, 5
      %v1020 = vsel %vm393, %v1015, %v1019
      %v1021 = vshrl.u32 %v984, 16
      %v1023 = vrot.slane %v1021, 4
      %v1024 = vor.u32 %v1023, %v1019
      %v1025 = vrot.slane %v1024, 4
      %v1027 = vshll.u32 %v999, 16
      %v1029 = vrot.slane %v1027, 5
      %v1030 = vsel %vm393, %v1025, %v1029
      %v1032 = vshrl.u32 %v985, 16
      %v1034 = vrot.slane %v1032, 4
      %v1035 = vshll.u32 %v985, 16
      %v1037 = vrot.slane %v1035, 5
      %v1038 = vor.u32 %v1034, %v1037
      %v1039 = vrot.slane %v1038, 4
      %v1041 = vshll.u32 %v986, 16
      %v1043 = vrot.slane %v1041, 5
      %v1044 = vsel %vm393, %v1039, %v1043
      %v1045 = vshrl.u32 %v986, 16
      %v1047 = vrot.slane %v1045, 4
      %v1048 = vor.u32 %v1047, %v1043
      %v1049 = vrot.slane %v1048, 4
      %v1051 = vshll.u32 %v1000, 16
      %v1053 = vrot.slane %v1051, 5
      %v1054 = vsel %vm393, %v1049, %v1053
      %v1056 = vshrl.u32 %v987, 16
      %v1058 = vrot.slane %v1056, 4
      %v1059 = vshll.u32 %v987, 16
      %v1061 = vrot.slane %v1059, 5
      %v1062 = vor.u32 %v1058, %v1061
      %v1063 = vrot.slane %v1062, 4
      %v1065 = vshll.u32 %v988, 16
      %v1067 = vrot.slane %v1065, 5
      %v1068 = vsel %vm393, %v1063, %v1067
      %v1069 = vshrl.u32 %v988, 16
      %v1071 = vrot.slane %v1069, 4
      %v1072 = vor.u32 %v1071, %v1067
      %v1073 = vrot.slane %v1072, 4
      %v1075 = vshll.u32 %v1001, 16
      %v1077 = vrot.slane %v1075, 5
      %v1078 = vsel %vm393, %v1073, %v1077
      %v1080 = vshrl.u32 %v989, 16
      %v1082 = vrot.slane %v1080, 4
      %v1083 = vshll.u32 %v989, 16
      %v1085 = vrot.slane %v1083, 5
      %v1086 = vor.u32 %v1082, %v1085
      %v1087 = vrot.slane %v1086, 4
      %v1089 = vshll.u32 %v990, 16
      %v1091 = vrot.slane %v1089, 5
      %v1092 = vsel %vm393, %v1087, %v1091
      %v1093 = vshrl.u32 %v990, 16
      %v1095 = vrot.slane %v1093, 4
      %v1096 = vor.u32 %v1095, %v1091
      %v1097 = vrot.slane %v1096, 4
      %v1099 = vshll.u32 %v1002, 16
      %v1101 = vrot.slane %v1099, 5
      %v1102 = vsel %vm393, %v1097, %v1101
      %v1104 = vshrl.u32 %v991, 16
      %v1106 = vrot.slane %v1104, 4
      %v1107 = vshll.u32 %v991, 16
      %v1109 = vrot.slane %v1107, 5
      %v1110 = vor.u32 %v1106, %v1109
      %v1111 = vrot.slane %v1110, 4
      %v1113 = vshll.u32 %v992, 16
      %v1115 = vrot.slane %v1113, 5
      %v1116 = vsel %vm393, %v1111, %v1115
      %v1117 = vshrl.u32 %v992, 16
      %v1119 = vrot.slane %v1117, 4
      %v1120 = vor.u32 %v1119, %v1115
      %v1121 = vrot.slane %v1120, 4
      %v1123 = vshll.u32 %v1003, 16
      %v1125 = vrot.slane %v1123, 5
      %v1126 = vsel %vm393, %v1121, %v1125
      %v1128 = vshrl.u32 %v993, 16
      %v1130 = vrot.slane %v1128, 4
      %v1131 = vshll.u32 %v993, 16
      %v1133 = vrot.slane %v1131, 5
      %v1134 = vor.u32 %v1130, %v1133
      %v1135 = vrot.slane %v1134, 4
      %v1137 = vshll.u32 %v994, 16
      %v1139 = vrot.slane %v1137, 5
      %v1140 = vsel %vm393, %v1135, %v1139
      %v1141 = vshrl.u32 %v994, 16
      %v1143 = vrot.slane %v1141, 4
      %v1144 = vor.u32 %v1143, %v1139
      %v1145 = vrot.slane %v1144, 4
      %v1147 = vshll.u32 %v1004, 16
      %v1149 = vrot.slane %v1147, 5
      %v1150 = vsel %vm393, %v1145, %v1149
      %v1152 = vshrl.u32 %v995, 16
      %v1154 = vrot.slane %v1152, 4
      %v1155 = vshll.u32 %v995, 16
      %v1157 = vrot.slane %v1155, 5
      %v1158 = vor.u32 %v1154, %v1157
      %v1159 = vrot.slane %v1158, 4
      %v1161 = vshll.u32 %v996, 16
      %v1163 = vrot.slane %v1161, 5
      %v1164 = vsel %vm393, %v1159, %v1163
      %v1165 = vshrl.u32 %v996, 16
      %v1167 = vrot.slane %v1165, 4
      %v1168 = vor.u32 %v1167, %v1163
      %v1169 = vrot.slane %v1168, 4
      %v1171 = vshll.u32 %v1005, 16
      %v1173 = vrot.slane %v1171, 5
      %v1174 = vsel %vm393, %v1169, %v1173
      %v1176 = vshrl.u32 %v997, 16
      %v1178 = vrot.slane %v1176, 4
      %v1179 = vshll.u32 %v997, 16
      %v1181 = vrot.slane %v1179, 5
      %v1182 = vor.u32 %v1178, %v1181
      %v1183 = vrot.slane %v1182, 4
      %v1185 = vshll.u32 %v998, 16
      %v1187 = vrot.slane %v1185, 5
      %v1188 = vsel %vm393, %v1183, %v1187
      %v1189 = vshrl.u32 %v998, 16
      %v1191 = vrot.slane %v1189, 4
      %v1192 = vor.u32 %v1191, %v1187
      %v1193 = vrot.slane %v1192, 4
      %v1195 = vshll.u32 %v1006, 16
      %v1197 = vrot.slane %v1195, 5
      %v1198 = vsel %vm393, %v1193, %v1197
      %v1199 = vld [vmem:[%s982] sm:$0xe]
      %v1200 = vld [vmem:[%s982 + $0xc] sm:$0xe]
      %v1201 = vld [vmem:[%s982 + $0x18] sm:$0xe]
      %v1202 = vld [vmem:[%s982 + $0x24] sm:$0xe]
      %v1203 = vld [vmem:[%s982 + $0x30] sm:$0xe]
      %v1204 = vld [vmem:[%s982 + $0x3c] sm:$0xe]
      %v1205 = vld [vmem:[%s982 + $0x48] sm:$0xe]
      %v1206 = vld [vmem:[%s982 + $0x54] sm:$0xe]
      %v1231 = vrot.slane %v1199, 5
      %v1232 = vrot.slane %v1231, 4
      %v1233 = vrot.slane %v984, 5
      %v1234 = vsel %vm620, %v1232, %v1233
      %v1235 = vrot.slane %v1233, 4
      %v1236 = vrot.slane %v999, 5
      %v1237 = vsel %vm620, %v1235, %v1236
      %v1238 = vrot.slane %v1200, 5
      %v1239 = vrot.slane %v1238, 4
      %v1240 = vrot.slane %v986, 5
      %v1241 = vsel %vm620, %v1239, %v1240
      %v1242 = vrot.slane %v1240, 4
      %v1243 = vrot.slane %v1000, 5
      %v1244 = vsel %vm620, %v1242, %v1243
      %v1245 = vrot.slane %v1201, 5
      %v1246 = vrot.slane %v1245, 4
      %v1247 = vrot.slane %v988, 5
      %v1248 = vsel %vm620, %v1246, %v1247
      %v1249 = vrot.slane %v1247, 4
      %v1250 = vrot.slane %v1001, 5
      %v1251 = vsel %vm620, %v1249, %v1250
      %v1252 = vrot.slane %v1202, 5
      %v1253 = vrot.slane %v1252, 4
      %v1254 = vrot.slane %v990, 5
      %v1255 = vsel %vm620, %v1253, %v1254
      %v1256 = vrot.slane %v1254, 4
      %v1257 = vrot.slane %v1002, 5
      %v1258 = vsel %vm620, %v1256, %v1257
      %v1259 = vrot.slane %v1203, 5
      %v1260 = vrot.slane %v1259, 4
      %v1261 = vrot.slane %v992, 5
      %v1262 = vsel %vm620, %v1260, %v1261
      %v1263 = vrot.slane %v1261, 4
      %v1264 = vrot.slane %v1003, 5
      %v1265 = vsel %vm620, %v1263, %v1264
      %v1266 = vrot.slane %v1204, 5
      %v1267 = vrot.slane %v1266, 4
      %v1268 = vrot.slane %v994, 5
      %v1269 = vsel %vm620, %v1267, %v1268
      %v1270 = vrot.slane %v1268, 4
      %v1271 = vrot.slane %v1004, 5
      %v1272 = vsel %vm620, %v1270, %v1271
      %v1273 = vrot.slane %v1205, 5
      %v1274 = vrot.slane %v1273, 4
      %v1275 = vrot.slane %v996, 5
      %v1276 = vsel %vm620, %v1274, %v1275
      %v1277 = vrot.slane %v1275, 4
      %v1278 = vrot.slane %v1005, 5
      %v1279 = vsel %vm620, %v1277, %v1278
      %v1280 = vrot.slane %v1206, 5
      %v1281 = vrot.slane %v1280, 4
      %v1282 = vrot.slane %v998, 5
      %v1283 = vsel %vm620, %v1281, %v1282
      %v1284 = vrot.slane %v1282, 4
      %v1285 = vrot.slane %v1006, 5
      %v1286 = vsel %vm620, %v1284, %v1285
      %v1287 = vld [vmem:[%s2] sm:$0xf]
      %v1288 = vld [vmem:[%s2 + $0x4] sm:$0xf]
      %v1289 = vld [vmem:[%s2 + $0x8] sm:$0xf]
      %v1290 = vld [vmem:[%s2 + $0xc] sm:$0xf]
      %v1291 = vld [vmem:[%s2 + $0x10] sm:$0xf]
      %v1292 = vld [vmem:[%s2 + $0x14] sm:$0xf]
      %v1293 = vld [vmem:[%s2 + $0x18] sm:$0xf]
      %v1294 = vld [vmem:[%s2 + $0x1c] sm:$0xf]
      %v1295 = vld [vmem:[%s2 + $0x20] sm:$0xf]
      %v1296 = vld [vmem:[%s2 + $0x24] sm:$0xf]
      %v1297 = vld [vmem:[%s2 + $0x28] sm:$0xf]
      %v1298 = vld [vmem:[%s2 + $0x2c] sm:$0xf]
      %v1299 = vld [vmem:[%s2 + $0x30] sm:$0xf]
      %v1300 = vld [vmem:[%s2 + $0x34] sm:$0xf]
      %v1301 = vld [vmem:[%s2 + $0x38] sm:$0xf]
      %v1302 = vld [vmem:[%s2 + $0x3c] sm:$0xf]
      %v1304 = vlaneseq
      %v1305 = vshrl.u32 %v1304, 7
      %v1306 = vsub.s32 0, %v1305
      %v1307 = vrot.slane %v366, %v1306
      %v1309 = vunpack.c.l.b16 %v715
      %v1310 = vunpack.c.l.b16 %v725
      %v1311 = vunpack.c.l.b16 %v739
      %v1312 = vunpack.c.l.b16 %v749
      %v1313 = vunpack.c.l.b16 %v763
      %v1314 = vunpack.c.l.b16 %v773
      %v1315 = vunpack.c.l.b16 %v787
      %v1316 = vunpack.c.l.b16 %v797
      %v1317 = vunpack.c.l.b16 %v811
      %v1318 = vunpack.c.l.b16 %v821
      %v1319 = vunpack.c.l.b16 %v835
      %v1320 = vunpack.c.l.b16 %v845
      %v1321 = vunpack.c.l.b16 %v859
      %v1322 = vunpack.c.l.b16 %v869
      %v1323 = vunpack.c.l.b16 %v883
      %v1324 = vunpack.c.l.b16 %v893
      %v1325 = vpack.c.b16 %v1310, %v1309
      %v1326 = vpack.c.b16 %v1312, %v1311
      %v1327 = vpack.c.b16 %v1314, %v1313
      %v1328 = vpack.c.b16 %v1316, %v1315
      %v1329 = vpack.c.b16 %v1318, %v1317
      %v1330 = vpack.c.b16 %v1320, %v1319
      %v1331 = vpack.c.b16 %v1322, %v1321
      %v1332 = vpack.c.b16 %v1324, %v1323
      %v1357 = vunpack.c.l.b16 %v1287
      %v1358 = vunpack.c.l.b16 %v1288
      %v1359 = vunpack.c.l.b16 %v1289
      %v1360 = vunpack.c.l.b16 %v1290
      %v1361 = vunpack.c.l.b16 %v1291
      %v1362 = vunpack.c.l.b16 %v1292
      %v1363 = vunpack.c.l.b16 %v1293
      %v1364 = vunpack.c.l.b16 %v1294
      %v1365 = vunpack.c.l.b16 %v1295
      %v1366 = vunpack.c.l.b16 %v1296
      %v1367 = vunpack.c.l.b16 %v1297
      %v1368 = vunpack.c.l.b16 %v1298
      %v1369 = vunpack.c.l.b16 %v1299
      %v1370 = vunpack.c.l.b16 %v1300
      %v1371 = vunpack.c.l.b16 %v1301
      %v1372 = vunpack.c.l.b16 %v1302
      %v1373 = vpack.c.b16 %v1358, %v1357
      %v1374 = vpack.c.b16 %v1360, %v1359
      %v1375 = vpack.c.b16 %v1362, %v1361
      %v1376 = vpack.c.b16 %v1364, %v1363
      %v1377 = vpack.c.b16 %v1366, %v1365
      %v1378 = vpack.c.b16 %v1368, %v1367
      %v1379 = vpack.c.b16 %v1370, %v1369
      %v1380 = vpack.c.b16 %v1372, %v1371
      %1389 = vmatprep.subr.bf16.mxu0 0
      %1390 = vmatpush1.bf16.msra.mxu0 %v1373
      %1391 = vmatprep.subr.bf16.mxu0 0
      %1392 = vmatpush1.bf16.msra.mxu0 %v1374
      %1393 = vmatprep.subr.bf16.mxu0 0
      %1394 = vmatpush1.bf16.msra.mxu0 %v1375
      %1395 = vmatprep.subr.bf16.mxu0 0
      %1396 = vmatpush1.bf16.msra.mxu0 %v1376
      %1397 = vmatprep.subr.bf16.mxu0 0
      %1398 = vmatpush1.bf16.msra.mxu0 %v1377
      %1399 = vmatprep.subr.bf16.mxu0 0
      %1400 = vmatpush1.bf16.msra.mxu0 %v1378
      %1401 = vmatprep.subr.bf16.mxu0 0
      %1402 = vmatpush1.bf16.msra.mxu0 %v1379
      %1403 = vmatprep.subr.bf16.mxu0 0
      %1404 = vmatpush1.bf16.msra.mxu0 %v1380
      %1405 = vmatprep.subr.bf16.mxu0 0
      %1406 = vmatpush1.bf16.msra.mxu0 0
      %1407 = vmatprep.subr.bf16.mxu0 0
      %1408 = vmatpush1.bf16.msra.mxu0 0
      %1409 = vmatprep.subr.bf16.mxu0 0
      %1410 = vmatpush1.bf16.msra.mxu0 0
      %1411 = vmatprep.subr.bf16.mxu0 0
      %1412 = vmatpush1.bf16.msra.mxu0 0
      %1413 = vmatprep.subr.bf16.mxu0 0
      %1414 = vmatpush1.bf16.msra.mxu0 0
      %1415 = vmatprep.subr.bf16.mxu0 0
      %1416 = vmatpush1.bf16.msra.mxu0 0
      %1417 = vmatprep.subr.bf16.mxu0 0
      %1418 = vmatpush1.bf16.msra.mxu0 0
      %1419 = vmatprep.subr.bf16.mxu0 0
      %1420 = vmatpush1.bf16.msra.mxu0 0
      %1421 = vmatprep.mubr.bf16.mxu0 0
      %1422 = vmatmul.mubr.bf16.gmra.mrb[0].mxu0 %v1325
      %v1423 = vpop.f32.mrb[0].mxu0
      %v1424 = vadd.f32 %v1307, %v1423
      %v1425 = vpop.f32.mrb[0].mxu0
      %v1426 = vpop.f32.mrb[0].mxu0
      %v1427 = vadd.f32 %v1307, %v1426
      %v1428 = vpop.f32.mrb[0].mxu0
      %1429 = vmatprep.mubr.bf16.mxu0 0
      %1430 = vmatmul.mubr.bf16.gmra.mrb[0].mxu0 %v1326
      %v1431 = vpop.f32.mrb[0].mxu0
      %v1432 = vadd.f32 %v1307, %v1431
      %v1433 = vpop.f32.mrb[0].mxu0
      %v1434 = vpop.f32.mrb[0].mxu0
      %v1435 = vadd.f32 %v1307, %v1434
      %v1436 = vpop.f32.mrb[0].mxu0
      %1437 = vmatprep.mubr.bf16.mxu0 0
      %1438 = vmatmul.mubr.bf16.gmra.mrb[0].mxu0 %v1327
      %v1439 = vpop.f32.mrb[0].mxu0
      %v1440 = vadd.f32 %v1307, %v1439
      %v1441 = vpop.f32.mrb[0].mxu0
      %v1442 = vpop.f32.mrb[0].mxu0
      %v1443 = vadd.f32 %v1307, %v1442
      %v1444 = vpop.f32.mrb[0].mxu0
      %1445 = vmatprep.mubr.bf16.mxu0 0
      %1446 = vmatmul.mubr.bf16.gmra.mrb[0].mxu0 %v1328
      %v1447 = vpop.f32.mrb[0].mxu0
      %v1448 = vadd.f32 %v1307, %v1447
      %v1449 = vpop.f32.mrb[0].mxu0
      %v1450 = vpop.f32.mrb[0].mxu0
      %v1451 = vadd.f32 %v1307, %v1450
      %v1452 = vpop.f32.mrb[0].mxu0
      %1453 = vmatprep.mubr.bf16.mxu0 0
      %1454 = vmatmul.mubr.bf16.gmra.mrb[0].mxu0 %v1329
      %v1455 = vpop.f32.mrb[0].mxu0
      %v1456 = vadd.f32 %v1307, %v1455
      %v1457 = vpop.f32.mrb[0].mxu0
      %v1458 = vpop.f32.mrb[0].mxu0
      %v1459 = vadd.f32 %v1307, %v1458
      %v1460 = vpop.f32.mrb[0].mxu0
      %1461 = vmatprep.mubr.bf16.mxu0 0
      %1462 = vmatmul.mubr.bf16.gmra.mrb[0].mxu0 %v1330
      %v1463 = vpop.f32.mrb[0].mxu0
      %v1464 = vadd.f32 %v1307, %v1463
      %v1465 = vpop.f32.mrb[0].mxu0
      %v1466 = vpop.f32.mrb[0].mxu0
      %v1467 = vadd.f32 %v1307, %v1466
      %v1468 = vpop.f32.mrb[0].mxu0
      %1469 = vmatprep.mubr.bf16.mxu0 0
      %1470 = vmatmul.mubr.bf16.gmra.mrb[0].mxu0 %v1331
      %v1471 = vpop.f32.mrb[0].mxu0
      %v1472 = vadd.f32 %v1307, %v1471
      %v1473 = vpop.f32.mrb[0].mxu0
      %v1474 = vpop.f32.mrb[0].mxu0
      %v1475 = vadd.f32 %v1307, %v1474
      %v1476 = vpop.f32.mrb[0].mxu0
      %1477 = vmatprep.mubr.bf16.mxu0 0
      %1478 = vmatmul.mubr.bf16.gmra.mrb[0].mxu0 %v1332
      %v1479 = vpop.f32.mrb[0].mxu0
      %v1480 = vadd.f32 %v1307, %v1479
      %v1481 = vpop.f32.mrb[0].mxu0
      %v1482 = vpop.f32.mrb[0].mxu0
      %v1483 = vadd.f32 %v1307, %v1482
      %v1484 = vpop.f32.mrb[0].mxu0
      %1485 = vdwg.mxu0
      %v1486 = vpack.c.bf16 %v1427, %v1424
      %v1487 = vpack.c.bf16 %v1435, %v1432
      %v1488 = vpack.c.bf16 %v1443, %v1440
      %v1489 = vpack.c.bf16 %v1451, %v1448
      %v1490 = vpack.c.bf16 %v1459, %v1456
      %v1491 = vpack.c.bf16 %v1467, %v1464
      %v1492 = vpack.c.bf16 %v1475, %v1472
      %v1493 = vpack.c.bf16 %v1483, %v1480
      %v1502 = vunpack.c.l.b16 %v1486
      %v1503 = vunpack.c.h.b16 %v1486
      %v1504 = vunpack.c.l.b16 %v1487
      %v1505 = vunpack.c.h.b16 %v1487
      %v1506 = vunpack.c.l.b16 %v1488
      %v1507 = vunpack.c.h.b16 %v1488
      %v1508 = vunpack.c.l.b16 %v1489
      %v1509 = vunpack.c.h.b16 %v1489
      %v1510 = vunpack.c.l.b16 %v1490
      %v1511 = vunpack.c.h.b16 %v1490
      %v1512 = vunpack.c.l.b16 %v1491
      %v1513 = vunpack.c.h.b16 %v1491
      %v1514 = vunpack.c.l.b16 %v1492
      %v1515 = vunpack.c.h.b16 %v1492
      %v1516 = vunpack.c.l.b16 %v1493
      %v1517 = vunpack.c.h.b16 %v1493
      %v1518 = vpack.c.b16 %v1502, %v1502
      %v1519 = vpack.c.b16 %v1503, %v1503
      %v1520 = vpack.c.b16 %v1504, %v1504
      %v1521 = vpack.c.b16 %v1505, %v1505
      %v1522 = vpack.c.b16 %v1506, %v1506
      %v1523 = vpack.c.b16 %v1507, %v1507
      %v1524 = vpack.c.b16 %v1508, %v1508
      %v1525 = vpack.c.b16 %v1509, %v1509
      %v1526 = vpack.c.b16 %v1510, %v1510
      %v1527 = vpack.c.b16 %v1511, %v1511
      %v1528 = vpack.c.b16 %v1512, %v1512
      %v1529 = vpack.c.b16 %v1513, %v1513
      %v1530 = vpack.c.b16 %v1514, %v1514
      %v1531 = vpack.c.b16 %v1515, %v1515
      %v1532 = vpack.c.b16 %v1516, %v1516
      %v1533 = vpack.c.b16 %v1517, %v1517
      %1550 = vst [vmem:[%s354] sm:$0xf] %v1518
      %1551 = vst [vmem:[%s354 + $0x4] sm:$0xf] %v1519
      %1552 = vst [vmem:[%s354 + $0x8] sm:$0xf] %v1520
      %1553 = vst [vmem:[%s354 + $0xc] sm:$0xf] %v1521
      %1554 = vst [vmem:[%s354 + $0x10] sm:$0xf] %v1522
      %1555 = vst [vmem:[%s354 + $0x14] sm:$0xf] %v1523
      %1556 = vst [vmem:[%s354 + $0x18] sm:$0xf] %v1524
      %1557 = vst [vmem:[%s354 + $0x1c] sm:$0xf] %v1525
      %1558 = vst [vmem:[%s354 + $0x20] sm:$0xf] %v1526
      %1559 = vst [vmem:[%s354 + $0x24] sm:$0xf] %v1527
      %1560 = vst [vmem:[%s354 + $0x28] sm:$0xf] %v1528
      %1561 = vst [vmem:[%s354 + $0x2c] sm:$0xf] %v1529
      %1562 = vst [vmem:[%s354 + $0x30] sm:$0xf] %v1530
      %1563 = vst [vmem:[%s354 + $0x34] sm:$0xf] %v1531
      %1564 = vst [vmem:[%s354 + $0x38] sm:$0xf] %v1532
      %1565 = vst [vmem:[%s354 + $0x3c] sm:$0xf] %v1533
      %v1574 = vunpack.c.l.b16 %v367
      %v1575 = vunpack.c.l.b16 %v368
      %v1576 = vunpack.c.l.b16 %v369
      %v1577 = vunpack.c.l.b16 %v370
      %v1578 = vunpack.c.l.b16 %v371
      %v1579 = vunpack.c.l.b16 %v372
      %v1580 = vunpack.c.l.b16 %v373
      %v1581 = vunpack.c.l.b16 %v374
      %v1582 = vunpack.c.l.b16 %v375
      %v1583 = vunpack.c.l.b16 %v376
      %v1584 = vunpack.c.l.b16 %v377
      %v1585 = vunpack.c.l.b16 %v378
      %v1586 = vunpack.c.l.b16 %v379
      %v1587 = vunpack.c.l.b16 %v380
      %v1588 = vunpack.c.l.b16 %v381
      %v1589 = vunpack.c.l.b16 %v382
      %v1590 = vpack.c.b16 %v1575, %v1574
      %v1591 = vpack.c.b16 %v1577, %v1576
      %v1592 = vpack.c.b16 %v1579, %v1578
      %v1593 = vpack.c.b16 %v1581, %v1580
      %v1594 = vpack.c.b16 %v1583, %v1582
      %v1595 = vpack.c.b16 %v1585, %v1584
      %v1596 = vpack.c.b16 %v1587, %v1586
      %v1597 = vpack.c.b16 %v1589, %v1588
      %v1606 = vunpack.c.l.b16 %v407
      %v1607 = vunpack.c.l.b16 %v417
      %v1608 = vunpack.c.l.b16 %v431
      %v1609 = vunpack.c.l.b16 %v441
      %v1610 = vunpack.c.l.b16 %v455
      %v1611 = vunpack.c.l.b16 %v465
      %v1612 = vunpack.c.l.b16 %v479
      %v1613 = vunpack.c.l.b16 %v489
      %v1614 = vunpack.c.l.b16 %v503
      %v1615 = vunpack.c.l.b16 %v513
      %v1616 = vunpack.c.l.b16 %v527
      %v1617 = vunpack.c.l.b16 %v537
      %v1618 = vunpack.c.l.b16 %v551
      %v1619 = vunpack.c.l.b16 %v561
      %v1620 = vunpack.c.l.b16 %v575
      %v1621 = vunpack.c.l.b16 %v585
      %v1622 = vpack.c.b16 %v1607, %v1606
      %v1623 = vpack.c.b16 %v1609, %v1608
      %v1624 = vpack.c.b16 %v1611, %v1610
      %v1625 = vpack.c.b16 %v1613, %v1612
      %v1626 = vpack.c.b16 %v1615, %v1614
      %v1627 = vpack.c.b16 %v1617, %v1616
      %v1628 = vpack.c.b16 %v1619, %v1618
      %v1629 = vpack.c.b16 %v1621, %v1620
      %v1646 = vunpack.c.l.b16 %v678
      %v1647 = vunpack.c.l.b16 %v679
      %v1648 = vunpack.c.l.b16 %v680
      %v1649 = vunpack.c.l.b16 %v681
      %v1650 = vunpack.c.l.b16 %v682
      %v1651 = vunpack.c.l.b16 %v683
      %v1652 = vunpack.c.l.b16 %v684
      %v1653 = vunpack.c.l.b16 %v685
      %v1654 = vunpack.c.l.b16 %v686
      %v1655 = vunpack.c.l.b16 %v687
      %v1656 = vunpack.c.l.b16 %v688
      %v1657 = vunpack.c.l.b16 %v689
      %v1658 = vunpack.c.l.b16 %v690
      %v1659 = vunpack.c.l.b16 %v691
      %v1660 = vunpack.c.l.b16 %v692
      %v1661 = vunpack.c.l.b16 %v693
      %v1662 = vpack.c.b16 %v1647, %v1646
      %v1663 = vpack.c.b16 %v1649, %v1648
      %v1664 = vpack.c.b16 %v1651, %v1650
      %v1665 = vpack.c.b16 %v1653, %v1652
      %v1666 = vpack.c.b16 %v1655, %v1654
      %v1667 = vpack.c.b16 %v1657, %v1656
      %v1668 = vpack.c.b16 %v1659, %v1658
      %v1669 = vpack.c.b16 %v1661, %v1660
      %v1678 = vld [vmem:[%s1] sm:$0xf]
      %v1679 = vld [vmem:[%s1 + $0x4] sm:$0xf]
      %v1680 = vld [vmem:[%s1 + $0x8] sm:$0xf]
      %v1681 = vld [vmem:[%s1 + $0xc] sm:$0xf]
      %v1682 = vld [vmem:[%s1 + $0x10] sm:$0xf]
      %v1683 = vld [vmem:[%s1 + $0x14] sm:$0xf]
      %v1684 = vld [vmem:[%s1 + $0x18] sm:$0xf]
      %v1685 = vld [vmem:[%s1 + $0x1c] sm:$0xf]
      %v1686 = vld [vmem:[%s1 + $0x20] sm:$0xf]
      %v1687 = vld [vmem:[%s1 + $0x24] sm:$0xf]
      %v1688 = vld [vmem:[%s1 + $0x28] sm:$0xf]
      %v1689 = vld [vmem:[%s1 + $0x2c] sm:$0xf]
      %v1690 = vld [vmem:[%s1 + $0x30] sm:$0xf]
      %v1691 = vld [vmem:[%s1 + $0x34] sm:$0xf]
      %v1692 = vld [vmem:[%s1 + $0x38] sm:$0xf]
      %v1693 = vld [vmem:[%s1 + $0x3c] sm:$0xf]
      %v1694 = vld [vmem:[%s1 + $0x40] sm:$0xf]
      %v1695 = vld [vmem:[%s1 + $0x44] sm:$0xf]
      %v1696 = vld [vmem:[%s1 + $0x48] sm:$0xf]
      %v1697 = vld [vmem:[%s1 + $0x4c] sm:$0xf]
      %v1698 = vld [vmem:[%s1 + $0x50] sm:$0xf]
      %v1699 = vld [vmem:[%s1 + $0x54] sm:$0xf]
      %v1700 = vld [vmem:[%s1 + $0x58] sm:$0xf]
      %v1701 = vld [vmem:[%s1 + $0x5c] sm:$0xf]
      %v1702 = vld [vmem:[%s1 + $0x60] sm:$0xf]
      %v1703 = vld [vmem:[%s1 + $0x64] sm:$0xf]
      %v1704 = vld [vmem:[%s1 + $0x68] sm:$0xf]
      %v1705 = vld [vmem:[%s1 + $0x6c] sm:$0xf]
      %v1706 = vld [vmem:[%s1 + $0x70] sm:$0xf]
      %v1707 = vld [vmem:[%s1 + $0x74] sm:$0xf]
      %v1708 = vld [vmem:[%s1 + $0x78] sm:$0xf]
      %v1709 = vld [vmem:[%s1 + $0x7c] sm:$0xf]
      %v1710 = vld [vmem:[%s1 + $0x80] sm:$0xf]
      %v1711 = vld [vmem:[%s1 + $0x84] sm:$0xf]
      %v1712 = vld [vmem:[%s1 + $0x88] sm:$0xf]
      %v1713 = vld [vmem:[%s1 + $0x8c] sm:$0xf]
      %v1714 = vld [vmem:[%s1 + $0x90] sm:$0xf]
      %v1715 = vld [vmem:[%s1 + $0x94] sm:$0xf]
      %v1716 = vld [vmem:[%s1 + $0x98] sm:$0xf]
      %v1717 = vld [vmem:[%s1 + $0x9c] sm:$0xf]
      %v1718 = vld [vmem:[%s1 + $0xa0] sm:$0xf]
      %v1719 = vld [vmem:[%s1 + $0xa4] sm:$0xf]
      %v1720 = vld [vmem:[%s1 + $0xa8] sm:$0xf]
      %v1721 = vld [vmem:[%s1 + $0xac] sm:$0xf]
      %v1722 = vld [vmem:[%s1 + $0xb0] sm:$0xf]
      %v1723 = vld [vmem:[%s1 + $0xb4] sm:$0xf]
      %v1724 = vld [vmem:[%s1 + $0xb8] sm:$0xf]
      %v1725 = vld [vmem:[%s1 + $0xbc] sm:$0xf]
      %v1726 = vld [vmem:[%s1 + $0xc0] sm:$0xf]
      %v1727 = vld [vmem:[%s1 + $0xc4] sm:$0xf]
      %v1728 = vld [vmem:[%s1 + $0xc8] sm:$0xf]
      %v1729 = vld [vmem:[%s1 + $0xcc] sm:$0xf]
      %v1730 = vld [vmem:[%s1 + $0xd0] sm:$0xf]
      %v1731 = vld [vmem:[%s1 + $0xd4] sm:$0xf]
      %v1732 = vld [vmem:[%s1 + $0xd8] sm:$0xf]
      %v1733 = vld [vmem:[%s1 + $0xdc] sm:$0xf]
      %v1734 = vld [vmem:[%s1 + $0xe0] sm:$0xf]
      %v1735 = vld [vmem:[%s1 + $0xe4] sm:$0xf]
      %v1736 = vld [vmem:[%s1 + $0xe8] sm:$0xf]
      %v1737 = vld [vmem:[%s1 + $0xec] sm:$0xf]
      %v1738 = vld [vmem:[%s1 + $0xf0] sm:$0xf]
      %v1739 = vld [vmem:[%s1 + $0xf4] sm:$0xf]
      %v1740 = vld [vmem:[%s1 + $0xf8] sm:$0xf]
      %v1741 = vld [vmem:[%s1 + $0xfc] sm:$0xf]
      %v1806 = vunpack.c.l.b16 %v1678
      %v1807 = vunpack.c.l.b16 %v1679
      %v1808 = vunpack.c.l.b16 %v1680
      %v1809 = vunpack.c.l.b16 %v1681
      %v1810 = vunpack.c.l.b16 %v1682
      %v1811 = vunpack.c.l.b16 %v1683
      %v1812 = vunpack.c.l.b16 %v1684
      %v1813 = vunpack.c.l.b16 %v1685
      %v1814 = vunpack.c.l.b16 %v1686
      %v1815 = vunpack.c.l.b16 %v1687
      %v1816 = vunpack.c.l.b16 %v1688
      %v1817 = vunpack.c.l.b16 %v1689
      %v1818 = vunpack.c.l.b16 %v1690
      %v1819 = vunpack.c.l.b16 %v1691
      %v1820 = vunpack.c.l.b16 %v1692
      %v1821 = vunpack.c.l.b16 %v1693
      %v1822 = vunpack.c.l.b16 %v1694
      %v1823 = vunpack.c.l.b16 %v1695
      %v1824 = vunpack.c.l.b16 %v1696
      %v1825 = vunpack.c.l.b16 %v1697
      %v1826 = vunpack.c.l.b16 %v1698
      %v1827 = vunpack.c.l.b16 %v1699
      %v1828 = vunpack.c.l.b16 %v1700
      %v1829 = vunpack.c.l.b16 %v1701
      %v1830 = vunpack.c.l.b16 %v1702
      %v1831 = vunpack.c.l.b16 %v1703
      %v1832 = vunpack.c.l.b16 %v1704
      %v1833 = vunpack.c.l.b16 %v1705
      %v1834 = vunpack.c.l.b16 %v1706
      %v1835 = vunpack.c.l.b16 %v1707
      %v1836 = vunpack.c.l.b16 %v1708
      %v1837 = vunpack.c.l.b16 %v1709
      %v1838 = vunpack.c.l.b16 %v1710
      %v1839 = vunpack.c.l.b16 %v1711
      %v1840 = vunpack.c.l.b16 %v1712
      %v1841 = vunpack.c.l.b16 %v1713
      %v1842 = vunpack.c.l.b16 %v1714
      %v1843 = vunpack.c.l.b16 %v1715
      %v1844 = vunpack.c.l.b16 %v1716
      %v1845 = vunpack.c.l.b16 %v1717
      %v1846 = vunpack.c.l.b16 %v1718
      %v1847 = vunpack.c.l.b16 %v1719
      %v1848 = vunpack.c.l.b16 %v1720
      %v1849 = vunpack.c.l.b16 %v1721
      %v1850 = vunpack.c.l.b16 %v1722
      %v1851 = vunpack.c.l.b16 %v1723
      %v1852 = vunpack.c.l.b16 %v1724
      %v1853 = vunpack.c.l.b16 %v1725
      %v1854 = vunpack.c.l.b16 %v1726
      %v1855 = vunpack.c.l.b16 %v1727
      %v1856 = vunpack.c.l.b16 %v1728
      %v1857 = vunpack.c.l.b16 %v1729
      %v1858 = vunpack.c.l.b16 %v1730
      %v1859 = vunpack.c.l.b16 %v1731
      %v1860 = vunpack.c.l.b16 %v1732
      %v1861 = vunpack.c.l.b16 %v1733
      %v1862 = vunpack.c.l.b16 %v1734
      %v1863 = vunpack.c.l.b16 %v1735
      %v1864 = vunpack.c.l.b16 %v1736
      %v1865 = vunpack.c.l.b16 %v1737
      %v1866 = vunpack.c.l.b16 %v1738
      %v1867 = vunpack.c.l.b16 %v1739
      %v1868 = vunpack.c.l.b16 %v1740
      %v1869 = vunpack.c.l.b16 %v1741
      %v1870 = vpack.c.b16 %v1807, %v1806
      %v1871 = vpack.c.b16 %v1809, %v1808
      %v1872 = vpack.c.b16 %v1811, %v1810
      %v1873 = vpack.c.b16 %v1813, %v1812
      %v1874 = vpack.c.b16 %v1815, %v1814
      %v1875 = vpack.c.b16 %v1817, %v1816
      %v1876 = vpack.c.b16 %v1819, %v1818
      %v1877 = vpack.c.b16 %v1821, %v1820
      %v1878 = vpack.c.b16 %v1823, %v1822
      %v1879 = vpack.c.b16 %v1825, %v1824
      %v1880 = vpack.c.b16 %v1827, %v1826
      %v1881 = vpack.c.b16 %v1829, %v1828
      %v1882 = vpack.c.b16 %v1831, %v1830
      %v1883 = vpack.c.b16 %v1833, %v1832
      %v1884 = vpack.c.b16 %v1835, %v1834
      %v1885 = vpack.c.b16 %v1837, %v1836
      %v1886 = vpack.c.b16 %v1839, %v1838
      %v1887 = vpack.c.b16 %v1841, %v1840
      %v1888 = vpack.c.b16 %v1843, %v1842
      %v1889 = vpack.c.b16 %v1845, %v1844
      %v1890 = vpack.c.b16 %v1847, %v1846
      %v1891 = vpack.c.b16 %v1849, %v1848
      %v1892 = vpack.c.b16 %v1851, %v1850
      %v1893 = vpack.c.b16 %v1853, %v1852
      %v1894 = vpack.c.b16 %v1855, %v1854
      %v1895 = vpack.c.b16 %v1857, %v1856
      %v1896 = vpack.c.b16 %v1859, %v1858
      %v1897 = vpack.c.b16 %v1861, %v1860
      %v1898 = vpack.c.b16 %v1863, %v1862
      %v1899 = vpack.c.b16 %v1865, %v1864
      %v1900 = vpack.c.b16 %v1867, %v1866
      %v1901 = vpack.c.b16 %v1869, %v1868
      %1934 = vmatprep.subr.bf16.mxu0 0
      %1935 = vmatpush1.bf16.msra.mxu0 %v1870
      %1936 = vmatprep.subr.bf16.mxu0 0
      %1937 = vmatpush1.bf16.msra.mxu0 %v1871
      %1938 = vmatprep.subr.bf16.mxu0 0
      %1939 = vmatpush1.bf16.msra.mxu0 %v1872
      %1940 = vmatprep.subr.bf16.mxu0 0
      %1941 = vmatpush1.bf16.msra.mxu0 %v1873
      %1942 = vmatprep.subr.bf16.mxu0 0
      %1943 = vmatpush1.bf16.msra.mxu0 %v1874
      %1944 = vmatprep.subr.bf16.mxu0 0
      %1945 = vmatpush1.bf16.msra.mxu0 %v1875
      %1946 = vmatprep.subr.bf16.mxu0 0
      %1947 = vmatpush1.bf16.msra.mxu0 %v1876
      %1948 = vmatprep.subr.bf16.mxu0 0
      %1949 = vmatpush1.bf16.msra.mxu0 %v1877
      %1950 = vmatprep.subr.bf16.mxu0 0
      %1951 = vmatpush1.bf16.msra.mxu0 %v1878
      %1952 = vmatprep.subr.bf16.mxu0 0
      %1953 = vmatpush1.bf16.msra.mxu0 %v1879
      %1954 = vmatprep.subr.bf16.mxu0 0
      %1955 = vmatpush1.bf16.msra.mxu0 %v1880
      %1956 = vmatprep.subr.bf16.mxu0 0
      %1957 = vmatpush1.bf16.msra.mxu0 %v1881
      %1958 = vmatprep.subr.bf16.mxu0 0
      %1959 = vmatpush1.bf16.msra.mxu0 %v1882
      %1960 = vmatprep.subr.bf16.mxu0 0
      %1961 = vmatpush1.bf16.msra.mxu0 %v1883
      %1962 = vmatprep.subr.bf16.mxu0 0
      %1963 = vmatpush1.bf16.msra.mxu0 %v1884
      %1964 = vmatprep.subr.bf16.mxu0 0
      %1965 = vmatpush1.bf16.msra.mxu0 %v1885
      %1966 = vmatprep.mubr.bf16.mxu0 %v1622
      %1967 = vmatmul.mubr.bf16.gmra.mrb[0].mxu0 %v1590
      %v1968 = vpop.f32.mrb[0].mxu0
      %v1969 = vadd.f32 0.0, %v1968
      %v1970 = vpop.f32.mrb[0].mxu0
      %v1971 = vpop.f32.mrb[0].mxu0
      %v1972 = vadd.f32 0.0, %v1971
      %v1973 = vpop.f32.mrb[0].mxu0
      %1974 = vmatprep.mubr.bf16.mxu0 %v1623
      %1975 = vmatmul.mubr.bf16.gmra.mrb[0].mxu0 %v1591
      %v1976 = vpop.f32.mrb[0].mxu0
      %v1977 = vadd.f32 0.0, %v1976
      %v1978 = vpop.f32.mrb[0].mxu0
      %v1979 = vpop.f32.mrb[0].mxu0
      %v1980 = vadd.f32 0.0, %v1979
      %v1981 = vpop.f32.mrb[0].mxu0
      %1982 = vmatprep.mubr.bf16.mxu0 %v1624
      %1983 = vmatmul.mubr.bf16.gmra.mrb[0].mxu0 %v1592
      %v1984 = vpop.f32.mrb[0].mxu0
      %v1985 = vadd.f32 0.0, %v1984
      %v1986 = vpop.f32.mrb[0].mxu0
      %v1987 = vpop.f32.mrb[0].mxu0
      %v1988 = vadd.f32 0.0, %v1987
      %v1989 = vpop.f32.mrb[0].mxu0
      %1990 = vmatprep.mubr.bf16.mxu0 %v1625
      %1991 = vmatmul.mubr.bf16.gmra.mrb[0].mxu0 %v1593
      %v1992 = vpop.f32.mrb[0].mxu0
      %v1993 = vadd.f32 0.0, %v1992
      %v1994 = vpop.f32.mrb[0].mxu0
      %v1995 = vpop.f32.mrb[0].mxu0
      %v1996 = vadd.f32 0.0, %v1995
      %v1997 = vpop.f32.mrb[0].mxu0
      %1998 = vmatprep.mubr.bf16.mxu0 %v1626
      %1999 = vmatmul.mubr.bf16.gmra.mrb[0].mxu0 %v1594
      %v2000 = vpop.f32.mrb[0].mxu0
      %v2001 = vadd.f32 0.0, %v2000
      %v2002 = vpop.f32.mrb[0].mxu0
      %v2003 = vpop.f32.mrb[0].mxu0
      %v2004 = vadd.f32 0.0, %v2003
      %v2005 = vpop.f32.mrb[0].mxu0
      %2006 = vmatprep.mubr.bf16.mxu0 %v1627
      %2007 = vmatmul.mubr.bf16.gmra.mrb[0].mxu0 %v1595
      %v2008 = vpop.f32.mrb[0].mxu0
      %v2009 = vadd.f32 0.0, %v2008
      %v2010 = vpop.f32.mrb[0].mxu0
      %v2011 = vpop.f32.mrb[0].mxu0
      %v2012 = vadd.f32 0.0, %v2011
      %v2013 = vpop.f32.mrb[0].mxu0
      %2014 = vmatprep.mubr.bf16.mxu0 %v1628
      %2015 = vmatmul.mubr.bf16.gmra.mrb[0].mxu0 %v1596
      %v2016 = vpop.f32.mrb[0].mxu0
      %v2017 = vadd.f32 0.0, %v2016
      %v2018 = vpop.f32.mrb[0].mxu0
      %v2019 = vpop.f32.mrb[0].mxu0
      %v2020 = vadd.f32 0.0, %v2019
      %v2021 = vpop.f32.mrb[0].mxu0
      %2022 = vmatprep.mubr.bf16.mxu0 %v1629
      %2023 = vmatmul.mubr.bf16.gmra.mrb[0].mxu0 %v1597
      %v2024 = vpop.f32.mrb[0].mxu0
      %v2025 = vadd.f32 0.0, %v2024
      %v2026 = vpop.f32.mrb[0].mxu0
      %v2027 = vpop.f32.mrb[0].mxu0
      %v2028 = vadd.f32 0.0, %v2027
      %v2029 = vpop.f32.mrb[0].mxu0
      %2030 = vdwg.mxu0
      %2031 = vmatprep.subr.bf16.mxu0 0
      %2032 = vmatpush1.bf16.msra.mxu0 %v1886
      %2033 = vmatprep.subr.bf16.mxu0 0
      %2034 = vmatpush1.bf16.msra.mxu0 %v1887
      %2035 = vmatprep.subr.bf16.mxu0 0
      %2036 = vmatpush1.bf16.msra.mxu0 %v1888
      %2037 = vmatprep.subr.bf16.mxu0 0
      %2038 = vmatpush1.bf16.msra.mxu0 %v1889
      %2039 = vmatprep.subr.bf16.mxu0 0
      %2040 = vmatpush1.bf16.msra.mxu0 %v1890
      %2041 = vmatprep.subr.bf16.mxu0 0
      %2042 = vmatpush1.bf16.msra.mxu0 %v1891
      %2043 = vmatprep.subr.bf16.mxu0 0
      %2044 = vmatpush1.bf16.msra.mxu0 %v1892
      %2045 = vmatprep.subr.bf16.mxu0 0
      %2046 = vmatpush1.bf16.msra.mxu0 %v1893
      %2047 = vmatprep.subr.bf16.mxu0 0
      %2048 = vmatpush1.bf16.msra.mxu0 %v1894
      %2049 = vmatprep.subr.bf16.mxu0 0
      %2050 = vmatpush1.bf16.msra.mxu0 %v1895
      %2051 = vmatprep.subr.bf16.mxu0 0
      %2052 = vmatpush1.bf16.msra.mxu0 %v1896
      %2053 = vmatprep.subr.bf16.mxu0 0
      %2054 = vmatpush1.bf16.msra.mxu0 %v1897
      %2055 = vmatprep.subr.bf16.mxu0 0
      %2056 = vmatpush1.bf16.msra.mxu0 %v1898
      %2057 = vmatprep.subr.bf16.mxu0 0
      %2058 = vmatpush1.bf16.msra.mxu0 %v1899
      %2059 = vmatprep.subr.bf16.mxu0 0
      %2060 = vmatpush1.bf16.msra.mxu0 %v1900
      %2061 = vmatprep.subr.bf16.mxu0 0
      %2062 = vmatpush1.bf16.msra.mxu0 %v1901
      %2063 = vmatprep.mubr.bf16.mxu0 %v1325
      %2064 = vmatmul.mubr.bf16.gmra.mrb[0].mxu0 %v1662
      %v2065 = vpop.f32.mrb[0].mxu0
      %v2066 = vadd.f32 %v1969, %v2065
      %v2067 = vpop.f32.mrb[0].mxu0
      %v2068 = vpop.f32.mrb[0].mxu0
      %v2069 = vadd.f32 %v1972, %v2068
      %v2070 = vpop.f32.mrb[0].mxu0
      %2071 = vmatprep.mubr.bf16.mxu0 %v1326
      %2072 = vmatmul.mubr.bf16.gmra.mrb[0].mxu0 %v1663
      %v2073 = vpop.f32.mrb[0].mxu0
      %v2074 = vadd.f32 %v1977, %v2073
      %v2075 = vpop.f32.mrb[0].mxu0
      %v2076 = vpop.f32.mrb[0].mxu0
      %v2077 = vadd.f32 %v1980, %v2076
      %v2078 = vpop.f32.mrb[0].mxu0
      %2079 = vmatprep.mubr.bf16.mxu0 %v1327
      %2080 = vmatmul.mubr.bf16.gmra.mrb[0].mxu0 %v1664
      %v2081 = vpop.f32.mrb[0].mxu0
      %v2082 = vadd.f32 %v1985, %v2081
      %v2083 = vpop.f32.mrb[0].mxu0
      %v2084 = vpop.f32.mrb[0].mxu0
      %v2085 = vadd.f32 %v1988, %v2084
      %v2086 = vpop.f32.mrb[0].mxu0
      %2087 = vmatprep.mubr.bf16.mxu0 %v1328
      %2088 = vmatmul.mubr.bf16.gmra.mrb[0].mxu0 %v1665
      %v2089 = vpop.f32.mrb[0].mxu0
      %v2090 = vadd.f32 %v1993, %v2089
      %v2091 = vpop.f32.mrb[0].mxu0
      %v2092 = vpop.f32.mrb[0].mxu0
      %v2093 = vadd.f32 %v1996, %v2092
      %v2094 = vpop.f32.mrb[0].mxu0
      %2095 = vmatprep.mubr.bf16.mxu0 %v1329
      %2096 = vmatmul.mubr.bf16.gmra.mrb[0].mxu0 %v1666
      %v2097 = vpop.f32.mrb[0].mxu0
      %v2098 = vadd.f32 %v2001, %v2097
      %v2099 = vpop.f32.mrb[0].mxu0
      %v2100 = vpop.f32.mrb[0].mxu0
      %v2101 = vadd.f32 %v2004, %v2100
      %v2102 = vpop.f32.mrb[0].mxu0
      %2103 = vmatprep.mubr.bf16.mxu0 %v1330
      %2104 = vmatmul.mubr.bf16.gmra.mrb[0].mxu0 %v1667
      %v2105 = vpop.f32.mrb[0].mxu0
      %v2106 = vadd.f32 %v2009, %v2105
      %v2107 = vpop.f32.mrb[0].mxu0
      %v2108 = vpop.f32.mrb[0].mxu0
      %v2109 = vadd.f32 %v2012, %v2108
      %v2110 = vpop.f32.mrb[0].mxu0
      %2111 = vmatprep.mubr.bf16.mxu0 %v1331
      %2112 = vmatmul.mubr.bf16.gmra.mrb[0].mxu0 %v1668
      %v2113 = vpop.f32.mrb[0].mxu0
      %v2114 = vadd.f32 %v2017, %v2113
      %v2115 = vpop.f32.mrb[0].mxu0
      %v2116 = vpop.f32.mrb[0].mxu0
      %v2117 = vadd.f32 %v2020, %v2116
      %v2118 = vpop.f32.mrb[0].mxu0
      %2119 = vmatprep.mubr.bf16.mxu0 %v1332
      %2120 = vmatmul.mubr.bf16.gmra.mrb[0].mxu0 %v1669
      %v2121 = vpop.f32.mrb[0].mxu0
      %v2122 = vadd.f32 %v2025, %v2121
      %v2123 = vpop.f32.mrb[0].mxu0
      %v2124 = vpop.f32.mrb[0].mxu0
      %v2125 = vadd.f32 %v2028, %v2124
      %v2126 = vpop.f32.mrb[0].mxu0
      %2127 = vdwg.mxu0
      %v2128 = vadd.f32 %v2066, %v2069
      %v2129 = vadd.f32 %v2128, %v2074
      %v2130 = vadd.f32 %v2129, %v2077
      %v2131 = vadd.f32 %v2130, %v2082
      %v2132 = vadd.f32 %v2131, %v2085
      %v2133 = vadd.f32 %v2132, %v2090
      %v2134 = vadd.f32 %v2133, %v2093
      %v2135 = vadd.f32 %v2134, %v2098
      %v2136 = vadd.f32 %v2135, %v2101
      %v2137 = vadd.f32 %v2136, %v2106
      %v2138 = vadd.f32 %v2137, %v2109
      %v2139 = vadd.f32 %v2138, %v2114
      %v2140 = vadd.f32 %v2139, %v2117
      %v2141 = vadd.f32 %v2140, %v2122
      %v2142 = vadd.f32 %v2141, %v2125
      %v2143 = vrot.slane %v2142, 4
      %v2144 = vadd.f32 %v2142, %v2143
      %v2145 = vrot.slane %v2144, 2
      %v2146 = vadd.f32 %v2144, %v2145
      %v2147 = vrot.slane %v2146, 1
      %v2148 = vadd.f32 %v2146, %v2147
      %v2149 = vadd.f32 %v2148, 0.0
      %v2150 = vmul.f32 %v2066, %v2066
      %v2151 = vmul.f32 %v2069, %v2069
      %v2152 = vmul.f32 %v2074, %v2074
      %v2153 = vmul.f32 %v2077, %v2077
      %v2154 = vmul.f32 %v2082, %v2082
      %v2155 = vmul.f32 %v2085, %v2085
      %v2156 = vmul.f32 %v2090, %v2090
      %v2157 = vmul.f32 %v2093, %v2093
      %v2158 = vmul.f32 %v2098, %v2098
      %v2159 = vmul.f32 %v2101, %v2101
      %v2160 = vmul.f32 %v2106, %v2106
      %v2161 = vmul.f32 %v2109, %v2109
      %v2162 = vmul.f32 %v2114, %v2114
      %v2163 = vmul.f32 %v2117, %v2117
      %v2164 = vmul.f32 %v2122, %v2122
      %v2165 = vmul.f32 %v2125, %v2125
      %v2166 = vadd.f32 %v2150, %v2151
      %v2167 = vadd.f32 %v2166, %v2152
      %v2168 = vadd.f32 %v2167, %v2153
      %v2169 = vadd.f32 %v2168, %v2154
      %v2170 = vadd.f32 %v2169, %v2155
      %v2171 = vadd.f32 %v2170, %v2156
      %v2172 = vadd.f32 %v2171, %v2157
      %v2173 = vadd.f32 %v2172, %v2158
      %v2174 = vadd.f32 %v2173, %v2159
      %v2175 = vadd.f32 %v2174, %v2160
      %v2176 = vadd.f32 %v2175, %v2161
      %v2177 = vadd.f32 %v2176, %v2162
      %v2178 = vadd.f32 %v2177, %v2163
      %v2179 = vadd.f32 %v2178, %v2164
      %v2180 = vadd.f32 %v2179, %v2165
      %v2181 = vrot.slane %v2180, 4
      %v2182 = vadd.f32 %v2180, %v2181
      %v2183 = vrot.slane %v2182, 2
      %v2184 = vadd.f32 %v2182, %v2183
      %v2185 = vrot.slane %v2184, 1
      %v2186 = vadd.f32 %v2184, %v2185
      %v2187 = vadd.f32 %v2186, 0.0
      %v2189 = vlaneseq
      %v2190 = vshrl.u32 %v2189, 7
      %v2191 = vsub.s32 0, %v2190
      %v2192 = vrot.slane %v365, %v2191
      %v2194 = vadd.f32 %v2066, %v2192
      %v2195 = vadd.f32 %v2069, %v2192
      %v2196 = vadd.f32 %v2074, %v2192
      %v2197 = vadd.f32 %v2077, %v2192
      %v2198 = vadd.f32 %v2082, %v2192
      %v2199 = vadd.f32 %v2085, %v2192
      %v2200 = vadd.f32 %v2090, %v2192
      %v2201 = vadd.f32 %v2093, %v2192
      %v2202 = vadd.f32 %v2098, %v2192
      %v2203 = vadd.f32 %v2101, %v2192
      %v2204 = vadd.f32 %v2106, %v2192
      %v2205 = vadd.f32 %v2109, %v2192
      %v2206 = vadd.f32 %v2114, %v2192
      %v2207 = vadd.f32 %v2117, %v2192
      %v2208 = vadd.f32 %v2122, %v2192
      %v2209 = vadd.f32 %v2125, %v2192
      %v2210 = vpack.c.bf16 %v2195, %v2194
      %v2211 = vpack.c.bf16 %v2197, %v2196
      %v2212 = vpack.c.bf16 %v2199, %v2198
      %v2213 = vpack.c.bf16 %v2201, %v2200
      %v2214 = vpack.c.bf16 %v2203, %v2202
      %v2215 = vpack.c.bf16 %v2205, %v2204
      %v2216 = vpack.c.bf16 %v2207, %v2206
      %v2217 = vpack.c.bf16 %v2209, %v2208
      %v2226 = vunpack.c.l.b16 %v2210
      %v2227 = vunpack.c.h.b16 %v2210
      %v2228 = vunpack.c.l.b16 %v2211
      %v2229 = vunpack.c.h.b16 %v2211
      %v2230 = vunpack.c.l.b16 %v2212
      %v2231 = vunpack.c.h.b16 %v2212
      %v2232 = vunpack.c.l.b16 %v2213
      %v2233 = vunpack.c.h.b16 %v2213
      %v2234 = vunpack.c.l.b16 %v2214
      %v2235 = vunpack.c.h.b16 %v2214
      %v2236 = vunpack.c.l.b16 %v2215
      %v2237 = vunpack.c.h.b16 %v2215
      %v2238 = vunpack.c.l.b16 %v2216
      %v2239 = vunpack.c.h.b16 %v2216
      %v2240 = vunpack.c.l.b16 %v2217
      %v2241 = vunpack.c.h.b16 %v2217
      %v2242 = vpack.c.b16 %v2226, %v2226
      %v2243 = vpack.c.b16 %v2227, %v2227
      %v2244 = vpack.c.b16 %v2228, %v2228
      %v2245 = vpack.c.b16 %v2229, %v2229
      %v2246 = vpack.c.b16 %v2230, %v2230
      %v2247 = vpack.c.b16 %v2231, %v2231
      %v2248 = vpack.c.b16 %v2232, %v2232
      %v2249 = vpack.c.b16 %v2233, %v2233
      %v2250 = vpack.c.b16 %v2234, %v2234
      %v2251 = vpack.c.b16 %v2235, %v2235
      %v2252 = vpack.c.b16 %v2236, %v2236
      %v2253 = vpack.c.b16 %v2237, %v2237
      %v2254 = vpack.c.b16 %v2238, %v2238
      %v2255 = vpack.c.b16 %v2239, %v2239
      %v2256 = vpack.c.b16 %v2240, %v2240
      %v2257 = vpack.c.b16 %v2241, %v2241
      %2274 = vst [vmem:[%s343] sm:$0xf] %v2242
      %2275 = vst [vmem:[%s343 + $0x8] sm:$0xf] %v2243
      %2276 = vst [vmem:[%s343 + $0x20] sm:$0xf] %v2244
      %2277 = vst [vmem:[%s343 + $0x28] sm:$0xf] %v2245
      %2278 = vst [vmem:[%s343 + $0x40] sm:$0xf] %v2246
      %2279 = vst [vmem:[%s343 + $0x48] sm:$0xf] %v2247
      %2280 = vst [vmem:[%s343 + $0x60] sm:$0xf] %v2248
      %2281 = vst [vmem:[%s343 + $0x68] sm:$0xf] %v2249
      %2282 = vst [vmem:[%s343 + $0x80] sm:$0xf] %v2250
      %2283 = vst [vmem:[%s343 + $0x88] sm:$0xf] %v2251
      %2284 = vst [vmem:[%s343 + $0xa0] sm:$0xf] %v2252
      %2285 = vst [vmem:[%s343 + $0xa8] sm:$0xf] %v2253
      %2286 = vst [vmem:[%s343 + $0xc0] sm:$0xf] %v2254
      %2287 = vst [vmem:[%s343 + $0xc8] sm:$0xf] %v2255
      %2288 = vst [vmem:[%s343 + $0xe0] sm:$0xf] %v2256
      %2289 = vst [vmem:[%s343 + $0xe8] sm:$0xf] %v2257
      %v2290 = vunpack.c.l.b16 %v624
      %v2291 = vunpack.c.l.b16 %v627
      %v2292 = vunpack.c.l.b16 %v631
      %v2293 = vunpack.c.l.b16 %v634
      %v2294 = vunpack.c.l.b16 %v638
      %v2295 = vunpack.c.l.b16 %v641
      %v2296 = vunpack.c.l.b16 %v645
      %v2297 = vunpack.c.l.b16 %v648
      %v2298 = vunpack.c.l.b16 %v652
      %v2299 = vunpack.c.l.b16 %v655
      %v2300 = vunpack.c.l.b16 %v659
      %v2301 = vunpack.c.l.b16 %v662
      %v2302 = vunpack.c.l.b16 %v666
      %v2303 = vunpack.c.l.b16 %v669
      %v2304 = vunpack.c.l.b16 %v673
      %v2305 = vunpack.c.l.b16 %v676
      %v2306 = vpack.c.b16 %v2291, %v2290
      %v2307 = vpack.c.b16 %v2293, %v2292
      %v2308 = vpack.c.b16 %v2295, %v2294
      %v2309 = vpack.c.b16 %v2297, %v2296
      %v2310 = vpack.c.b16 %v2299, %v2298
      %v2311 = vpack.c.b16 %v2301, %v2300
      %v2312 = vpack.c.b16 %v2303, %v2302
      %v2313 = vpack.c.b16 %v2305, %v2304
      %v2322 = vunpack.c.l.b16 %v929
      %v2323 = vunpack.c.l.b16 %v932
      %v2324 = vunpack.c.l.b16 %v936
      %v2325 = vunpack.c.l.b16 %v939
      %v2326 = vunpack.c.l.b16 %v943
      %v2327 = vunpack.c.l.b16 %v946
      %v2328 = vunpack.c.l.b16 %v950
      %v2329 = vunpack.c.l.b16 %v953
      %v2330 = vunpack.c.l.b16 %v957
      %v2331 = vunpack.c.l.b16 %v960
      %v2332 = vunpack.c.l.b16 %v964
      %v2333 = vunpack.c.l.b16 %v967
      %v2334 = vunpack.c.l.b16 %v971
      %v2335 = vunpack.c.l.b16 %v974
      %v2336 = vunpack.c.l.b16 %v978
      %v2337 = vunpack.c.l.b16 %v981
      %v2338 = vpack.c.b16 %v2323, %v2322
      %v2339 = vpack.c.b16 %v2325, %v2324
      %v2340 = vpack.c.b16 %v2327, %v2326
      %v2341 = vpack.c.b16 %v2329, %v2328
      %v2342 = vpack.c.b16 %v2331, %v2330
      %v2343 = vpack.c.b16 %v2333, %v2332
      %v2344 = vpack.c.b16 %v2335, %v2334
      %v2345 = vpack.c.b16 %v2337, %v2336
      %s2354 = scalar_lea.vmem %s1, 256
      %v2355 = vld [vmem:[%s2354] sm:$0xf]
      %v2356 = vld [vmem:[%s2354 + $0x4] sm:$0xf]
      %v2357 = vld [vmem:[%s2354 + $0x8] sm:$0xf]
      %v2358 = vld [vmem:[%s2354 + $0xc] sm:$0xf]
      %v2359 = vld [vmem:[%s2354 + $0x10] sm:$0xf]
      %v2360 = vld [vmem:[%s2354 + $0x14] sm:$0xf]
      %v2361 = vld [vmem:[%s2354 + $0x18] sm:$0xf]
      %v2362 = vld [vmem:[%s2354 + $0x1c] sm:$0xf]
      %v2363 = vld [vmem:[%s2354 + $0x20] sm:$0xf]
      %v2364 = vld [vmem:[%s2354 + $0x24] sm:$0xf]
      %v2365 = vld [vmem:[%s2354 + $0x28] sm:$0xf]
      %v2366 = vld [vmem:[%s2354 + $0x2c] sm:$0xf]
      %v2367 = vld [vmem:[%s2354 + $0x30] sm:$0xf]
      %v2368 = vld [vmem:[%s2354 + $0x34] sm:$0xf]
      %v2369 = vld [vmem:[%s2354 + $0x38] sm:$0xf]
      %v2370 = vld [vmem:[%s2354 + $0x3c] sm:$0xf]
      %v2371 = vld [vmem:[%s2354 + $0x40] sm:$0xf]
      %v2372 = vld [vmem:[%s2354 + $0x44] sm:$0xf]
      %v2373 = vld [vmem:[%s2354 + $0x48] sm:$0xf]
      %v2374 = vld [vmem:[%s2354 + $0x4c] sm:$0xf]
      %v2375 = vld [vmem:[%s2354 + $0x50] sm:$0xf]
      %v2376 = vld [vmem:[%s2354 + $0x54] sm:$0xf]
      %v2377 = vld [vmem:[%s2354 + $0x58] sm:$0xf]
      %v2378 = vld [vmem:[%s2354 + $0x5c] sm:$0xf]
      %v2379 = vld [vmem:[%s2354 + $0x60] sm:$0xf]
      %v2380 = vld [vmem:[%s2354 + $0x64] sm:$0xf]
      %v2381 = vld [vmem:[%s2354 + $0x68] sm:$0xf]
      %v2382 = vld [vmem:[%s2354 + $0x6c] sm:$0xf]
      %v2383 = vld [vmem:[%s2354 + $0x70] sm:$0xf]
      %v2384 = vld [vmem:[%s2354 + $0x74] sm:$0xf]
      %v2385 = vld [vmem:[%s2354 + $0x78] sm:$0xf]
      %v2386 = vld [vmem:[%s2354 + $0x7c] sm:$0xf]
      %v2387 = vld [vmem:[%s2354 + $0x80] sm:$0xf]
      %v2388 = vld [vmem:[%s2354 + $0x84] sm:$0xf]
      %v2389 = vld [vmem:[%s2354 + $0x88] sm:$0xf]
      %v2390 = vld [vmem:[%s2354 + $0x8c] sm:$0xf]
      %v2391 = vld [vmem:[%s2354 + $0x90] sm:$0xf]
      %v2392 = vld [vmem:[%s2354 + $0x94] sm:$0xf]
      %v2393 = vld [vmem:[%s2354 + $0x98] sm:$0xf]
      %v2394 = vld [vmem:[%s2354 + $0x9c] sm:$0xf]
      %v2395 = vld [vmem:[%s2354 + $0xa0] sm:$0xf]
      %v2396 = vld [vmem:[%s2354 + $0xa4] sm:$0xf]
      %v2397 = vld [vmem:[%s2354 + $0xa8] sm:$0xf]
      %v2398 = vld [vmem:[%s2354 + $0xac] sm:$0xf]
      %v2399 = vld [vmem:[%s2354 + $0xb0] sm:$0xf]
      %v2400 = vld [vmem:[%s2354 + $0xb4] sm:$0xf]
      %v2401 = vld [vmem:[%s2354 + $0xb8] sm:$0xf]
      %v2402 = vld [vmem:[%s2354 + $0xbc] sm:$0xf]
      %v2403 = vld [vmem:[%s2354 + $0xc0] sm:$0xf]
      %v2404 = vld [vmem:[%s2354 + $0xc4] sm:$0xf]
      %v2405 = vld [vmem:[%s2354 + $0xc8] sm:$0xf]
      %v2406 = vld [vmem:[%s2354 + $0xcc] sm:$0xf]
      %v2407 = vld [vmem:[%s2354 + $0xd0] sm:$0xf]
      %v2408 = vld [vmem:[%s2354 + $0xd4] sm:$0xf]
      %v2409 = vld [vmem:[%s2354 + $0xd8] sm:$0xf]
      %v2410 = vld [vmem:[%s2354 + $0xdc] sm:$0xf]
      %v2411 = vld [vmem:[%s2354 + $0xe0] sm:$0xf]
      %v2412 = vld [vmem:[%s2354 + $0xe4] sm:$0xf]
      %v2413 = vld [vmem:[%s2354 + $0xe8] sm:$0xf]
      %v2414 = vld [vmem:[%s2354 + $0xec] sm:$0xf]
      %v2415 = vld [vmem:[%s2354 + $0xf0] sm:$0xf]
      %v2416 = vld [vmem:[%s2354 + $0xf4] sm:$0xf]
      %v2417 = vld [vmem:[%s2354 + $0xf8] sm:$0xf]
      %v2418 = vld [vmem:[%s2354 + $0xfc] sm:$0xf]
      %v2483 = vunpack.c.l.b16 %v2355
      %v2484 = vunpack.c.l.b16 %v2356
      %v2485 = vunpack.c.l.b16 %v2357
      %v2486 = vunpack.c.l.b16 %v2358
      %v2487 = vunpack.c.l.b16 %v2359
      %v2488 = vunpack.c.l.b16 %v2360
      %v2489 = vunpack.c.l.b16 %v2361
      %v2490 = vunpack.c.l.b16 %v2362
      %v2491 = vunpack.c.l.b16 %v2363
      %v2492 = vunpack.c.l.b16 %v2364
      %v2493 = vunpack.c.l.b16 %v2365
      %v2494 = vunpack.c.l.b16 %v2366
      %v2495 = vunpack.c.l.b16 %v2367
      %v2496 = vunpack.c.l.b16 %v2368
      %v2497 = vunpack.c.l.b16 %v2369
      %v2498 = vunpack.c.l.b16 %v2370
      %v2499 = vunpack.c.l.b16 %v2371
      %v2500 = vunpack.c.l.b16 %v2372
      %v2501 = vunpack.c.l.b16 %v2373
      %v2502 = vunpack.c.l.b16 %v2374
      %v2503 = vunpack.c.l.b16 %v2375
      %v2504 = vunpack.c.l.b16 %v2376
      %v2505 = vunpack.c.l.b16 %v2377
      %v2506 = vunpack.c.l.b16 %v2378
      %v2507 = vunpack.c.l.b16 %v2379
      %v2508 = vunpack.c.l.b16 %v2380
      %v2509 = vunpack.c.l.b16 %v2381
      %v2510 = vunpack.c.l.b16 %v2382
      %v2511 = vunpack.c.l.b16 %v2383
      %v2512 = vunpack.c.l.b16 %v2384
      %v2513 = vunpack.c.l.b16 %v2385
      %v2514 = vunpack.c.l.b16 %v2386
      %v2515 = vunpack.c.l.b16 %v2387
      %v2516 = vunpack.c.l.b16 %v2388
      %v2517 = vunpack.c.l.b16 %v2389
      %v2518 = vunpack.c.l.b16 %v2390
      %v2519 = vunpack.c.l.b16 %v2391
      %v2520 = vunpack.c.l.b16 %v2392
      %v2521 = vunpack.c.l.b16 %v2393
      %v2522 = vunpack.c.l.b16 %v2394
      %v2523 = vunpack.c.l.b16 %v2395
      %v2524 = vunpack.c.l.b16 %v2396
      %v2525 = vunpack.c.l.b16 %v2397
      %v2526 = vunpack.c.l.b16 %v2398
      %v2527 = vunpack.c.l.b16 %v2399
      %v2528 = vunpack.c.l.b16 %v2400
      %v2529 = vunpack.c.l.b16 %v2401
      %v2530 = vunpack.c.l.b16 %v2402
      %v2531 = vunpack.c.l.b16 %v2403
      %v2532 = vunpack.c.l.b16 %v2404
      %v2533 = vunpack.c.l.b16 %v2405
      %v2534 = vunpack.c.l.b16 %v2406
      %v2535 = vunpack.c.l.b16 %v2407
      %v2536 = vunpack.c.l.b16 %v2408
      %v2537 = vunpack.c.l.b16 %v2409
      %v2538 = vunpack.c.l.b16 %v2410
      %v2539 = vunpack.c.l.b16 %v2411
      %v2540 = vunpack.c.l.b16 %v2412
      %v2541 = vunpack.c.l.b16 %v2413
      %v2542 = vunpack.c.l.b16 %v2414
      %v2543 = vunpack.c.l.b16 %v2415
      %v2544 = vunpack.c.l.b16 %v2416
      %v2545 = vunpack.c.l.b16 %v2417
      %v2546 = vunpack.c.l.b16 %v2418
      %v2547 = vpack.c.b16 %v2484, %v2483
      %v2548 = vpack.c.b16 %v2486, %v2485
      %v2549 = vpack.c.b16 %v2488, %v2487
      %v2550 = vpack.c.b16 %v2490, %v2489
      %v2551 = vpack.c.b16 %v2492, %v2491
      %v2552 = vpack.c.b16 %v2494, %v2493
      %v2553 = vpack.c.b16 %v2496, %v2495
      %v2554 = vpack.c.b16 %v2498, %v2497
      %v2555 = vpack.c.b16 %v2500, %v2499
      %v2556 = vpack.c.b16 %v2502, %v2501
      %v2557 = vpack.c.b16 %v2504, %v2503
      %v2558 = vpack.c.b16 %v2506, %v2505
      %v2559 = vpack.c.b16 %v2508, %v2507
      %v2560 = vpack.c.b16 %v2510, %v2509
      %v2561 = vpack.c.b16 %v2512, %v2511
      %v2562 = vpack.c.b16 %v2514, %v2513
      %v2563 = vpack.c.b16 %v2516, %v2515
      %v2564 = vpack.c.b16 %v2518, %v2517
      %v2565 = vpack.c.b16 %v2520, %v2519
      %v2566 = vpack.c.b16 %v2522, %v2521
      %v2567 = vpack.c.b16 %v2524, %v2523
      %v2568 = vpack.c.b16 %v2526, %v2525
      %v2569 = vpack.c.b16 %v2528, %v2527
      %v2570 = vpack.c.b16 %v2530, %v2529
      %v2571 = vpack.c.b16 %v2532, %v2531
      %v2572 = vpack.c.b16 %v2534, %v2533
      %v2573 = vpack.c.b16 %v2536, %v2535
      %v2574 = vpack.c.b16 %v2538, %v2537
      %v2575 = vpack.c.b16 %v2540, %v2539
      %v2576 = vpack.c.b16 %v2542, %v2541
      %v2577 = vpack.c.b16 %v2544, %v2543
      %v2578 = vpack.c.b16 %v2546, %v2545
      %2611 = vmatprep.subr.bf16.mxu0 0
      %2612 = vmatpush1.bf16.msra.mxu0 %v2547
      %2613 = vmatprep.subr.bf16.mxu0 0
      %2614 = vmatpush1.bf16.msra.mxu0 %v2548
      %2615 = vmatprep.subr.bf16.mxu0 0
      %2616 = vmatpush1.bf16.msra.mxu0 %v2549
      %2617 = vmatprep.subr.bf16.mxu0 0
      %2618 = vmatpush1.bf16.msra.mxu0 %v2550
      %2619 = vmatprep.subr.bf16.mxu0 0
      %2620 = vmatpush1.bf16.msra.mxu0 %v2551
      %2621 = vmatprep.subr.bf16.mxu0 0
      %2622 = vmatpush1.bf16.msra.mxu0 %v2552
      %2623 = vmatprep.subr.bf16.mxu0 0
      %2624 = vmatpush1.bf16.msra.mxu0 %v2553
      %2625 = vmatprep.subr.bf16.mxu0 0
      %2626 = vmatpush1.bf16.msra.mxu0 %v2554
      %2627 = vmatprep.subr.bf16.mxu0 0
      %2628 = vmatpush1.bf16.msra.mxu0 %v2555
      %2629 = vmatprep.subr.bf16.mxu0 0
      %2630 = vmatpush1.bf16.msra.mxu0 %v2556
      %2631 = vmatprep.subr.bf16.mxu0 0
      %2632 = vmatpush1.bf16.msra.mxu0 %v2557
      %2633 = vmatprep.subr.bf16.mxu0 0
      %2634 = vmatpush1.bf16.msra.mxu0 %v2558
      %2635 = vmatprep.subr.bf16.mxu0 0
      %2636 = vmatpush1.bf16.msra.mxu0 %v2559
      %2637 = vmatprep.subr.bf16.mxu0 0
      %2638 = vmatpush1.bf16.msra.mxu0 %v2560
      %2639 = vmatprep.subr.bf16.mxu0 0
      %2640 = vmatpush1.bf16.msra.mxu0 %v2561
      %2641 = vmatprep.subr.bf16.mxu0 0
      %2642 = vmatpush1.bf16.msra.mxu0 %v2562
      %2643 = vmatprep.mubr.bf16.mxu0 %v2306
      %2644 = vmatmul.mubr.bf16.gmra.mrb[0].mxu0 %v1622
      %v2645 = vpop.f32.mrb[0].mxu0
      %v2646 = vadd.f32 0.0, %v2645
      %v2647 = vpop.f32.mrb[0].mxu0
      %v2648 = vpop.f32.mrb[0].mxu0
      %v2649 = vadd.f32 0.0, %v2648
      %v2650 = vpop.f32.mrb[0].mxu0
      %2651 = vmatprep.mubr.bf16.mxu0 %v2307
      %2652 = vmatmul.mubr.bf16.gmra.mrb[0].mxu0 %v1623
      %v2653 = vpop.f32.mrb[0].mxu0
      %v2654 = vadd.f32 0.0, %v2653
      %v2655 = vpop.f32.mrb[0].mxu0
      %v2656 = vpop.f32.mrb[0].mxu0
      %v2657 = vadd.f32 0.0, %v2656
      %v2658 = vpop.f32.mrb[0].mxu0
      %2659 = vmatprep.mubr.bf16.mxu0 %v2308
      %2660 = vmatmul.mubr.bf16.gmra.mrb[0].mxu0 %v1624
      %v2661 = vpop.f32.mrb[0].mxu0
      %v2662 = vadd.f32 0.0, %v2661
      %v2663 = vpop.f32.mrb[0].mxu0
      %v2664 = vpop.f32.mrb[0].mxu0
      %v2665 = vadd.f32 0.0, %v2664
      %v2666 = vpop.f32.mrb[0].mxu0
      %2667 = vmatprep.mubr.bf16.mxu0 %v2309
      %2668 = vmatmul.mubr.bf16.gmra.mrb[0].mxu0 %v1625
      %v2669 = vpop.f32.mrb[0].mxu0
      %v2670 = vadd.f32 0.0, %v2669
      %v2671 = vpop.f32.mrb[0].mxu0
      %v2672 = vpop.f32.mrb[0].mxu0
      %v2673 = vadd.f32 0.0, %v2672
      %v2674 = vpop.f32.mrb[0].mxu0
      %2675 = vmatprep.mubr.bf16.mxu0 %v2310
      %2676 = vmatmul.mubr.bf16.gmra.mrb[0].mxu0 %v1626
      %v2677 = vpop.f32.mrb[0].mxu0
      %v2678 = vadd.f32 0.0, %v2677
      %v2679 = vpop.f32.mrb[0].mxu0
      %v2680 = vpop.f32.mrb[0].mxu0
      %v2681 = vadd.f32 0.0, %v2680
      %v2682 = vpop.f32.mrb[0].mxu0
      %2683 = vmatprep.mubr.bf16.mxu0 %v2311
      %2684 = vmatmul.mubr.bf16.gmra.mrb[0].mxu0 %v1627
      %v2685 = vpop.f32.mrb[0].mxu0
      %v2686 = vadd.f32 0.0, %v2685
      %v2687 = vpop.f32.mrb[0].mxu0
      %v2688 = vpop.f32.mrb[0].mxu0
      %v2689 = vadd.f32 0.0, %v2688
      %v2690 = vpop.f32.mrb[0].mxu0
      %2691 = vmatprep.mubr.bf16.mxu0 %v2312
      %2692 = vmatmul.mubr.bf16.gmra.mrb[0].mxu0 %v1628
      %v2693 = vpop.f32.mrb[0].mxu0
      %v2694 = vadd.f32 0.0, %v2693
      %v2695 = vpop.f32.mrb[0].mxu0
      %v2696 = vpop.f32.mrb[0].mxu0
      %v2697 = vadd.f32 0.0, %v2696
      %v2698 = vpop.f32.mrb[0].mxu0
      %2699 = vmatprep.mubr.bf16.mxu0 %v2313
      %2700 = vmatmul.mubr.bf16.gmra.mrb[0].mxu0 %v1629
      %v2701 = vpop.f32.mrb[0].mxu0
      %v2702 = vadd.f32 0.0, %v2701
      %v2703 = vpop.f32.mrb[0].mxu0
      %v2704 = vpop.f32.mrb[0].mxu0
      %v2705 = vadd.f32 0.0, %v2704
      %v2706 = vpop.f32.mrb[0].mxu0
      %2707 = vdwg.mxu0
      %2708 = vmatprep.subr.bf16.mxu0 0
      %2709 = vmatpush1.bf16.msra.mxu0 %v2563
      %2710 = vmatprep.subr.bf16.mxu0 0
      %2711 = vmatpush1.bf16.msra.mxu0 %v2564
      %2712 = vmatprep.subr.bf16.mxu0 0
      %2713 = vmatpush1.bf16.msra.mxu0 %v2565
      %2714 = vmatprep.subr.bf16.mxu0 0
      %2715 = vmatpush1.bf16.msra.mxu0 %v2566
      %2716 = vmatprep.subr.bf16.mxu0 0
      %2717 = vmatpush1.bf16.msra.mxu0 %v2567
      %2718 = vmatprep.subr.bf16.mxu0 0
      %2719 = vmatpush1.bf16.msra.mxu0 %v2568
      %2720 = vmatprep.subr.bf16.mxu0 0
      %2721 = vmatpush1.bf16.msra.mxu0 %v2569
      %2722 = vmatprep.subr.bf16.mxu0 0
      %2723 = vmatpush1.bf16.msra.mxu0 %v2570
      %2724 = vmatprep.subr.bf16.mxu0 0
      %2725 = vmatpush1.bf16.msra.mxu0 %v2571
      %2726 = vmatprep.subr.bf16.mxu0 0
      %2727 = vmatpush1.bf16.msra.mxu0 %v2572
      %2728 = vmatprep.subr.bf16.mxu0 0
      %2729 = vmatpush1.bf16.msra.mxu0 %v2573
      %2730 = vmatprep.subr.bf16.mxu0 0
      %2731 = vmatpush1.bf16.msra.mxu0 %v2574
      %2732 = vmatprep.subr.bf16.mxu0 0
      %2733 = vmatpush1.bf16.msra.mxu0 %v2575
      %2734 = vmatprep.subr.bf16.mxu0 0
      %2735 = vmatpush1.bf16.msra.mxu0 %v2576
      %2736 = vmatprep.subr.bf16.mxu0 0
      %2737 = vmatpush1.bf16.msra.mxu0 %v2577
      %2738 = vmatprep.subr.bf16.mxu0 0
      %2739 = vmatpush1.bf16.msra.mxu0 %v2578
      %2740 = vmatprep.mubr.bf16.mxu0 %v2338
      %2741 = vmatmul.mubr.bf16.gmra.mrb[0].mxu0 %v1325
      %v2742 = vpop.f32.mrb[0].mxu0
      %v2743 = vadd.f32 %v2646, %v2742
      %v2744 = vpop.f32.mrb[0].mxu0
      %v2745 = vpop.f32.mrb[0].mxu0
      %v2746 = vadd.f32 %v2649, %v2745
      %v2747 = vpop.f32.mrb[0].mxu0
      %2748 = vmatprep.mubr.bf16.mxu0 %v2339
      %2749 = vmatmul.mubr.bf16.gmra.mrb[0].mxu0 %v1326
      %v2750 = vpop.f32.mrb[0].mxu0
      %v2751 = vadd.f32 %v2654, %v2750
      %v2752 = vpop.f32.mrb[0].mxu0
      %v2753 = vpop.f32.mrb[0].mxu0
      %v2754 = vadd.f32 %v2657, %v2753
      %v2755 = vpop.f32.mrb[0].mxu0
      %2756 = vmatprep.mubr.bf16.mxu0 %v2340
      %2757 = vmatmul.mubr.bf16.gmra.mrb[0].mxu0 %v1327
      %v2758 = vpop.f32.mrb[0].mxu0
      %v2759 = vadd.f32 %v2662, %v2758
      %v2760 = vpop.f32.mrb[0].mxu0
      %v2761 = vpop.f32.mrb[0].mxu0
      %v2762 = vadd.f32 %v2665, %v2761
      %v2763 = vpop.f32.mrb[0].mxu0
      %2764 = vmatprep.mubr.bf16.mxu0 %v2341
      %2765 = vmatmul.mubr.bf16.gmra.mrb[0].mxu0 %v1328
      %v2766 = vpop.f32.mrb[0].mxu0
      %v2767 = vadd.f32 %v2670, %v2766
      %v2768 = vpop.f32.mrb[0].mxu0
      %v2769 = vpop.f32.mrb[0].mxu0
      %v2770 = vadd.f32 %v2673, %v2769
      %v2771 = vpop.f32.mrb[0].mxu0
      %2772 = vmatprep.mubr.bf16.mxu0 %v2342
      %2773 = vmatmul.mubr.bf16.gmra.mrb[0].mxu0 %v1329
      %v2774 = vpop.f32.mrb[0].mxu0
      %v2775 = vadd.f32 %v2678, %v2774
      %v2776 = vpop.f32.mrb[0].mxu0
      %v2777 = vpop.f32.mrb[0].mxu0
      %v2778 = vadd.f32 %v2681, %v2777
      %v2779 = vpop.f32.mrb[0].mxu0
      %2780 = vmatprep.mubr.bf16.mxu0 %v2343
      %2781 = vmatmul.mubr.bf16.gmra.mrb[0].mxu0 %v1330
      %v2782 = vpop.f32.mrb[0].mxu0
      %v2783 = vadd.f32 %v2686, %v2782
      %v2784 = vpop.f32.mrb[0].mxu0
      %v2785 = vpop.f32.mrb[0].mxu0
      %v2786 = vadd.f32 %v2689, %v2785
      %v2787 = vpop.f32.mrb[0].mxu0
      %2788 = vmatprep.mubr.bf16.mxu0 %v2344
      %2789 = vmatmul.mubr.bf16.gmra.mrb[0].mxu0 %v1331
      %v2790 = vpop.f32.mrb[0].mxu0
      %v2791 = vadd.f32 %v2694, %v2790
      %v2792 = vpop.f32.mrb[0].mxu0
      %v2793 = vpop.f32.mrb[0].mxu0
      %v2794 = vadd.f32 %v2697, %v2793
      %v2795 = vpop.f32.mrb[0].mxu0
      %2796 = vmatprep.mubr.bf16.mxu0 %v2345
      %2797 = vmatmul.mubr.bf16.gmra.mrb[0].mxu0 %v1332
      %v2798 = vpop.f32.mrb[0].mxu0
      %v2799 = vadd.f32 %v2702, %v2798
      %v2800 = vpop.f32.mrb[0].mxu0
      %v2801 = vpop.f32.mrb[0].mxu0
      %v2802 = vadd.f32 %v2705, %v2801
      %v2803 = vpop.f32.mrb[0].mxu0
      %2804 = vdwg.mxu0
      %v2805 = vadd.f32 %v2743, %v2746
      %v2806 = vadd.f32 %v2805, %v2751
      %v2807 = vadd.f32 %v2806, %v2754
      %v2808 = vadd.f32 %v2807, %v2759
      %v2809 = vadd.f32 %v2808, %v2762
      %v2810 = vadd.f32 %v2809, %v2767
      %v2811 = vadd.f32 %v2810, %v2770
      %v2812 = vadd.f32 %v2811, %v2775
      %v2813 = vadd.f32 %v2812, %v2778
      %v2814 = vadd.f32 %v2813, %v2783
      %v2815 = vadd.f32 %v2814, %v2786
      %v2816 = vadd.f32 %v2815, %v2791
      %v2817 = vadd.f32 %v2816, %v2794
      %v2818 = vadd.f32 %v2817, %v2799
      %v2819 = vadd.f32 %v2818, %v2802
      %v2820 = vrot.slane %v2819, 4
      %v2821 = vadd.f32 %v2819, %v2820
      %v2822 = vrot.slane %v2821, 2
      %v2823 = vadd.f32 %v2821, %v2822
      %v2824 = vrot.slane %v2823, 1
      %v2825 = vadd.f32 %v2823, %v2824
      %v2826 = vadd.f32 %v2149, %v2825
      %v2827 = vmul.f32 %v2743, %v2743
      %v2828 = vmul.f32 %v2746, %v2746
      %v2829 = vmul.f32 %v2751, %v2751
      %v2830 = vmul.f32 %v2754, %v2754
      %v2831 = vmul.f32 %v2759, %v2759
      %v2832 = vmul.f32 %v2762, %v2762
      %v2833 = vmul.f32 %v2767, %v2767
      %v2834 = vmul.f32 %v2770, %v2770
      %v2835 = vmul.f32 %v2775, %v2775
      %v2836 = vmul.f32 %v2778, %v2778
      %v2837 = vmul.f32 %v2783, %v2783
      %v2838 = vmul.f32 %v2786, %v2786
      %v2839 = vmul.f32 %v2791, %v2791
      %v2840 = vmul.f32 %v2794, %v2794
      %v2841 = vmul.f32 %v2799, %v2799
      %v2842 = vmul.f32 %v2802, %v2802
      %v2843 = vadd.f32 %v2827, %v2828
      %v2844 = vadd.f32 %v2843, %v2829
      %v2845 = vadd.f32 %v2844, %v2830
      %v2846 = vadd.f32 %v2845, %v2831
      %v2847 = vadd.f32 %v2846, %v2832
      %v2848 = vadd.f32 %v2847, %v2833
      %v2849 = vadd.f32 %v2848, %v2834
      %v2850 = vadd.f32 %v2849, %v2835
      %v2851 = vadd.f32 %v2850, %v2836
      %v2852 = vadd.f32 %v2851, %v2837
      %v2853 = vadd.f32 %v2852, %v2838
      %v2854 = vadd.f32 %v2853, %v2839
      %v2855 = vadd.f32 %v2854, %v2840
      %v2856 = vadd.f32 %v2855, %v2841
      %v2857 = vadd.f32 %v2856, %v2842
      %v2858 = vrot.slane %v2857, 4
      %v2859 = vadd.f32 %v2857, %v2858
      %v2860 = vrot.slane %v2859, 2
      %v2861 = vadd.f32 %v2859, %v2860
      %v2862 = vrot.slane %v2861, 1
      %v2863 = vadd.f32 %v2861, %v2862
      %v2864 = vadd.f32 %v2187, %v2863
      %v2865 = vadd.f32 %v2743, %v2192
      %v2866 = vadd.f32 %v2746, %v2192
      %v2867 = vadd.f32 %v2751, %v2192
      %v2868 = vadd.f32 %v2754, %v2192
      %v2869 = vadd.f32 %v2759, %v2192
      %v2870 = vadd.f32 %v2762, %v2192
      %v2871 = vadd.f32 %v2767, %v2192
      %v2872 = vadd.f32 %v2770, %v2192
      %v2873 = vadd.f32 %v2775, %v2192
      %v2874 = vadd.f32 %v2778, %v2192
      %v2875 = vadd.f32 %v2783, %v2192
      %v2876 = vadd.f32 %v2786, %v2192
      %v2877 = vadd.f32 %v2791, %v2192
      %v2878 = vadd.f32 %v2794, %v2192
      %v2879 = vadd.f32 %v2799, %v2192
      %v2880 = vadd.f32 %v2802, %v2192
      %v2881 = vpack.c.bf16 %v2866, %v2865
      %v2882 = vpack.c.bf16 %v2868, %v2867
      %v2883 = vpack.c.bf16 %v2870, %v2869
      %v2884 = vpack.c.bf16 %v2872, %v2871
      %v2885 = vpack.c.bf16 %v2874, %v2873
      %v2886 = vpack.c.bf16 %v2876, %v2875
      %v2887 = vpack.c.bf16 %v2878, %v2877
      %v2888 = vpack.c.bf16 %v2880, %v2879
      %v2897 = vunpack.c.l.b16 %v2881
      %v2898 = vunpack.c.h.b16 %v2881
      %v2899 = vunpack.c.l.b16 %v2882
      %v2900 = vunpack.c.h.b16 %v2882
      %v2901 = vunpack.c.l.b16 %v2883
      %v2902 = vunpack.c.h.b16 %v2883
      %v2903 = vunpack.c.l.b16 %v2884
      %v2904 = vunpack.c.h.b16 %v2884
      %v2905 = vunpack.c.l.b16 %v2885
      %v2906 = vunpack.c.h.b16 %v2885
      %v2907 = vunpack.c.l.b16 %v2886
      %v2908 = vunpack.c.h.b16 %v2886
      %v2909 = vunpack.c.l.b16 %v2887
      %v2910 = vunpack.c.h.b16 %v2887
      %v2911 = vunpack.c.l.b16 %v2888
      %v2912 = vunpack.c.h.b16 %v2888
      %v2913 = vpack.c.b16 %v2897, %v2897
      %v2914 = vpack.c.b16 %v2898, %v2898
      %v2915 = vpack.c.b16 %v2899, %v2899
      %v2916 = vpack.c.b16 %v2900, %v2900
      %v2917 = vpack.c.b16 %v2901, %v2901
      %v2918 = vpack.c.b16 %v2902, %v2902
      %v2919 = vpack.c.b16 %v2903, %v2903
      %v2920 = vpack.c.b16 %v2904, %v2904
      %v2921 = vpack.c.b16 %v2905, %v2905
      %v2922 = vpack.c.b16 %v2906, %v2906
      %v2923 = vpack.c.b16 %v2907, %v2907
      %v2924 = vpack.c.b16 %v2908, %v2908
      %v2925 = vpack.c.b16 %v2909, %v2909
      %v2926 = vpack.c.b16 %v2910, %v2910
      %v2927 = vpack.c.b16 %v2911, %v2911
      %v2928 = vpack.c.b16 %v2912, %v2912
      %2945 = vst [vmem:[%s343 + $0x4] sm:$0xf] %v2913
      %2946 = vst [vmem:[%s343 + $0xc] sm:$0xf] %v2914
      %2947 = vst [vmem:[%s343 + $0x24] sm:$0xf] %v2915
      %2948 = vst [vmem:[%s343 + $0x2c] sm:$0xf] %v2916
      %2949 = vst [vmem:[%s343 + $0x44] sm:$0xf] %v2917
      %2950 = vst [vmem:[%s343 + $0x4c] sm:$0xf] %v2918
      %2951 = vst [vmem:[%s343 + $0x64] sm:$0xf] %v2919
      %2952 = vst [vmem:[%s343 + $0x6c] sm:$0xf] %v2920
      %2953 = vst [vmem:[%s343 + $0x84] sm:$0xf] %v2921
      %2954 = vst [vmem:[%s343 + $0x8c] sm:$0xf] %v2922
      %2955 = vst [vmem:[%s343 + $0xa4] sm:$0xf] %v2923
      %2956 = vst [vmem:[%s343 + $0xac] sm:$0xf] %v2924
      %2957 = vst [vmem:[%s343 + $0xc4] sm:$0xf] %v2925
      %2958 = vst [vmem:[%s343 + $0xcc] sm:$0xf] %v2926
      %2959 = vst [vmem:[%s343 + $0xe4] sm:$0xf] %v2927
      %2960 = vst [vmem:[%s343 + $0xec] sm:$0xf] %v2928
      %v2969 = vunpack.c.l.b16 %v983
      %v2970 = vunpack.c.l.b16 %v984
      %v2971 = vunpack.c.l.b16 %v985
      %v2972 = vunpack.c.l.b16 %v986
      %v2973 = vunpack.c.l.b16 %v987
      %v2974 = vunpack.c.l.b16 %v988
      %v2975 = vunpack.c.l.b16 %v989
      %v2976 = vunpack.c.l.b16 %v990
      %v2977 = vunpack.c.l.b16 %v991
      %v2978 = vunpack.c.l.b16 %v992
      %v2979 = vunpack.c.l.b16 %v993
      %v2980 = vunpack.c.l.b16 %v994
      %v2981 = vunpack.c.l.b16 %v995
      %v2982 = vunpack.c.l.b16 %v996
      %v2983 = vunpack.c.l.b16 %v997
      %v2984 = vunpack.c.l.b16 %v998
      %v2985 = vpack.c.b16 %v2970, %v2969
      %v2986 = vpack.c.b16 %v2972, %v2971
      %v2987 = vpack.c.b16 %v2974, %v2973
      %v2988 = vpack.c.b16 %v2976, %v2975
      %v2989 = vpack.c.b16 %v2978, %v2977
      %v2990 = vpack.c.b16 %v2980, %v2979
      %v2991 = vpack.c.b16 %v2982, %v2981
      %v2992 = vpack.c.b16 %v2984, %v2983
      %v3001 = vunpack.c.l.b16 %v1020
      %v3002 = vunpack.c.l.b16 %v1030
      %v3003 = vunpack.c.l.b16 %v1044
      %v3004 = vunpack.c.l.b16 %v1054
      %v3005 = vunpack.c.l.b16 %v1068
      %v3006 = vunpack.c.l.b16 %v1078
      %v3007 = vunpack.c.l.b16 %v1092
      %v3008 = vunpack.c.l.b16 %v1102
      %v3009 = vunpack.c.l.b16 %v1116
      %v3010 = vunpack.c.l.b16 %v1126
      %v3011 = vunpack.c.l.b16 %v1140
      %v3012 = vunpack.c.l.b16 %v1150
      %v3013 = vunpack.c.l.b16 %v1164
      %v3014 = vunpack.c.l.b16 %v1174
      %v3015 = vunpack.c.l.b16 %v1188
      %v3016 = vunpack.c.l.b16 %v1198
      %v3017 = vpack.c.b16 %v3002, %v3001
      %v3018 = vpack.c.b16 %v3004, %v3003
      %v3019 = vpack.c.b16 %v3006, %v3005
      %v3020 = vpack.c.b16 %v3008, %v3007
      %v3021 = vpack.c.b16 %v3010, %v3009
      %v3022 = vpack.c.b16 %v3012, %v3011
      %v3023 = vpack.c.b16 %v3014, %v3013
      %v3024 = vpack.c.b16 %v3016, %v3015
      %s3033 = scalar_lea.vmem %s1, 512
      %v3034 = vld [vmem:[%s3033] sm:$0xf]
      %v3035 = vld [vmem:[%s3033 + $0x4] sm:$0xf]
      %v3036 = vld [vmem:[%s3033 + $0x8] sm:$0xf]
      %v3037 = vld [vmem:[%s3033 + $0xc] sm:$0xf]
      %v3038 = vld [vmem:[%s3033 + $0x10] sm:$0xf]
      %v3039 = vld [vmem:[%s3033 + $0x14] sm:$0xf]
      %v3040 = vld [vmem:[%s3033 + $0x18] sm:$0xf]
      %v3041 = vld [vmem:[%s3033 + $0x1c] sm:$0xf]
      %v3042 = vld [vmem:[%s3033 + $0x20] sm:$0xf]
      %v3043 = vld [vmem:[%s3033 + $0x24] sm:$0xf]
      %v3044 = vld [vmem:[%s3033 + $0x28] sm:$0xf]
      %v3045 = vld [vmem:[%s3033 + $0x2c] sm:$0xf]
      %v3046 = vld [vmem:[%s3033 + $0x30] sm:$0xf]
      %v3047 = vld [vmem:[%s3033 + $0x34] sm:$0xf]
      %v3048 = vld [vmem:[%s3033 + $0x38] sm:$0xf]
      %v3049 = vld [vmem:[%s3033 + $0x3c] sm:$0xf]
      %v3050 = vld [vmem:[%s3033 + $0x40] sm:$0xf]
      %v3051 = vld [vmem:[%s3033 + $0x44] sm:$0xf]
      %v3052 = vld [vmem:[%s3033 + $0x48] sm:$0xf]
      %v3053 = vld [vmem:[%s3033 + $0x4c] sm:$0xf]
      %v3054 = vld [vmem:[%s3033 + $0x50] sm:$0xf]
      %v3055 = vld [vmem:[%s3033 + $0x54] sm:$0xf]
      %v3056 = vld [vmem:[%s3033 + $0x58] sm:$0xf]
      %v3057 = vld [vmem:[%s3033 + $0x5c] sm:$0xf]
      %v3058 = vld [vmem:[%s3033 + $0x60] sm:$0xf]
      %v3059 = vld [vmem:[%s3033 + $0x64] sm:$0xf]
      %v3060 = vld [vmem:[%s3033 + $0x68] sm:$0xf]
      %v3061 = vld [vmem:[%s3033 + $0x6c] sm:$0xf]
      %v3062 = vld [vmem:[%s3033 + $0x70] sm:$0xf]
      %v3063 = vld [vmem:[%s3033 + $0x74] sm:$0xf]
      %v3064 = vld [vmem:[%s3033 + $0x78] sm:$0xf]
      %v3065 = vld [vmem:[%s3033 + $0x7c] sm:$0xf]
      %v3066 = vld [vmem:[%s3033 + $0x80] sm:$0xf]
      %v3067 = vld [vmem:[%s3033 + $0x84] sm:$0xf]
      %v3068 = vld [vmem:[%s3033 + $0x88] sm:$0xf]
      %v3069 = vld [vmem:[%s3033 + $0x8c] sm:$0xf]
      %v3070 = vld [vmem:[%s3033 + $0x90] sm:$0xf]
      %v3071 = vld [vmem:[%s3033 + $0x94] sm:$0xf]
      %v3072 = vld [vmem:[%s3033 + $0x98] sm:$0xf]
      %v3073 = vld [vmem:[%s3033 + $0x9c] sm:$0xf]
      %v3074 = vld [vmem:[%s3033 + $0xa0] sm:$0xf]
      %v3075 = vld [vmem:[%s3033 + $0xa4] sm:$0xf]
      %v3076 = vld [vmem:[%s3033 + $0xa8] sm:$0xf]
      %v3077 = vld [vmem:[%s3033 + $0xac] sm:$0xf]
      %v3078 = vld [vmem:[%s3033 + $0xb0] sm:$0xf]
      %v3079 = vld [vmem:[%s3033 + $0xb4] sm:$0xf]
      %v3080 = vld [vmem:[%s3033 + $0xb8] sm:$0xf]
      %v3081 = vld [vmem:[%s3033 + $0xbc] sm:$0xf]
      %v3082 = vld [vmem:[%s3033 + $0xc0] sm:$0xf]
      %v3083 = vld [vmem:[%s3033 + $0xc4] sm:$0xf]
      %v3084 = vld [vmem:[%s3033 + $0xc8] sm:$0xf]
      %v3085 = vld [vmem:[%s3033 + $0xcc] sm:$0xf]
      %v3086 = vld [vmem:[%s3033 + $0xd0] sm:$0xf]
      %v3087 = vld [vmem:[%s3033 + $0xd4] sm:$0xf]
      %v3088 = vld [vmem:[%s3033 + $0xd8] sm:$0xf]
      %v3089 = vld [vmem:[%s3033 + $0xdc] sm:$0xf]
      %v3090 = vld [vmem:[%s3033 + $0xe0] sm:$0xf]
      %v3091 = vld [vmem:[%s3033 + $0xe4] sm:$0xf]
      %v3092 = vld [vmem:[%s3033 + $0xe8] sm:$0xf]
      %v3093 = vld [vmem:[%s3033 + $0xec] sm:$0xf]
      %v3094 = vld [vmem:[%s3033 + $0xf0] sm:$0xf]
      %v3095 = vld [vmem:[%s3033 + $0xf4] sm:$0xf]
      %v3096 = vld [vmem:[%s3033 + $0xf8] sm:$0xf]
      %v3097 = vld [vmem:[%s3033 + $0xfc] sm:$0xf]
      %v3162 = vunpack.c.l.b16 %v3034
      %v3163 = vunpack.c.l.b16 %v3035
      %v3164 = vunpack.c.l.b16 %v3036
      %v3165 = vunpack.c.l.b16 %v3037
      %v3166 = vunpack.c.l.b16 %v3038
      %v3167 = vunpack.c.l.b16 %v3039
      %v3168 = vunpack.c.l.b16 %v3040
      %v3169 = vunpack.c.l.b16 %v3041
      %v3170 = vunpack.c.l.b16 %v3042
      %v3171 = vunpack.c.l.b16 %v3043
      %v3172 = vunpack.c.l.b16 %v3044
      %v3173 = vunpack.c.l.b16 %v3045
      %v3174 = vunpack.c.l.b16 %v3046
      %v3175 = vunpack.c.l.b16 %v3047
      %v3176 = vunpack.c.l.b16 %v3048
      %v3177 = vunpack.c.l.b16 %v3049
      %v3178 = vunpack.c.l.b16 %v3050
      %v3179 = vunpack.c.l.b16 %v3051
      %v3180 = vunpack.c.l.b16 %v3052
      %v3181 = vunpack.c.l.b16 %v3053
      %v3182 = vunpack.c.l.b16 %v3054
      %v3183 = vunpack.c.l.b16 %v3055
      %v3184 = vunpack.c.l.b16 %v3056
      %v3185 = vunpack.c.l.b16 %v3057
      %v3186 = vunpack.c.l.b16 %v3058
      %v3187 = vunpack.c.l.b16 %v3059
      %v3188 = vunpack.c.l.b16 %v3060
      %v3189 = vunpack.c.l.b16 %v3061
      %v3190 = vunpack.c.l.b16 %v3062
      %v3191 = vunpack.c.l.b16 %v3063
      %v3192 = vunpack.c.l.b16 %v3064
      %v3193 = vunpack.c.l.b16 %v3065
      %v3194 = vunpack.c.l.b16 %v3066
      %v3195 = vunpack.c.l.b16 %v3067
      %v3196 = vunpack.c.l.b16 %v3068
      %v3197 = vunpack.c.l.b16 %v3069
      %v3198 = vunpack.c.l.b16 %v3070
      %v3199 = vunpack.c.l.b16 %v3071
      %v3200 = vunpack.c.l.b16 %v3072
      %v3201 = vunpack.c.l.b16 %v3073
      %v3202 = vunpack.c.l.b16 %v3074
      %v3203 = vunpack.c.l.b16 %v3075
      %v3204 = vunpack.c.l.b16 %v3076
      %v3205 = vunpack.c.l.b16 %v3077
      %v3206 = vunpack.c.l.b16 %v3078
      %v3207 = vunpack.c.l.b16 %v3079
      %v3208 = vunpack.c.l.b16 %v3080
      %v3209 = vunpack.c.l.b16 %v3081
      %v3210 = vunpack.c.l.b16 %v3082
      %v3211 = vunpack.c.l.b16 %v3083
      %v3212 = vunpack.c.l.b16 %v3084
      %v3213 = vunpack.c.l.b16 %v3085
      %v3214 = vunpack.c.l.b16 %v3086
      %v3215 = vunpack.c.l.b16 %v3087
      %v3216 = vunpack.c.l.b16 %v3088
      %v3217 = vunpack.c.l.b16 %v3089
      %v3218 = vunpack.c.l.b16 %v3090
      %v3219 = vunpack.c.l.b16 %v3091
      %v3220 = vunpack.c.l.b16 %v3092
      %v3221 = vunpack.c.l.b16 %v3093
      %v3222 = vunpack.c.l.b16 %v3094
      %v3223 = vunpack.c.l.b16 %v3095
      %v3224 = vunpack.c.l.b16 %v3096
      %v3225 = vunpack.c.l.b16 %v3097
      %v3226 = vpack.c.b16 %v3163, %v3162
      %v3227 = vpack.c.b16 %v3165, %v3164
      %v3228 = vpack.c.b16 %v3167, %v3166
      %v3229 = vpack.c.b16 %v3169, %v3168
      %v3230 = vpack.c.b16 %v3171, %v3170
      %v3231 = vpack.c.b16 %v3173, %v3172
      %v3232 = vpack.c.b16 %v3175, %v3174
      %v3233 = vpack.c.b16 %v3177, %v3176
      %v3234 = vpack.c.b16 %v3179, %v3178
      %v3235 = vpack.c.b16 %v3181, %v3180
      %v3236 = vpack.c.b16 %v3183, %v3182
      %v3237 = vpack.c.b16 %v3185, %v3184
      %v3238 = vpack.c.b16 %v3187, %v3186
      %v3239 = vpack.c.b16 %v3189, %v3188
      %v3240 = vpack.c.b16 %v3191, %v3190
      %v3241 = vpack.c.b16 %v3193, %v3192
      %v3242 = vpack.c.b16 %v3195, %v3194
      %v3243 = vpack.c.b16 %v3197, %v3196
      %v3244 = vpack.c.b16 %v3199, %v3198
      %v3245 = vpack.c.b16 %v3201, %v3200
      %v3246 = vpack.c.b16 %v3203, %v3202
      %v3247 = vpack.c.b16 %v3205, %v3204
      %v3248 = vpack.c.b16 %v3207, %v3206
      %v3249 = vpack.c.b16 %v3209, %v3208
      %v3250 = vpack.c.b16 %v3211, %v3210
      %v3251 = vpack.c.b16 %v3213, %v3212
      %v3252 = vpack.c.b16 %v3215, %v3214
      %v3253 = vpack.c.b16 %v3217, %v3216
      %v3254 = vpack.c.b16 %v3219, %v3218
      %v3255 = vpack.c.b16 %v3221, %v3220
      %v3256 = vpack.c.b16 %v3223, %v3222
      %v3257 = vpack.c.b16 %v3225, %v3224
      %3290 = vmatprep.subr.bf16.mxu0 0
      %3291 = vmatpush1.bf16.msra.mxu0 %v3226
      %3292 = vmatprep.subr.bf16.mxu0 0
      %3293 = vmatpush1.bf16.msra.mxu0 %v3227
      %3294 = vmatprep.subr.bf16.mxu0 0
      %3295 = vmatpush1.bf16.msra.mxu0 %v3228
      %3296 = vmatprep.subr.bf16.mxu0 0
      %3297 = vmatpush1.bf16.msra.mxu0 %v3229
      %3298 = vmatprep.subr.bf16.mxu0 0
      %3299 = vmatpush1.bf16.msra.mxu0 %v3230
      %3300 = vmatprep.subr.bf16.mxu0 0
      %3301 = vmatpush1.bf16.msra.mxu0 %v3231
      %3302 = vmatprep.subr.bf16.mxu0 0
      %3303 = vmatpush1.bf16.msra.mxu0 %v3232
      %3304 = vmatprep.subr.bf16.mxu0 0
      %3305 = vmatpush1.bf16.msra.mxu0 %v3233
      %3306 = vmatprep.subr.bf16.mxu0 0
      %3307 = vmatpush1.bf16.msra.mxu0 %v3234
      %3308 = vmatprep.subr.bf16.mxu0 0
      %3309 = vmatpush1.bf16.msra.mxu0 %v3235
      %3310 = vmatprep.subr.bf16.mxu0 0
      %3311 = vmatpush1.bf16.msra.mxu0 %v3236
      %3312 = vmatprep.subr.bf16.mxu0 0
      %3313 = vmatpush1.bf16.msra.mxu0 %v3237
      %3314 = vmatprep.subr.bf16.mxu0 0
      %3315 = vmatpush1.bf16.msra.mxu0 %v3238
      %3316 = vmatprep.subr.bf16.mxu0 0
      %3317 = vmatpush1.bf16.msra.mxu0 %v3239
      %3318 = vmatprep.subr.bf16.mxu0 0
      %3319 = vmatpush1.bf16.msra.mxu0 %v3240
      %3320 = vmatprep.subr.bf16.mxu0 0
      %3321 = vmatpush1.bf16.msra.mxu0 %v3241
      %3322 = vmatprep.mubr.bf16.mxu0 %v1325
      %3323 = vmatmul.mubr.bf16.gmra.mrb[0].mxu0 %v1662
      %v3324 = vpop.f32.mrb[0].mxu0
      %v3325 = vadd.f32 0.0, %v3324
      %v3326 = vpop.f32.mrb[0].mxu0
      %v3327 = vpop.f32.mrb[0].mxu0
      %v3328 = vadd.f32 0.0, %v3327
      %v3329 = vpop.f32.mrb[0].mxu0
      %3330 = vmatprep.mubr.bf16.mxu0 %v1326
      %3331 = vmatmul.mubr.bf16.gmra.mrb[0].mxu0 %v1663
      %v3332 = vpop.f32.mrb[0].mxu0
      %v3333 = vadd.f32 0.0, %v3332
      %v3334 = vpop.f32.mrb[0].mxu0
      %v3335 = vpop.f32.mrb[0].mxu0
      %v3336 = vadd.f32 0.0, %v3335
      %v3337 = vpop.f32.mrb[0].mxu0
      %3338 = vmatprep.mubr.bf16.mxu0 %v1327
      %3339 = vmatmul.mubr.bf16.gmra.mrb[0].mxu0 %v1664
      %v3340 = vpop.f32.mrb[0].mxu0
      %v3341 = vadd.f32 0.0, %v3340
      %v3342 = vpop.f32.mrb[0].mxu0
      %v3343 = vpop.f32.mrb[0].mxu0
      %v3344 = vadd.f32 0.0, %v3343
      %v3345 = vpop.f32.mrb[0].mxu0
      %3346 = vmatprep.mubr.bf16.mxu0 %v1328
      %3347 = vmatmul.mubr.bf16.gmra.mrb[0].mxu0 %v1665
      %v3348 = vpop.f32.mrb[0].mxu0
      %v3349 = vadd.f32 0.0, %v3348
      %v3350 = vpop.f32.mrb[0].mxu0
      %v3351 = vpop.f32.mrb[0].mxu0
      %v3352 = vadd.f32 0.0, %v3351
      %v3353 = vpop.f32.mrb[0].mxu0
      %3354 = vmatprep.mubr.bf16.mxu0 %v1329
      %3355 = vmatmul.mubr.bf16.gmra.mrb[0].mxu0 %v1666
      %v3356 = vpop.f32.mrb[0].mxu0
      %v3357 = vadd.f32 0.0, %v3356
      %v3358 = vpop.f32.mrb[0].mxu0
      %v3359 = vpop.f32.mrb[0].mxu0
      %v3360 = vadd.f32 0.0, %v3359
      %v3361 = vpop.f32.mrb[0].mxu0
      %3362 = vmatprep.mubr.bf16.mxu0 %v1330
      %3363 = vmatmul.mubr.bf16.gmra.mrb[0].mxu0 %v1667
      %v3364 = vpop.f32.mrb[0].mxu0
      %v3365 = vadd.f32 0.0, %v3364
      %v3366 = vpop.f32.mrb[0].mxu0
      %v3367 = vpop.f32.mrb[0].mxu0
      %v3368 = vadd.f32 0.0, %v3367
      %v3369 = vpop.f32.mrb[0].mxu0
      %3370 = vmatprep.mubr.bf16.mxu0 %v1331
      %3371 = vmatmul.mubr.bf16.gmra.mrb[0].mxu0 %v1668
      %v3372 = vpop.f32.mrb[0].mxu0
      %v3373 = vadd.f32 0.0, %v3372
      %v3374 = vpop.f32.mrb[0].mxu0
      %v3375 = vpop.f32.mrb[0].mxu0
      %v3376 = vadd.f32 0.0, %v3375
      %v3377 = vpop.f32.mrb[0].mxu0
      %3378 = vmatprep.mubr.bf16.mxu0 %v1332
      %3379 = vmatmul.mubr.bf16.gmra.mrb[0].mxu0 %v1669
      %v3380 = vpop.f32.mrb[0].mxu0
      %v3381 = vadd.f32 0.0, %v3380
      %v3382 = vpop.f32.mrb[0].mxu0
      %v3383 = vpop.f32.mrb[0].mxu0
      %v3384 = vadd.f32 0.0, %v3383
      %v3385 = vpop.f32.mrb[0].mxu0
      %3386 = vdwg.mxu0
      %3387 = vmatprep.subr.bf16.mxu0 0
      %3388 = vmatpush1.bf16.msra.mxu0 %v3242
      %3389 = vmatprep.subr.bf16.mxu0 0
      %3390 = vmatpush1.bf16.msra.mxu0 %v3243
      %3391 = vmatprep.subr.bf16.mxu0 0
      %3392 = vmatpush1.bf16.msra.mxu0 %v3244
      %3393 = vmatprep.subr.bf16.mxu0 0
      %3394 = vmatpush1.bf16.msra.mxu0 %v3245
      %3395 = vmatprep.subr.bf16.mxu0 0
      %3396 = vmatpush1.bf16.msra.mxu0 %v3246
      %3397 = vmatprep.subr.bf16.mxu0 0
      %3398 = vmatpush1.bf16.msra.mxu0 %v3247
      %3399 = vmatprep.subr.bf16.mxu0 0
      %3400 = vmatpush1.bf16.msra.mxu0 %v3248
      %3401 = vmatprep.subr.bf16.mxu0 0
      %3402 = vmatpush1.bf16.msra.mxu0 %v3249
      %3403 = vmatprep.subr.bf16.mxu0 0
      %3404 = vmatpush1.bf16.msra.mxu0 %v3250
      %3405 = vmatprep.subr.bf16.mxu0 0
      %3406 = vmatpush1.bf16.msra.mxu0 %v3251
      %3407 = vmatprep.subr.bf16.mxu0 0
      %3408 = vmatpush1.bf16.msra.mxu0 %v3252
      %3409 = vmatprep.subr.bf16.mxu0 0
      %3410 = vmatpush1.bf16.msra.mxu0 %v3253
      %3411 = vmatprep.subr.bf16.mxu0 0
      %3412 = vmatpush1.bf16.msra.mxu0 %v3254
      %3413 = vmatprep.subr.bf16.mxu0 0
      %3414 = vmatpush1.bf16.msra.mxu0 %v3255
      %3415 = vmatprep.subr.bf16.mxu0 0
      %3416 = vmatpush1.bf16.msra.mxu0 %v3256
      %3417 = vmatprep.subr.bf16.mxu0 0
      %3418 = vmatpush1.bf16.msra.mxu0 %v3257
      %3419 = vmatprep.mubr.bf16.mxu0 %v3017
      %3420 = vmatmul.mubr.bf16.gmra.mrb[0].mxu0 %v2985
      %v3421 = vpop.f32.mrb[0].mxu0
      %v3422 = vadd.f32 %v3325, %v3421
      %v3423 = vpop.f32.mrb[0].mxu0
      %v3424 = vpop.f32.mrb[0].mxu0
      %v3425 = vadd.f32 %v3328, %v3424
      %v3426 = vpop.f32.mrb[0].mxu0
      %3427 = vmatprep.mubr.bf16.mxu0 %v3018
      %3428 = vmatmul.mubr.bf16.gmra.mrb[0].mxu0 %v2986
      %v3429 = vpop.f32.mrb[0].mxu0
      %v3430 = vadd.f32 %v3333, %v3429
      %v3431 = vpop.f32.mrb[0].mxu0
      %v3432 = vpop.f32.mrb[0].mxu0
      %v3433 = vadd.f32 %v3336, %v3432
      %v3434 = vpop.f32.mrb[0].mxu0
      %3435 = vmatprep.mubr.bf16.mxu0 %v3019
      %3436 = vmatmul.mubr.bf16.gmra.mrb[0].mxu0 %v2987
      %v3437 = vpop.f32.mrb[0].mxu0
      %v3438 = vadd.f32 %v3341, %v3437
      %v3439 = vpop.f32.mrb[0].mxu0
      %v3440 = vpop.f32.mrb[0].mxu0
      %v3441 = vadd.f32 %v3344, %v3440
      %v3442 = vpop.f32.mrb[0].mxu0
      %3443 = vmatprep.mubr.bf16.mxu0 %v3020
      %3444 = vmatmul.mubr.bf16.gmra.mrb[0].mxu0 %v2988
      %v3445 = vpop.f32.mrb[0].mxu0
      %v3446 = vadd.f32 %v3349, %v3445
      %v3447 = vpop.f32.mrb[0].mxu0
      %v3448 = vpop.f32.mrb[0].mxu0
      %v3449 = vadd.f32 %v3352, %v3448
      %v3450 = vpop.f32.mrb[0].mxu0
      %3451 = vmatprep.mubr.bf16.mxu0 %v3021
      %3452 = vmatmul.mubr.bf16.gmra.mrb[0].mxu0 %v2989
      %v3453 = vpop.f32.mrb[0].mxu0
      %v3454 = vadd.f32 %v3357, %v3453
      %v3455 = vpop.f32.mrb[0].mxu0
      %v3456 = vpop.f32.mrb[0].mxu0
      %v3457 = vadd.f32 %v3360, %v3456
      %v3458 = vpop.f32.mrb[0].mxu0
      %3459 = vmatprep.mubr.bf16.mxu0 %v3022
      %3460 = vmatmul.mubr.bf16.gmra.mrb[0].mxu0 %v2990
      %v3461 = vpop.f32.mrb[0].mxu0
      %v3462 = vadd.f32 %v3365, %v3461
      %v3463 = vpop.f32.mrb[0].mxu0
      %v3464 = vpop.f32.mrb[0].mxu0
      %v3465 = vadd.f32 %v3368, %v3464
      %v3466 = vpop.f32.mrb[0].mxu0
      %3467 = vmatprep.mubr.bf16.mxu0 %v3023
      %3468 = vmatmul.mubr.bf16.gmra.mrb[0].mxu0 %v2991
      %v3469 = vpop.f32.mrb[0].mxu0
      %v3470 = vadd.f32 %v3373, %v3469
      %v3471 = vpop.f32.mrb[0].mxu0
      %v3472 = vpop.f32.mrb[0].mxu0
      %v3473 = vadd.f32 %v3376, %v3472
      %v3474 = vpop.f32.mrb[0].mxu0
      %3475 = vmatprep.mubr.bf16.mxu0 %v3024
      %3476 = vmatmul.mubr.bf16.gmra.mrb[0].mxu0 %v2992
      %v3477 = vpop.f32.mrb[0].mxu0
      %v3478 = vadd.f32 %v3381, %v3477
      %v3479 = vpop.f32.mrb[0].mxu0
      %v3480 = vpop.f32.mrb[0].mxu0
      %v3481 = vadd.f32 %v3384, %v3480
      %v3482 = vpop.f32.mrb[0].mxu0
      %3483 = vdwg.mxu0
      %v3484 = vadd.f32 %v3422, %v3425
      %v3485 = vadd.f32 %v3484, %v3430
      %v3486 = vadd.f32 %v3485, %v3433
      %v3487 = vadd.f32 %v3486, %v3438
      %v3488 = vadd.f32 %v3487, %v3441
      %v3489 = vadd.f32 %v3488, %v3446
      %v3490 = vadd.f32 %v3489, %v3449
      %v3491 = vadd.f32 %v3490, %v3454
      %v3492 = vadd.f32 %v3491, %v3457
      %v3493 = vadd.f32 %v3492, %v3462
      %v3494 = vadd.f32 %v3493, %v3465
      %v3495 = vadd.f32 %v3494, %v3470
      %v3496 = vadd.f32 %v3495, %v3473
      %v3497 = vadd.f32 %v3496, %v3478
      %v3498 = vadd.f32 %v3497, %v3481
      %v3499 = vrot.slane %v3498, 4
      %v3500 = vadd.f32 %v3498, %v3499
      %v3501 = vrot.slane %v3500, 2
      %v3502 = vadd.f32 %v3500, %v3501
      %v3503 = vrot.slane %v3502, 1
      %v3504 = vadd.f32 %v3502, %v3503
      %v3505 = vadd.f32 %v2826, %v3504
      %v3506 = vmul.f32 %v3422, %v3422
      %v3507 = vmul.f32 %v3425, %v3425
      %v3508 = vmul.f32 %v3430, %v3430
      %v3509 = vmul.f32 %v3433, %v3433
      %v3510 = vmul.f32 %v3438, %v3438
      %v3511 = vmul.f32 %v3441, %v3441
      %v3512 = vmul.f32 %v3446, %v3446
      %v3513 = vmul.f32 %v3449, %v3449
      %v3514 = vmul.f32 %v3454, %v3454
      %v3515 = vmul.f32 %v3457, %v3457
      %v3516 = vmul.f32 %v3462, %v3462
      %v3517 = vmul.f32 %v3465, %v3465
      %v3518 = vmul.f32 %v3470, %v3470
      %v3519 = vmul.f32 %v3473, %v3473
      %v3520 = vmul.f32 %v3478, %v3478
      %v3521 = vmul.f32 %v3481, %v3481
      %v3522 = vadd.f32 %v3506, %v3507
      %v3523 = vadd.f32 %v3522, %v3508
      %v3524 = vadd.f32 %v3523, %v3509
      %v3525 = vadd.f32 %v3524, %v3510
      %v3526 = vadd.f32 %v3525, %v3511
      %v3527 = vadd.f32 %v3526, %v3512
      %v3528 = vadd.f32 %v3527, %v3513
      %v3529 = vadd.f32 %v3528, %v3514
      %v3530 = vadd.f32 %v3529, %v3515
      %v3531 = vadd.f32 %v3530, %v3516
      %v3532 = vadd.f32 %v3531, %v3517
      %v3533 = vadd.f32 %v3532, %v3518
      %v3534 = vadd.f32 %v3533, %v3519
      %v3535 = vadd.f32 %v3534, %v3520
      %v3536 = vadd.f32 %v3535, %v3521
      %v3537 = vrot.slane %v3536, 4
      %v3538 = vadd.f32 %v3536, %v3537
      %v3539 = vrot.slane %v3538, 2
      %v3540 = vadd.f32 %v3538, %v3539
      %v3541 = vrot.slane %v3540, 1
      %v3542 = vadd.f32 %v3540, %v3541
      %v3543 = vadd.f32 %v2864, %v3542
      %v3544 = vadd.f32 %v3422, %v2192
      %v3545 = vadd.f32 %v3425, %v2192
      %v3546 = vadd.f32 %v3430, %v2192
      %v3547 = vadd.f32 %v3433, %v2192
      %v3548 = vadd.f32 %v3438, %v2192
      %v3549 = vadd.f32 %v3441, %v2192
      %v3550 = vadd.f32 %v3446, %v2192
      %v3551 = vadd.f32 %v3449, %v2192
      %v3552 = vadd.f32 %v3454, %v2192
      %v3553 = vadd.f32 %v3457, %v2192
      %v3554 = vadd.f32 %v3462, %v2192
      %v3555 = vadd.f32 %v3465, %v2192
      %v3556 = vadd.f32 %v3470, %v2192
      %v3557 = vadd.f32 %v3473, %v2192
      %v3558 = vadd.f32 %v3478, %v2192
      %v3559 = vadd.f32 %v3481, %v2192
      %v3560 = vpack.c.bf16 %v3545, %v3544
      %v3561 = vpack.c.bf16 %v3547, %v3546
      %v3562 = vpack.c.bf16 %v3549, %v3548
      %v3563 = vpack.c.bf16 %v3551, %v3550
      %v3564 = vpack.c.bf16 %v3553, %v3552
      %v3565 = vpack.c.bf16 %v3555, %v3554
      %v3566 = vpack.c.bf16 %v3557, %v3556
      %v3567 = vpack.c.bf16 %v3559, %v3558
      %v3576 = vunpack.c.l.b16 %v3560
      %v3577 = vunpack.c.h.b16 %v3560
      %v3578 = vunpack.c.l.b16 %v3561
      %v3579 = vunpack.c.h.b16 %v3561
      %v3580 = vunpack.c.l.b16 %v3562
      %v3581 = vunpack.c.h.b16 %v3562
      %v3582 = vunpack.c.l.b16 %v3563
      %v3583 = vunpack.c.h.b16 %v3563
      %v3584 = vunpack.c.l.b16 %v3564
      %v3585 = vunpack.c.h.b16 %v3564
      %v3586 = vunpack.c.l.b16 %v3565
      %v3587 = vunpack.c.h.b16 %v3565
      %v3588 = vunpack.c.l.b16 %v3566
      %v3589 = vunpack.c.h.b16 %v3566
      %v3590 = vunpack.c.l.b16 %v3567
      %v3591 = vunpack.c.h.b16 %v3567
      %v3592 = vpack.c.b16 %v3576, %v3576
      %v3593 = vpack.c.b16 %v3577, %v3577
      %v3594 = vpack.c.b16 %v3578, %v3578
      %v3595 = vpack.c.b16 %v3579, %v3579
      %v3596 = vpack.c.b16 %v3580, %v3580
      %v3597 = vpack.c.b16 %v3581, %v3581
      %v3598 = vpack.c.b16 %v3582, %v3582
      %v3599 = vpack.c.b16 %v3583, %v3583
      %v3600 = vpack.c.b16 %v3584, %v3584
      %v3601 = vpack.c.b16 %v3585, %v3585
      %v3602 = vpack.c.b16 %v3586, %v3586
      %v3603 = vpack.c.b16 %v3587, %v3587
      %v3604 = vpack.c.b16 %v3588, %v3588
      %v3605 = vpack.c.b16 %v3589, %v3589
      %v3606 = vpack.c.b16 %v3590, %v3590
      %v3607 = vpack.c.b16 %v3591, %v3591
      %s3624 = scalar_lea.vmem %s343, 16
      %3625 = vst [vmem:[%s3624] sm:$0xf] %v3592
      %3626 = vst [vmem:[%s3624 + $0x8] sm:$0xf] %v3593
      %3627 = vst [vmem:[%s3624 + $0x20] sm:$0xf] %v3594
      %3628 = vst [vmem:[%s3624 + $0x28] sm:$0xf] %v3595
      %3629 = vst [vmem:[%s3624 + $0x40] sm:$0xf] %v3596
      %3630 = vst [vmem:[%s3624 + $0x48] sm:$0xf] %v3597
      %3631 = vst [vmem:[%s3624 + $0x60] sm:$0xf] %v3598
      %3632 = vst [vmem:[%s3624 + $0x68] sm:$0xf] %v3599
      %3633 = vst [vmem:[%s3624 + $0x80] sm:$0xf] %v3600
      %3634 = vst [vmem:[%s3624 + $0x88] sm:$0xf] %v3601
      %3635 = vst [vmem:[%s3624 + $0xa0] sm:$0xf] %v3602
      %3636 = vst [vmem:[%s3624 + $0xa8] sm:$0xf] %v3603
      %3637 = vst [vmem:[%s3624 + $0xc0] sm:$0xf] %v3604
      %3638 = vst [vmem:[%s3624 + $0xc8] sm:$0xf] %v3605
      %3639 = vst [vmem:[%s3624 + $0xe0] sm:$0xf] %v3606
      %3640 = vst [vmem:[%s3624 + $0xe8] sm:$0xf] %v3607
      %v3641 = vunpack.c.l.b16 %v1234
      %v3642 = vunpack.c.l.b16 %v1237
      %v3643 = vunpack.c.l.b16 %v1241
      %v3644 = vunpack.c.l.b16 %v1244
      %v3645 = vunpack.c.l.b16 %v1248
      %v3646 = vunpack.c.l.b16 %v1251
      %v3647 = vunpack.c.l.b16 %v1255
      %v3648 = vunpack.c.l.b16 %v1258
      %v3649 = vunpack.c.l.b16 %v1262
      %v3650 = vunpack.c.l.b16 %v1265
      %v3651 = vunpack.c.l.b16 %v1269
      %v3652 = vunpack.c.l.b16 %v1272
      %v3653 = vunpack.c.l.b16 %v1276
      %v3654 = vunpack.c.l.b16 %v1279
      %v3655 = vunpack.c.l.b16 %v1283
      %v3656 = vunpack.c.l.b16 %v1286
      %v3657 = vpack.c.b16 %v3642, %v3641
      %v3658 = vpack.c.b16 %v3644, %v3643
      %v3659 = vpack.c.b16 %v3646, %v3645
      %v3660 = vpack.c.b16 %v3648, %v3647
      %v3661 = vpack.c.b16 %v3650, %v3649
      %v3662 = vpack.c.b16 %v3652, %v3651
      %v3663 = vpack.c.b16 %v3654, %v3653
      %v3664 = vpack.c.b16 %v3656, %v3655
      %s3673 = scalar_lea.vmem %s1, 768
      %v3674 = vld [vmem:[%s3673] sm:$0xf]
      %v3675 = vld [vmem:[%s3673 + $0x4] sm:$0xf]
      %v3676 = vld [vmem:[%s3673 + $0x8] sm:$0xf]
      %v3677 = vld [vmem:[%s3673 + $0xc] sm:$0xf]
      %v3678 = vld [vmem:[%s3673 + $0x10] sm:$0xf]
      %v3679 = vld [vmem:[%s3673 + $0x14] sm:$0xf]
      %v3680 = vld [vmem:[%s3673 + $0x18] sm:$0xf]
      %v3681 = vld [vmem:[%s3673 + $0x1c] sm:$0xf]
      %v3682 = vld [vmem:[%s3673 + $0x20] sm:$0xf]
      %v3683 = vld [vmem:[%s3673 + $0x24] sm:$0xf]
      %v3684 = vld [vmem:[%s3673 + $0x28] sm:$0xf]
      %v3685 = vld [vmem:[%s3673 + $0x2c] sm:$0xf]
      %v3686 = vld [vmem:[%s3673 + $0x30] sm:$0xf]
      %v3687 = vld [vmem:[%s3673 + $0x34] sm:$0xf]
      %v3688 = vld [vmem:[%s3673 + $0x38] sm:$0xf]
      %v3689 = vld [vmem:[%s3673 + $0x3c] sm:$0xf]
      %v3690 = vld [vmem:[%s3673 + $0x40] sm:$0xf]
      %v3691 = vld [vmem:[%s3673 + $0x44] sm:$0xf]
      %v3692 = vld [vmem:[%s3673 + $0x48] sm:$0xf]
      %v3693 = vld [vmem:[%s3673 + $0x4c] sm:$0xf]
      %v3694 = vld [vmem:[%s3673 + $0x50] sm:$0xf]
      %v3695 = vld [vmem:[%s3673 + $0x54] sm:$0xf]
      %v3696 = vld [vmem:[%s3673 + $0x58] sm:$0xf]
      %v3697 = vld [vmem:[%s3673 + $0x5c] sm:$0xf]
      %v3698 = vld [vmem:[%s3673 + $0x60] sm:$0xf]
      %v3699 = vld [vmem:[%s3673 + $0x64] sm:$0xf]
      %v3700 = vld [vmem:[%s3673 + $0x68] sm:$0xf]
      %v3701 = vld [vmem:[%s3673 + $0x6c] sm:$0xf]
      %v3702 = vld [vmem:[%s3673 + $0x70] sm:$0xf]
      %v3703 = vld [vmem:[%s3673 + $0x74] sm:$0xf]
      %v3704 = vld [vmem:[%s3673 + $0x78] sm:$0xf]
      %v3705 = vld [vmem:[%s3673 + $0x7c] sm:$0xf]
      %v3706 = vld [vmem:[%s3673 + $0x80] sm:$0xf]
      %v3707 = vld [vmem:[%s3673 + $0x84] sm:$0xf]
      %v3708 = vld [vmem:[%s3673 + $0x88] sm:$0xf]
      %v3709 = vld [vmem:[%s3673 + $0x8c] sm:$0xf]
      %v3710 = vld [vmem:[%s3673 + $0x90] sm:$0xf]
      %v3711 = vld [vmem:[%s3673 + $0x94] sm:$0xf]
      %v3712 = vld [vmem:[%s3673 + $0x98] sm:$0xf]
      %v3713 = vld [vmem:[%s3673 + $0x9c] sm:$0xf]
      %v3714 = vld [vmem:[%s3673 + $0xa0] sm:$0xf]
      %v3715 = vld [vmem:[%s3673 + $0xa4] sm:$0xf]
      %v3716 = vld [vmem:[%s3673 + $0xa8] sm:$0xf]
      %v3717 = vld [vmem:[%s3673 + $0xac] sm:$0xf]
      %v3718 = vld [vmem:[%s3673 + $0xb0] sm:$0xf]
      %v3719 = vld [vmem:[%s3673 + $0xb4] sm:$0xf]
      %v3720 = vld [vmem:[%s3673 + $0xb8] sm:$0xf]
      %v3721 = vld [vmem:[%s3673 + $0xbc] sm:$0xf]
      %v3722 = vld [vmem:[%s3673 + $0xc0] sm:$0xf]
      %v3723 = vld [vmem:[%s3673 + $0xc4] sm:$0xf]
      %v3724 = vld [vmem:[%s3673 + $0xc8] sm:$0xf]
      %v3725 = vld [vmem:[%s3673 + $0xcc] sm:$0xf]
      %v3726 = vld [vmem:[%s3673 + $0xd0] sm:$0xf]
      %v3727 = vld [vmem:[%s3673 + $0xd4] sm:$0xf]
      %v3728 = vld [vmem:[%s3673 + $0xd8] sm:$0xf]
      %v3729 = vld [vmem:[%s3673 + $0xdc] sm:$0xf]
      %v3730 = vld [vmem:[%s3673 + $0xe0] sm:$0xf]
      %v3731 = vld [vmem:[%s3673 + $0xe4] sm:$0xf]
      %v3732 = vld [vmem:[%s3673 + $0xe8] sm:$0xf]
      %v3733 = vld [vmem:[%s3673 + $0xec] sm:$0xf]
      %v3734 = vld [vmem:[%s3673 + $0xf0] sm:$0xf]
      %v3735 = vld [vmem:[%s3673 + $0xf4] sm:$0xf]
      %v3736 = vld [vmem:[%s3673 + $0xf8] sm:$0xf]
      %v3737 = vld [vmem:[%s3673 + $0xfc] sm:$0xf]
      %v3802 = vunpack.c.l.b16 %v3674
      %v3803 = vunpack.c.l.b16 %v3675
      %v3804 = vunpack.c.l.b16 %v3676
      %v3805 = vunpack.c.l.b16 %v3677
      %v3806 = vunpack.c.l.b16 %v3678
      %v3807 = vunpack.c.l.b16 %v3679
      %v3808 = vunpack.c.l.b16 %v3680
      %v3809 = vunpack.c.l.b16 %v3681
      %v3810 = vunpack.c.l.b16 %v3682
      %v3811 = vunpack.c.l.b16 %v3683
      %v3812 = vunpack.c.l.b16 %v3684
      %v3813 = vunpack.c.l.b16 %v3685
      %v3814 = vunpack.c.l.b16 %v3686
      %v3815 = vunpack.c.l.b16 %v3687
      %v3816 = vunpack.c.l.b16 %v3688
      %v3817 = vunpack.c.l.b16 %v3689
      %v3818 = vunpack.c.l.b16 %v3690
      %v3819 = vunpack.c.l.b16 %v3691
      %v3820 = vunpack.c.l.b16 %v3692
      %v3821 = vunpack.c.l.b16 %v3693
      %v3822 = vunpack.c.l.b16 %v3694
      %v3823 = vunpack.c.l.b16 %v3695
      %v3824 = vunpack.c.l.b16 %v3696
      %v3825 = vunpack.c.l.b16 %v3697
      %v3826 = vunpack.c.l.b16 %v3698
      %v3827 = vunpack.c.l.b16 %v3699
      %v3828 = vunpack.c.l.b16 %v3700
      %v3829 = vunpack.c.l.b16 %v3701
      %v3830 = vunpack.c.l.b16 %v3702
      %v3831 = vunpack.c.l.b16 %v3703
      %v3832 = vunpack.c.l.b16 %v3704
      %v3833 = vunpack.c.l.b16 %v3705
      %v3834 = vunpack.c.l.b16 %v3706
      %v3835 = vunpack.c.l.b16 %v3707
      %v3836 = vunpack.c.l.b16 %v3708
      %v3837 = vunpack.c.l.b16 %v3709
      %v3838 = vunpack.c.l.b16 %v3710
      %v3839 = vunpack.c.l.b16 %v3711
      %v3840 = vunpack.c.l.b16 %v3712
      %v3841 = vunpack.c.l.b16 %v3713
      %v3842 = vunpack.c.l.b16 %v3714
      %v3843 = vunpack.c.l.b16 %v3715
      %v3844 = vunpack.c.l.b16 %v3716
      %v3845 = vunpack.c.l.b16 %v3717
      %v3846 = vunpack.c.l.b16 %v3718
      %v3847 = vunpack.c.l.b16 %v3719
      %v3848 = vunpack.c.l.b16 %v3720
      %v3849 = vunpack.c.l.b16 %v3721
      %v3850 = vunpack.c.l.b16 %v3722
      %v3851 = vunpack.c.l.b16 %v3723
      %v3852 = vunpack.c.l.b16 %v3724
      %v3853 = vunpack.c.l.b16 %v3725
      %v3854 = vunpack.c.l.b16 %v3726
      %v3855 = vunpack.c.l.b16 %v3727
      %v3856 = vunpack.c.l.b16 %v3728
      %v3857 = vunpack.c.l.b16 %v3729
      %v3858 = vunpack.c.l.b16 %v3730
      %v3859 = vunpack.c.l.b16 %v3731
      %v3860 = vunpack.c.l.b16 %v3732
      %v3861 = vunpack.c.l.b16 %v3733
      %v3862 = vunpack.c.l.b16 %v3734
      %v3863 = vunpack.c.l.b16 %v3735
      %v3864 = vunpack.c.l.b16 %v3736
      %v3865 = vunpack.c.l.b16 %v3737
      %v3866 = vpack.c.b16 %v3803, %v3802
      %v3867 = vpack.c.b16 %v3805, %v3804
      %v3868 = vpack.c.b16 %v3807, %v3806
      %v3869 = vpack.c.b16 %v3809, %v3808
      %v3870 = vpack.c.b16 %v3811, %v3810
      %v3871 = vpack.c.b16 %v3813, %v3812
      %v3872 = vpack.c.b16 %v3815, %v3814
      %v3873 = vpack.c.b16 %v3817, %v3816
      %v3874 = vpack.c.b16 %v3819, %v3818
      %v3875 = vpack.c.b16 %v3821, %v3820
      %v3876 = vpack.c.b16 %v3823, %v3822
      %v3877 = vpack.c.b16 %v3825, %v3824
      %v3878 = vpack.c.b16 %v3827, %v3826
      %v3879 = vpack.c.b16 %v3829, %v3828
      %v3880 = vpack.c.b16 %v3831, %v3830
      %v3881 = vpack.c.b16 %v3833, %v3832
      %v3882 = vpack.c.b16 %v3835, %v3834
      %v3883 = vpack.c.b16 %v3837, %v3836
      %v3884 = vpack.c.b16 %v3839, %v3838
      %v3885 = vpack.c.b16 %v3841, %v3840
      %v3886 = vpack.c.b16 %v3843, %v3842
      %v3887 = vpack.c.b16 %v3845, %v3844
      %v3888 = vpack.c.b16 %v3847, %v3846
      %v3889 = vpack.c.b16 %v3849, %v3848
      %v3890 = vpack.c.b16 %v3851, %v3850
      %v3891 = vpack.c.b16 %v3853, %v3852
      %v3892 = vpack.c.b16 %v3855, %v3854
      %v3893 = vpack.c.b16 %v3857, %v3856
      %v3894 = vpack.c.b16 %v3859, %v3858
      %v3895 = vpack.c.b16 %v3861, %v3860
      %v3896 = vpack.c.b16 %v3863, %v3862
      %v3897 = vpack.c.b16 %v3865, %v3864
      %3930 = vmatprep.subr.bf16.mxu0 0
      %3931 = vmatpush1.bf16.msra.mxu0 %v3866
      %3932 = vmatprep.subr.bf16.mxu0 0
      %3933 = vmatpush1.bf16.msra.mxu0 %v3867
      %3934 = vmatprep.subr.bf16.mxu0 0
      %3935 = vmatpush1.bf16.msra.mxu0 %v3868
      %3936 = vmatprep.subr.bf16.mxu0 0
      %3937 = vmatpush1.bf16.msra.mxu0 %v3869
      %3938 = vmatprep.subr.bf16.mxu0 0
      %3939 = vmatpush1.bf16.msra.mxu0 %v3870
      %3940 = vmatprep.subr.bf16.mxu0 0
      %3941 = vmatpush1.bf16.msra.mxu0 %v3871
      %3942 = vmatprep.subr.bf16.mxu0 0
      %3943 = vmatpush1.bf16.msra.mxu0 %v3872
      %3944 = vmatprep.subr.bf16.mxu0 0
      %3945 = vmatpush1.bf16.msra.mxu0 %v3873
      %3946 = vmatprep.subr.bf16.mxu0 0
      %3947 = vmatpush1.bf16.msra.mxu0 %v3874
      %3948 = vmatprep.subr.bf16.mxu0 0
      %3949 = vmatpush1.bf16.msra.mxu0 %v3875
      %3950 = vmatprep.subr.bf16.mxu0 0
      %3951 = vmatpush1.bf16.msra.mxu0 %v3876
      %3952 = vmatprep.subr.bf16.mxu0 0
      %3953 = vmatpush1.bf16.msra.mxu0 %v3877
      %3954 = vmatprep.subr.bf16.mxu0 0
      %3955 = vmatpush1.bf16.msra.mxu0 %v3878
      %3956 = vmatprep.subr.bf16.mxu0 0
      %3957 = vmatpush1.bf16.msra.mxu0 %v3879
      %3958 = vmatprep.subr.bf16.mxu0 0
      %3959 = vmatpush1.bf16.msra.mxu0 %v3880
      %3960 = vmatprep.subr.bf16.mxu0 0
      %3961 = vmatpush1.bf16.msra.mxu0 %v3881
      %3962 = vmatprep.mubr.bf16.mxu0 %v2338
      %3963 = vmatmul.mubr.bf16.gmra.mrb[0].mxu0 %v1325
      %v3964 = vpop.f32.mrb[0].mxu0
      %v3965 = vadd.f32 0.0, %v3964
      %v3966 = vpop.f32.mrb[0].mxu0
      %v3967 = vpop.f32.mrb[0].mxu0
      %v3968 = vadd.f32 0.0, %v3967
      %v3969 = vpop.f32.mrb[0].mxu0
      %3970 = vmatprep.mubr.bf16.mxu0 %v2339
      %3971 = vmatmul.mubr.bf16.gmra.mrb[0].mxu0 %v1326
      %v3972 = vpop.f32.mrb[0].mxu0
      %v3973 = vadd.f32 0.0, %v3972
      %v3974 = vpop.f32.mrb[0].mxu0
      %v3975 = vpop.f32.mrb[0].mxu0
      %v3976 = vadd.f32 0.0, %v3975
      %v3977 = vpop.f32.mrb[0].mxu0
      %3978 = vmatprep.mubr.bf16.mxu0 %v2340
      %3979 = vmatmul.mubr.bf16.gmra.mrb[0].mxu0 %v1327
      %v3980 = vpop.f32.mrb[0].mxu0
      %v3981 = vadd.f32 0.0, %v3980
      %v3982 = vpop.f32.mrb[0].mxu0
      %v3983 = vpop.f32.mrb[0].mxu0
      %v3984 = vadd.f32 0.0, %v3983
      %v3985 = vpop.f32.mrb[0].mxu0
      %3986 = vmatprep.mubr.bf16.mxu0 %v2341
      %3987 = vmatmul.mubr.bf16.gmra.mrb[0].mxu0 %v1328
      %v3988 = vpop.f32.mrb[0].mxu0
      %v3989 = vadd.f32 0.0, %v3988
      %v3990 = vpop.f32.mrb[0].mxu0
      %v3991 = vpop.f32.mrb[0].mxu0
      %v3992 = vadd.f32 0.0, %v3991
      %v3993 = vpop.f32.mrb[0].mxu0
      %3994 = vmatprep.mubr.bf16.mxu0 %v2342
      %3995 = vmatmul.mubr.bf16.gmra.mrb[0].mxu0 %v1329
      %v3996 = vpop.f32.mrb[0].mxu0
      %v3997 = vadd.f32 0.0, %v3996
      %v3998 = vpop.f32.mrb[0].mxu0
      %v3999 = vpop.f32.mrb[0].mxu0
      %v4000 = vadd.f32 0.0, %v3999
      %v4001 = vpop.f32.mrb[0].mxu0
      %4002 = vmatprep.mubr.bf16.mxu0 %v2343
      %4003 = vmatmul.mubr.bf16.gmra.mrb[0].mxu0 %v1330
      %v4004 = vpop.f32.mrb[0].mxu0
      %v4005 = vadd.f32 0.0, %v4004
      %v4006 = vpop.f32.mrb[0].mxu0
      %v4007 = vpop.f32.mrb[0].mxu0
      %v4008 = vadd.f32 0.0, %v4007
      %v4009 = vpop.f32.mrb[0].mxu0
      %4010 = vmatprep.mubr.bf16.mxu0 %v2344
      %4011 = vmatmul.mubr.bf16.gmra.mrb[0].mxu0 %v1331
      %v4012 = vpop.f32.mrb[0].mxu0
      %v4013 = vadd.f32 0.0, %v4012
      %v4014 = vpop.f32.mrb[0].mxu0
      %v4015 = vpop.f32.mrb[0].mxu0
      %v4016 = vadd.f32 0.0, %v4015
      %v4017 = vpop.f32.mrb[0].mxu0
      %4018 = vmatprep.mubr.bf16.mxu0 %v2345
      %4019 = vmatmul.mubr.bf16.gmra.mrb[0].mxu0 %v1332
      %v4020 = vpop.f32.mrb[0].mxu0
      %v4021 = vadd.f32 0.0, %v4020
      %v4022 = vpop.f32.mrb[0].mxu0
      %v4023 = vpop.f32.mrb[0].mxu0
      %v4024 = vadd.f32 0.0, %v4023
      %v4025 = vpop.f32.mrb[0].mxu0
      %4026 = vdwg.mxu0
      %4027 = vmatprep.subr.bf16.mxu0 0
      %4028 = vmatpush1.bf16.msra.mxu0 %v3882
      %4029 = vmatprep.subr.bf16.mxu0 0
      %4030 = vmatpush1.bf16.msra.mxu0 %v3883
      %4031 = vmatprep.subr.bf16.mxu0 0
      %4032 = vmatpush1.bf16.msra.mxu0 %v3884
      %4033 = vmatprep.subr.bf16.mxu0 0
      %4034 = vmatpush1.bf16.msra.mxu0 %v3885
      %4035 = vmatprep.subr.bf16.mxu0 0
      %4036 = vmatpush1.bf16.msra.mxu0 %v3886
      %4037 = vmatprep.subr.bf16.mxu0 0
      %4038 = vmatpush1.bf16.msra.mxu0 %v3887
      %4039 = vmatprep.subr.bf16.mxu0 0
      %4040 = vmatpush1.bf16.msra.mxu0 %v3888
      %4041 = vmatprep.subr.bf16.mxu0 0
      %4042 = vmatpush1.bf16.msra.mxu0 %v3889
      %4043 = vmatprep.subr.bf16.mxu0 0
      %4044 = vmatpush1.bf16.msra.mxu0 %v3890
      %4045 = vmatprep.subr.bf16.mxu0 0
      %4046 = vmatpush1.bf16.msra.mxu0 %v3891
      %4047 = vmatprep.subr.bf16.mxu0 0
      %4048 = vmatpush1.bf16.msra.mxu0 %v3892
      %4049 = vmatprep.subr.bf16.mxu0 0
      %4050 = vmatpush1.bf16.msra.mxu0 %v3893
      %4051 = vmatprep.subr.bf16.mxu0 0
      %4052 = vmatpush1.bf16.msra.mxu0 %v3894
      %4053 = vmatprep.subr.bf16.mxu0 0
      %4054 = vmatpush1.bf16.msra.mxu0 %v3895
      %4055 = vmatprep.subr.bf16.mxu0 0
      %4056 = vmatpush1.bf16.msra.mxu0 %v3896
      %4057 = vmatprep.subr.bf16.mxu0 0
      %4058 = vmatpush1.bf16.msra.mxu0 %v3897
      %4059 = vmatprep.mubr.bf16.mxu0 %v3657
      %4060 = vmatmul.mubr.bf16.gmra.mrb[0].mxu0 %v3017
      %v4061 = vpop.f32.mrb[0].mxu0
      %v4062 = vadd.f32 %v3965, %v4061
      %v4063 = vpop.f32.mrb[0].mxu0
      %v4064 = vpop.f32.mrb[0].mxu0
      %v4065 = vadd.f32 %v3968, %v4064
      %v4066 = vpop.f32.mrb[0].mxu0
      %4067 = vmatprep.mubr.bf16.mxu0 %v3658
      %4068 = vmatmul.mubr.bf16.gmra.mrb[0].mxu0 %v3018
      %v4069 = vpop.f32.mrb[0].mxu0
      %v4070 = vadd.f32 %v3973, %v4069
      %v4071 = vpop.f32.mrb[0].mxu0
      %v4072 = vpop.f32.mrb[0].mxu0
      %v4073 = vadd.f32 %v3976, %v4072
      %v4074 = vpop.f32.mrb[0].mxu0
      %4075 = vmatprep.mubr.bf16.mxu0 %v3659
      %4076 = vmatmul.mubr.bf16.gmra.mrb[0].mxu0 %v3019
      %v4077 = vpop.f32.mrb[0].mxu0
      %v4078 = vadd.f32 %v3981, %v4077
      %v4079 = vpop.f32.mrb[0].mxu0
      %v4080 = vpop.f32.mrb[0].mxu0
      %v4081 = vadd.f32 %v3984, %v4080
      %v4082 = vpop.f32.mrb[0].mxu0
      %4083 = vmatprep.mubr.bf16.mxu0 %v3660
      %4084 = vmatmul.mubr.bf16.gmra.mrb[0].mxu0 %v3020
      %v4085 = vpop.f32.mrb[0].mxu0
      %v4086 = vadd.f32 %v3989, %v4085
      %v4087 = vpop.f32.mrb[0].mxu0
      %v4088 = vpop.f32.mrb[0].mxu0
      %v4089 = vadd.f32 %v3992, %v4088
      %v4090 = vpop.f32.mrb[0].mxu0
      %4091 = vmatprep.mubr.bf16.mxu0 %v3661
      %4092 = vmatmul.mubr.bf16.gmra.mrb[0].mxu0 %v3021
      %v4093 = vpop.f32.mrb[0].mxu0
      %v4094 = vadd.f32 %v3997, %v4093
      %v4095 = vpop.f32.mrb[0].mxu0
      %v4096 = vpop.f32.mrb[0].mxu0
      %v4097 = vadd.f32 %v4000, %v4096
      %v4098 = vpop.f32.mrb[0].mxu0
      %4099 = vmatprep.mubr.bf16.mxu0 %v3662
      %4100 = vmatmul.mubr.bf16.gmra.mrb[0].mxu0 %v3022
      %v4101 = vpop.f32.mrb[0].mxu0
      %v4102 = vadd.f32 %v4005, %v4101
      %v4103 = vpop.f32.mrb[0].mxu0
      %v4104 = vpop.f32.mrb[0].mxu0
      %v4105 = vadd.f32 %v4008, %v4104
      %v4106 = vpop.f32.mrb[0].mxu0
      %4107 = vmatprep.mubr.bf16.mxu0 %v3663
      %4108 = vmatmul.mubr.bf16.gmra.mrb[0].mxu0 %v3023
      %v4109 = vpop.f32.mrb[0].mxu0
      %v4110 = vadd.f32 %v4013, %v4109
      %v4111 = vpop.f32.mrb[0].mxu0
      %v4112 = vpop.f32.mrb[0].mxu0
      %v4113 = vadd.f32 %v4016, %v4112
      %v4114 = vpop.f32.mrb[0].mxu0
      %4115 = vmatprep.mubr.bf16.mxu0 %v3664
      %4116 = vmatmul.mubr.bf16.gmra.mrb[0].mxu0 %v3024
      %v4117 = vpop.f32.mrb[0].mxu0
      %v4118 = vadd.f32 %v4021, %v4117
      %v4119 = vpop.f32.mrb[0].mxu0
      %v4120 = vpop.f32.mrb[0].mxu0
      %v4121 = vadd.f32 %v4024, %v4120
      %v4122 = vpop.f32.mrb[0].mxu0
      %4123 = vdwg.mxu0
      %v4124 = vadd.f32 %v4062, %v4065
      %v4125 = vadd.f32 %v4124, %v4070
      %v4126 = vadd.f32 %v4125, %v4073
      %v4127 = vadd.f32 %v4126, %v4078
      %v4128 = vadd.f32 %v4127, %v4081
      %v4129 = vadd.f32 %v4128, %v4086
      %v4130 = vadd.f32 %v4129, %v4089
      %v4131 = vadd.f32 %v4130, %v4094
      %v4132 = vadd.f32 %v4131, %v4097
      %v4133 = vadd.f32 %v4132, %v4102
      %v4134 = vadd.f32 %v4133, %v4105
      %v4135 = vadd.f32 %v4134, %v4110
      %v4136 = vadd.f32 %v4135, %v4113
      %v4137 = vadd.f32 %v4136, %v4118
      %v4138 = vadd.f32 %v4137, %v4121
      %v4139 = vrot.slane %v4138, 4
      %v4140 = vadd.f32 %v4138, %v4139
      %v4141 = vrot.slane %v4140, 2
      %v4142 = vadd.f32 %v4140, %v4141
      %v4143 = vrot.slane %v4142, 1
      %v4144 = vadd.f32 %v4142, %v4143
      %v4145 = vadd.f32 %v3505, %v4144
      %v4146 = vmul.f32 %v4062, %v4062
      %v4147 = vmul.f32 %v4065, %v4065
      %v4148 = vmul.f32 %v4070, %v4070
      %v4149 = vmul.f32 %v4073, %v4073
      %v4150 = vmul.f32 %v4078, %v4078
      %v4151 = vmul.f32 %v4081, %v4081
      %v4152 = vmul.f32 %v4086, %v4086
      %v4153 = vmul.f32 %v4089, %v4089
      %v4154 = vmul.f32 %v4094, %v4094
      %v4155 = vmul.f32 %v4097, %v4097
      %v4156 = vmul.f32 %v4102, %v4102
      %v4157 = vmul.f32 %v4105, %v4105
      %v4158 = vmul.f32 %v4110, %v4110
      %v4159 = vmul.f32 %v4113, %v4113
      %v4160 = vmul.f32 %v4118, %v4118
      %v4161 = vmul.f32 %v4121, %v4121
      %v4162 = vadd.f32 %v4146, %v4147
      %v4163 = vadd.f32 %v4162, %v4148
      %v4164 = vadd.f32 %v4163, %v4149
      %v4165 = vadd.f32 %v4164, %v4150
      %v4166 = vadd.f32 %v4165, %v4151
      %v4167 = vadd.f32 %v4166, %v4152
      %v4168 = vadd.f32 %v4167, %v4153
      %v4169 = vadd.f32 %v4168, %v4154
      %v4170 = vadd.f32 %v4169, %v4155
      %v4171 = vadd.f32 %v4170, %v4156
      %v4172 = vadd.f32 %v4171, %v4157
      %v4173 = vadd.f32 %v4172, %v4158
      %v4174 = vadd.f32 %v4173, %v4159
      %v4175 = vadd.f32 %v4174, %v4160
      %v4176 = vadd.f32 %v4175, %v4161
      %v4177 = vrot.slane %v4176, 4
      %v4178 = vadd.f32 %v4176, %v4177
      %v4179 = vrot.slane %v4178, 2
      %v4180 = vadd.f32 %v4178, %v4179
      %v4181 = vrot.slane %v4180, 1
      %v4182 = vadd.f32 %v4180, %v4181
      %v4183 = vadd.f32 %v3543, %v4182
      %v4184 = vadd.f32 %v4062, %v2192
      %v4185 = vadd.f32 %v4065, %v2192
      %v4186 = vadd.f32 %v4070, %v2192
      %v4187 = vadd.f32 %v4073, %v2192
      %v4188 = vadd.f32 %v4078, %v2192
      %v4189 = vadd.f32 %v4081, %v2192
      %v4190 = vadd.f32 %v4086, %v2192
      %v4191 = vadd.f32 %v4089, %v2192
      %v4192 = vadd.f32 %v4094, %v2192
      %v4193 = vadd.f32 %v4097, %v2192
      %v4194 = vadd.f32 %v4102, %v2192
      %v4195 = vadd.f32 %v4105, %v2192
      %v4196 = vadd.f32 %v4110, %v2192
      %v4197 = vadd.f32 %v4113, %v2192
      %v4198 = vadd.f32 %v4118, %v2192
      %v4199 = vadd.f32 %v4121, %v2192
      %v4200 = vpack.c.bf16 %v4185, %v4184
      %v4201 = vpack.c.bf16 %v4187, %v4186
      %v4202 = vpack.c.bf16 %v4189, %v4188
      %v4203 = vpack.c.bf16 %v4191, %v4190
      %v4204 = vpack.c.bf16 %v4193, %v4192
      %v4205 = vpack.c.bf16 %v4195, %v4194
      %v4206 = vpack.c.bf16 %v4197, %v4196
      %v4207 = vpack.c.bf16 %v4199, %v4198
      %v4216 = vunpack.c.l.b16 %v4200
      %v4217 = vunpack.c.h.b16 %v4200
      %v4218 = vunpack.c.l.b16 %v4201
      %v4219 = vunpack.c.h.b16 %v4201
      %v4220 = vunpack.c.l.b16 %v4202
      %v4221 = vunpack.c.h.b16 %v4202
      %v4222 = vunpack.c.l.b16 %v4203
      %v4223 = vunpack.c.h.b16 %v4203
      %v4224 = vunpack.c.l.b16 %v4204
      %v4225 = vunpack.c.h.b16 %v4204
      %v4226 = vunpack.c.l.b16 %v4205
      %v4227 = vunpack.c.h.b16 %v4205
      %v4228 = vunpack.c.l.b16 %v4206
      %v4229 = vunpack.c.h.b16 %v4206
      %v4230 = vunpack.c.l.b16 %v4207
      %v4231 = vunpack.c.h.b16 %v4207
      %v4232 = vpack.c.b16 %v4216, %v4216
      %v4233 = vpack.c.b16 %v4217, %v4217
      %v4234 = vpack.c.b16 %v4218, %v4218
      %v4235 = vpack.c.b16 %v4219, %v4219
      %v4236 = vpack.c.b16 %v4220, %v4220
      %v4237 = vpack.c.b16 %v4221, %v4221
      %v4238 = vpack.c.b16 %v4222, %v4222
      %v4239 = vpack.c.b16 %v4223, %v4223
      %v4240 = vpack.c.b16 %v4224, %v4224
      %v4241 = vpack.c.b16 %v4225, %v4225
      %v4242 = vpack.c.b16 %v4226, %v4226
      %v4243 = vpack.c.b16 %v4227, %v4227
      %v4244 = vpack.c.b16 %v4228, %v4228
      %v4245 = vpack.c.b16 %v4229, %v4229
      %v4246 = vpack.c.b16 %v4230, %v4230
      %v4247 = vpack.c.b16 %v4231, %v4231
      %4264 = vst [vmem:[%s3624 + $0x4] sm:$0xf] %v4232
      %4265 = vst [vmem:[%s3624 + $0xc] sm:$0xf] %v4233
      %4266 = vst [vmem:[%s3624 + $0x24] sm:$0xf] %v4234
      %4267 = vst [vmem:[%s3624 + $0x2c] sm:$0xf] %v4235
      %4268 = vst [vmem:[%s3624 + $0x44] sm:$0xf] %v4236
      %4269 = vst [vmem:[%s3624 + $0x4c] sm:$0xf] %v4237
      %4270 = vst [vmem:[%s3624 + $0x64] sm:$0xf] %v4238
      %4271 = vst [vmem:[%s3624 + $0x6c] sm:$0xf] %v4239
      %4272 = vst [vmem:[%s3624 + $0x84] sm:$0xf] %v4240
      %4273 = vst [vmem:[%s3624 + $0x8c] sm:$0xf] %v4241
      %4274 = vst [vmem:[%s3624 + $0xa4] sm:$0xf] %v4242
      %4275 = vst [vmem:[%s3624 + $0xac] sm:$0xf] %v4243
      %4276 = vst [vmem:[%s3624 + $0xc4] sm:$0xf] %v4244
      %4277 = vst [vmem:[%s3624 + $0xcc] sm:$0xf] %v4245
      %4278 = vst [vmem:[%s3624 + $0xe4] sm:$0xf] %v4246
      %4279 = vst [vmem:[%s3624 + $0xec] sm:$0xf] %v4247
      %v4282 = vcombine.low %v4145, %v4183
      %v4284 = vunpack.c.l.s4 1966171168
      %v4285 = vunpack.c.0.s8 %v4284
      %v4286 = vlaneseq
      %v4287 = vshrl.u32 %v4286, 7
      %v4288 = vsub.s32 %v4285, %v4287
      %v4289 = vrot.slane %v4282, %v4288
      %v4291 = vunpack.c.l.s4 1966171168
      %v4292 = vunpack.c.0.s8 %v4291
      %v4293 = vlaneseq
      %v4294 = vshrl.u32 %v4293, 7
      %v4295 = vsub.s32 %v4292, %v4294
      %v4296 = vrot.slane %v4289, %v4295
      %v4298 = vlaneseq
      %vm4299 = vcmp.ge.s32.totalorder %v4298, 0
      %vm4300 = vcmp.lt.s32.totalorder %v4298, 256
      %vm4301 = vmand %vm4299, %vm4300
      %4302 = vst.msk [vmem:[%s363] sm:$0x3] %vm4301, %v4296
      %s4303 = smul.u32 8, %s24
      %p4304 = scmp.lt.s32.totalorder %s23, 1
      %s4305 = scalar_select %p4304, %s23, 1
      %p4306 = scmp.lt.s32.totalorder %s4303, 15
      %s4307 = scalar_select %p4306, %s4303, 15
      %s4308 = smul.addr %s4307, 8
      %s4309 = smul.addr %s4305, 128
      %s4310 = sadd.s32 %s4308, %s4309
      %s4311 = smul.addr %s4310, 4
      %s4312 = scalar_lea.vmem %s5, %s4311
      %s4313 = smul.u32 8, %s24
      %p4314 = scmp.lt.s32.totalorder %s23, 1
      %s4315 = scalar_select %p4314, %s23, 1
      %p4316 = scmp.lt.s32.totalorder %s4313, 15
      %s4317 = scalar_select %p4316, %s4313, 15
      %s4318 = smul.addr %s4317, 2
      %s4319 = smul.addr %s4315, 32
      %s4320 = sadd.s32 %s4318, %s4319
      %s4321 = smul.addr %s4320, 4
      %s4322 = scalar_lea.vmem %s6, %s4321
      %p4323 = scmp.lt.s32.totalorder %s23, 1
      %s4324 = scalar_select %p4323, %s23, 1
      %p4325 = scmp.lt.s32.totalorder %s24, 1
      %s4326 = scalar_select %p4325, %s24, 1
      %s4327 = smul.addr %s4326, 2
      %s4328 = smul.addr %s4324, 4
      %s4329 = sadd.s32 %s4327, %s4328
      %s4330 = scalar_lea.vmem %s7, %s4329
      // Predicated region
      $region41: #{deconv_res_block_forward.2} parent=39 // pred_check
        %p4331 = pneg %p163
      $region42: #{deconv_res_block_forward.2} parent=39 // pred_check_branch
        %4333 = sbr.rel (%p4331) target = $region44
      $region43: #{deconv_res_block_forward.2} parent=39 // pred_region
        %s4334 = smul.u32 8, %s24
      $region44: #{deconv_res_block_forward.2} parent=39 // pred_fallthru
        _
      // Predicated region
      $region45: #{deconv_res_block_forward.2} parent=39 // pred_check
        %p4335 = pneg %p191
      $region46: #{deconv_res_block_forward.2} parent=39 // pred_check_branch
        %4337 = sbr.rel (%p4335) target = $region48
      $region47: #{deconv_res_block_forward.2} parent=39 // pred_region
        %s4338 = smul.u32 8, %s24
      $region48: #{deconv_res_block_forward.2} parent=39 // pred_fallthru
        _
      // Predicated region
      $region49: #{deconv_res_block_forward.2} parent=39 // pred_check
        %p4339 = pneg %p219
      $region50: #{deconv_res_block_forward.2} parent=39 // pred_check_branch
        %4341 = sbr.rel (%p4339) target = $region52
      $region51: #{deconv_res_block_forward.2} parent=39 // pred_region
        _
      $region52: #{deconv_res_block_forward.2} parent=39 // pred_fallthru
        _
    $region40: #{deconv_res_block_forward.2} parent=5 // pred_fallthru
      _
    %p4342 = scmp.le.s32.totalorder 2, %s14
    // Predicated region
    $region53: #{deconv_res_block_forward.2} parent=5 // pred_check
      %p4343 = pneg %p4342
    $region54: #{deconv_res_block_forward.2} parent=5 // pred_check_branch
      %4345 = sbr.rel (%p4343) target = $region56
    $region55: #{deconv_res_block_forward.2} parent=5 // pred_region
      %s4346 = ssub.s32 %s14, 2
      // Predicated region
      $region57: #{deconv_res_block_forward.2} parent=55 // pred_check
        %p4347 = pneg %p169
      $region58: #{deconv_res_block_forward.2} parent=55 // pred_check_branch
        %4349 = sbr.rel (%p4347) target = $region60
      $region59: #{deconv_res_block_forward.2} parent=55 // pred_region
        %s4350 = smul.u32 8, %s26
        %p4351 = scmp.lt.s32.totalorder %s25, 1
        %s4352 = scalar_select %p4351, %s25, 1
        %p4353 = scmp.lt.s32.totalorder %s4350, 15
        %s4354 = scalar_select %p4353, %s4350, 15
        %s4355 = smul.addr %s4354, 8
        %s4356 = smul.addr %s4352, 128
        %s4357 = sadd.s32 %s4355, %s4356
        %s4358 = smul.addr %s4357, 4
        %s4359 = scalar_lea.vmem %s5, %s4358
      $region60: #{deconv_res_block_forward.2} parent=55 // pred_fallthru
        _
      // Predicated region
      $region61: #{deconv_res_block_forward.2} parent=55 // pred_check
        %p4360 = pneg %p197
      $region62: #{deconv_res_block_forward.2} parent=55 // pred_check_branch
        %4362 = sbr.rel (%p4360) target = $region64
      $region63: #{deconv_res_block_forward.2} parent=55 // pred_region
        %s4363 = smul.u32 8, %s26
        %p4364 = scmp.lt.s32.totalorder %s25, 1
        %s4365 = scalar_select %p4364, %s25, 1
        %p4366 = scmp.lt.s32.totalorder %s4363, 15
        %s4367 = scalar_select %p4366, %s4363, 15
        %s4368 = smul.addr %s4367, 2
        %s4369 = smul.addr %s4365, 32
        %s4370 = sadd.s32 %s4368, %s4369
        %s4371 = smul.addr %s4370, 4
        %s4372 = scalar_lea.vmem %s6, %s4371
      $region64: #{deconv_res_block_forward.2} parent=55 // pred_fallthru
        _
      // Predicated region
      $region65: #{deconv_res_block_forward.2} parent=55 // pred_check
        %p4373 = pneg %p225
      $region66: #{deconv_res_block_forward.2} parent=55 // pred_check_branch
        %4375 = sbr.rel (%p4373) target = $region68
      $region67: #{deconv_res_block_forward.2} parent=55 // pred_region
        %p4376 = scmp.lt.s32.totalorder %s25, 1
        %s4377 = scalar_select %p4376, %s25, 1
        %p4378 = scmp.lt.s32.totalorder %s26, 1
        %s4379 = scalar_select %p4378, %s26, 1
        %s4380 = smul.addr %s4379, 2
        %s4381 = smul.addr %s4377, 4
        %s4382 = sadd.s32 %s4380, %s4381
        %s4383 = scalar_lea.vmem %s7, %s4382
      $region68: #{deconv_res_block_forward.2} parent=55 // pred_fallthru
        _
    $region56: #{deconv_res_block_forward.2} parent=5 // pred_fallthru
      _
  $region6: #{deconv_res_block_forward.2} parent=0 // loop_footer
    %s18 = sadd.s32 1, %s14
  $region7: #{deconv_res_block_forward.2} parent=0 // loop_footer_branch
    %13 = sbr.rel target = $region3
  $region8: #{deconv_res_block_forward.2} parent=0 // loop_exit
    _

// kernel: deconv_res_block_forward.3
$region0: #{deconv_res_block_forward.3}
  #allocation0 [shape = 'u32[]', space=smem, size = 0x4, offset = 0x4, fixed_abs, tag = 'smem constant byte address 0x4 - core index']
  #allocation1 [shape = 'u32[144,128]{1,0:T(1,128)}', space=vmem, size = 0x12000, scoped, tag = 'internal scratch']
  %s0 = inlined_call_operand.vmem [shape: bf16[2,16,2,16,256], index: 0, kind: input, shape index: {}, may-alias: {0,1,2}]
  %s1 = inlined_call_operand.vmem [shape: bf16[2,16,2,16,256], index: 1, kind: input, shape index: {}, may-alias: {0,1,2}]
  %s2 = inlined_call_operand.vmem [shape: bf16[2,16,2,16,256], index: 2, kind: input, shape index: {}, may-alias: {0,1,2}]
  %s3 = inlined_call_operand.vmem [shape: bf16[2,16,16,128], index: 3, kind: input, shape index: {}]
  %s4 = inlined_call_operand.vmem [shape: f32[1,256], index: 4, kind: input, shape index: {}]
  %s5 = inlined_call_operand.vmem [shape: f32[1,256], index: 5, kind: input, shape index: {}]
  %s6 = inlined_call_operand.vmem [shape: bf16[3,384,128], index: 6, kind: input, shape index: {}]
  %s7 = inlined_call_operand.vmem [shape: f32[1,128], index: 7, kind: input, shape index: {}]
  %s8 = inlined_call_operand.vmem [shape: bf16[2,16,2,16,256], index: 8, kind: output, shape index: {0}]
  %s9 = inlined_call_operand.vmem [shape: f32[2,2,1,256], index: 9, kind: output, shape index: {1}]
  %10 = xla_tuple %s8, %s9
  %s11 = sld [smem:[#allocation0]]
  $region73: #{deconv_res_block_forward.3} parent=0
    _
  %s13 = ssub.s32 1, %s11
  %s14 = scalar_select 0, %s13, %s11
  loop: start=0, step=1, limit=6
  $region2: #{deconv_res_block_forward.3} parent=0 // loop_pre_header
    _
  $region3: #{deconv_res_block_forward.3} parent=0 // loop_header
    %s16 = sphi 0, %s20
    %p17 = scmp.ge.s32.totalorder %s16, 6
    %s23 = sphi 0, %s35
    %s24 = sphi 0, %s31
    %s25 = sphi 0, %s23
    %s26 = sphi 0, %s24
    %s27 = sphi 0, %s25
    %s28 = sphi 0, %s26
    %s40 = sphi 0, %s42
    %s43 = sphi 0, %s40
    %s44 = sphi 0, %s43
    %s60 = sphi 0, %s44
    %s76 = sphi 0, %s78
    %s79 = sphi 0, %s76
    %s80 = sphi 0, %s79
    %s96 = sphi 0, %s80
    %s112 = sphi 0, %s114
    %s115 = sphi 0, %s112
    %s116 = sphi 0, %s115
    %s132 = sphi 0, %s116
    %s140 = sphi 0, %s142
    %s143 = sphi 0, %s140
    %s144 = sphi 0, %s143
    %s160 = sphi 0, %s144
    %s164 = sphi 0, %s164
    %s166 = sphi 0, %s164
    %s167 = sphi 0, %s166
    %s181 = sphi 0, %s167
    %s185 = sphi 0, %s185
    %s187 = sphi 0, %s185
    %s188 = sphi 0, %s187
    %s202 = sphi 0, %s188
    %s206 = sphi 0, %s206
    %s208 = sphi 0, %s206
    %s209 = sphi 0, %s208
    %s223 = sphi 0, %s209
    %s227 = sphi 0, %s227
    %s229 = sphi 0, %s227
    %s230 = sphi 0, %s229
    %s244 = sphi 0, %s230
    %s252 = sphi 0, %s254
    %s255 = sphi 0, %s252
    %s256 = sphi 0, %s255
    %s272 = sphi 0, %s256
    %s280 = sphi 0, %s282
    %s283 = sphi 0, %s280
    %s284 = sphi 0, %s283
    %s300 = sphi 0, %s284
  $region4: #{deconv_res_block_forward.3} parent=0 // loop_header_branch
    %19 = sbr.rel (%p17) target = $region8
  $region5: #{deconv_res_block_forward.3} parent=0 // loop_body
    %s21 = ssub.s32 %s16, 1
    %s22 = ssub.s32 %s16, 2
    %s29 = sadd.s32 1, %s24
    %p30 = scmp.ge.s32.totalorder %s29, 2
    %s31 = scalar_select %p30, 0, %s29
    %s32 = sadd.s32 1, %s23
    %s33 = scalar_select %p30, %s32, %s23
    %p34 = scmp.ge.s32.totalorder %s33, 2
    %s35 = scalar_select %p34, 0, %s33
    %s36 = ssub.s32 %s23, %s35
    %s37 = ssub.s32 %s24, %s31
    %s38 = sor.u32 %s36, %s37
    %p39 = scmp.eq.s32.totalorder %s38, 0
    %s41 = sadd.s32 %s40, 1
    %s42 = scalar_select %p39, %s40, %s41
    %p45 = pneg %p39
    %p46 = scmp.eq.s32.totalorder %s16, 3
    %p47 = por %p45, %p46
    %p48 = scmp.ne.s32.totalorder %s40, %s43
    %p49 = scmp.eq.s32.totalorder %s16, 0
    %p50 = por %p48, %p49
    %p51 = scmp.ne.s32.totalorder %s40, %s43
    %p52 = scmp.eq.s32.totalorder %s21, 3
    %p53 = por %p51, %p52
    %p54 = scmp.ne.s32.totalorder %s43, %s44
    %p55 = scmp.eq.s32.totalorder %s21, 0
    %p56 = por %p54, %p55
    %p57 = scmp.ne.s32.totalorder %s43, %s44
    %p58 = scmp.eq.s32.totalorder %s22, 3
    %p59 = por %p57, %p58
    %p61 = scmp.ne.s32.totalorder %s44, %s60
    %p62 = scmp.eq.s32.totalorder %s22, 0
    %p63 = por %p61, %p62
    %s64 = smul.u32 %s24, 8
    %s65 = ssub.s32 %s64, 1
    %p66 = scmp.gt.s32.totalorder %s65, 0
    %s67 = scalar_select %p66, %s65, 0
    %s68 = smul.u32 %s31, 8
    %s69 = ssub.s32 %s68, 1
    %p70 = scmp.gt.s32.totalorder %s69, 0
    %s71 = scalar_select %p70, %s69, 0
    %s72 = ssub.s32 %s23, %s35
    %s73 = ssub.s32 %s67, %s71
    %s74 = sor.u32 %s72, %s73
    %p75 = scmp.eq.s32.totalorder %s74, 0
    %s77 = sadd.s32 %s76, 1
    %s78 = scalar_select %p75, %s76, %s77
    %p81 = pneg %p75
    %p82 = scmp.eq.s32.totalorder %s16, 3
    %p83 = por %p81, %p82
    %p84 = scmp.ne.s32.totalorder %s76, %s79
    %p85 = scmp.eq.s32.totalorder %s16, 0
    %p86 = por %p84, %p85
    %p87 = scmp.ne.s32.totalorder %s76, %s79
    %p88 = scmp.eq.s32.totalorder %s21, 3
    %p89 = por %p87, %p88
    %p90 = scmp.ne.s32.totalorder %s79, %s80
    %p91 = scmp.eq.s32.totalorder %s21, 0
    %p92 = por %p90, %p91
    %p93 = scmp.ne.s32.totalorder %s79, %s80
    %p94 = scmp.eq.s32.totalorder %s22, 3
    %p95 = por %p93, %p94
    %p97 = scmp.ne.s32.totalorder %s80, %s96
    %p98 = scmp.eq.s32.totalorder %s22, 0
    %p99 = por %p97, %p98
    %s100 = sadd.s32 %s24, 1
    %s101 = smul.u32 %s100, 8
    %p102 = scmp.lt.s32.totalorder %s101, 15
    %s103 = scalar_select %p102, %s101, 15
    %s104 = sadd.s32 %s31, 1
    %s105 = smul.u32 %s104, 8
    %p106 = scmp.lt.s32.totalorder %s105, 15
    %s107 = scalar_select %p106, %s105, 15
    %s108 = ssub.s32 %s23, %s35
    %s109 = ssub.s32 %s103, %s107
    %s110 = sor.u32 %s108, %s109
    %p111 = scmp.eq.s32.totalorder %s110, 0
    %s113 = sadd.s32 %s112, 1
    %s114 = scalar_select %p111, %s112, %s113
    %p117 = pneg %p111
    %p118 = scmp.eq.s32.totalorder %s16, 3
    %p119 = por %p117, %p118
    %p120 = scmp.ne.s32.totalorder %s112, %s115
    %p121 = scmp.eq.s32.totalorder %s16, 0
    %p122 = por %p120, %p121
    %p123 = scmp.ne.s32.totalorder %s112, %s115
    %p124 = scmp.eq.s32.totalorder %s21, 3
    %p125 = por %p123, %p124
    %p126 = scmp.ne.s32.totalorder %s115, %s116
    %p127 = scmp.eq.s32.totalorder %s21, 0
    %p128 = por %p126, %p127
    %p129 = scmp.ne.s32.totalorder %s115, %s116
    %p130 = scmp.eq.s32.totalorder %s22, 3
    %p131 = por %p129, %p130
    %p133 = scmp.ne.s32.totalorder %s116, %s132
    %p134 = scmp.eq.s32.totalorder %s22, 0
    %p135 = por %p133, %p134
    %s136 = ssub.s32 %s23, %s35
    %s137 = ssub.s32 %s24, %s31
    %s138 = sor.u32 %s136, %s137
    %p139 = scmp.eq.s32.totalorder %s138, 0
    %s141 = sadd.s32 %s140, 1
    %s142 = scalar_select %p139, %s140, %s141
    %p145 = pneg %p139
    %p146 = scmp.eq.s32.totalorder %s16, 3
    %p147 = por %p145, %p146
    %p148 = scmp.ne.s32.totalorder %s140, %s143
    %p149 = scmp.eq.s32.totalorder %s16, 0
    %p150 = por %p148, %p149
    %p151 = scmp.ne.s32.totalorder %s140, %s143
    %p152 = scmp.eq.s32.totalorder %s21, 3
    %p153 = por %p151, %p152
    %p154 = scmp.ne.s32.totalorder %s143, %s144
    %p155 = scmp.eq.s32.totalorder %s21, 0
    %p156 = por %p154, %p155
    %p157 = scmp.ne.s32.totalorder %s143, %s144
    %p158 = scmp.eq.s32.totalorder %s22, 3
    %p159 = por %p157, %p158
    %p161 = scmp.ne.s32.totalorder %s144, %s160
    %p162 = scmp.eq.s32.totalorder %s22, 0
    %p163 = por %p161, %p162
    %s165 = sadd.s32 %s164, 1
    %p168 = scmp.eq.s32.totalorder %s16, 3
    %p169 = scmp.ne.s32.totalorder %s164, %s166
    %p170 = scmp.eq.s32.totalorder %s16, 0
    %p171 = por %p169, %p170
    %p172 = scmp.ne.s32.totalorder %s164, %s166
    %p173 = scmp.eq.s32.totalorder %s21, 3
    %p174 = por %p172, %p173
    %p175 = scmp.ne.s32.totalorder %s166, %s167
    %p176 = scmp.eq.s32.totalorder %s21, 0
    %p177 = por %p175, %p176
    %p178 = scmp.ne.s32.totalorder %s166, %s167
    %p179 = scmp.eq.s32.totalorder %s22, 3
    %p180 = por %p178, %p179
    %p182 = scmp.ne.s32.totalorder %s167, %s181
    %p183 = scmp.eq.s32.totalorder %s22, 0
    %p184 = por %p182, %p183
    %s186 = sadd.s32 %s185, 1
    %p189 = scmp.eq.s32.totalorder %s16, 3
    %p190 = scmp.ne.s32.totalorder %s185, %s187
    %p191 = scmp.eq.s32.totalorder %s16, 0
    %p192 = por %p190, %p191
    %p193 = scmp.ne.s32.totalorder %s185, %s187
    %p194 = scmp.eq.s32.totalorder %s21, 3
    %p195 = por %p193, %p194
    %p196 = scmp.ne.s32.totalorder %s187, %s188
    %p197 = scmp.eq.s32.totalorder %s21, 0
    %p198 = por %p196, %p197
    %p199 = scmp.ne.s32.totalorder %s187, %s188
    %p200 = scmp.eq.s32.totalorder %s22, 3
    %p201 = por %p199, %p200
    %p203 = scmp.ne.s32.totalorder %s188, %s202
    %p204 = scmp.eq.s32.totalorder %s22, 0
    %p205 = por %p203, %p204
    %s207 = sadd.s32 %s206, 1
    %p210 = scmp.eq.s32.totalorder %s16, 3
    %p211 = scmp.ne.s32.totalorder %s206, %s208
    %p212 = scmp.eq.s32.totalorder %s16, 0
    %p213 = por %p211, %p212
    %p214 = scmp.ne.s32.totalorder %s206, %s208
    %p215 = scmp.eq.s32.totalorder %s21, 3
    %p216 = por %p214, %p215
    %p217 = scmp.ne.s32.totalorder %s208, %s209
    %p218 = scmp.eq.s32.totalorder %s21, 0
    %p219 = por %p217, %p218
    %p220 = scmp.ne.s32.totalorder %s208, %s209
    %p221 = scmp.eq.s32.totalorder %s22, 3
    %p222 = por %p220, %p221
    %p224 = scmp.ne.s32.totalorder %s209, %s223
    %p225 = scmp.eq.s32.totalorder %s22, 0
    %p226 = por %p224, %p225
    %s228 = sadd.s32 %s227, 1
    %p231 = scmp.eq.s32.totalorder %s16, 3
    %p232 = scmp.ne.s32.totalorder %s227, %s229
    %p233 = scmp.eq.s32.totalorder %s16, 0
    %p234 = por %p232, %p233
    %p235 = scmp.ne.s32.totalorder %s227, %s229
    %p236 = scmp.eq.s32.totalorder %s21, 3
    %p237 = por %p235, %p236
    %p238 = scmp.ne.s32.totalorder %s229, %s230
    %p239 = scmp.eq.s32.totalorder %s21, 0
    %p240 = por %p238, %p239
    %p241 = scmp.ne.s32.totalorder %s229, %s230
    %p242 = scmp.eq.s32.totalorder %s22, 3
    %p243 = por %p241, %p242
    %p245 = scmp.ne.s32.totalorder %s230, %s244
    %p246 = scmp.eq.s32.totalorder %s22, 0
    %p247 = por %p245, %p246
    %s248 = ssub.s32 %s23, %s35
    %s249 = ssub.s32 %s24, %s31
    %s250 = sor.u32 %s248, %s249
    %p251 = scmp.eq.s32.totalorder %s250, 0
    %s253 = sadd.s32 %s252, 1
    %s254 = scalar_select %p251, %s252, %s253
    %p257 = pneg %p251
    %p258 = scmp.eq.s32.totalorder %s16, 3
    %p259 = por %p257, %p258
    %p260 = scmp.ne.s32.totalorder %s252, %s255
    %p261 = scmp.eq.s32.totalorder %s16, 0
    %p262 = por %p260, %p261
    %p263 = scmp.ne.s32.totalorder %s252, %s255
    %p264 = scmp.eq.s32.totalorder %s21, 3
    %p265 = por %p263, %p264
    %p266 = scmp.ne.s32.totalorder %s255, %s256
    %p267 = scmp.eq.s32.totalorder %s21, 0
    %p268 = por %p266, %p267
    %p269 = scmp.ne.s32.totalorder %s255, %s256
    %p270 = scmp.eq.s32.totalorder %s22, 3
    %p271 = por %p269, %p270
    %p273 = scmp.ne.s32.totalorder %s256, %s272
    %p274 = scmp.eq.s32.totalorder %s22, 0
    %p275 = por %p273, %p274
    %s276 = ssub.s32 %s23, %s35
    %s277 = ssub.s32 %s24, %s31
    %s278 = sor.u32 %s276, %s277
    %p279 = scmp.eq.s32.totalorder %s278, 0
    %s281 = sadd.s32 %s280, 1
    %s282 = scalar_select %p279, %s280, %s281
    %p285 = pneg %p279
    %p286 = scmp.eq.s32.totalorder %s16, 3
    %p287 = por %p285, %p286
    %p288 = scmp.ne.s32.totalorder %s280, %s283
    %p289 = scmp.eq.s32.totalorder %s16, 0
    %p290 = por %p288, %p289
    %p291 = scmp.ne.s32.totalorder %s280, %s283
    %p292 = scmp.eq.s32.totalorder %s21, 3
    %p293 = por %p291, %p292
    %p294 = scmp.ne.s32.totalorder %s283, %s284
    %p295 = scmp.eq.s32.totalorder %s21, 0
    %p296 = por %p294, %p295
    %p297 = scmp.ne.s32.totalorder %s283, %s284
    %p298 = scmp.eq.s32.totalorder %s22, 3
    %p299 = por %p297, %p298
    %p301 = scmp.ne.s32.totalorder %s284, %s300
    %p302 = scmp.eq.s32.totalorder %s22, 0
    %p303 = por %p301, %p302
    %p304 = scmp.le.s32.totalorder 1, %s16
    %p305 = scmp.lt.s32.totalorder %s16, 5
    %p306 = pnand %p304, %p305
    %p307 = pneg %p306
    // Predicated region
    $region9: #{deconv_res_block_forward.3} parent=5 // pred_check
      _
    $region10: #{deconv_res_block_forward.3} parent=5 // pred_check_branch
      %309 = sbr.rel (%p306) target = $region12
    $region11: #{deconv_res_block_forward.3} parent=5 // pred_region
      %s310 = ssub.s32 %s16, 1
      // Predicated region
      $region13: #{deconv_res_block_forward.3} parent=11 // pred_check
        %p311 = pneg %p177
      $region14: #{deconv_res_block_forward.3} parent=11 // pred_check_branch
        %313 = sbr.rel (%p311) target = $region16
      $region15: #{deconv_res_block_forward.3} parent=11 // pred_region
        _
      $region16: #{deconv_res_block_forward.3} parent=11 // pred_fallthru
        _
      // Predicated region
      $region17: #{deconv_res_block_forward.3} parent=11 // pred_check
        %p314 = pneg %p198
      $region18: #{deconv_res_block_forward.3} parent=11 // pred_check_branch
        %316 = sbr.rel (%p314) target = $region20
      $region19: #{deconv_res_block_forward.3} parent=11 // pred_region
        _
      $region20: #{deconv_res_block_forward.3} parent=11 // pred_fallthru
        _
      // Predicated region
      $region21: #{deconv_res_block_forward.3} parent=11 // pred_check
        %p317 = pneg %p219
      $region22: #{deconv_res_block_forward.3} parent=11 // pred_check_branch
        %319 = sbr.rel (%p317) target = $region24
      $region23: #{deconv_res_block_forward.3} parent=11 // pred_region
        _
      $region24: #{deconv_res_block_forward.3} parent=11 // pred_fallthru
        _
      // Predicated region
      $region25: #{deconv_res_block_forward.3} parent=11 // pred_check
        %p320 = pneg %p240
      $region26: #{deconv_res_block_forward.3} parent=11 // pred_check_branch
        %322 = sbr.rel (%p320) target = $region28
      $region27: #{deconv_res_block_forward.3} parent=11 // pred_region
        _
      $region28: #{deconv_res_block_forward.3} parent=11 // pred_fallthru
        _
    $region12: #{deconv_res_block_forward.3} parent=5 // pred_fallthru
      _
    %p323 = scmp.lt.s32.totalorder %s16, 4
    // Predicated region
    $region29: #{deconv_res_block_forward.3} parent=5 // pred_check
      %p324 = pneg %p323
    $region30: #{deconv_res_block_forward.3} parent=5 // pred_check_branch
      %326 = sbr.rel (%p324) target = $region32
    $region31: #{deconv_res_block_forward.3} parent=5 // pred_region
      // Predicated region
      $region33: #{deconv_res_block_forward.3} parent=31 // pred_check
        %p327 = pneg %p50
      $region34: #{deconv_res_block_forward.3} parent=31 // pred_check_branch
        %329 = sbr.rel (%p327) target = $region36
      $region35: #{deconv_res_block_forward.3} parent=31 // pred_region
        %s330 = smul.u32 8, %s24
        %p331 = scmp.lt.s32.totalorder %s23, 1
        %s332 = scalar_select %p331, %s23, 1
        %p333 = scmp.lt.s32.totalorder %s330, 15
        %s334 = scalar_select %p333, %s330, 15
        %s335 = smul.addr %s334, 8
        %s336 = smul.addr %s332, 128
        %s337 = sadd.s32 %s335, %s336
        %s338 = smul.addr %s337, 4
        %s339 = scalar_lea.vmem %s0, %s338
        %s340 = smul.u32 8, %s24
      $region36: #{deconv_res_block_forward.3} parent=31 // pred_fallthru
        _
      // Predicated region
      $region37: #{deconv_res_block_forward.3} parent=31 // pred_check
        %p341 = pneg %p86
      $region38: #{deconv_res_block_forward.3} parent=31 // pred_check_branch
        %343 = sbr.rel (%p341) target = $region40
      $region39: #{deconv_res_block_forward.3} parent=31 // pred_region
        %s344 = smul.u32 %s24, 8
        %s345 = ssub.s32 %s344, 1
        %p346 = scmp.gt.s32.totalorder %s345, 0
        %s347 = scalar_select %p346, %s345, 0
        %p348 = scmp.lt.s32.totalorder %s23, 1
        %s349 = scalar_select %p348, %s23, 1
        %p350 = scmp.lt.s32.totalorder %s347, 15
        %s351 = scalar_select %p350, %s347, 15
        %s352 = smul.addr %s351, 8
        %s353 = sadd.s32 4, %s352
        %s354 = smul.addr %s349, 128
        %s355 = sadd.s32 %s353, %s354
        %s356 = smul.addr %s355, 4
        %s357 = scalar_lea.vmem %s1, %s356
        %s358 = smul.u32 %s24, 8
        %s359 = ssub.s32 %s358, 1
        %p360 = scmp.gt.s32.totalorder %s359, 0
        %s361 = scalar_select %p360, %s359, 0
      $region40: #{deconv_res_block_forward.3} parent=31 // pred_fallthru
        _
      // Predicated region
      $region41: #{deconv_res_block_forward.3} parent=31 // pred_check
        %p362 = pneg %p122
      $region42: #{deconv_res_block_forward.3} parent=31 // pred_check_branch
        %364 = sbr.rel (%p362) target = $region44
      $region43: #{deconv_res_block_forward.3} parent=31 // pred_region
        %s365 = sadd.s32 %s24, 1
        %s366 = smul.u32 %s365, 8
        %p367 = scmp.lt.s32.totalorder %s366, 15
        %s368 = scalar_select %p367, %s366, 15
        %p369 = scmp.lt.s32.totalorder %s23, 1
        %s370 = scalar_select %p369, %s23, 1
        %p371 = scmp.lt.s32.totalorder %s368, 15
        %s372 = scalar_select %p371, %s368, 15
        %s373 = smul.addr %s372, 8
        %s374 = smul.addr %s370, 128
        %s375 = sadd.s32 %s373, %s374
        %s376 = smul.addr %s375, 4
        %s377 = scalar_lea.vmem %s2, %s376
        %s378 = sadd.s32 %s24, 1
        %s379 = smul.u32 %s378, 8
        %p380 = scmp.lt.s32.totalorder %s379, 15
        %s381 = scalar_select %p380, %s379, 15
      $region44: #{deconv_res_block_forward.3} parent=31 // pred_fallthru
        _
      // Predicated region
      $region45: #{deconv_res_block_forward.3} parent=31 // pred_check
        %p382 = pneg %p150
      $region46: #{deconv_res_block_forward.3} parent=31 // pred_check_branch
        %384 = sbr.rel (%p382) target = $region48
      $region47: #{deconv_res_block_forward.3} parent=31 // pred_region
        %s385 = smul.u32 8, %s24
        %p386 = scmp.lt.s32.totalorder %s23, 1
        %s387 = scalar_select %p386, %s23, 1
        %p388 = scmp.lt.s32.totalorder %s385, 15
        %s389 = scalar_select %p388, %s385, 15
        %s390 = smul.addr %s389, 2
        %s391 = smul.addr %s387, 32
        %s392 = sadd.s32 %s390, %s391
        %s393 = smul.addr %s392, 4
        %s394 = scalar_lea.vmem %s3, %s393
        %s395 = smul.u32 8, %s24
      $region48: #{deconv_res_block_forward.3} parent=31 // pred_fallthru
        _
    $region32: #{deconv_res_block_forward.3} parent=5 // pred_fallthru
      _
    %p396 = scmp.le.s32.totalorder 1, %s16
    %p397 = scmp.lt.s32.totalorder %s16, 5
    %p398 = pnand %p396, %p397
    %p399 = pneg %p398
    // Predicated region
    $region49: #{deconv_res_block_forward.3} parent=5 // pred_check
      _
    $region50: #{deconv_res_block_forward.3} parent=5 // pred_check_branch
      %401 = sbr.rel (%p398) target = $region52
    $region51: #{deconv_res_block_forward.3} parent=5 // pred_region
      %s402 = ssub.s32 %s16, 1
      %s403 = smul.u32 8, %s26
      %p404 = scmp.lt.s32.totalorder %s25, 1
      %s405 = scalar_select %p404, %s25, 1
      %p406 = scmp.lt.s32.totalorder %s403, 15
      %s407 = scalar_select %p406, %s403, 15
      %s408 = smul.addr %s407, 8
      %s409 = smul.addr %s405, 128
      %s410 = sadd.s32 %s408, %s409
      %s411 = smul.addr %s410, 4
      %s412 = scalar_lea.vmem %s0, %s411
      %p413 = pneg %p56
      %p414 = pneg %p53
      %s415 = smul.u32 %s26, 8
      %s416 = ssub.s32 %s415, 1
      %p417 = scmp.gt.s32.totalorder %s416, 0
      %s418 = scalar_select %p417, %s416, 0
      %p419 = scmp.lt.s32.totalorder %s25, 1
      %s420 = scalar_select %p419, %s25, 1
      %p421 = scmp.lt.s32.totalorder %s418, 15
      %s422 = scalar_select %p421, %s418, 15
      %s423 = smul.addr %s422, 8
      %s424 = sadd.s32 4, %s423
      %s425 = smul.addr %s420, 128
      %s426 = sadd.s32 %s424, %s425
      %s427 = smul.addr %s426, 4
      %s428 = scalar_lea.vmem %s1, %s427
      %p429 = pneg %p92
      %p430 = pneg %p89
      %s431 = sadd.s32 %s26, 1
      %s432 = smul.u32 %s431, 8
      %p433 = scmp.lt.s32.totalorder %s432, 15
      %s434 = scalar_select %p433, %s432, 15
      %p435 = scmp.lt.s32.totalorder %s25, 1
      %s436 = scalar_select %p435, %s25, 1
      %p437 = scmp.lt.s32.totalorder %s434, 15
      %s438 = scalar_select %p437, %s434, 15
      %s439 = smul.addr %s438, 8
      %s440 = smul.addr %s436, 128
      %s441 = sadd.s32 %s439, %s440
      %s442 = smul.addr %s441, 4
      %s443 = scalar_lea.vmem %s2, %s442
      %p444 = pneg %p128
      %p445 = pneg %p125
      %s446 = smul.u32 8, %s26
      %p447 = scmp.lt.s32.totalorder %s25, 1
      %s448 = scalar_select %p447, %s25, 1
      %p449 = scmp.lt.s32.totalorder %s446, 15
      %s450 = scalar_select %p449, %s446, 15
      %s451 = smul.addr %s450, 2
      %s452 = smul.addr %s448, 32
      %s453 = sadd.s32 %s451, %s452
      %s454 = smul.addr %s453, 4
      %s455 = scalar_lea.vmem %s3, %s454
      %p456 = pneg %p156
      %p457 = pneg %p153
      %p458 = pneg %p177
      %p459 = pneg %p174
      %p460 = pneg %p198
      %p461 = pneg %p195
      %p462 = pneg %p219
      %p463 = pneg %p216
      %p464 = pneg %p240
      %p465 = pneg %p237
      %p466 = pneg %p268
      %p467 = pneg %p265
      %s468 = smul.u32 8, %s26
      %p469 = scmp.lt.s32.totalorder %s25, 1
      %s470 = scalar_select %p469, %s25, 1
      %p471 = scmp.lt.s32.totalorder %s468, 15
      %s472 = scalar_select %p471, %s468, 15
      %s473 = smul.addr %s472, 8
      %s474 = smul.addr %s470, 128
      %s475 = sadd.s32 %s473, %s474
      %s476 = smul.addr %s475, 4
      %s477 = scalar_lea.vmem %s8, %s476
      %p478 = pneg %p296
      %p479 = pneg %p293
      %p480 = scmp.lt.s32.totalorder %s25, 1
      %s481 = scalar_select %p480, %s25, 1
      %p482 = scmp.lt.s32.totalorder %s26, 1
      %s483 = scalar_select %p482, %s26, 1
      %s484 = smul.addr %s483, 2
      %s485 = smul.addr %s481, 4
      %s486 = sadd.s32 %s484, %s485
      %s487 = scalar_lea.vmem %s9, %s486
      %s488 = smul.u32 8, %s26
      %p489 = scmp.lt.s32.totalorder %s25, 1
      %s490 = scalar_select %p489, %s25, 1
      %p491 = scmp.lt.s32.totalorder %s488, 15
      %s492 = scalar_select %p491, %s488, 15
      %s493 = smul.addr %s492, 8
      %s494 = smul.addr %s490, 128
      %s495 = sadd.s32 %s493, %s494
      %s496 = smul.addr %s495, 4
      %s497 = scalar_lea.vmem %s0, %s496
      %s498 = smul.u32 8, %s26
      %s499 = smul.u32 %s26, 8
      %s500 = ssub.s32 %s499, 1
      %p501 = scmp.gt.s32.totalorder %s500, 0
      %s502 = scalar_select %p501, %s500, 0
      %p503 = scmp.lt.s32.totalorder %s25, 1
      %s504 = scalar_select %p503, %s25, 1
      %p505 = scmp.lt.s32.totalorder %s502, 15
      %s506 = scalar_select %p505, %s502, 15
      %s507 = smul.addr %s506, 8
      %s508 = sadd.s32 4, %s507
      %s509 = smul.addr %s504, 128
      %s510 = sadd.s32 %s508, %s509
      %s511 = smul.addr %s510, 4
      %s512 = scalar_lea.vmem %s1, %s511
      %s513 = smul.u32 %s26, 8
      %s514 = ssub.s32 %s513, 1
      %p515 = scmp.gt.s32.totalorder %s514, 0
      %s516 = scalar_select %p515, %s514, 0
      %s517 = sadd.s32 %s26, 1
      %s518 = smul.u32 %s517, 8
      %p519 = scmp.lt.s32.totalorder %s518, 15
      %s520 = scalar_select %p519, %s518, 15
      %p521 = scmp.lt.s32.totalorder %s25, 1
      %s522 = scalar_select %p521, %s25, 1
      %p523 = scmp.lt.s32.totalorder %s520, 15
      %s524 = scalar_select %p523, %s520, 15
      %s525 = smul.addr %s524, 8
      %s526 = smul.addr %s522, 128
      %s527 = sadd.s32 %s525, %s526
      %s528 = smul.addr %s527, 4
      %s529 = scalar_lea.vmem %s2, %s528
      %s530 = sadd.s32 %s26, 1
      %s531 = smul.u32 %s530, 8
      %p532 = scmp.lt.s32.totalorder %s531, 15
      %s533 = scalar_select %p532, %s531, 15
      %s534 = smul.u32 8, %s26
      %p535 = scmp.lt.s32.totalorder %s25, 1
      %s536 = scalar_select %p535, %s25, 1
      %p537 = scmp.lt.s32.totalorder %s534, 15
      %s538 = scalar_select %p537, %s534, 15
      %s539 = smul.addr %s538, 2
      %s540 = smul.addr %s536, 32
      %s541 = sadd.s32 %s539, %s540
      %s542 = smul.addr %s541, 4
      %s543 = scalar_lea.vmem %s3, %s542
      %s544 = smul.u32 8, %s26
      %s545 = smul.u32 8, %s26
      %p546 = scmp.lt.s32.totalorder %s25, 1
      %s547 = scalar_select %p546, %s25, 1
      %p548 = scmp.lt.s32.totalorder %s545, 15
      %s549 = scalar_select %p548, %s545, 15
      %s550 = smul.addr %s549, 8
      %s551 = smul.addr %s547, 128
      %s552 = sadd.s32 %s550, %s551
      %s553 = smul.addr %s552, 4
      %s554 = scalar_lea.vmem %s8, %s553
      %s555 = smul.u32 8, %s26
      %p556 = scmp.lt.s32.totalorder %s25, 1
      %s557 = scalar_select %p556, %s25, 1
      %p558 = scmp.lt.s32.totalorder %s26, 1
      %s559 = scalar_select %p558, %s26, 1
      %s560 = smul.addr %s559, 2
      %s561 = smul.addr %s557, 4
      %s562 = sadd.s32 %s560, %s561
      %s563 = scalar_lea.vmem %s9, %s562
      %v565 = vld [vmem:[%s4] sm:$0x3]
      %v566 = vld [vmem:[%s5] sm:$0x3]
      %v567 = vld [vmem:[%s7] sm:$0x1]
      %p568 = scmp.gt.s32.totalorder %s26, 0
      %s569 = scalar_select %p568, 1, 0
      %s570 = scvt.s32.f32 %s569
      %p571 = scmp.lt.s32.totalorder %s26, 1
      %s572 = scalar_select %p571, 1, 0
      %s573 = scvt.s32.f32 %s572
      %v574 = vld [vmem:[%s497] sm:$0xff]
      %v575 = vld [vmem:[%s497 + $0x8] sm:$0xff]
      %v576 = vld [vmem:[%s497 + $0x10] sm:$0xff]
      %v577 = vld [vmem:[%s497 + $0x18] sm:$0xff]
      %v578 = vld [vmem:[%s497 + $0x20] sm:$0xff]
      %v579 = vld [vmem:[%s497 + $0x28] sm:$0xff]
      %v580 = vld [vmem:[%s497 + $0x30] sm:$0xff]
      %v581 = vld [vmem:[%s497 + $0x38] sm:$0xff]
      %v582 = vld [vmem:[%s497 + $0x40] sm:$0xff]
      %v583 = vld [vmem:[%s497 + $0x48] sm:$0xff]
      %v584 = vld [vmem:[%s497 + $0x50] sm:$0xff]
      %v585 = vld [vmem:[%s497 + $0x58] sm:$0xff]
      %v586 = vld [vmem:[%s497 + $0x60] sm:$0xff]
      %v587 = vld [vmem:[%s497 + $0x68] sm:$0xff]
      %v588 = vld [vmem:[%s497 + $0x70] sm:$0xff]
      %v589 = vld [vmem:[%s497 + $0x78] sm:$0xff]
      %v590 = vld [vmem:[%s497 + $0x80] sm:$0xff]
      %v591 = vld [vmem:[%s497 + $0x88] sm:$0xff]
      %v592 = vld [vmem:[%s497 + $0x90] sm:$0xff]
      %v593 = vld [vmem:[%s497 + $0x98] sm:$0xff]
      %v594 = vld [vmem:[%s497 + $0xa0] sm:$0xff]
      %v595 = vld [vmem:[%s497 + $0xa8] sm:$0xff]
      %v596 = vld [vmem:[%s497 + $0xb0] sm:$0xff]
      %v597 = vld [vmem:[%s497 + $0xb8] sm:$0xff]
      %v598 = vld [vmem:[%s497 + $0xc0] sm:$0xff]
      %v599 = vld [vmem:[%s497 + $0xc8] sm:$0xff]
      %v600 = vld [vmem:[%s497 + $0xd0] sm:$0xff]
      %v601 = vld [vmem:[%s497 + $0xd8] sm:$0xff]
      %v602 = vld [vmem:[%s497 + $0xe0] sm:$0xff]
      %v603 = vld [vmem:[%s497 + $0xe8] sm:$0xff]
      %v604 = vld [vmem:[%s497 + $0xf0] sm:$0xff]
      %v605 = vld [vmem:[%s497 + $0xf8] sm:$0xff]
      %v606 = vunpack.c.l.bf16 %v574
      %v607 = vunpack.c.h.bf16 %v574
      %v608 = vunpack.c.l.bf16 %v575
      %v609 = vunpack.c.h.bf16 %v575
      %v610 = vunpack.c.l.bf16 %v576
      %v611 = vunpack.c.h.bf16 %v576
      %v612 = vunpack.c.l.bf16 %v577
      %v613 = vunpack.c.h.bf16 %v577
      %v614 = vunpack.c.l.bf16 %v578
      %v615 = vunpack.c.h.bf16 %v578
      %v616 = vunpack.c.l.bf16 %v579
      %v617 = vunpack.c.h.bf16 %v579
      %v618 = vunpack.c.l.bf16 %v580
      %v619 = vunpack.c.h.bf16 %v580
      %v620 = vunpack.c.l.bf16 %v581
      %v621 = vunpack.c.h.bf16 %v581
      %v622 = vunpack.c.l.bf16 %v582
      %v623 = vunpack.c.h.bf16 %v582
      %v624 = vunpack.c.l.bf16 %v583
      %v625 = vunpack.c.h.bf16 %v583
      %v626 = vunpack.c.l.bf16 %v584
      %v627 = vunpack.c.h.bf16 %v584
      %v628 = vunpack.c.l.bf16 %v585
      %v629 = vunpack.c.h.bf16 %v585
      %v630 = vunpack.c.l.bf16 %v586
      %v631 = vunpack.c.h.bf16 %v586
      %v632 = vunpack.c.l.bf16 %v587
      %v633 = vunpack.c.h.bf16 %v587
      %v634 = vunpack.c.l.bf16 %v588
      %v635 = vunpack.c.h.bf16 %v588
      %v636 = vunpack.c.l.bf16 %v589
      %v637 = vunpack.c.h.bf16 %v589
      %v638 = vunpack.c.l.bf16 %v590
      %v639 = vunpack.c.h.bf16 %v590
      %v640 = vunpack.c.l.bf16 %v591
      %v641 = vunpack.c.h.bf16 %v591
      %v642 = vunpack.c.l.bf16 %v592
      %v643 = vunpack.c.h.bf16 %v592
      %v644 = vunpack.c.l.bf16 %v593
      %v645 = vunpack.c.h.bf16 %v593
      %v646 = vunpack.c.l.bf16 %v594
      %v647 = vunpack.c.h.bf16 %v594
      %v648 = vunpack.c.l.bf16 %v595
      %v649 = vunpack.c.h.bf16 %v595
      %v650 = vunpack.c.l.bf16 %v596
      %v651 = vunpack.c.h.bf16 %v596
      %v652 = vunpack.c.l.bf16 %v597
      %v653 = vunpack.c.h.bf16 %v597
      %v654 = vunpack.c.l.bf16 %v598
      %v655 = vunpack.c.h.bf16 %v598
      %v656 = vunpack.c.l.bf16 %v599
      %v657 = vunpack.c.h.bf16 %v599
      %v658 = vunpack.c.l.bf16 %v600
      %v659 = vunpack.c.h.bf16 %v600
      %v660 = vunpack.c.l.bf16 %v601
      %v661 = vunpack.c.h.bf16 %v601
      %v662 = vunpack.c.l.bf16 %v602
      %v663 = vunpack.c.h.bf16 %v602
      %v664 = vunpack.c.l.bf16 %v603
      %v665 = vunpack.c.h.bf16 %v603
      %v666 = vunpack.c.l.bf16 %v604
      %v667 = vunpack.c.h.bf16 %v604
      %v668 = vunpack.c.l.bf16 %v605
      %v669 = vunpack.c.h.bf16 %v605
      %v671 = vlaneseq
      %v672 = vshrl.u32 %v671, 7
      %v673 = vsub.s32 0, %v672
      %v674 = vrot.slane %v565, %v673
      %v675 = vlaneseq
      %v676 = vshrl.u32 %v675, 7
      %v677 = vsub.s32 1, %v676
      %v678 = vrot.slane %v565, %v677
      %v681 = vmul.f32 %v606, %v674
      %v682 = vmul.f32 %v607, %v678
      %v683 = vmul.f32 %v608, %v674
      %v684 = vmul.f32 %v609, %v678
      %v685 = vmul.f32 %v610, %v674
      %v686 = vmul.f32 %v611, %v678
      %v687 = vmul.f32 %v612, %v674
      %v688 = vmul.f32 %v613, %v678
      %v689 = vmul.f32 %v614, %v674
      %v690 = vmul.f32 %v615, %v678
      %v691 = vmul.f32 %v616, %v674
      %v692 = vmul.f32 %v617, %v678
      %v693 = vmul.f32 %v618, %v674
      %v694 = vmul.f32 %v619, %v678
      %v695 = vmul.f32 %v620, %v674
      %v696 = vmul.f32 %v621, %v678
      %v697 = vmul.f32 %v622, %v674
      %v698 = vmul.f32 %v623, %v678
      %v699 = vmul.f32 %v624, %v674
      %v700 = vmul.f32 %v625, %v678
      %v701 = vmul.f32 %v626, %v674
      %v702 = vmul.f32 %v627, %v678
      %v703 = vmul.f32 %v628, %v674
      %v704 = vmul.f32 %v629, %v678
      %v705 = vmul.f32 %v630, %v674
      %v706 = vmul.f32 %v631, %v678
      %v707 = vmul.f32 %v632, %v674
      %v708 = vmul.f32 %v633, %v678
      %v709 = vmul.f32 %v634, %v674
      %v710 = vmul.f32 %v635, %v678
      %v711 = vmul.f32 %v636, %v674
      %v712 = vmul.f32 %v637, %v678
      %v713 = vmul.f32 %v638, %v674
      %v714 = vmul.f32 %v639, %v678
      %v715 = vmul.f32 %v640, %v674
      %v716 = vmul.f32 %v641, %v678
      %v717 = vmul.f32 %v642, %v674
      %v718 = vmul.f32 %v643, %v678
      %v719 = vmul.f32 %v644, %v674
      %v720 = vmul.f32 %v645, %v678
      %v721 = vmul.f32 %v646, %v674
      %v722 = vmul.f32 %v647, %v678
      %v723 = vmul.f32 %v648, %v674
      %v724 = vmul.f32 %v649, %v678
      %v725 = vmul.f32 %v650, %v674
      %v726 = vmul.f32 %v651, %v678
      %v727 = vmul.f32 %v652, %v674
      %v728 = vmul.f32 %v653, %v678
      %v729 = vmul.f32 %v654, %v674
      %v730 = vmul.f32 %v655, %v678
      %v731 = vmul.f32 %v656, %v674
      %v732 = vmul.f32 %v657, %v678
      %v733 = vmul.f32 %v658, %v674
      %v734 = vmul.f32 %v659, %v678
      %v735 = vmul.f32 %v660, %v674
      %v736 = vmul.f32 %v661, %v678
      %v737 = vmul.f32 %v662, %v674
      %v738 = vmul.f32 %v663, %v678
      %v739 = vmul.f32 %v664, %v674
      %v740 = vmul.f32 %v665, %v678
      %v741 = vmul.f32 %v666, %v674
      %v742 = vmul.f32 %v667, %v678
      %v743 = vmul.f32 %v668, %v674
      %v744 = vmul.f32 %v669, %v678
      %v746 = vlaneseq
      %v747 = vshrl.u32 %v746, 7
      %v748 = vsub.s32 0, %v747
      %v749 = vrot.slane %v566, %v748
      %v750 = vlaneseq
      %v751 = vshrl.u32 %v750, 7
      %v752 = vsub.s32 1, %v751
      %v753 = vrot.slane %v566, %v752
      %v756 = vadd.f32 %v681, %v749
      %v757 = vadd.f32 %v682, %v753
      %v758 = vadd.f32 %v683, %v749
      %v759 = vadd.f32 %v684, %v753
      %v760 = vadd.f32 %v685, %v749
      %v761 = vadd.f32 %v686, %v753
      %v762 = vadd.f32 %v687, %v749
      %v763 = vadd.f32 %v688, %v753
      %v764 = vadd.f32 %v689, %v749
      %v765 = vadd.f32 %v690, %v753
      %v766 = vadd.f32 %v691, %v749
      %v767 = vadd.f32 %v692, %v753
      %v768 = vadd.f32 %v693, %v749
      %v769 = vadd.f32 %v694, %v753
      %v770 = vadd.f32 %v695, %v749
      %v771 = vadd.f32 %v696, %v753
      %v772 = vadd.f32 %v697, %v749
      %v773 = vadd.f32 %v698, %v753
      %v774 = vadd.f32 %v699, %v749
      %v775 = vadd.f32 %v700, %v753
      %v776 = vadd.f32 %v701, %v749
      %v777 = vadd.f32 %v702, %v753
      %v778 = vadd.f32 %v703, %v749
      %v779 = vadd.f32 %v704, %v753
      %v780 = vadd.f32 %v705, %v749
      %v781 = vadd.f32 %v706, %v753
      %v782 = vadd.f32 %v707, %v749
      %v783 = vadd.f32 %v708, %v753
      %v784 = vadd.f32 %v709, %v749
      %v785 = vadd.f32 %v710, %v753
      %v786 = vadd.f32 %v711, %v749
      %v787 = vadd.f32 %v712, %v753
      %v788 = vadd.f32 %v713, %v749
      %v789 = vadd.f32 %v714, %v753
      %v790 = vadd.f32 %v715, %v749
      %v791 = vadd.f32 %v716, %v753
      %v792 = vadd.f32 %v717, %v749
      %v793 = vadd.f32 %v718, %v753
      %v794 = vadd.f32 %v719, %v749
      %v795 = vadd.f32 %v720, %v753
      %v796 = vadd.f32 %v721, %v749
      %v797 = vadd.f32 %v722, %v753
      %v798 = vadd.f32 %v723, %v749
      %v799 = vadd.f32 %v724, %v753
      %v800 = vadd.f32 %v725, %v749
      %v801 = vadd.f32 %v726, %v753
      %v802 = vadd.f32 %v727, %v749
      %v803 = vadd.f32 %v728, %v753
      %v804 = vadd.f32 %v729, %v749
      %v805 = vadd.f32 %v730, %v753
      %v806 = vadd.f32 %v731, %v749
      %v807 = vadd.f32 %v732, %v753
      %v808 = vadd.f32 %v733, %v749
      %v809 = vadd.f32 %v734, %v753
      %v810 = vadd.f32 %v735, %v749
      %v811 = vadd.f32 %v736, %v753
      %v812 = vadd.f32 %v737, %v749
      %v813 = vadd.f32 %v738, %v753
      %v814 = vadd.f32 %v739, %v749
      %v815 = vadd.f32 %v740, %v753
      %v816 = vadd.f32 %v741, %v749
      %v817 = vadd.f32 %v742, %v753
      %v818 = vadd.f32 %v743, %v749
      %v819 = vadd.f32 %v744, %v753
      %v820 = vmax.f32 %v756, 0.0
      %v821 = vmax.f32 %v757, 0.0
      %v822 = vmax.f32 %v758, 0.0
      %v823 = vmax.f32 %v759, 0.0
      %v824 = vmax.f32 %v760, 0.0
      %v825 = vmax.f32 %v761, 0.0
      %v826 = vmax.f32 %v762, 0.0
      %v827 = vmax.f32 %v763, 0.0
      %v828 = vmax.f32 %v764, 0.0
      %v829 = vmax.f32 %v765, 0.0
      %v830 = vmax.f32 %v766, 0.0
      %v831 = vmax.f32 %v767, 0.0
      %v832 = vmax.f32 %v768, 0.0
      %v833 = vmax.f32 %v769, 0.0
      %v834 = vmax.f32 %v770, 0.0
      %v835 = vmax.f32 %v771, 0.0
      %v836 = vmax.f32 %v772, 0.0
      %v837 = vmax.f32 %v773, 0.0
      %v838 = vmax.f32 %v774, 0.0
      %v839 = vmax.f32 %v775, 0.0
      %v840 = vmax.f32 %v776, 0.0
      %v841 = vmax.f32 %v777, 0.0
      %v842 = vmax.f32 %v778, 0.0
      %v843 = vmax.f32 %v779, 0.0
      %v844 = vmax.f32 %v780, 0.0
      %v845 = vmax.f32 %v781, 0.0
      %v846 = vmax.f32 %v782, 0.0
      %v847 = vmax.f32 %v783, 0.0
      %v848 = vmax.f32 %v784, 0.0
      %v849 = vmax.f32 %v785, 0.0
      %v850 = vmax.f32 %v786, 0.0
      %v851 = vmax.f32 %v787, 0.0
      %v852 = vmax.f32 %v788, 0.0
      %v853 = vmax.f32 %v789, 0.0
      %v854 = vmax.f32 %v790, 0.0
      %v855 = vmax.f32 %v791, 0.0
      %v856 = vmax.f32 %v792, 0.0
      %v857 = vmax.f32 %v793, 0.0
      %v858 = vmax.f32 %v794, 0.0
      %v859 = vmax.f32 %v795, 0.0
      %v860 = vmax.f32 %v796, 0.0
      %v861 = vmax.f32 %v797, 0.0
      %v862 = vmax.f32 %v798, 0.0
      %v863 = vmax.f32 %v799, 0.0
      %v864 = vmax.f32 %v800, 0.0
      %v865 = vmax.f32 %v801, 0.0
      %v866 = vmax.f32 %v802, 0.0
      %v867 = vmax.f32 %v803, 0.0
      %v868 = vmax.f32 %v804, 0.0
      %v869 = vmax.f32 %v805, 0.0
      %v870 = vmax.f32 %v806, 0.0
      %v871 = vmax.f32 %v807, 0.0
      %v872 = vmax.f32 %v808, 0.0
      %v873 = vmax.f32 %v809, 0.0
      %v874 = vmax.f32 %v810, 0.0
      %v875 = vmax.f32 %v811, 0.0
      %v876 = vmax.f32 %v812, 0.0
      %v877 = vmax.f32 %v813, 0.0
      %v878 = vmax.f32 %v814, 0.0
      %v879 = vmax.f32 %v815, 0.0
      %v880 = vmax.f32 %v816, 0.0
      %v881 = vmax.f32 %v817, 0.0
      %v882 = vmax.f32 %v818, 0.0
      %v883 = vmax.f32 %v819, 0.0
      %v884 = vld [vmem:[%s512] sm:$0xff]
      %v885 = vld [vmem:[%s512 + $0x8] sm:$0xff]
      %v886 = vunpack.c.l.bf16 %v884
      %v887 = vunpack.c.h.bf16 %v884
      %v888 = vunpack.c.l.bf16 %v885
      %v889 = vunpack.c.h.bf16 %v885
      %v890 = vmul.f32 %v886, %v674
      %v891 = vmul.f32 %v887, %v678
      %v892 = vmul.f32 %v888, %v674
      %v893 = vmul.f32 %v889, %v678
      %v894 = vadd.f32 %v890, %v749
      %v895 = vadd.f32 %v891, %v753
      %v896 = vadd.f32 %v892, %v749
      %v897 = vadd.f32 %v893, %v753
      %v898 = vmax.f32 %v894, 0.0
      %v899 = vmax.f32 %v895, 0.0
      %v900 = vmax.f32 %v896, 0.0
      %v901 = vmax.f32 %v897, 0.0
      %v902 = vstv %s570
      %v903 = vmul.f32 %v898, %v902
      %v904 = vmul.f32 %v899, %v902
      %v905 = vmul.f32 %v900, %v902
      %v906 = vmul.f32 %v901, %v902
      %v907 = vld [vmem:[%s529] sm:$0xff]
      %v908 = vld [vmem:[%s529 + $0x8] sm:$0xff]
      %v909 = vunpack.c.l.bf16 %v907
      %v910 = vunpack.c.h.bf16 %v907
      %v911 = vunpack.c.l.bf16 %v908
      %v912 = vunpack.c.h.bf16 %v908
      %v913 = vmul.f32 %v909, %v674
      %v914 = vmul.f32 %v910, %v678
      %v915 = vmul.f32 %v911, %v674
      %v916 = vmul.f32 %v912, %v678
      %v917 = vadd.f32 %v913, %v749
      %v918 = vadd.f32 %v914, %v753
      %v919 = vadd.f32 %v915, %v749
      %v920 = vadd.f32 %v916, %v753
      %v921 = vmax.f32 %v917, 0.0
      %v922 = vmax.f32 %v918, 0.0
      %v923 = vmax.f32 %v919, 0.0
      %v924 = vmax.f32 %v920, 0.0
      %v925 = vstv %s573
      %v926 = vmul.f32 %v921, %v925
      %v927 = vmul.f32 %v922, %v925
      %v928 = vmul.f32 %v923, %v925
      %v929 = vmul.f32 %v924, %v925
      %v930 = vlaneseq
      %v931 = vshrl.u32 %v930, 7
      %v932 = vadd.s32 %v931, 8
      %vm933 = vcmp.ge.s32.totalorder %v931, 1
      %vm934 = vcmp.ge.s32.totalorder %v932, 1
      %vm935 = vcmp.lt.s32.totalorder %v931, 15
      %vm936 = vcmp.lt.s32.totalorder %v932, 15
      %v937 = vrot.slane %v904, 7
      %v938 = vrot.slane %v825, 7
      %v939 = vrot.slane %v833, 7
      %v940 = vrot.slane %v841, 7
      %v941 = vrot.slane %v849, 7
      %v942 = vrot.slane %v857, 7
      %v943 = vrot.slane %v865, 7
      %v944 = vrot.slane %v873, 7
      %v945 = vrot.slane %v906, 7
      %v946 = vrot.slane %v827, 7
      %v947 = vrot.slane %v835, 7
      %v948 = vrot.slane %v843, 7
      %v949 = vrot.slane %v851, 7
      %v950 = vrot.slane %v859, 7
      %v951 = vrot.slane %v867, 7
      %v952 = vrot.slane %v875, 7
      %vm953 = vcmp.lt.s32.totalorder %v931, 1
      %v954 = vsel %vm953, %v937, %v945
      %v955 = vsel %vm953, %v938, %v946
      %v956 = vsel %vm953, %v939, %v947
      %v957 = vsel %vm953, %v940, %v948
      %v958 = vsel %vm953, %v941, %v949
      %v959 = vsel %vm953, %v942, %v950
      %v960 = vsel %vm953, %v943, %v951
      %v961 = vsel %vm953, %v944, %v952
      %v962 = vsel %vm953, %v945, %v937
      %v963 = vsel %vm953, %v946, %v938
      %v964 = vsel %vm953, %v947, %v939
      %v965 = vsel %vm953, %v948, %v940
      %v966 = vsel %vm953, %v949, %v941
      %v967 = vsel %vm953, %v950, %v942
      %v968 = vsel %vm953, %v951, %v943
      %v969 = vsel %vm953, %v952, %v944
      %v970 = vsel %vm933, 1, 0
      %v971 = vsel %vm934, 1, 0
      %vm972 = vcmp.eq.s32.totalorder %v970, 1
      %vm973 = vcmp.eq.s32.totalorder %v971, 1
      %v974 = vsel %vm972, %v962, 0.0
      %v975 = vsel %vm973, %v954, 0.0
      %v976 = vsel %vm972, %v963, 0.0
      %v977 = vsel %vm973, %v955, 0.0
      %v978 = vsel %vm972, %v964, 0.0
      %v979 = vsel %vm973, %v956, 0.0
      %v980 = vsel %vm972, %v965, 0.0
      %v981 = vsel %vm973, %v957, 0.0
      %v982 = vsel %vm972, %v966, 0.0
      %v983 = vsel %vm973, %v958, 0.0
      %v984 = vsel %vm972, %v967, 0.0
      %v985 = vsel %vm973, %v959, 0.0
      %v986 = vsel %vm972, %v968, 0.0
      %v987 = vsel %vm973, %v960, 0.0
      %v988 = vsel %vm972, %v969, 0.0
      %v989 = vsel %vm973, %v961, 0.0
      %v990 = vpack.c.bf16 %v975, %v974
      %v991 = vpack.c.bf16 %v977, %v976
      %v992 = vpack.c.bf16 %v979, %v978
      %v993 = vpack.c.bf16 %v981, %v980
      %v994 = vpack.c.bf16 %v983, %v982
      %v995 = vpack.c.bf16 %v985, %v984
      %v996 = vpack.c.bf16 %v987, %v986
      %v997 = vpack.c.bf16 %v989, %v988
      %v998 = vpack.c.bf16 %v905, %v903
      %v999 = vpack.c.bf16 %v826, %v824
      %v1000 = vpack.c.bf16 %v834, %v832
      %v1001 = vpack.c.bf16 %v842, %v840
      %v1002 = vpack.c.bf16 %v850, %v848
      %v1003 = vpack.c.bf16 %v858, %v856
      %v1004 = vpack.c.bf16 %v866, %v864
      %v1005 = vpack.c.bf16 %v874, %v872
      %v1006 = vpack.c.bf16 %v906, %v904
      %v1007 = vpack.c.bf16 %v827, %v825
      %v1008 = vpack.c.bf16 %v835, %v833
      %v1009 = vpack.c.bf16 %v843, %v841
      %v1010 = vpack.c.bf16 %v851, %v849
      %v1011 = vpack.c.bf16 %v859, %v857
      %v1012 = vpack.c.bf16 %v867, %v865
      %v1013 = vpack.c.bf16 %v875, %v873
      %v1014 = vrot.slane %v903, 1
      %v1015 = vrot.slane %v824, 1
      %v1016 = vrot.slane %v832, 1
      %v1017 = vrot.slane %v840, 1
      %v1018 = vrot.slane %v848, 1
      %v1019 = vrot.slane %v856, 1
      %v1020 = vrot.slane %v864, 1
      %v1021 = vrot.slane %v872, 1
      %v1022 = vrot.slane %v905, 1
      %v1023 = vrot.slane %v826, 1
      %v1024 = vrot.slane %v834, 1
      %v1025 = vrot.slane %v842, 1
      %v1026 = vrot.slane %v850, 1
      %v1027 = vrot.slane %v858, 1
      %v1028 = vrot.slane %v866, 1
      %v1029 = vrot.slane %v874, 1
      %vm1030 = vcmp.lt.s32.totalorder %v931, 7
      %v1031 = vsel %vm1030, %v1014, %v1022
      %v1032 = vsel %vm1030, %v1015, %v1023
      %v1033 = vsel %vm1030, %v1016, %v1024
      %v1034 = vsel %vm1030, %v1017, %v1025
      %v1035 = vsel %vm1030, %v1018, %v1026
      %v1036 = vsel %vm1030, %v1019, %v1027
      %v1037 = vsel %vm1030, %v1020, %v1028
      %v1038 = vsel %vm1030, %v1021, %v1029
      %v1039 = vsel %vm1030, %v1022, %v1014
      %v1040 = vsel %vm1030, %v1023, %v1015
      %v1041 = vsel %vm1030, %v1024, %v1016
      %v1042 = vsel %vm1030, %v1025, %v1017
      %v1043 = vsel %vm1030, %v1026, %v1018
      %v1044 = vsel %vm1030, %v1027, %v1019
      %v1045 = vsel %vm1030, %v1028, %v1020
      %v1046 = vsel %vm1030, %v1029, %v1021
      %v1047 = vsel %vm935, 1, 0
      %v1048 = vsel %vm936, 1, 0
      %vm1049 = vcmp.eq.s32.totalorder %v1047, 1
      %vm1050 = vcmp.eq.s32.totalorder %v1048, 1
      %v1051 = vsel %vm1049, %v1031, 0.0
      %v1052 = vsel %vm1050, %v1039, 0.0
      %v1053 = vsel %vm1049, %v1032, 0.0
      %v1054 = vsel %vm1050, %v1040, 0.0
      %v1055 = vsel %vm1049, %v1033, 0.0
      %v1056 = vsel %vm1050, %v1041, 0.0
      %v1057 = vsel %vm1049, %v1034, 0.0
      %v1058 = vsel %vm1050, %v1042, 0.0
      %v1059 = vsel %vm1049, %v1035, 0.0
      %v1060 = vsel %vm1050, %v1043, 0.0
      %v1061 = vsel %vm1049, %v1036, 0.0
      %v1062 = vsel %vm1050, %v1044, 0.0
      %v1063 = vsel %vm1049, %v1037, 0.0
      %v1064 = vsel %vm1050, %v1045, 0.0
      %v1065 = vsel %vm1049, %v1038, 0.0
      %v1066 = vsel %vm1050, %v1046, 0.0
      %v1067 = vpack.c.bf16 %v1052, %v1051
      %v1068 = vpack.c.bf16 %v1054, %v1053
      %v1069 = vpack.c.bf16 %v1056, %v1055
      %v1070 = vpack.c.bf16 %v1058, %v1057
      %v1071 = vpack.c.bf16 %v1060, %v1059
      %v1072 = vpack.c.bf16 %v1062, %v1061
      %v1073 = vpack.c.bf16 %v1064, %v1063
      %v1074 = vpack.c.bf16 %v1066, %v1065
      %v1075 = vrot.slane %v821, 7
      %v1076 = vrot.slane %v829, 7
      %v1077 = vrot.slane %v837, 7
      %v1078 = vrot.slane %v845, 7
      %v1079 = vrot.slane %v853, 7
      %v1080 = vrot.slane %v861, 7
      %v1081 = vrot.slane %v869, 7
      %v1082 = vrot.slane %v877, 7
      %v1083 = vrot.slane %v823, 7
      %v1084 = vrot.slane %v831, 7
      %v1085 = vrot.slane %v839, 7
      %v1086 = vrot.slane %v847, 7
      %v1087 = vrot.slane %v855, 7
      %v1088 = vrot.slane %v863, 7
      %v1089 = vrot.slane %v871, 7
      %v1090 = vrot.slane %v879, 7
      %v1091 = vsel %vm953, %v1075, %v1083
      %v1092 = vsel %vm953, %v1076, %v1084
      %v1093 = vsel %vm953, %v1077, %v1085
      %v1094 = vsel %vm953, %v1078, %v1086
      %v1095 = vsel %vm953, %v1079, %v1087
      %v1096 = vsel %vm953, %v1080, %v1088
      %v1097 = vsel %vm953, %v1081, %v1089
      %v1098 = vsel %vm953, %v1082, %v1090
      %v1099 = vsel %vm953, %v1083, %v1075
      %v1100 = vsel %vm953, %v1084, %v1076
      %v1101 = vsel %vm953, %v1085, %v1077
      %v1102 = vsel %vm953, %v1086, %v1078
      %v1103 = vsel %vm953, %v1087, %v1079
      %v1104 = vsel %vm953, %v1088, %v1080
      %v1105 = vsel %vm953, %v1089, %v1081
      %v1106 = vsel %vm953, %v1090, %v1082
      %v1107 = vsel %vm972, %v1099, 0.0
      %v1108 = vsel %vm973, %v1091, 0.0
      %v1109 = vsel %vm972, %v1100, 0.0
      %v1110 = vsel %vm973, %v1092, 0.0
      %v1111 = vsel %vm972, %v1101, 0.0
      %v1112 = vsel %vm973, %v1093, 0.0
      %v1113 = vsel %vm972, %v1102, 0.0
      %v1114 = vsel %vm973, %v1094, 0.0
      %v1115 = vsel %vm972, %v1103, 0.0
      %v1116 = vsel %vm973, %v1095, 0.0
      %v1117 = vsel %vm972, %v1104, 0.0
      %v1118 = vsel %vm973, %v1096, 0.0
      %v1119 = vsel %vm972, %v1105, 0.0
      %v1120 = vsel %vm973, %v1097, 0.0
      %v1121 = vsel %vm972, %v1106, 0.0
      %v1122 = vsel %vm973, %v1098, 0.0
      %v1123 = vpack.c.bf16 %v1108, %v1107
      %v1124 = vpack.c.bf16 %v1110, %v1109
      %v1125 = vpack.c.bf16 %v1112, %v1111
      %v1126 = vpack.c.bf16 %v1114, %v1113
      %v1127 = vpack.c.bf16 %v1116, %v1115
      %v1128 = vpack.c.bf16 %v1118, %v1117
      %v1129 = vpack.c.bf16 %v1120, %v1119
      %v1130 = vpack.c.bf16 %v1122, %v1121
      %v1131 = vpack.c.bf16 %v822, %v820
      %v1132 = vpack.c.bf16 %v830, %v828
      %v1133 = vpack.c.bf16 %v838, %v836
      %v1134 = vpack.c.bf16 %v846, %v844
      %v1135 = vpack.c.bf16 %v854, %v852
      %v1136 = vpack.c.bf16 %v862, %v860
      %v1137 = vpack.c.bf16 %v870, %v868
      %v1138 = vpack.c.bf16 %v878, %v876
      %v1139 = vpack.c.bf16 %v823, %v821
      %v1140 = vpack.c.bf16 %v831, %v829
      %v1141 = vpack.c.bf16 %v839, %v837
      %v1142 = vpack.c.bf16 %v847, %v845
      %v1143 = vpack.c.bf16 %v855, %v853
      %v1144 = vpack.c.bf16 %v863, %v861
      %v1145 = vpack.c.bf16 %v871, %v869
      %v1146 = vpack.c.bf16 %v879, %v877
      %v1147 = vrot.slane %v820, 1
      %v1148 = vrot.slane %v828, 1
      %v1149 = vrot.slane %v836, 1
      %v1150 = vrot.slane %v844, 1
      %v1151 = vrot.slane %v852, 1
      %v1152 = vrot.slane %v860, 1
      %v1153 = vrot.slane %v868, 1
      %v1154 = vrot.slane %v876, 1
      %v1155 = vrot.slane %v822, 1
      %v1156 = vrot.slane %v830, 1
      %v1157 = vrot.slane %v838, 1
      %v1158 = vrot.slane %v846, 1
      %v1159 = vrot.slane %v854, 1
      %v1160 = vrot.slane %v862, 1
      %v1161 = vrot.slane %v870, 1
      %v1162 = vrot.slane %v878, 1
      %v1163 = vsel %vm1030, %v1147, %v1155
      %v1164 = vsel %vm1030, %v1148, %v1156
      %v1165 = vsel %vm1030, %v1149, %v1157
      %v1166 = vsel %vm1030, %v1150, %v1158
      %v1167 = vsel %vm1030, %v1151, %v1159
      %v1168 = vsel %vm1030, %v1152, %v1160
      %v1169 = vsel %vm1030, %v1153, %v1161
      %v1170 = vsel %vm1030, %v1154, %v1162
      %v1171 = vsel %vm1030, %v1155, %v1147
      %v1172 = vsel %vm1030, %v1156, %v1148
      %v1173 = vsel %vm1030, %v1157, %v1149
      %v1174 = vsel %vm1030, %v1158, %v1150
      %v1175 = vsel %vm1030, %v1159, %v1151
      %v1176 = vsel %vm1030, %v1160, %v1152
      %v1177 = vsel %vm1030, %v1161, %v1153
      %v1178 = vsel %vm1030, %v1162, %v1154
      %v1179 = vsel %vm1049, %v1163, 0.0
      %v1180 = vsel %vm1050, %v1171, 0.0
      %v1181 = vsel %vm1049, %v1164, 0.0
      %v1182 = vsel %vm1050, %v1172, 0.0
      %v1183 = vsel %vm1049, %v1165, 0.0
      %v1184 = vsel %vm1050, %v1173, 0.0
      %v1185 = vsel %vm1049, %v1166, 0.0
      %v1186 = vsel %vm1050, %v1174, 0.0
      %v1187 = vsel %vm1049, %v1167, 0.0
      %v1188 = vsel %vm1050, %v1175, 0.0
      %v1189 = vsel %vm1049, %v1168, 0.0
      %v1190 = vsel %vm1050, %v1176, 0.0
      %v1191 = vsel %vm1049, %v1169, 0.0
      %v1192 = vsel %vm1050, %v1177, 0.0
      %v1193 = vsel %vm1049, %v1170, 0.0
      %v1194 = vsel %vm1050, %v1178, 0.0
      %v1195 = vpack.c.bf16 %v1180, %v1179
      %v1196 = vpack.c.bf16 %v1182, %v1181
      %v1197 = vpack.c.bf16 %v1184, %v1183
      %v1198 = vpack.c.bf16 %v1186, %v1185
      %v1199 = vpack.c.bf16 %v1188, %v1187
      %v1200 = vpack.c.bf16 %v1190, %v1189
      %v1201 = vpack.c.bf16 %v1192, %v1191
      %v1202 = vpack.c.bf16 %v1194, %v1193
      %v1203 = vrot.slane %v881, 7
      %v1204 = vrot.slane %v883, 7
      %v1205 = vsel %vm953, %v1203, %v1204
      %v1206 = vsel %vm953, %v1204, %v1203
      %v1207 = vsel %vm972, %v1206, 0.0
      %v1208 = vsel %vm973, %v1205, 0.0
      %v1209 = vpack.c.bf16 %v1208, %v1207
      %v1210 = vpack.c.bf16 %v882, %v880
      %v1211 = vpack.c.bf16 %v883, %v881
      %v1212 = vrot.slane %v880, 1
      %v1213 = vrot.slane %v882, 1
      %v1214 = vsel %vm1030, %v1212, %v1213
      %v1215 = vsel %vm1030, %v1213, %v1212
      %v1216 = vsel %vm1049, %v1214, 0.0
      %v1217 = vsel %vm1050, %v1215, 0.0
      %v1218 = vpack.c.bf16 %v1217, %v1216
      %v1219 = vrot.slane %v927, 7
      %v1220 = vrot.slane %v929, 7
      %v1221 = vsel %vm953, %v1219, %v1220
      %v1222 = vsel %vm953, %v1220, %v1219
      %v1223 = vsel %vm972, %v1222, 0.0
      %v1224 = vsel %vm973, %v1221, 0.0
      %v1225 = vpack.c.bf16 %v1224, %v1223
      %v1226 = vpack.c.bf16 %v928, %v926
      %v1227 = vpack.c.bf16 %v929, %v927
      %v1228 = vrot.slane %v926, 1
      %v1229 = vrot.slane %v928, 1
      %v1230 = vsel %vm1030, %v1228, %v1229
      %v1231 = vsel %vm1030, %v1229, %v1228
      %v1232 = vsel %vm1049, %v1230, 0.0
      %v1233 = vsel %vm1050, %v1231, 0.0
      %v1234 = vpack.c.bf16 %v1233, %v1232
      %v1235 = vld [vmem:[%s543] sm:$0xf]
      %v1236 = vld [vmem:[%s543 + $0x4] sm:$0xf]
      %v1237 = vld [vmem:[%s543 + $0x8] sm:$0xf]
      %v1238 = vld [vmem:[%s543 + $0xc] sm:$0xf]
      %v1239 = vld [vmem:[%s543 + $0x10] sm:$0xf]
      %v1240 = vld [vmem:[%s543 + $0x14] sm:$0xf]
      %v1241 = vld [vmem:[%s543 + $0x18] sm:$0xf]
      %v1242 = vld [vmem:[%s543 + $0x1c] sm:$0xf]
      %v1243 = vld [vmem:[%s543 + $0x20] sm:$0xf]
      %v1244 = vld [vmem:[%s543 + $0x24] sm:$0xf]
      %v1245 = vld [vmem:[%s543 + $0x28] sm:$0xf]
      %v1246 = vld [vmem:[%s543 + $0x2c] sm:$0xf]
      %v1247 = vld [vmem:[%s543 + $0x30] sm:$0xf]
      %v1248 = vld [vmem:[%s543 + $0x34] sm:$0xf]
      %v1249 = vld [vmem:[%s543 + $0x38] sm:$0xf]
      %v1250 = vld [vmem:[%s543 + $0x3c] sm:$0xf]
      %v1251 = vunpack.c.l.bf16 %v1235
      %v1252 = vunpack.c.l.bf16 %v1236
      %v1253 = vunpack.c.l.bf16 %v1237
      %v1254 = vunpack.c.l.bf16 %v1238
      %v1255 = vunpack.c.l.bf16 %v1239
      %v1256 = vunpack.c.l.bf16 %v1240
      %v1257 = vunpack.c.l.bf16 %v1241
      %v1258 = vunpack.c.l.bf16 %v1242
      %v1259 = vunpack.c.l.bf16 %v1243
      %v1260 = vunpack.c.l.bf16 %v1244
      %v1261 = vunpack.c.l.bf16 %v1245
      %v1262 = vunpack.c.l.bf16 %v1246
      %v1263 = vunpack.c.l.bf16 %v1247
      %v1264 = vunpack.c.l.bf16 %v1248
      %v1265 = vunpack.c.l.bf16 %v1249
      %v1266 = vunpack.c.l.bf16 %v1250
      %v1267 = vld [vmem:[%s6] sm:$0xf]
      %v1268 = vld [vmem:[%s6 + $0x4] sm:$0xf]
      %v1269 = vld [vmem:[%s6 + $0x8] sm:$0xf]
      %v1270 = vld [vmem:[%s6 + $0xc] sm:$0xf]
      %v1271 = vld [vmem:[%s6 + $0x10] sm:$0xf]
      %v1272 = vld [vmem:[%s6 + $0x14] sm:$0xf]
      %v1273 = vld [vmem:[%s6 + $0x18] sm:$0xf]
      %v1274 = vld [vmem:[%s6 + $0x1c] sm:$0xf]
      %v1275 = vld [vmem:[%s6 + $0x20] sm:$0xf]
      %v1276 = vld [vmem:[%s6 + $0x24] sm:$0xf]
      %v1277 = vld [vmem:[%s6 + $0x28] sm:$0xf]
      %v1278 = vld [vmem:[%s6 + $0x2c] sm:$0xf]
      %v1279 = vld [vmem:[%s6 + $0x30] sm:$0xf]
      %v1280 = vld [vmem:[%s6 + $0x34] sm:$0xf]
      %v1281 = vld [vmem:[%s6 + $0x38] sm:$0xf]
      %v1282 = vld [vmem:[%s6 + $0x3c] sm:$0xf]
      %v1283 = vld [vmem:[%s6 + $0x40] sm:$0xf]
      %v1284 = vld [vmem:[%s6 + $0x44] sm:$0xf]
      %v1285 = vld [vmem:[%s6 + $0x48] sm:$0xf]
      %v1286 = vld [vmem:[%s6 + $0x4c] sm:$0xf]
      %v1287 = vld [vmem:[%s6 + $0x50] sm:$0xf]
      %v1288 = vld [vmem:[%s6 + $0x54] sm:$0xf]
      %v1289 = vld [vmem:[%s6 + $0x58] sm:$0xf]
      %v1290 = vld [vmem:[%s6 + $0x5c] sm:$0xf]
      %v1291 = vld [vmem:[%s6 + $0x60] sm:$0xf]
      %v1292 = vld [vmem:[%s6 + $0x64] sm:$0xf]
      %v1293 = vld [vmem:[%s6 + $0x68] sm:$0xf]
      %v1294 = vld [vmem:[%s6 + $0x6c] sm:$0xf]
      %v1295 = vld [vmem:[%s6 + $0x70] sm:$0xf]
      %v1296 = vld [vmem:[%s6 + $0x74] sm:$0xf]
      %v1297 = vld [vmem:[%s6 + $0x78] sm:$0xf]
      %v1298 = vld [vmem:[%s6 + $0x7c] sm:$0xf]
      %v1299 = vld [vmem:[%s6 + $0x80] sm:$0xf]
      %v1300 = vld [vmem:[%s6 + $0x84] sm:$0xf]
      %v1301 = vld [vmem:[%s6 + $0x88] sm:$0xf]
      %v1302 = vld [vmem:[%s6 + $0x8c] sm:$0xf]
      %v1303 = vld [vmem:[%s6 + $0x90] sm:$0xf]
      %v1304 = vld [vmem:[%s6 + $0x94] sm:$0xf]
      %v1305 = vld [vmem:[%s6 + $0x98] sm:$0xf]
      %v1306 = vld [vmem:[%s6 + $0x9c] sm:$0xf]
      %v1307 = vld [vmem:[%s6 + $0xa0] sm:$0xf]
      %v1308 = vld [vmem:[%s6 + $0xa4] sm:$0xf]
      %v1309 = vld [vmem:[%s6 + $0xa8] sm:$0xf]
      %v1310 = vld [vmem:[%s6 + $0xac] sm:$0xf]
      %v1311 = vld [vmem:[%s6 + $0xb0] sm:$0xf]
      %v1312 = vld [vmem:[%s6 + $0xb4] sm:$0xf]
      %v1313 = vld [vmem:[%s6 + $0xb8] sm:$0xf]
      %v1314 = vld [vmem:[%s6 + $0xbc] sm:$0xf]
      %s1315 = scalar_lea.vmem %s6, 192
      %v1316 = vld [vmem:[%s1315] sm:$0xf]
      %v1317 = vld [vmem:[%s1315 + $0x4] sm:$0xf]
      %v1318 = vld [vmem:[%s1315 + $0x8] sm:$0xf]
      %v1319 = vld [vmem:[%s1315 + $0xc] sm:$0xf]
      %v1320 = vld [vmem:[%s1315 + $0x10] sm:$0xf]
      %v1321 = vld [vmem:[%s1315 + $0x14] sm:$0xf]
      %v1322 = vld [vmem:[%s1315 + $0x18] sm:$0xf]
      %v1323 = vld [vmem:[%s1315 + $0x1c] sm:$0xf]
      %v1324 = vld [vmem:[%s1315 + $0x20] sm:$0xf]
      %v1325 = vld [vmem:[%s1315 + $0x24] sm:$0xf]
      %v1326 = vld [vmem:[%s1315 + $0x28] sm:$0xf]
      %v1327 = vld [vmem:[%s1315 + $0x2c] sm:$0xf]
      %v1328 = vld [vmem:[%s1315 + $0x30] sm:$0xf]
      %v1329 = vld [vmem:[%s1315 + $0x34] sm:$0xf]
      %v1330 = vld [vmem:[%s1315 + $0x38] sm:$0xf]
      %v1331 = vld [vmem:[%s1315 + $0x3c] sm:$0xf]
      %v1332 = vld [vmem:[%s1315 + $0x40] sm:$0xf]
      %v1333 = vld [vmem:[%s1315 + $0x44] sm:$0xf]
      %v1334 = vld [vmem:[%s1315 + $0x48] sm:$0xf]
      %v1335 = vld [vmem:[%s1315 + $0x4c] sm:$0xf]
      %v1336 = vld [vmem:[%s1315 + $0x50] sm:$0xf]
      %v1337 = vld [vmem:[%s1315 + $0x54] sm:$0xf]
      %v1338 = vld [vmem:[%s1315 + $0x58] sm:$0xf]
      %v1339 = vld [vmem:[%s1315 + $0x5c] sm:$0xf]
      %v1340 = vld [vmem:[%s1315 + $0x60] sm:$0xf]
      %v1341 = vld [vmem:[%s1315 + $0x64] sm:$0xf]
      %v1342 = vld [vmem:[%s1315 + $0x68] sm:$0xf]
      %v1343 = vld [vmem:[%s1315 + $0x6c] sm:$0xf]
      %v1344 = vld [vmem:[%s1315 + $0x70] sm:$0xf]
      %v1345 = vld [vmem:[%s1315 + $0x74] sm:$0xf]
      %v1346 = vld [vmem:[%s1315 + $0x78] sm:$0xf]
      %v1347 = vld [vmem:[%s1315 + $0x7c] sm:$0xf]
      %v1348 = vld [vmem:[%s1315 + $0x80] sm:$0xf]
      %v1349 = vld [vmem:[%s1315 + $0x84] sm:$0xf]
      %v1350 = vld [vmem:[%s1315 + $0x88] sm:$0xf]
      %v1351 = vld [vmem:[%s1315 + $0x8c] sm:$0xf]
      %v1352 = vld [vmem:[%s1315 + $0x90] sm:$0xf]
      %v1353 = vld [vmem:[%s1315 + $0x94] sm:$0xf]
      %v1354 = vld [vmem:[%s1315 + $0x98] sm:$0xf]
      %v1355 = vld [vmem:[%s1315 + $0x9c] sm:$0xf]
      %v1356 = vld [vmem:[%s1315 + $0xa0] sm:$0xf]
      %v1357 = vld [vmem:[%s1315 + $0xa4] sm:$0xf]
      %v1358 = vld [vmem:[%s1315 + $0xa8] sm:$0xf]
      %v1359 = vld [vmem:[%s1315 + $0xac] sm:$0xf]
      %v1360 = vld [vmem:[%s1315 + $0xb0] sm:$0xf]
      %v1361 = vld [vmem:[%s1315 + $0xb4] sm:$0xf]
      %v1362 = vld [vmem:[%s1315 + $0xb8] sm:$0xf]
      %v1363 = vld [vmem:[%s1315 + $0xbc] sm:$0xf]
      %v1412 = vunpack.c.l.b16 %v1316
      %v1413 = vunpack.c.l.b16 %v1317
      %v1414 = vunpack.c.l.b16 %v1318
      %v1415 = vunpack.c.l.b16 %v1319
      %v1416 = vunpack.c.l.b16 %v1320
      %v1417 = vunpack.c.l.b16 %v1321
      %v1418 = vunpack.c.l.b16 %v1322
      %v1419 = vunpack.c.l.b16 %v1323
      %v1420 = vunpack.c.l.b16 %v1324
      %v1421 = vunpack.c.l.b16 %v1325
      %v1422 = vunpack.c.l.b16 %v1326
      %v1423 = vunpack.c.l.b16 %v1327
      %v1424 = vunpack.c.l.b16 %v1328
      %v1425 = vunpack.c.l.b16 %v1329
      %v1426 = vunpack.c.l.b16 %v1330
      %v1427 = vunpack.c.l.b16 %v1331
      %v1428 = vunpack.c.l.b16 %v1332
      %v1429 = vunpack.c.l.b16 %v1333
      %v1430 = vunpack.c.l.b16 %v1334
      %v1431 = vunpack.c.l.b16 %v1335
      %v1432 = vunpack.c.l.b16 %v1336
      %v1433 = vunpack.c.l.b16 %v1337
      %v1434 = vunpack.c.l.b16 %v1338
      %v1435 = vunpack.c.l.b16 %v1339
      %v1436 = vunpack.c.l.b16 %v1340
      %v1437 = vunpack.c.l.b16 %v1341
      %v1438 = vunpack.c.l.b16 %v1342
      %v1439 = vunpack.c.l.b16 %v1343
      %v1440 = vunpack.c.l.b16 %v1344
      %v1441 = vunpack.c.l.b16 %v1345
      %v1442 = vunpack.c.l.b16 %v1346
      %v1443 = vunpack.c.l.b16 %v1347
      %v1444 = vunpack.c.l.b16 %v1348
      %v1445 = vunpack.c.l.b16 %v1349
      %v1446 = vunpack.c.l.b16 %v1350
      %v1447 = vunpack.c.l.b16 %v1351
      %v1448 = vunpack.c.l.b16 %v1352
      %v1449 = vunpack.c.l.b16 %v1353
      %v1450 = vunpack.c.l.b16 %v1354
      %v1451 = vunpack.c.l.b16 %v1355
      %v1452 = vunpack.c.l.b16 %v1356
      %v1453 = vunpack.c.l.b16 %v1357
      %v1454 = vunpack.c.l.b16 %v1358
      %v1455 = vunpack.c.l.b16 %v1359
      %v1456 = vunpack.c.l.b16 %v1360
      %v1457 = vunpack.c.l.b16 %v1361
      %v1458 = vunpack.c.l.b16 %v1362
      %v1459 = vunpack.c.l.b16 %v1363
      %v1460 = vpack.c.b16 %v1413, %v1412
      %v1461 = vpack.c.b16 %v1415, %v1414
      %v1462 = vpack.c.b16 %v1417, %v1416
      %v1463 = vpack.c.b16 %v1419, %v1418
      %v1464 = vpack.c.b16 %v1421, %v1420
      %v1465 = vpack.c.b16 %v1423, %v1422
      %v1466 = vpack.c.b16 %v1425, %v1424
      %v1467 = vpack.c.b16 %v1427, %v1426
      %v1468 = vpack.c.b16 %v1429, %v1428
      %v1469 = vpack.c.b16 %v1431, %v1430
      %v1470 = vpack.c.b16 %v1433, %v1432
      %v1471 = vpack.c.b16 %v1435, %v1434
      %v1472 = vpack.c.b16 %v1437, %v1436
      %v1473 = vpack.c.b16 %v1439, %v1438
      %v1474 = vpack.c.b16 %v1441, %v1440
      %v1475 = vpack.c.b16 %v1443, %v1442
      %v1476 = vpack.c.b16 %v1445, %v1444
      %v1477 = vpack.c.b16 %v1447, %v1446
      %v1478 = vpack.c.b16 %v1449, %v1448
      %v1479 = vpack.c.b16 %v1451, %v1450
      %v1480 = vpack.c.b16 %v1453, %v1452
      %v1481 = vpack.c.b16 %v1455, %v1454
      %v1482 = vpack.c.b16 %v1457, %v1456
      %v1483 = vpack.c.b16 %v1459, %v1458
      %1508 = vmatprep.subr.bf16.mxu0 0
      %1509 = vmatpush1.bf16.msra.mxu0 %v1460
      %1510 = vmatprep.subr.bf16.mxu0 0
      %1511 = vmatpush1.bf16.msra.mxu0 %v1461
      %1512 = vmatprep.subr.bf16.mxu0 0
      %1513 = vmatpush1.bf16.msra.mxu0 %v1462
      %1514 = vmatprep.subr.bf16.mxu0 0
      %1515 = vmatpush1.bf16.msra.mxu0 %v1463
      %1516 = vmatprep.subr.bf16.mxu0 0
      %1517 = vmatpush1.bf16.msra.mxu0 %v1464
      %1518 = vmatprep.subr.bf16.mxu0 0
      %1519 = vmatpush1.bf16.msra.mxu0 %v1465
      %1520 = vmatprep.subr.bf16.mxu0 0
      %1521 = vmatpush1.bf16.msra.mxu0 %v1466
      %1522 = vmatprep.subr.bf16.mxu0 0
      %1523 = vmatpush1.bf16.msra.mxu0 %v1467
      %1524 = vmatprep.subr.bf16.mxu0 0
      %1525 = vmatpush1.bf16.msra.mxu0 %v1468
      %1526 = vmatprep.subr.bf16.mxu0 0
      %1527 = vmatpush1.bf16.msra.mxu0 %v1469
      %1528 = vmatprep.subr.bf16.mxu0 0
      %1529 = vmatpush1.bf16.msra.mxu0 %v1470
      %1530 = vmatprep.subr.bf16.mxu0 0
      %1531 = vmatpush1.bf16.msra.mxu0 %v1471
      %1532 = vmatprep.subr.bf16.mxu0 0
      %1533 = vmatpush1.bf16.msra.mxu0 %v1472
      %1534 = vmatprep.subr.bf16.mxu0 0
      %1535 = vmatpush1.bf16.msra.mxu0 %v1473
      %1536 = vmatprep.subr.bf16.mxu0 0
      %1537 = vmatpush1.bf16.msra.mxu0 %v1474
      %1538 = vmatprep.subr.bf16.mxu0 0
      %1539 = vmatpush1.bf16.msra.mxu0 %v1475
      %1540 = vmatprep.mubr.bf16.mxu0 %v1131
      %1541 = vmatmul.mubr.bf16.gmra.mrb[0].mxu0 %v1123
      %v1542 = vpop.f32.mrb[0].mxu0
      %v1543 = vadd.f32 0.0, %v1542
      %v1544 = vpop.f32.mrb[0].mxu0
      %v1545 = vpop.f32.mrb[0].mxu0
      %v1546 = vadd.f32 0.0, %v1545
      %v1547 = vpop.f32.mrb[0].mxu0
      %1548 = vmatprep.mubr.bf16.mxu0 %v1132
      %1549 = vmatmul.mubr.bf16.gmra.mrb[0].mxu0 %v1124
      %v1550 = vpop.f32.mrb[0].mxu0
      %v1551 = vadd.f32 0.0, %v1550
      %v1552 = vpop.f32.mrb[0].mxu0
      %v1553 = vpop.f32.mrb[0].mxu0
      %v1554 = vadd.f32 0.0, %v1553
      %v1555 = vpop.f32.mrb[0].mxu0
      %1556 = vmatprep.mubr.bf16.mxu0 %v1133
      %1557 = vmatmul.mubr.bf16.gmra.mrb[0].mxu0 %v1125
      %v1558 = vpop.f32.mrb[0].mxu0
      %v1559 = vadd.f32 0.0, %v1558
      %v1560 = vpop.f32.mrb[0].mxu0
      %v1561 = vpop.f32.mrb[0].mxu0
      %v1562 = vadd.f32 0.0, %v1561
      %v1563 = vpop.f32.mrb[0].mxu0
      %1564 = vmatprep.mubr.bf16.mxu0 %v1134
      %1565 = vmatmul.mubr.bf16.gmra.mrb[0].mxu0 %v1126
      %v1566 = vpop.f32.mrb[0].mxu0
      %v1567 = vadd.f32 0.0, %v1566
      %v1568 = vpop.f32.mrb[0].mxu0
      %v1569 = vpop.f32.mrb[0].mxu0
      %v1570 = vadd.f32 0.0, %v1569
      %v1571 = vpop.f32.mrb[0].mxu0
      %1572 = vmatprep.mubr.bf16.mxu0 %v1135
      %1573 = vmatmul.mubr.bf16.gmra.mrb[0].mxu0 %v1127
      %v1574 = vpop.f32.mrb[0].mxu0
      %v1575 = vadd.f32 0.0, %v1574
      %v1576 = vpop.f32.mrb[0].mxu0
      %v1577 = vpop.f32.mrb[0].mxu0
      %v1578 = vadd.f32 0.0, %v1577
      %v1579 = vpop.f32.mrb[0].mxu0
      %1580 = vmatprep.mubr.bf16.mxu0 %v1136
      %1581 = vmatmul.mubr.bf16.gmra.mrb[0].mxu0 %v1128
      %v1582 = vpop.f32.mrb[0].mxu0
      %v1583 = vadd.f32 0.0, %v1582
      %v1584 = vpop.f32.mrb[0].mxu0
      %v1585 = vpop.f32.mrb[0].mxu0
      %v1586 = vadd.f32 0.0, %v1585
      %v1587 = vpop.f32.mrb[0].mxu0
      %1588 = vmatprep.mubr.bf16.mxu0 %v1137
      %1589 = vmatmul.mubr.bf16.gmra.mrb[0].mxu0 %v1129
      %v1590 = vpop.f32.mrb[0].mxu0
      %v1591 = vadd.f32 0.0, %v1590
      %v1592 = vpop.f32.mrb[0].mxu0
      %v1593 = vpop.f32.mrb[0].mxu0
      %v1594 = vadd.f32 0.0, %v1593
      %v1595 = vpop.f32.mrb[0].mxu0
      %1596 = vmatprep.mubr.bf16.mxu0 %v1138
      %1597 = vmatmul.mubr.bf16.gmra.mrb[0].mxu0 %v1130
      %v1598 = vpop.f32.mrb[0].mxu0
      %v1599 = vadd.f32 0.0, %v1598
      %v1600 = vpop.f32.mrb[0].mxu0
      %v1601 = vpop.f32.mrb[0].mxu0
      %v1602 = vadd.f32 0.0, %v1601
      %v1603 = vpop.f32.mrb[0].mxu0
      %1604 = vdwg.mxu0
      %1605 = vmatprep.subr.bf16.mxu0 0
      %1606 = vmatpush1.bf16.msra.mxu0 %v1476
      %1607 = vmatprep.subr.bf16.mxu0 0
      %1608 = vmatpush1.bf16.msra.mxu0 %v1477
      %1609 = vmatprep.subr.bf16.mxu0 0
      %1610 = vmatpush1.bf16.msra.mxu0 %v1478
      %1611 = vmatprep.subr.bf16.mxu0 0
      %1612 = vmatpush1.bf16.msra.mxu0 %v1479
      %1613 = vmatprep.subr.bf16.mxu0 0
      %1614 = vmatpush1.bf16.msra.mxu0 %v1480
      %1615 = vmatprep.subr.bf16.mxu0 0
      %1616 = vmatpush1.bf16.msra.mxu0 %v1481
      %1617 = vmatprep.subr.bf16.mxu0 0
      %1618 = vmatpush1.bf16.msra.mxu0 %v1482
      %1619 = vmatprep.subr.bf16.mxu0 0
      %1620 = vmatpush1.bf16.msra.mxu0 %v1483
      %1621 = vmatprep.subr.bf16.mxu0 0
      %1622 = vmatpush1.bf16.msra.mxu0 0
      %1623 = vmatprep.subr.bf16.mxu0 0
      %1624 = vmatpush1.bf16.msra.mxu0 0
      %1625 = vmatprep.subr.bf16.mxu0 0
      %1626 = vmatpush1.bf16.msra.mxu0 0
      %1627 = vmatprep.subr.bf16.mxu0 0
      %1628 = vmatpush1.bf16.msra.mxu0 0
      %1629 = vmatprep.subr.bf16.mxu0 0
      %1630 = vmatpush1.bf16.msra.mxu0 0
      %1631 = vmatprep.subr.bf16.mxu0 0
      %1632 = vmatpush1.bf16.msra.mxu0 0
      %1633 = vmatprep.subr.bf16.mxu0 0
      %1634 = vmatpush1.bf16.msra.mxu0 0
      %1635 = vmatprep.subr.bf16.mxu0 0
      %1636 = vmatpush1.bf16.msra.mxu0 0
      %1637 = vmatprep.mubr.bf16.mxu0 0
      %1638 = vmatmul.mubr.bf16.gmra.mrb[0].mxu0 %v1139
      %v1639 = vpop.f32.mrb[0].mxu0
      %v1640 = vadd.f32 %v1543, %v1639
      %v1641 = vpop.f32.mrb[0].mxu0
      %v1642 = vpop.f32.mrb[0].mxu0
      %v1643 = vadd.f32 %v1546, %v1642
      %v1644 = vpop.f32.mrb[0].mxu0
      %1645 = vmatprep.mubr.bf16.mxu0 0
      %1646 = vmatmul.mubr.bf16.gmra.mrb[0].mxu0 %v1140
      %v1647 = vpop.f32.mrb[0].mxu0
      %v1648 = vadd.f32 %v1551, %v1647
      %v1649 = vpop.f32.mrb[0].mxu0
      %v1650 = vpop.f32.mrb[0].mxu0
      %v1651 = vadd.f32 %v1554, %v1650
      %v1652 = vpop.f32.mrb[0].mxu0
      %1653 = vmatprep.mubr.bf16.mxu0 0
      %1654 = vmatmul.mubr.bf16.gmra.mrb[0].mxu0 %v1141
      %v1655 = vpop.f32.mrb[0].mxu0
      %v1656 = vadd.f32 %v1559, %v1655
      %v1657 = vpop.f32.mrb[0].mxu0
      %v1658 = vpop.f32.mrb[0].mxu0
      %v1659 = vadd.f32 %v1562, %v1658
      %v1660 = vpop.f32.mrb[0].mxu0
      %1661 = vmatprep.mubr.bf16.mxu0 0
      %1662 = vmatmul.mubr.bf16.gmra.mrb[0].mxu0 %v1142
      %v1663 = vpop.f32.mrb[0].mxu0
      %v1664 = vadd.f32 %v1567, %v1663
      %v1665 = vpop.f32.mrb[0].mxu0
      %v1666 = vpop.f32.mrb[0].mxu0
      %v1667 = vadd.f32 %v1570, %v1666
      %v1668 = vpop.f32.mrb[0].mxu0
      %1669 = vmatprep.mubr.bf16.mxu0 0
      %1670 = vmatmul.mubr.bf16.gmra.mrb[0].mxu0 %v1143
      %v1671 = vpop.f32.mrb[0].mxu0
      %v1672 = vadd.f32 %v1575, %v1671
      %v1673 = vpop.f32.mrb[0].mxu0
      %v1674 = vpop.f32.mrb[0].mxu0
      %v1675 = vadd.f32 %v1578, %v1674
      %v1676 = vpop.f32.mrb[0].mxu0
      %1677 = vmatprep.mubr.bf16.mxu0 0
      %1678 = vmatmul.mubr.bf16.gmra.mrb[0].mxu0 %v1144
      %v1679 = vpop.f32.mrb[0].mxu0
      %v1680 = vadd.f32 %v1583, %v1679
      %v1681 = vpop.f32.mrb[0].mxu0
      %v1682 = vpop.f32.mrb[0].mxu0
      %v1683 = vadd.f32 %v1586, %v1682
      %v1684 = vpop.f32.mrb[0].mxu0
      %1685 = vmatprep.mubr.bf16.mxu0 0
      %1686 = vmatmul.mubr.bf16.gmra.mrb[0].mxu0 %v1145
      %v1687 = vpop.f32.mrb[0].mxu0
      %v1688 = vadd.f32 %v1591, %v1687
      %v1689 = vpop.f32.mrb[0].mxu0
      %v1690 = vpop.f32.mrb[0].mxu0
      %v1691 = vadd.f32 %v1594, %v1690
      %v1692 = vpop.f32.mrb[0].mxu0
      %1693 = vmatprep.mubr.bf16.mxu0 0
      %1694 = vmatmul.mubr.bf16.gmra.mrb[0].mxu0 %v1146
      %v1695 = vpop.f32.mrb[0].mxu0
      %v1696 = vadd.f32 %v1599, %v1695
      %v1697 = vpop.f32.mrb[0].mxu0
      %v1698 = vpop.f32.mrb[0].mxu0
      %v1699 = vadd.f32 %v1602, %v1698
      %v1700 = vpop.f32.mrb[0].mxu0
      %1701 = vdwg.mxu0
      %v1750 = vunpack.c.l.b16 %v1267
      %v1751 = vunpack.c.l.b16 %v1268
      %v1752 = vunpack.c.l.b16 %v1269
      %v1753 = vunpack.c.l.b16 %v1270
      %v1754 = vunpack.c.l.b16 %v1271
      %v1755 = vunpack.c.l.b16 %v1272
      %v1756 = vunpack.c.l.b16 %v1273
      %v1757 = vunpack.c.l.b16 %v1274
      %v1758 = vunpack.c.l.b16 %v1275
      %v1759 = vunpack.c.l.b16 %v1276
      %v1760 = vunpack.c.l.b16 %v1277
      %v1761 = vunpack.c.l.b16 %v1278
      %v1762 = vunpack.c.l.b16 %v1279
      %v1763 = vunpack.c.l.b16 %v1280
      %v1764 = vunpack.c.l.b16 %v1281
      %v1765 = vunpack.c.l.b16 %v1282
      %v1766 = vunpack.c.l.b16 %v1283
      %v1767 = vunpack.c.l.b16 %v1284
      %v1768 = vunpack.c.l.b16 %v1285
      %v1769 = vunpack.c.l.b16 %v1286
      %v1770 = vunpack.c.l.b16 %v1287
      %v1771 = vunpack.c.l.b16 %v1288
      %v1772 = vunpack.c.l.b16 %v1289
      %v1773 = vunpack.c.l.b16 %v1290
      %v1774 = vunpack.c.l.b16 %v1291
      %v1775 = vunpack.c.l.b16 %v1292
      %v1776 = vunpack.c.l.b16 %v1293
      %v1777 = vunpack.c.l.b16 %v1294
      %v1778 = vunpack.c.l.b16 %v1295
      %v1779 = vunpack.c.l.b16 %v1296
      %v1780 = vunpack.c.l.b16 %v1297
      %v1781 = vunpack.c.l.b16 %v1298
      %v1782 = vunpack.c.l.b16 %v1299
      %v1783 = vunpack.c.l.b16 %v1300
      %v1784 = vunpack.c.l.b16 %v1301
      %v1785 = vunpack.c.l.b16 %v1302
      %v1786 = vunpack.c.l.b16 %v1303
      %v1787 = vunpack.c.l.b16 %v1304
      %v1788 = vunpack.c.l.b16 %v1305
      %v1789 = vunpack.c.l.b16 %v1306
      %v1790 = vunpack.c.l.b16 %v1307
      %v1791 = vunpack.c.l.b16 %v1308
      %v1792 = vunpack.c.l.b16 %v1309
      %v1793 = vunpack.c.l.b16 %v1310
      %v1794 = vunpack.c.l.b16 %v1311
      %v1795 = vunpack.c.l.b16 %v1312
      %v1796 = vunpack.c.l.b16 %v1313
      %v1797 = vunpack.c.l.b16 %v1314
      %v1798 = vpack.c.b16 %v1751, %v1750
      %v1799 = vpack.c.b16 %v1753, %v1752
      %v1800 = vpack.c.b16 %v1755, %v1754
      %v1801 = vpack.c.b16 %v1757, %v1756
      %v1802 = vpack.c.b16 %v1759, %v1758
      %v1803 = vpack.c.b16 %v1761, %v1760
      %v1804 = vpack.c.b16 %v1763, %v1762
      %v1805 = vpack.c.b16 %v1765, %v1764
      %v1806 = vpack.c.b16 %v1767, %v1766
      %v1807 = vpack.c.b16 %v1769, %v1768
      %v1808 = vpack.c.b16 %v1771, %v1770
      %v1809 = vpack.c.b16 %v1773, %v1772
      %v1810 = vpack.c.b16 %v1775, %v1774
      %v1811 = vpack.c.b16 %v1777, %v1776
      %v1812 = vpack.c.b16 %v1779, %v1778
      %v1813 = vpack.c.b16 %v1781, %v1780
      %v1814 = vpack.c.b16 %v1783, %v1782
      %v1815 = vpack.c.b16 %v1785, %v1784
      %v1816 = vpack.c.b16 %v1787, %v1786
      %v1817 = vpack.c.b16 %v1789, %v1788
      %v1818 = vpack.c.b16 %v1791, %v1790
      %v1819 = vpack.c.b16 %v1793, %v1792
      %v1820 = vpack.c.b16 %v1795, %v1794
      %v1821 = vpack.c.b16 %v1797, %v1796
      %1846 = vmatprep.subr.bf16.mxu0 0
      %1847 = vmatpush1.bf16.msra.mxu0 %v1798
      %1848 = vmatprep.subr.bf16.mxu0 0
      %1849 = vmatpush1.bf16.msra.mxu0 %v1799
      %1850 = vmatprep.subr.bf16.mxu0 0
      %1851 = vmatpush1.bf16.msra.mxu0 %v1800
      %1852 = vmatprep.subr.bf16.mxu0 0
      %1853 = vmatpush1.bf16.msra.mxu0 %v1801
      %1854 = vmatprep.subr.bf16.mxu0 0
      %1855 = vmatpush1.bf16.msra.mxu0 %v1802
      %1856 = vmatprep.subr.bf16.mxu0 0
      %1857 = vmatpush1.bf16.msra.mxu0 %v1803
      %1858 = vmatprep.subr.bf16.mxu0 0
      %1859 = vmatpush1.bf16.msra.mxu0 %v1804
      %1860 = vmatprep.subr.bf16.mxu0 0
      %1861 = vmatpush1.bf16.msra.mxu0 %v1805
      %1862 = vmatprep.subr.bf16.mxu0 0
      %1863 = vmatpush1.bf16.msra.mxu0 %v1806
      %1864 = vmatprep.subr.bf16.mxu0 0
      %1865 = vmatpush1.bf16.msra.mxu0 %v1807
      %1866 = vmatprep.subr.bf16.mxu0 0
      %1867 = vmatpush1.bf16.msra.mxu0 %v1808
      %1868 = vmatprep.subr.bf16.mxu0 0
      %1869 = vmatpush1.bf16.msra.mxu0 %v1809
      %1870 = vmatprep.subr.bf16.mxu0 0
      %1871 = vmatpush1.bf16.msra.mxu0 %v1810
      %1872 = vmatprep.subr.bf16.mxu0 0
      %1873 = vmatpush1.bf16.msra.mxu0 %v1811
      %1874 = vmatprep.subr.bf16.mxu0 0
      %1875 = vmatpush1.bf16.msra.mxu0 %v1812
      %1876 = vmatprep.subr.bf16.mxu0 0
      %1877 = vmatpush1.bf16.msra.mxu0 %v1813
      %1878 = vmatprep.mubr.bf16.mxu0 %v998
      %1879 = vmatmul.mubr.bf16.gmra.mrb[0].mxu0 %v990
      %v1880 = vpop.f32.mrb[0].mxu0
      %v1881 = vadd.f32 %v1640, %v1880
      %v1882 = vpop.f32.mrb[0].mxu0
      %v1883 = vpop.f32.mrb[0].mxu0
      %v1884 = vadd.f32 %v1643, %v1883
      %v1885 = vpop.f32.mrb[0].mxu0
      %1886 = vmatprep.mubr.bf16.mxu0 %v999
      %1887 = vmatmul.mubr.bf16.gmra.mrb[0].mxu0 %v991
      %v1888 = vpop.f32.mrb[0].mxu0
      %v1889 = vadd.f32 %v1648, %v1888
      %v1890 = vpop.f32.mrb[0].mxu0
      %v1891 = vpop.f32.mrb[0].mxu0
      %v1892 = vadd.f32 %v1651, %v1891
      %v1893 = vpop.f32.mrb[0].mxu0
      %1894 = vmatprep.mubr.bf16.mxu0 %v1000
      %1895 = vmatmul.mubr.bf16.gmra.mrb[0].mxu0 %v992
      %v1896 = vpop.f32.mrb[0].mxu0
      %v1897 = vadd.f32 %v1656, %v1896
      %v1898 = vpop.f32.mrb[0].mxu0
      %v1899 = vpop.f32.mrb[0].mxu0
      %v1900 = vadd.f32 %v1659, %v1899
      %v1901 = vpop.f32.mrb[0].mxu0
      %1902 = vmatprep.mubr.bf16.mxu0 %v1001
      %1903 = vmatmul.mubr.bf16.gmra.mrb[0].mxu0 %v993
      %v1904 = vpop.f32.mrb[0].mxu0
      %v1905 = vadd.f32 %v1664, %v1904
      %v1906 = vpop.f32.mrb[0].mxu0
      %v1907 = vpop.f32.mrb[0].mxu0
      %v1908 = vadd.f32 %v1667, %v1907
      %v1909 = vpop.f32.mrb[0].mxu0
      %1910 = vmatprep.mubr.bf16.mxu0 %v1002
      %1911 = vmatmul.mubr.bf16.gmra.mrb[0].mxu0 %v994
      %v1912 = vpop.f32.mrb[0].mxu0
      %v1913 = vadd.f32 %v1672, %v1912
      %v1914 = vpop.f32.mrb[0].mxu0
      %v1915 = vpop.f32.mrb[0].mxu0
      %v1916 = vadd.f32 %v1675, %v1915
      %v1917 = vpop.f32.mrb[0].mxu0
      %1918 = vmatprep.mubr.bf16.mxu0 %v1003
      %1919 = vmatmul.mubr.bf16.gmra.mrb[0].mxu0 %v995
      %v1920 = vpop.f32.mrb[0].mxu0
      %v1921 = vadd.f32 %v1680, %v1920
      %v1922 = vpop.f32.mrb[0].mxu0
      %v1923 = vpop.f32.mrb[0].mxu0
      %v1924 = vadd.f32 %v1683, %v1923
      %v1925 = vpop.f32.mrb[0].mxu0
      %1926 = vmatprep.mubr.bf16.mxu0 %v1004
      %1927 = vmatmul.mubr.bf16.gmra.mrb[0].mxu0 %v996
      %v1928 = vpop.f32.mrb[0].mxu0
      %v1929 = vadd.f32 %v1688, %v1928
      %v1930 = vpop.f32.mrb[0].mxu0
      %v1931 = vpop.f32.mrb[0].mxu0
      %v1932 = vadd.f32 %v1691, %v1931
      %v1933 = vpop.f32.mrb[0].mxu0
      %1934 = vmatprep.mubr.bf16.mxu0 %v1005
      %1935 = vmatmul.mubr.bf16.gmra.mrb[0].mxu0 %v997
      %v1936 = vpop.f32.mrb[0].mxu0
      %v1937 = vadd.f32 %v1696, %v1936
      %v1938 = vpop.f32.mrb[0].mxu0
      %v1939 = vpop.f32.mrb[0].mxu0
      %v1940 = vadd.f32 %v1699, %v1939
      %v1941 = vpop.f32.mrb[0].mxu0
      %1942 = vdwg.mxu0
      %1943 = vmatprep.subr.bf16.mxu0 0
      %1944 = vmatpush1.bf16.msra.mxu0 %v1814
      %1945 = vmatprep.subr.bf16.mxu0 0
      %1946 = vmatpush1.bf16.msra.mxu0 %v1815
      %1947 = vmatprep.subr.bf16.mxu0 0
      %1948 = vmatpush1.bf16.msra.mxu0 %v1816
      %1949 = vmatprep.subr.bf16.mxu0 0
      %1950 = vmatpush1.bf16.msra.mxu0 %v1817
      %1951 = vmatprep.subr.bf16.mxu0 0
      %1952 = vmatpush1.bf16.msra.mxu0 %v1818
      %1953 = vmatprep.subr.bf16.mxu0 0
      %1954 = vmatpush1.bf16.msra.mxu0 %v1819
      %1955 = vmatprep.subr.bf16.mxu0 0
      %1956 = vmatpush1.bf16.msra.mxu0 %v1820
      %1957 = vmatprep.subr.bf16.mxu0 0
      %1958 = vmatpush1.bf16.msra.mxu0 %v1821
      %1959 = vmatprep.subr.bf16.mxu0 0
      %1960 = vmatpush1.bf16.msra.mxu0 0
      %1961 = vmatprep.subr.bf16.mxu0 0
      %1962 = vmatpush1.bf16.msra.mxu0 0
      %1963 = vmatprep.subr.bf16.mxu0 0
      %1964 = vmatpush1.bf16.msra.mxu0 0
      %1965 = vmatprep.subr.bf16.mxu0 0
      %1966 = vmatpush1.bf16.msra.mxu0 0
      %1967 = vmatprep.subr.bf16.mxu0 0
      %1968 = vmatpush1.bf16.msra.mxu0 0
      %1969 = vmatprep.subr.bf16.mxu0 0
      %1970 = vmatpush1.bf16.msra.mxu0 0
      %1971 = vmatprep.subr.bf16.mxu0 0
      %1972 = vmatpush1.bf16.msra.mxu0 0
      %1973 = vmatprep.subr.bf16.mxu0 0
      %1974 = vmatpush1.bf16.msra.mxu0 0
      %1975 = vmatprep.mubr.bf16.mxu0 0
      %1976 = vmatmul.mubr.bf16.gmra.mrb[0].mxu0 %v1006
      %v1977 = vpop.f32.mrb[0].mxu0
      %v1978 = vadd.f32 %v1881, %v1977
      %v1979 = vpop.f32.mrb[0].mxu0
      %v1980 = vpop.f32.mrb[0].mxu0
      %v1981 = vadd.f32 %v1884, %v1980
      %v1982 = vpop.f32.mrb[0].mxu0
      %1983 = vmatprep.mubr.bf16.mxu0 0
      %1984 = vmatmul.mubr.bf16.gmra.mrb[0].mxu0 %v1007
      %v1985 = vpop.f32.mrb[0].mxu0
      %v1986 = vadd.f32 %v1889, %v1985
      %v1987 = vpop.f32.mrb[0].mxu0
      %v1988 = vpop.f32.mrb[0].mxu0
      %v1989 = vadd.f32 %v1892, %v1988
      %v1990 = vpop.f32.mrb[0].mxu0
      %1991 = vmatprep.mubr.bf16.mxu0 0
      %1992 = vmatmul.mubr.bf16.gmra.mrb[0].mxu0 %v1008
      %v1993 = vpop.f32.mrb[0].mxu0
      %v1994 = vadd.f32 %v1897, %v1993
      %v1995 = vpop.f32.mrb[0].mxu0
      %v1996 = vpop.f32.mrb[0].mxu0
      %v1997 = vadd.f32 %v1900, %v1996
      %v1998 = vpop.f32.mrb[0].mxu0
      %1999 = vmatprep.mubr.bf16.mxu0 0
      %2000 = vmatmul.mubr.bf16.gmra.mrb[0].mxu0 %v1009
      %v2001 = vpop.f32.mrb[0].mxu0
      %v2002 = vadd.f32 %v1905, %v2001
      %v2003 = vpop.f32.mrb[0].mxu0
      %v2004 = vpop.f32.mrb[0].mxu0
      %v2005 = vadd.f32 %v1908, %v2004
      %v2006 = vpop.f32.mrb[0].mxu0
      %2007 = vmatprep.mubr.bf16.mxu0 0
      %2008 = vmatmul.mubr.bf16.gmra.mrb[0].mxu0 %v1010
      %v2009 = vpop.f32.mrb[0].mxu0
      %v2010 = vadd.f32 %v1913, %v2009
      %v2011 = vpop.f32.mrb[0].mxu0
      %v2012 = vpop.f32.mrb[0].mxu0
      %v2013 = vadd.f32 %v1916, %v2012
      %v2014 = vpop.f32.mrb[0].mxu0
      %2015 = vmatprep.mubr.bf16.mxu0 0
      %2016 = vmatmul.mubr.bf16.gmra.mrb[0].mxu0 %v1011
      %v2017 = vpop.f32.mrb[0].mxu0
      %v2018 = vadd.f32 %v1921, %v2017
      %v2019 = vpop.f32.mrb[0].mxu0
      %v2020 = vpop.f32.mrb[0].mxu0
      %v2021 = vadd.f32 %v1924, %v2020
      %v2022 = vpop.f32.mrb[0].mxu0
      %2023 = vmatprep.mubr.bf16.mxu0 0
      %2024 = vmatmul.mubr.bf16.gmra.mrb[0].mxu0 %v1012
      %v2025 = vpop.f32.mrb[0].mxu0
      %v2026 = vadd.f32 %v1929, %v2025
      %v2027 = vpop.f32.mrb[0].mxu0
      %v2028 = vpop.f32.mrb[0].mxu0
      %v2029 = vadd.f32 %v1932, %v2028
      %v2030 = vpop.f32.mrb[0].mxu0
      %2031 = vmatprep.mubr.bf16.mxu0 0
      %2032 = vmatmul.mubr.bf16.gmra.mrb[0].mxu0 %v1013
      %v2033 = vpop.f32.mrb[0].mxu0
      %v2034 = vadd.f32 %v1937, %v2033
      %v2035 = vpop.f32.mrb[0].mxu0
      %v2036 = vpop.f32.mrb[0].mxu0
      %v2037 = vadd.f32 %v1940, %v2036
      %v2038 = vpop.f32.mrb[0].mxu0
      %2039 = vdwg.mxu0
      %s2040 = scalar_lea.vmem %s6, 384
      %v2041 = vld [vmem:[%s2040] sm:$0xf]
      %v2042 = vld [vmem:[%s2040 + $0x4] sm:$0xf]
      %v2043 = vld [vmem:[%s2040 + $0x8] sm:$0xf]
      %v2044 = vld [vmem:[%s2040 + $0xc] sm:$0xf]
      %v2045 = vld [vmem:[%s2040 + $0x10] sm:$0xf]
      %v2046 = vld [vmem:[%s2040 + $0x14] sm:$0xf]
      %v2047 = vld [vmem:[%s2040 + $0x18] sm:$0xf]
      %v2048 = vld [vmem:[%s2040 + $0x1c] sm:$0xf]
      %v2049 = vld [vmem:[%s2040 + $0x20] sm:$0xf]
      %v2050 = vld [vmem:[%s2040 + $0x24] sm:$0xf]
      %v2051 = vld [vmem:[%s2040 + $0x28] sm:$0xf]
      %v2052 = vld [vmem:[%s2040 + $0x2c] sm:$0xf]
      %v2053 = vld [vmem:[%s2040 + $0x30] sm:$0xf]
      %v2054 = vld [vmem:[%s2040 + $0x34] sm:$0xf]
      %v2055 = vld [vmem:[%s2040 + $0x38] sm:$0xf]
      %v2056 = vld [vmem:[%s2040 + $0x3c] sm:$0xf]
      %v2057 = vld [vmem:[%s2040 + $0x40] sm:$0xf]
      %v2058 = vld [vmem:[%s2040 + $0x44] sm:$0xf]
      %v2059 = vld [vmem:[%s2040 + $0x48] sm:$0xf]
      %v2060 = vld [vmem:[%s2040 + $0x4c] sm:$0xf]
      %v2061 = vld [vmem:[%s2040 + $0x50] sm:$0xf]
      %v2062 = vld [vmem:[%s2040 + $0x54] sm:$0xf]
      %v2063 = vld [vmem:[%s2040 + $0x58] sm:$0xf]
      %v2064 = vld [vmem:[%s2040 + $0x5c] sm:$0xf]
      %v2065 = vld [vmem:[%s2040 + $0x60] sm:$0xf]
      %v2066 = vld [vmem:[%s2040 + $0x64] sm:$0xf]
      %v2067 = vld [vmem:[%s2040 + $0x68] sm:$0xf]
      %v2068 = vld [vmem:[%s2040 + $0x6c] sm:$0xf]
      %v2069 = vld [vmem:[%s2040 + $0x70] sm:$0xf]
      %v2070 = vld [vmem:[%s2040 + $0x74] sm:$0xf]
      %v2071 = vld [vmem:[%s2040 + $0x78] sm:$0xf]
      %v2072 = vld [vmem:[%s2040 + $0x7c] sm:$0xf]
      %v2073 = vld [vmem:[%s2040 + $0x80] sm:$0xf]
      %v2074 = vld [vmem:[%s2040 + $0x84] sm:$0xf]
      %v2075 = vld [vmem:[%s2040 + $0x88] sm:$0xf]
      %v2076 = vld [vmem:[%s2040 + $0x8c] sm:$0xf]
      %v2077 = vld [vmem:[%s2040 + $0x90] sm:$0xf]
      %v2078 = vld [vmem:[%s2040 + $0x94] sm:$0xf]
      %v2079 = vld [vmem:[%s2040 + $0x98] sm:$0xf]
      %v2080 = vld [vmem:[%s2040 + $0x9c] sm:$0xf]
      %v2081 = vld [vmem:[%s2040 + $0xa0] sm:$0xf]
      %v2082 = vld [vmem:[%s2040 + $0xa4] sm:$0xf]
      %v2083 = vld [vmem:[%s2040 + $0xa8] sm:$0xf]
      %v2084 = vld [vmem:[%s2040 + $0xac] sm:$0xf]
      %v2085 = vld [vmem:[%s2040 + $0xb0] sm:$0xf]
      %v2086 = vld [vmem:[%s2040 + $0xb4] sm:$0xf]
      %v2087 = vld [vmem:[%s2040 + $0xb8] sm:$0xf]
      %v2088 = vld [vmem:[%s2040 + $0xbc] sm:$0xf]
      %v2137 = vunpack.c.l.b16 %v2041
      %v2138 = vunpack.c.l.b16 %v2042
      %v2139 = vunpack.c.l.b16 %v2043
      %v2140 = vunpack.c.l.b16 %v2044
      %v2141 = vunpack.c.l.b16 %v2045
      %v2142 = vunpack.c.l.b16 %v2046
      %v2143 = vunpack.c.l.b16 %v2047
      %v2144 = vunpack.c.l.b16 %v2048
      %v2145 = vunpack.c.l.b16 %v2049
      %v2146 = vunpack.c.l.b16 %v2050
      %v2147 = vunpack.c.l.b16 %v2051
      %v2148 = vunpack.c.l.b16 %v2052
      %v2149 = vunpack.c.l.b16 %v2053
      %v2150 = vunpack.c.l.b16 %v2054
      %v2151 = vunpack.c.l.b16 %v2055
      %v2152 = vunpack.c.l.b16 %v2056
      %v2153 = vunpack.c.l.b16 %v2057
      %v2154 = vunpack.c.l.b16 %v2058
      %v2155 = vunpack.c.l.b16 %v2059
      %v2156 = vunpack.c.l.b16 %v2060
      %v2157 = vunpack.c.l.b16 %v2061
      %v2158 = vunpack.c.l.b16 %v2062
      %v2159 = vunpack.c.l.b16 %v2063
      %v2160 = vunpack.c.l.b16 %v2064
      %v2161 = vunpack.c.l.b16 %v2065
      %v2162 = vunpack.c.l.b16 %v2066
      %v2163 = vunpack.c.l.b16 %v2067
      %v2164 = vunpack.c.l.b16 %v2068
      %v2165 = vunpack.c.l.b16 %v2069
      %v2166 = vunpack.c.l.b16 %v2070
      %v2167 = vunpack.c.l.b16 %v2071
      %v2168 = vunpack.c.l.b16 %v2072
      %v2169 = vunpack.c.l.b16 %v2073
      %v2170 = vunpack.c.l.b16 %v2074
      %v2171 = vunpack.c.l.b16 %v2075
      %v2172 = vunpack.c.l.b16 %v2076
      %v2173 = vunpack.c.l.b16 %v2077
      %v2174 = vunpack.c.l.b16 %v2078
      %v2175 = vunpack.c.l.b16 %v2079
      %v2176 = vunpack.c.l.b16 %v2080
      %v2177 = vunpack.c.l.b16 %v2081
      %v2178 = vunpack.c.l.b16 %v2082
      %v2179 = vunpack.c.l.b16 %v2083
      %v2180 = vunpack.c.l.b16 %v2084
      %v2181 = vunpack.c.l.b16 %v2085
      %v2182 = vunpack.c.l.b16 %v2086
      %v2183 = vunpack.c.l.b16 %v2087
      %v2184 = vunpack.c.l.b16 %v2088
      %v2185 = vpack.c.b16 %v2138, %v2137
      %v2186 = vpack.c.b16 %v2140, %v2139
      %v2187 = vpack.c.b16 %v2142, %v2141
      %v2188 = vpack.c.b16 %v2144, %v2143
      %v2189 = vpack.c.b16 %v2146, %v2145
      %v2190 = vpack.c.b16 %v2148, %v2147
      %v2191 = vpack.c.b16 %v2150, %v2149
      %v2192 = vpack.c.b16 %v2152, %v2151
      %v2193 = vpack.c.b16 %v2154, %v2153
      %v2194 = vpack.c.b16 %v2156, %v2155
      %v2195 = vpack.c.b16 %v2158, %v2157
      %v2196 = vpack.c.b16 %v2160, %v2159
      %v2197 = vpack.c.b16 %v2162, %v2161
      %v2198 = vpack.c.b16 %v2164, %v2163
      %v2199 = vpack.c.b16 %v2166, %v2165
      %v2200 = vpack.c.b16 %v2168, %v2167
      %v2201 = vpack.c.b16 %v2170, %v2169
      %v2202 = vpack.c.b16 %v2172, %v2171
      %v2203 = vpack.c.b16 %v2174, %v2173
      %v2204 = vpack.c.b16 %v2176, %v2175
      %v2205 = vpack.c.b16 %v2178, %v2177
      %v2206 = vpack.c.b16 %v2180, %v2179
      %v2207 = vpack.c.b16 %v2182, %v2181
      %v2208 = vpack.c.b16 %v2184, %v2183
      %2233 = vmatprep.subr.bf16.mxu0 0
      %2234 = vmatpush1.bf16.msra.mxu0 %v2185
      %2235 = vmatprep.subr.bf16.mxu0 0
      %2236 = vmatpush1.bf16.msra.mxu0 %v2186
      %2237 = vmatprep.subr.bf16.mxu0 0
      %2238 = vmatpush1.bf16.msra.mxu0 %v2187
      %2239 = vmatprep.subr.bf16.mxu0 0
      %2240 = vmatpush1.bf16.msra.mxu0 %v2188
      %2241 = vmatprep.subr.bf16.mxu0 0
      %2242 = vmatpush1.bf16.msra.mxu0 %v2189
      %2243 = vmatprep.subr.bf16.mxu0 0
      %2244 = vmatpush1.bf16.msra.mxu0 %v2190
      %2245 = vmatprep.subr.bf16.mxu0 0
      %2246 = vmatpush1.bf16.msra.mxu0 %v2191
      %2247 = vmatprep.subr.bf16.mxu0 0
      %2248 = vmatpush1.bf16.msra.mxu0 %v2192
      %2249 = vmatprep.subr.bf16.mxu0 0
      %2250 = vmatpush1.bf16.msra.mxu0 %v2193
      %2251 = vmatprep.subr.bf16.mxu0 0
      %2252 = vmatpush1.bf16.msra.mxu0 %v2194
      %2253 = vmatprep.subr.bf16.mxu0 0
      %2254 = vmatpush1.bf16.msra.mxu0 %v2195
      %2255 = vmatprep.subr.bf16.mxu0 0
      %2256 = vmatpush1.bf16.msra.mxu0 %v2196
      %2257 = vmatprep.subr.bf16.mxu0 0
      %2258 = vmatpush1.bf16.msra.mxu0 %v2197
      %2259 = vmatprep.subr.bf16.mxu0 0
      %2260 = vmatpush1.bf16.msra.mxu0 %v2198
      %2261 = vmatprep.subr.bf16.mxu0 0
      %2262 = vmatpush1.bf16.msra.mxu0 %v2199
      %2263 = vmatprep.subr.bf16.mxu0 0
      %2264 = vmatpush1.bf16.msra.mxu0 %v2200
      %2265 = vmatprep.mubr.bf16.mxu0 %v999
      %2266 = vmatmul.mubr.bf16.gmra.mrb[0].mxu0 %v991
      %v2267 = vpop.f32.mrb[0].mxu0
      %v2268 = vadd.f32 0.0, %v2267
      %v2269 = vpop.f32.mrb[0].mxu0
      %v2270 = vpop.f32.mrb[0].mxu0
      %v2271 = vadd.f32 0.0, %v2270
      %v2272 = vpop.f32.mrb[0].mxu0
      %2273 = vmatprep.mubr.bf16.mxu0 %v1000
      %2274 = vmatmul.mubr.bf16.gmra.mrb[0].mxu0 %v992
      %v2275 = vpop.f32.mrb[0].mxu0
      %v2276 = vadd.f32 0.0, %v2275
      %v2277 = vpop.f32.mrb[0].mxu0
      %v2278 = vpop.f32.mrb[0].mxu0
      %v2279 = vadd.f32 0.0, %v2278
      %v2280 = vpop.f32.mrb[0].mxu0
      %2281 = vmatprep.mubr.bf16.mxu0 %v1001
      %2282 = vmatmul.mubr.bf16.gmra.mrb[0].mxu0 %v993
      %v2283 = vpop.f32.mrb[0].mxu0
      %v2284 = vadd.f32 0.0, %v2283
      %v2285 = vpop.f32.mrb[0].mxu0
      %v2286 = vpop.f32.mrb[0].mxu0
      %v2287 = vadd.f32 0.0, %v2286
      %v2288 = vpop.f32.mrb[0].mxu0
      %2289 = vmatprep.mubr.bf16.mxu0 %v1002
      %2290 = vmatmul.mubr.bf16.gmra.mrb[0].mxu0 %v994
      %v2291 = vpop.f32.mrb[0].mxu0
      %v2292 = vadd.f32 0.0, %v2291
      %v2293 = vpop.f32.mrb[0].mxu0
      %v2294 = vpop.f32.mrb[0].mxu0
      %v2295 = vadd.f32 0.0, %v2294
      %v2296 = vpop.f32.mrb[0].mxu0
      %2297 = vmatprep.mubr.bf16.mxu0 %v1003
      %2298 = vmatmul.mubr.bf16.gmra.mrb[0].mxu0 %v995
      %v2299 = vpop.f32.mrb[0].mxu0
      %v2300 = vadd.f32 0.0, %v2299
      %v2301 = vpop.f32.mrb[0].mxu0
      %v2302 = vpop.f32.mrb[0].mxu0
      %v2303 = vadd.f32 0.0, %v2302
      %v2304 = vpop.f32.mrb[0].mxu0
      %2305 = vmatprep.mubr.bf16.mxu0 %v1004
      %2306 = vmatmul.mubr.bf16.gmra.mrb[0].mxu0 %v996
      %v2307 = vpop.f32.mrb[0].mxu0
      %v2308 = vadd.f32 0.0, %v2307
      %v2309 = vpop.f32.mrb[0].mxu0
      %v2310 = vpop.f32.mrb[0].mxu0
      %v2311 = vadd.f32 0.0, %v2310
      %v2312 = vpop.f32.mrb[0].mxu0
      %2313 = vmatprep.mubr.bf16.mxu0 %v1005
      %2314 = vmatmul.mubr.bf16.gmra.mrb[0].mxu0 %v997
      %v2315 = vpop.f32.mrb[0].mxu0
      %v2316 = vadd.f32 0.0, %v2315
      %v2317 = vpop.f32.mrb[0].mxu0
      %v2318 = vpop.f32.mrb[0].mxu0
      %v2319 = vadd.f32 0.0, %v2318
      %v2320 = vpop.f32.mrb[0].mxu0
      %2321 = vmatprep.mubr.bf16.mxu0 %v1210
      %2322 = vmatmul.mubr.bf16.gmra.mrb[0].mxu0 %v1209
      %v2323 = vpop.f32.mrb[0].mxu0
      %v2324 = vadd.f32 0.0, %v2323
      %v2325 = vpop.f32.mrb[0].mxu0
      %v2326 = vpop.f32.mrb[0].mxu0
      %v2327 = vadd.f32 0.0, %v2326
      %v2328 = vpop.f32.mrb[0].mxu0
      %2329 = vdwg.mxu0
      %2330 = vmatprep.subr.bf16.mxu0 0
      %2331 = vmatpush1.bf16.msra.mxu0 %v2201
      %2332 = vmatprep.subr.bf16.mxu0 0
      %2333 = vmatpush1.bf16.msra.mxu0 %v2202
      %2334 = vmatprep.subr.bf16.mxu0 0
      %2335 = vmatpush1.bf16.msra.mxu0 %v2203
      %2336 = vmatprep.subr.bf16.mxu0 0
      %2337 = vmatpush1.bf16.msra.mxu0 %v2204
      %2338 = vmatprep.subr.bf16.mxu0 0
      %2339 = vmatpush1.bf16.msra.mxu0 %v2205
      %2340 = vmatprep.subr.bf16.mxu0 0
      %2341 = vmatpush1.bf16.msra.mxu0 %v2206
      %2342 = vmatprep.subr.bf16.mxu0 0
      %2343 = vmatpush1.bf16.msra.mxu0 %v2207
      %2344 = vmatprep.subr.bf16.mxu0 0
      %2345 = vmatpush1.bf16.msra.mxu0 %v2208
      %2346 = vmatprep.subr.bf16.mxu0 0
      %2347 = vmatpush1.bf16.msra.mxu0 0
      %2348 = vmatprep.subr.bf16.mxu0 0
      %2349 = vmatpush1.bf16.msra.mxu0 0
      %2350 = vmatprep.subr.bf16.mxu0 0
      %2351 = vmatpush1.bf16.msra.mxu0 0
      %2352 = vmatprep.subr.bf16.mxu0 0
      %2353 = vmatpush1.bf16.msra.mxu0 0
      %2354 = vmatprep.subr.bf16.mxu0 0
      %2355 = vmatpush1.bf16.msra.mxu0 0
      %2356 = vmatprep.subr.bf16.mxu0 0
      %2357 = vmatpush1.bf16.msra.mxu0 0
      %2358 = vmatprep.subr.bf16.mxu0 0
      %2359 = vmatpush1.bf16.msra.mxu0 0
      %2360 = vmatprep.subr.bf16.mxu0 0
      %2361 = vmatpush1.bf16.msra.mxu0 0
      %2362 = vmatprep.mubr.bf16.mxu0 0
      %2363 = vmatmul.mubr.bf16.gmra.mrb[0].mxu0 %v1007
      %v2364 = vpop.f32.mrb[0].mxu0
      %v2365 = vadd.f32 %v2268, %v2364
      %v2366 = vpop.f32.mrb[0].mxu0
      %v2367 = vpop.f32.mrb[0].mxu0
      %v2368 = vadd.f32 %v2271, %v2367
      %v2369 = vpop.f32.mrb[0].mxu0
      %2370 = vmatprep.mubr.bf16.mxu0 0
      %2371 = vmatmul.mubr.bf16.gmra.mrb[0].mxu0 %v1008
      %v2372 = vpop.f32.mrb[0].mxu0
      %v2373 = vadd.f32 %v2276, %v2372
      %v2374 = vpop.f32.mrb[0].mxu0
      %v2375 = vpop.f32.mrb[0].mxu0
      %v2376 = vadd.f32 %v2279, %v2375
      %v2377 = vpop.f32.mrb[0].mxu0
      %2378 = vmatprep.mubr.bf16.mxu0 0
      %2379 = vmatmul.mubr.bf16.gmra.mrb[0].mxu0 %v1009
      %v2380 = vpop.f32.mrb[0].mxu0
      %v2381 = vadd.f32 %v2284, %v2380
      %v2382 = vpop.f32.mrb[0].mxu0
      %v2383 = vpop.f32.mrb[0].mxu0
      %v2384 = vadd.f32 %v2287, %v2383
      %v2385 = vpop.f32.mrb[0].mxu0
      %2386 = vmatprep.mubr.bf16.mxu0 0
      %2387 = vmatmul.mubr.bf16.gmra.mrb[0].mxu0 %v1010
      %v2388 = vpop.f32.mrb[0].mxu0
      %v2389 = vadd.f32 %v2292, %v2388
      %v2390 = vpop.f32.mrb[0].mxu0
      %v2391 = vpop.f32.mrb[0].mxu0
      %v2392 = vadd.f32 %v2295, %v2391
      %v2393 = vpop.f32.mrb[0].mxu0
      %2394 = vmatprep.mubr.bf16.mxu0 0
      %2395 = vmatmul.mubr.bf16.gmra.mrb[0].mxu0 %v1011
      %v2396 = vpop.f32.mrb[0].mxu0
      %v2397 = vadd.f32 %v2300, %v2396
      %v2398 = vpop.f32.mrb[0].mxu0
      %v2399 = vpop.f32.mrb[0].mxu0
      %v2400 = vadd.f32 %v2303, %v2399
      %v2401 = vpop.f32.mrb[0].mxu0
      %2402 = vmatprep.mubr.bf16.mxu0 0
      %2403 = vmatmul.mubr.bf16.gmra.mrb[0].mxu0 %v1012
      %v2404 = vpop.f32.mrb[0].mxu0
      %v2405 = vadd.f32 %v2308, %v2404
      %v2406 = vpop.f32.mrb[0].mxu0
      %v2407 = vpop.f32.mrb[0].mxu0
      %v2408 = vadd.f32 %v2311, %v2407
      %v2409 = vpop.f32.mrb[0].mxu0
      %2410 = vmatprep.mubr.bf16.mxu0 0
      %2411 = vmatmul.mubr.bf16.gmra.mrb[0].mxu0 %v1013
      %v2412 = vpop.f32.mrb[0].mxu0
      %v2413 = vadd.f32 %v2316, %v2412
      %v2414 = vpop.f32.mrb[0].mxu0
      %v2415 = vpop.f32.mrb[0].mxu0
      %v2416 = vadd.f32 %v2319, %v2415
      %v2417 = vpop.f32.mrb[0].mxu0
      %2418 = vmatprep.mubr.bf16.mxu0 0
      %2419 = vmatmul.mubr.bf16.gmra.mrb[0].mxu0 %v1211
      %v2420 = vpop.f32.mrb[0].mxu0
      %v2421 = vadd.f32 %v2324, %v2420
      %v2422 = vpop.f32.mrb[0].mxu0
      %v2423 = vpop.f32.mrb[0].mxu0
      %v2424 = vadd.f32 %v2327, %v2423
      %v2425 = vpop.f32.mrb[0].mxu0
      %2426 = vdwg.mxu0
      %v2427 = vadd.f32 %v1978, %v2365
      %v2428 = vadd.f32 %v1981, %v2368
      %v2429 = vadd.f32 %v1986, %v2373
      %v2430 = vadd.f32 %v1989, %v2376
      %v2431 = vadd.f32 %v1994, %v2381
      %v2432 = vadd.f32 %v1997, %v2384
      %v2433 = vadd.f32 %v2002, %v2389
      %v2434 = vadd.f32 %v2005, %v2392
      %v2435 = vadd.f32 %v2010, %v2397
      %v2436 = vadd.f32 %v2013, %v2400
      %v2437 = vadd.f32 %v2018, %v2405
      %v2438 = vadd.f32 %v2021, %v2408
      %v2439 = vadd.f32 %v2026, %v2413
      %v2440 = vadd.f32 %v2029, %v2416
      %v2441 = vadd.f32 %v2034, %v2421
      %v2442 = vadd.f32 %v2037, %v2424
      %v2443 = vadd.f32 %v2427, %v1251
      %v2444 = vadd.f32 %v2428, %v1252
      %v2445 = vadd.f32 %v2429, %v1253
      %v2446 = vadd.f32 %v2430, %v1254
      %v2447 = vadd.f32 %v2431, %v1255
      %v2448 = vadd.f32 %v2432, %v1256
      %v2449 = vadd.f32 %v2433, %v1257
      %v2450 = vadd.f32 %v2434, %v1258
      %v2451 = vadd.f32 %v2435, %v1259
      %v2452 = vadd.f32 %v2436, %v1260
      %v2453 = vadd.f32 %v2437, %v1261
      %v2454 = vadd.f32 %v2438, %v1262
      %v2455 = vadd.f32 %v2439, %v1263
      %v2456 = vadd.f32 %v2440, %v1264
      %v2457 = vadd.f32 %v2441, %v1265
      %v2458 = vadd.f32 %v2442, %v1266
      %v2459 = vadd.f32 %v2443, %v2444
      %v2460 = vadd.f32 %v2459, %v2445
      %v2461 = vadd.f32 %v2460, %v2446
      %v2462 = vadd.f32 %v2461, %v2447
      %v2463 = vadd.f32 %v2462, %v2448
      %v2464 = vadd.f32 %v2463, %v2449
      %v2465 = vadd.f32 %v2464, %v2450
      %v2466 = vadd.f32 %v2465, %v2451
      %v2467 = vadd.f32 %v2466, %v2452
      %v2468 = vadd.f32 %v2467, %v2453
      %v2469 = vadd.f32 %v2468, %v2454
      %v2470 = vadd.f32 %v2469, %v2455
      %v2471 = vadd.f32 %v2470, %v2456
      %v2472 = vadd.f32 %v2471, %v2457
      %v2473 = vadd.f32 %v2472, %v2458
      %v2474 = vrot.slane %v2473, 4
      %v2475 = vadd.f32 %v2473, %v2474
      %v2476 = vrot.slane %v2475, 2
      %v2477 = vadd.f32 %v2475, %v2476
      %v2478 = vrot.slane %v2477, 1
      %v2479 = vadd.f32 %v2477, %v2478
      %v2480 = vadd.f32 %v2479, 0.0
      %v2481 = vmul.f32 %v2443, %v2443
      %v2482 = vmul.f32 %v2444, %v2444
      %v2483 = vmul.f32 %v2445, %v2445
      %v2484 = vmul.f32 %v2446, %v2446
      %v2485 = vmul.f32 %v2447, %v2447
      %v2486 = vmul.f32 %v2448, %v2448
      %v2487 = vmul.f32 %v2449, %v2449
      %v2488 = vmul.f32 %v2450, %v2450
      %v2489 = vmul.f32 %v2451, %v2451
      %v2490 = vmul.f32 %v2452, %v2452
      %v2491 = vmul.f32 %v2453, %v2453
      %v2492 = vmul.f32 %v2454, %v2454
      %v2493 = vmul.f32 %v2455, %v2455
      %v2494 = vmul.f32 %v2456, %v2456
      %v2495 = vmul.f32 %v2457, %v2457
      %v2496 = vmul.f32 %v2458, %v2458
      %v2497 = vadd.f32 %v2481, %v2482
      %v2498 = vadd.f32 %v2497, %v2483
      %v2499 = vadd.f32 %v2498, %v2484
      %v2500 = vadd.f32 %v2499, %v2485
      %v2501 = vadd.f32 %v2500, %v2486
      %v2502 = vadd.f32 %v2501, %v2487
      %v2503 = vadd.f32 %v2502, %v2488
      %v2504 = vadd.f32 %v2503, %v2489
      %v2505 = vadd.f32 %v2504, %v2490
      %v2506 = vadd.f32 %v2505, %v2491
      %v2507 = vadd.f32 %v2506, %v2492
      %v2508 = vadd.f32 %v2507, %v2493
      %v2509 = vadd.f32 %v2508, %v2494
      %v2510 = vadd.f32 %v2509, %v2495
      %v2511 = vadd.f32 %v2510, %v2496
      %v2512 = vrot.slane %v2511, 4
      %v2513 = vadd.f32 %v2511, %v2512
      %v2514 = vrot.slane %v2513, 2
      %v2515 = vadd.f32 %v2513, %v2514
      %v2516 = vrot.slane %v2515, 1
      %v2517 = vadd.f32 %v2515, %v2516
      %v2518 = vadd.f32 %v2517, 0.0
      %v2520 = vlaneseq
      %v2521 = vshrl.u32 %v2520, 7
      %v2522 = vsub.s32 0, %v2521
      %v2523 = vrot.slane %v567, %v2522
      %v2525 = vadd.f32 %v2443, %v2523
      %v2526 = vadd.f32 %v2444, %v2523
      %v2527 = vadd.f32 %v2445, %v2523
      %v2528 = vadd.f32 %v2446, %v2523
      %v2529 = vadd.f32 %v2447, %v2523
      %v2530 = vadd.f32 %v2448, %v2523
      %v2531 = vadd.f32 %v2449, %v2523
      %v2532 = vadd.f32 %v2450, %v2523
      %v2533 = vadd.f32 %v2451, %v2523
      %v2534 = vadd.f32 %v2452, %v2523
      %v2535 = vadd.f32 %v2453, %v2523
      %v2536 = vadd.f32 %v2454, %v2523
      %v2537 = vadd.f32 %v2455, %v2523
      %v2538 = vadd.f32 %v2456, %v2523
      %v2539 = vadd.f32 %v2457, %v2523
      %v2540 = vadd.f32 %v2458, %v2523
      %v2541 = vpack.c.bf16 %v2526, %v2525
      %v2542 = vpack.c.bf16 %v2528, %v2527
      %v2543 = vpack.c.bf16 %v2530, %v2529
      %v2544 = vpack.c.bf16 %v2532, %v2531
      %v2545 = vpack.c.bf16 %v2534, %v2533
      %v2546 = vpack.c.bf16 %v2536, %v2535
      %v2547 = vpack.c.bf16 %v2538, %v2537
      %v2548 = vpack.c.bf16 %v2540, %v2539
      %v2557 = vunpack.c.l.b16 %v2541
      %v2558 = vunpack.c.h.b16 %v2541
      %v2559 = vunpack.c.l.b16 %v2542
      %v2560 = vunpack.c.h.b16 %v2542
      %v2561 = vunpack.c.l.b16 %v2543
      %v2562 = vunpack.c.h.b16 %v2543
      %v2563 = vunpack.c.l.b16 %v2544
      %v2564 = vunpack.c.h.b16 %v2544
      %v2565 = vunpack.c.l.b16 %v2545
      %v2566 = vunpack.c.h.b16 %v2545
      %v2567 = vunpack.c.l.b16 %v2546
      %v2568 = vunpack.c.h.b16 %v2546
      %v2569 = vunpack.c.l.b16 %v2547
      %v2570 = vunpack.c.h.b16 %v2547
      %v2571 = vunpack.c.l.b16 %v2548
      %v2572 = vunpack.c.h.b16 %v2548
      %v2573 = vpack.c.b16 %v2557, %v2557
      %v2574 = vpack.c.b16 %v2558, %v2558
      %v2575 = vpack.c.b16 %v2559, %v2559
      %v2576 = vpack.c.b16 %v2560, %v2560
      %v2577 = vpack.c.b16 %v2561, %v2561
      %v2578 = vpack.c.b16 %v2562, %v2562
      %v2579 = vpack.c.b16 %v2563, %v2563
      %v2580 = vpack.c.b16 %v2564, %v2564
      %v2581 = vpack.c.b16 %v2565, %v2565
      %v2582 = vpack.c.b16 %v2566, %v2566
      %v2583 = vpack.c.b16 %v2567, %v2567
      %v2584 = vpack.c.b16 %v2568, %v2568
      %v2585 = vpack.c.b16 %v2569, %v2569
      %v2586 = vpack.c.b16 %v2570, %v2570
      %v2587 = vpack.c.b16 %v2571, %v2571
      %v2588 = vpack.c.b16 %v2572, %v2572
      %2605 = vst [vmem:[%s554] sm:$0xf] %v2573
      %2606 = vst [vmem:[%s554 + $0x8] sm:$0xf] %v2574
      %2607 = vst [vmem:[%s554 + $0x20] sm:$0xf] %v2575
      %2608 = vst [vmem:[%s554 + $0x28] sm:$0xf] %v2576
      %2609 = vst [vmem:[%s554 + $0x40] sm:$0xf] %v2577
      %2610 = vst [vmem:[%s554 + $0x48] sm:$0xf] %v2578
      %2611 = vst [vmem:[%s554 + $0x60] sm:$0xf] %v2579
      %2612 = vst [vmem:[%s554 + $0x68] sm:$0xf] %v2580
      %2613 = vst [vmem:[%s554 + $0x80] sm:$0xf] %v2581
      %2614 = vst [vmem:[%s554 + $0x88] sm:$0xf] %v2582
      %2615 = vst [vmem:[%s554 + $0xa0] sm:$0xf] %v2583
      %2616 = vst [vmem:[%s554 + $0xa8] sm:$0xf] %v2584
      %2617 = vst [vmem:[%s554 + $0xc0] sm:$0xf] %v2585
      %2618 = vst [vmem:[%s554 + $0xc8] sm:$0xf] %v2586
      %2619 = vst [vmem:[%s554 + $0xe0] sm:$0xf] %v2587
      %2620 = vst [vmem:[%s554 + $0xe8] sm:$0xf] %v2588
      %v2621 = vld [vmem:[%s6] sm:$0xf]
      %v2622 = vld [vmem:[%s6 + $0x4] sm:$0xf]
      %v2623 = vld [vmem:[%s6 + $0x8] sm:$0xf]
      %v2624 = vld [vmem:[%s6 + $0xc] sm:$0xf]
      %v2625 = vld [vmem:[%s6 + $0x10] sm:$0xf]
      %v2626 = vld [vmem:[%s6 + $0x14] sm:$0xf]
      %v2627 = vld [vmem:[%s6 + $0x18] sm:$0xf]
      %v2628 = vld [vmem:[%s6 + $0x1c] sm:$0xf]
      %v2629 = vld [vmem:[%s6 + $0x20] sm:$0xf]
      %v2630 = vld [vmem:[%s6 + $0x24] sm:$0xf]
      %v2631 = vld [vmem:[%s6 + $0x28] sm:$0xf]
      %v2632 = vld [vmem:[%s6 + $0x2c] sm:$0xf]
      %v2633 = vld [vmem:[%s6 + $0x30] sm:$0xf]
      %v2634 = vld [vmem:[%s6 + $0x34] sm:$0xf]
      %v2635 = vld [vmem:[%s6 + $0x38] sm:$0xf]
      %v2636 = vld [vmem:[%s6 + $0x3c] sm:$0xf]
      %v2637 = vld [vmem:[%s6 + $0x40] sm:$0xf]
      %v2638 = vld [vmem:[%s6 + $0x44] sm:$0xf]
      %v2639 = vld [vmem:[%s6 + $0x48] sm:$0xf]
      %v2640 = vld [vmem:[%s6 + $0x4c] sm:$0xf]
      %v2641 = vld [vmem:[%s6 + $0x50] sm:$0xf]
      %v2642 = vld [vmem:[%s6 + $0x54] sm:$0xf]
      %v2643 = vld [vmem:[%s6 + $0x58] sm:$0xf]
      %v2644 = vld [vmem:[%s6 + $0x5c] sm:$0xf]
      %v2645 = vld [vmem:[%s6 + $0x60] sm:$0xf]
      %v2646 = vld [vmem:[%s6 + $0x64] sm:$0xf]
      %v2647 = vld [vmem:[%s6 + $0x68] sm:$0xf]
      %v2648 = vld [vmem:[%s6 + $0x6c] sm:$0xf]
      %v2649 = vld [vmem:[%s6 + $0x70] sm:$0xf]
      %v2650 = vld [vmem:[%s6 + $0x74] sm:$0xf]
      %v2651 = vld [vmem:[%s6 + $0x78] sm:$0xf]
      %v2652 = vld [vmem:[%s6 + $0x7c] sm:$0xf]
      %v2653 = vld [vmem:[%s6 + $0x80] sm:$0xf]
      %v2654 = vld [vmem:[%s6 + $0x84] sm:$0xf]
      %v2655 = vld [vmem:[%s6 + $0x88] sm:$0xf]
      %v2656 = vld [vmem:[%s6 + $0x8c] sm:$0xf]
      %v2657 = vld [vmem:[%s6 + $0x90] sm:$0xf]
      %v2658 = vld [vmem:[%s6 + $0x94] sm:$0xf]
      %v2659 = vld [vmem:[%s6 + $0x98] sm:$0xf]
      %v2660 = vld [vmem:[%s6 + $0x9c] sm:$0xf]
      %v2661 = vld [vmem:[%s6 + $0xa0] sm:$0xf]
      %v2662 = vld [vmem:[%s6 + $0xa4] sm:$0xf]
      %v2663 = vld [vmem:[%s6 + $0xa8] sm:$0xf]
      %v2664 = vld [vmem:[%s6 + $0xac] sm:$0xf]
      %v2665 = vld [vmem:[%s6 + $0xb0] sm:$0xf]
      %v2666 = vld [vmem:[%s6 + $0xb4] sm:$0xf]
      %v2667 = vld [vmem:[%s6 + $0xb8] sm:$0xf]
      %v2668 = vld [vmem:[%s6 + $0xbc] sm:$0xf]
      %v2669 = vld [vmem:[%s1315] sm:$0xf]
      %v2670 = vld [vmem:[%s1315 + $0x4] sm:$0xf]
      %v2671 = vld [vmem:[%s1315 + $0x8] sm:$0xf]
      %v2672 = vld [vmem:[%s1315 + $0xc] sm:$0xf]
      %v2673 = vld [vmem:[%s1315 + $0x10] sm:$0xf]
      %v2674 = vld [vmem:[%s1315 + $0x14] sm:$0xf]
      %v2675 = vld [vmem:[%s1315 + $0x18] sm:$0xf]
      %v2676 = vld [vmem:[%s1315 + $0x1c] sm:$0xf]
      %v2677 = vld [vmem:[%s1315 + $0x20] sm:$0xf]
      %v2678 = vld [vmem:[%s1315 + $0x24] sm:$0xf]
      %v2679 = vld [vmem:[%s1315 + $0x28] sm:$0xf]
      %v2680 = vld [vmem:[%s1315 + $0x2c] sm:$0xf]
      %v2681 = vld [vmem:[%s1315 + $0x30] sm:$0xf]
      %v2682 = vld [vmem:[%s1315 + $0x34] sm:$0xf]
      %v2683 = vld [vmem:[%s1315 + $0x38] sm:$0xf]
      %v2684 = vld [vmem:[%s1315 + $0x3c] sm:$0xf]
      %v2685 = vld [vmem:[%s1315 + $0x40] sm:$0xf]
      %v2686 = vld [vmem:[%s1315 + $0x44] sm:$0xf]
      %v2687 = vld [vmem:[%s1315 + $0x48] sm:$0xf]
      %v2688 = vld [vmem:[%s1315 + $0x4c] sm:$0xf]
      %v2689 = vld [vmem:[%s1315 + $0x50] sm:$0xf]
      %v2690 = vld [vmem:[%s1315 + $0x54] sm:$0xf]
      %v2691 = vld [vmem:[%s1315 + $0x58] sm:$0xf]
      %v2692 = vld [vmem:[%s1315 + $0x5c] sm:$0xf]
      %v2693 = vld [vmem:[%s1315 + $0x60] sm:$0xf]
      %v2694 = vld [vmem:[%s1315 + $0x64] sm:$0xf]
      %v2695 = vld [vmem:[%s1315 + $0x68] sm:$0xf]
      %v2696 = vld [vmem:[%s1315 + $0x6c] sm:$0xf]
      %v2697 = vld [vmem:[%s1315 + $0x70] sm:$0xf]
      %v2698 = vld [vmem:[%s1315 + $0x74] sm:$0xf]
      %v2699 = vld [vmem:[%s1315 + $0x78] sm:$0xf]
      %v2700 = vld [vmem:[%s1315 + $0x7c] sm:$0xf]
      %v2701 = vld [vmem:[%s1315 + $0x80] sm:$0xf]
      %v2702 = vld [vmem:[%s1315 + $0x84] sm:$0xf]
      %v2703 = vld [vmem:[%s1315 + $0x88] sm:$0xf]
      %v2704 = vld [vmem:[%s1315 + $0x8c] sm:$0xf]
      %v2705 = vld [vmem:[%s1315 + $0x90] sm:$0xf]
      %v2706 = vld [vmem:[%s1315 + $0x94] sm:$0xf]
      %v2707 = vld [vmem:[%s1315 + $0x98] sm:$0xf]
      %v2708 = vld [vmem:[%s1315 + $0x9c] sm:$0xf]
      %v2709 = vld [vmem:[%s1315 + $0xa0] sm:$0xf]
      %v2710 = vld [vmem:[%s1315 + $0xa4] sm:$0xf]
      %v2711 = vld [vmem:[%s1315 + $0xa8] sm:$0xf]
      %v2712 = vld [vmem:[%s1315 + $0xac] sm:$0xf]
      %v2713 = vld [vmem:[%s1315 + $0xb0] sm:$0xf]
      %v2714 = vld [vmem:[%s1315 + $0xb4] sm:$0xf]
      %v2715 = vld [vmem:[%s1315 + $0xb8] sm:$0xf]
      %v2716 = vld [vmem:[%s1315 + $0xbc] sm:$0xf]
      %v2765 = vunpack.c.l.b16 %v2669
      %v2766 = vunpack.c.l.b16 %v2670
      %v2767 = vunpack.c.l.b16 %v2671
      %v2768 = vunpack.c.l.b16 %v2672
      %v2769 = vunpack.c.l.b16 %v2673
      %v2770 = vunpack.c.l.b16 %v2674
      %v2771 = vunpack.c.l.b16 %v2675
      %v2772 = vunpack.c.l.b16 %v2676
      %v2773 = vunpack.c.l.b16 %v2677
      %v2774 = vunpack.c.l.b16 %v2678
      %v2775 = vunpack.c.l.b16 %v2679
      %v2776 = vunpack.c.l.b16 %v2680
      %v2777 = vunpack.c.l.b16 %v2681
      %v2778 = vunpack.c.l.b16 %v2682
      %v2779 = vunpack.c.l.b16 %v2683
      %v2780 = vunpack.c.l.b16 %v2684
      %v2781 = vunpack.c.l.b16 %v2685
      %v2782 = vunpack.c.l.b16 %v2686
      %v2783 = vunpack.c.l.b16 %v2687
      %v2784 = vunpack.c.l.b16 %v2688
      %v2785 = vunpack.c.l.b16 %v2689
      %v2786 = vunpack.c.l.b16 %v2690
      %v2787 = vunpack.c.l.b16 %v2691
      %v2788 = vunpack.c.l.b16 %v2692
      %v2789 = vunpack.c.l.b16 %v2693
      %v2790 = vunpack.c.l.b16 %v2694
      %v2791 = vunpack.c.l.b16 %v2695
      %v2792 = vunpack.c.l.b16 %v2696
      %v2793 = vunpack.c.l.b16 %v2697
      %v2794 = vunpack.c.l.b16 %v2698
      %v2795 = vunpack.c.l.b16 %v2699
      %v2796 = vunpack.c.l.b16 %v2700
      %v2797 = vunpack.c.l.b16 %v2701
      %v2798 = vunpack.c.l.b16 %v2702
      %v2799 = vunpack.c.l.b16 %v2703
      %v2800 = vunpack.c.l.b16 %v2704
      %v2801 = vunpack.c.l.b16 %v2705
      %v2802 = vunpack.c.l.b16 %v2706
      %v2803 = vunpack.c.l.b16 %v2707
      %v2804 = vunpack.c.l.b16 %v2708
      %v2805 = vunpack.c.l.b16 %v2709
      %v2806 = vunpack.c.l.b16 %v2710
      %v2807 = vunpack.c.l.b16 %v2711
      %v2808 = vunpack.c.l.b16 %v2712
      %v2809 = vunpack.c.l.b16 %v2713
      %v2810 = vunpack.c.l.b16 %v2714
      %v2811 = vunpack.c.l.b16 %v2715
      %v2812 = vunpack.c.l.b16 %v2716
      %v2813 = vpack.c.b16 %v2766, %v2765
      %v2814 = vpack.c.b16 %v2768, %v2767
      %v2815 = vpack.c.b16 %v2770, %v2769
      %v2816 = vpack.c.b16 %v2772, %v2771
      %v2817 = vpack.c.b16 %v2774, %v2773
      %v2818 = vpack.c.b16 %v2776, %v2775
      %v2819 = vpack.c.b16 %v2778, %v2777
      %v2820 = vpack.c.b16 %v2780, %v2779
      %v2821 = vpack.c.b16 %v2782, %v2781
      %v2822 = vpack.c.b16 %v2784, %v2783
      %v2823 = vpack.c.b16 %v2786, %v2785
      %v2824 = vpack.c.b16 %v2788, %v2787
      %v2825 = vpack.c.b16 %v2790, %v2789
      %v2826 = vpack.c.b16 %v2792, %v2791
      %v2827 = vpack.c.b16 %v2794, %v2793
      %v2828 = vpack.c.b16 %v2796, %v2795
      %v2829 = vpack.c.b16 %v2798, %v2797
      %v2830 = vpack.c.b16 %v2800, %v2799
      %v2831 = vpack.c.b16 %v2802, %v2801
      %v2832 = vpack.c.b16 %v2804, %v2803
      %v2833 = vpack.c.b16 %v2806, %v2805
      %v2834 = vpack.c.b16 %v2808, %v2807
      %v2835 = vpack.c.b16 %v2810, %v2809
      %v2836 = vpack.c.b16 %v2812, %v2811
      %2861 = vmatprep.subr.bf16.mxu0 0
      %2862 = vmatpush1.bf16.msra.mxu0 %v2813
      %2863 = vmatprep.subr.bf16.mxu0 0
      %2864 = vmatpush1.bf16.msra.mxu0 %v2814
      %2865 = vmatprep.subr.bf16.mxu0 0
      %2866 = vmatpush1.bf16.msra.mxu0 %v2815
      %2867 = vmatprep.subr.bf16.mxu0 0
      %2868 = vmatpush1.bf16.msra.mxu0 %v2816
      %2869 = vmatprep.subr.bf16.mxu0 0
      %2870 = vmatpush1.bf16.msra.mxu0 %v2817
      %2871 = vmatprep.subr.bf16.mxu0 0
      %2872 = vmatpush1.bf16.msra.mxu0 %v2818
      %2873 = vmatprep.subr.bf16.mxu0 0
      %2874 = vmatpush1.bf16.msra.mxu0 %v2819
      %2875 = vmatprep.subr.bf16.mxu0 0
      %2876 = vmatpush1.bf16.msra.mxu0 %v2820
      %2877 = vmatprep.subr.bf16.mxu0 0
      %2878 = vmatpush1.bf16.msra.mxu0 %v2821
      %2879 = vmatprep.subr.bf16.mxu0 0
      %2880 = vmatpush1.bf16.msra.mxu0 %v2822
      %2881 = vmatprep.subr.bf16.mxu0 0
      %2882 = vmatpush1.bf16.msra.mxu0 %v2823
      %2883 = vmatprep.subr.bf16.mxu0 0
      %2884 = vmatpush1.bf16.msra.mxu0 %v2824
      %2885 = vmatprep.subr.bf16.mxu0 0
      %2886 = vmatpush1.bf16.msra.mxu0 %v2825
      %2887 = vmatprep.subr.bf16.mxu0 0
      %2888 = vmatpush1.bf16.msra.mxu0 %v2826
      %2889 = vmatprep.subr.bf16.mxu0 0
      %2890 = vmatpush1.bf16.msra.mxu0 %v2827
      %2891 = vmatprep.subr.bf16.mxu0 0
      %2892 = vmatpush1.bf16.msra.mxu0 %v2828
      %2893 = vmatprep.mubr.bf16.mxu0 %v1139
      %2894 = vmatmul.mubr.bf16.gmra.mrb[0].mxu0 %v1131
      %v2895 = vpop.f32.mrb[0].mxu0
      %v2896 = vadd.f32 0.0, %v2895
      %v2897 = vpop.f32.mrb[0].mxu0
      %v2898 = vpop.f32.mrb[0].mxu0
      %v2899 = vadd.f32 0.0, %v2898
      %v2900 = vpop.f32.mrb[0].mxu0
      %2901 = vmatprep.mubr.bf16.mxu0 %v1140
      %2902 = vmatmul.mubr.bf16.gmra.mrb[0].mxu0 %v1132
      %v2903 = vpop.f32.mrb[0].mxu0
      %v2904 = vadd.f32 0.0, %v2903
      %v2905 = vpop.f32.mrb[0].mxu0
      %v2906 = vpop.f32.mrb[0].mxu0
      %v2907 = vadd.f32 0.0, %v2906
      %v2908 = vpop.f32.mrb[0].mxu0
      %2909 = vmatprep.mubr.bf16.mxu0 %v1141
      %2910 = vmatmul.mubr.bf16.gmra.mrb[0].mxu0 %v1133
      %v2911 = vpop.f32.mrb[0].mxu0
      %v2912 = vadd.f32 0.0, %v2911
      %v2913 = vpop.f32.mrb[0].mxu0
      %v2914 = vpop.f32.mrb[0].mxu0
      %v2915 = vadd.f32 0.0, %v2914
      %v2916 = vpop.f32.mrb[0].mxu0
      %2917 = vmatprep.mubr.bf16.mxu0 %v1142
      %2918 = vmatmul.mubr.bf16.gmra.mrb[0].mxu0 %v1134
      %v2919 = vpop.f32.mrb[0].mxu0
      %v2920 = vadd.f32 0.0, %v2919
      %v2921 = vpop.f32.mrb[0].mxu0
      %v2922 = vpop.f32.mrb[0].mxu0
      %v2923 = vadd.f32 0.0, %v2922
      %v2924 = vpop.f32.mrb[0].mxu0
      %2925 = vmatprep.mubr.bf16.mxu0 %v1143
      %2926 = vmatmul.mubr.bf16.gmra.mrb[0].mxu0 %v1135
      %v2927 = vpop.f32.mrb[0].mxu0
      %v2928 = vadd.f32 0.0, %v2927
      %v2929 = vpop.f32.mrb[0].mxu0
      %v2930 = vpop.f32.mrb[0].mxu0
      %v2931 = vadd.f32 0.0, %v2930
      %v2932 = vpop.f32.mrb[0].mxu0
      %2933 = vmatprep.mubr.bf16.mxu0 %v1144
      %2934 = vmatmul.mubr.bf16.gmra.mrb[0].mxu0 %v1136
      %v2935 = vpop.f32.mrb[0].mxu0
      %v2936 = vadd.f32 0.0, %v2935
      %v2937 = vpop.f32.mrb[0].mxu0
      %v2938 = vpop.f32.mrb[0].mxu0
      %v2939 = vadd.f32 0.0, %v2938
      %v2940 = vpop.f32.mrb[0].mxu0
      %2941 = vmatprep.mubr.bf16.mxu0 %v1145
      %2942 = vmatmul.mubr.bf16.gmra.mrb[0].mxu0 %v1137
      %v2943 = vpop.f32.mrb[0].mxu0
      %v2944 = vadd.f32 0.0, %v2943
      %v2945 = vpop.f32.mrb[0].mxu0
      %v2946 = vpop.f32.mrb[0].mxu0
      %v2947 = vadd.f32 0.0, %v2946
      %v2948 = vpop.f32.mrb[0].mxu0
      %2949 = vmatprep.mubr.bf16.mxu0 %v1146
      %2950 = vmatmul.mubr.bf16.gmra.mrb[0].mxu0 %v1138
      %v2951 = vpop.f32.mrb[0].mxu0
      %v2952 = vadd.f32 0.0, %v2951
      %v2953 = vpop.f32.mrb[0].mxu0
      %v2954 = vpop.f32.mrb[0].mxu0
      %v2955 = vadd.f32 0.0, %v2954
      %v2956 = vpop.f32.mrb[0].mxu0
      %2957 = vdwg.mxu0
      %2958 = vmatprep.subr.bf16.mxu0 0
      %2959 = vmatpush1.bf16.msra.mxu0 %v2829
      %2960 = vmatprep.subr.bf16.mxu0 0
      %2961 = vmatpush1.bf16.msra.mxu0 %v2830
      %2962 = vmatprep.subr.bf16.mxu0 0
      %2963 = vmatpush1.bf16.msra.mxu0 %v2831
      %2964 = vmatprep.subr.bf16.mxu0 0
      %2965 = vmatpush1.bf16.msra.mxu0 %v2832
      %2966 = vmatprep.subr.bf16.mxu0 0
      %2967 = vmatpush1.bf16.msra.mxu0 %v2833
      %2968 = vmatprep.subr.bf16.mxu0 0
      %2969 = vmatpush1.bf16.msra.mxu0 %v2834
      %2970 = vmatprep.subr.bf16.mxu0 0
      %2971 = vmatpush1.bf16.msra.mxu0 %v2835
      %2972 = vmatprep.subr.bf16.mxu0 0
      %2973 = vmatpush1.bf16.msra.mxu0 %v2836
      %2974 = vmatprep.subr.bf16.mxu0 0
      %2975 = vmatpush1.bf16.msra.mxu0 0
      %2976 = vmatprep.subr.bf16.mxu0 0
      %2977 = vmatpush1.bf16.msra.mxu0 0
      %2978 = vmatprep.subr.bf16.mxu0 0
      %2979 = vmatpush1.bf16.msra.mxu0 0
      %2980 = vmatprep.subr.bf16.mxu0 0
      %2981 = vmatpush1.bf16.msra.mxu0 0
      %2982 = vmatprep.subr.bf16.mxu0 0
      %2983 = vmatpush1.bf16.msra.mxu0 0
      %2984 = vmatprep.subr.bf16.mxu0 0
      %2985 = vmatpush1.bf16.msra.mxu0 0
      %2986 = vmatprep.subr.bf16.mxu0 0
      %2987 = vmatpush1.bf16.msra.mxu0 0
      %2988 = vmatprep.subr.bf16.mxu0 0
      %2989 = vmatpush1.bf16.msra.mxu0 0
      %2990 = vmatprep.mubr.bf16.mxu0 0
      %2991 = vmatmul.mubr.bf16.gmra.mrb[0].mxu0 %v1195
      %v2992 = vpop.f32.mrb[0].mxu0
      %v2993 = vadd.f32 %v2896, %v2992
      %v2994 = vpop.f32.mrb[0].mxu0
      %v2995 = vpop.f32.mrb[0].mxu0
      %v2996 = vadd.f32 %v2899, %v2995
      %v2997 = vpop.f32.mrb[0].mxu0
      %2998 = vmatprep.mubr.bf16.mxu0 0
      %2999 = vmatmul.mubr.bf16.gmra.mrb[0].mxu0 %v1196
      %v3000 = vpop.f32.mrb[0].mxu0
      %v3001 = vadd.f32 %v2904, %v3000
      %v3002 = vpop.f32.mrb[0].mxu0
      %v3003 = vpop.f32.mrb[0].mxu0
      %v3004 = vadd.f32 %v2907, %v3003
      %v3005 = vpop.f32.mrb[0].mxu0
      %3006 = vmatprep.mubr.bf16.mxu0 0
      %3007 = vmatmul.mubr.bf16.gmra.mrb[0].mxu0 %v1197
      %v3008 = vpop.f32.mrb[0].mxu0
      %v3009 = vadd.f32 %v2912, %v3008
      %v3010 = vpop.f32.mrb[0].mxu0
      %v3011 = vpop.f32.mrb[0].mxu0
      %v3012 = vadd.f32 %v2915, %v3011
      %v3013 = vpop.f32.mrb[0].mxu0
      %3014 = vmatprep.mubr.bf16.mxu0 0
      %3015 = vmatmul.mubr.bf16.gmra.mrb[0].mxu0 %v1198
      %v3016 = vpop.f32.mrb[0].mxu0
      %v3017 = vadd.f32 %v2920, %v3016
      %v3018 = vpop.f32.mrb[0].mxu0
      %v3019 = vpop.f32.mrb[0].mxu0
      %v3020 = vadd.f32 %v2923, %v3019
      %v3021 = vpop.f32.mrb[0].mxu0
      %3022 = vmatprep.mubr.bf16.mxu0 0
      %3023 = vmatmul.mubr.bf16.gmra.mrb[0].mxu0 %v1199
      %v3024 = vpop.f32.mrb[0].mxu0
      %v3025 = vadd.f32 %v2928, %v3024
      %v3026 = vpop.f32.mrb[0].mxu0
      %v3027 = vpop.f32.mrb[0].mxu0
      %v3028 = vadd.f32 %v2931, %v3027
      %v3029 = vpop.f32.mrb[0].mxu0
      %3030 = vmatprep.mubr.bf16.mxu0 0
      %3031 = vmatmul.mubr.bf16.gmra.mrb[0].mxu0 %v1200
      %v3032 = vpop.f32.mrb[0].mxu0
      %v3033 = vadd.f32 %v2936, %v3032
      %v3034 = vpop.f32.mrb[0].mxu0
      %v3035 = vpop.f32.mrb[0].mxu0
      %v3036 = vadd.f32 %v2939, %v3035
      %v3037 = vpop.f32.mrb[0].mxu0
      %3038 = vmatprep.mubr.bf16.mxu0 0
      %3039 = vmatmul.mubr.bf16.gmra.mrb[0].mxu0 %v1201
      %v3040 = vpop.f32.mrb[0].mxu0
      %v3041 = vadd.f32 %v2944, %v3040
      %v3042 = vpop.f32.mrb[0].mxu0
      %v3043 = vpop.f32.mrb[0].mxu0
      %v3044 = vadd.f32 %v2947, %v3043
      %v3045 = vpop.f32.mrb[0].mxu0
      %3046 = vmatprep.mubr.bf16.mxu0 0
      %3047 = vmatmul.mubr.bf16.gmra.mrb[0].mxu0 %v1202
      %v3048 = vpop.f32.mrb[0].mxu0
      %v3049 = vadd.f32 %v2952, %v3048
      %v3050 = vpop.f32.mrb[0].mxu0
      %v3051 = vpop.f32.mrb[0].mxu0
      %v3052 = vadd.f32 %v2955, %v3051
      %v3053 = vpop.f32.mrb[0].mxu0
      %3054 = vdwg.mxu0
      %v3103 = vunpack.c.l.b16 %v2621
      %v3104 = vunpack.c.l.b16 %v2622
      %v3105 = vunpack.c.l.b16 %v2623
      %v3106 = vunpack.c.l.b16 %v2624
      %v3107 = vunpack.c.l.b16 %v2625
      %v3108 = vunpack.c.l.b16 %v2626
      %v3109 = vunpack.c.l.b16 %v2627
      %v3110 = vunpack.c.l.b16 %v2628
      %v3111 = vunpack.c.l.b16 %v2629
      %v3112 = vunpack.c.l.b16 %v2630
      %v3113 = vunpack.c.l.b16 %v2631
      %v3114 = vunpack.c.l.b16 %v2632
      %v3115 = vunpack.c.l.b16 %v2633
      %v3116 = vunpack.c.l.b16 %v2634
      %v3117 = vunpack.c.l.b16 %v2635
      %v3118 = vunpack.c.l.b16 %v2636
      %v3119 = vunpack.c.l.b16 %v2637
      %v3120 = vunpack.c.l.b16 %v2638
      %v3121 = vunpack.c.l.b16 %v2639
      %v3122 = vunpack.c.l.b16 %v2640
      %v3123 = vunpack.c.l.b16 %v2641
      %v3124 = vunpack.c.l.b16 %v2642
      %v3125 = vunpack.c.l.b16 %v2643
      %v3126 = vunpack.c.l.b16 %v2644
      %v3127 = vunpack.c.l.b16 %v2645
      %v3128 = vunpack.c.l.b16 %v2646
      %v3129 = vunpack.c.l.b16 %v2647
      %v3130 = vunpack.c.l.b16 %v2648
      %v3131 = vunpack.c.l.b16 %v2649
      %v3132 = vunpack.c.l.b16 %v2650
      %v3133 = vunpack.c.l.b16 %v2651
      %v3134 = vunpack.c.l.b16 %v2652
      %v3135 = vunpack.c.l.b16 %v2653
      %v3136 = vunpack.c.l.b16 %v2654
      %v3137 = vunpack.c.l.b16 %v2655
      %v3138 = vunpack.c.l.b16 %v2656
      %v3139 = vunpack.c.l.b16 %v2657
      %v3140 = vunpack.c.l.b16 %v2658
      %v3141 = vunpack.c.l.b16 %v2659
      %v3142 = vunpack.c.l.b16 %v2660
      %v3143 = vunpack.c.l.b16 %v2661
      %v3144 = vunpack.c.l.b16 %v2662
      %v3145 = vunpack.c.l.b16 %v2663
      %v3146 = vunpack.c.l.b16 %v2664
      %v3147 = vunpack.c.l.b16 %v2665
      %v3148 = vunpack.c.l.b16 %v2666
      %v3149 = vunpack.c.l.b16 %v2667
      %v3150 = vunpack.c.l.b16 %v2668
      %v3151 = vpack.c.b16 %v3104, %v3103
      %v3152 = vpack.c.b16 %v3106, %v3105
      %v3153 = vpack.c.b16 %v3108, %v3107
      %v3154 = vpack.c.b16 %v3110, %v3109
      %v3155 = vpack.c.b16 %v3112, %v3111
      %v3156 = vpack.c.b16 %v3114, %v3113
      %v3157 = vpack.c.b16 %v3116, %v3115
      %v3158 = vpack.c.b16 %v3118, %v3117
      %v3159 = vpack.c.b16 %v3120, %v3119
      %v3160 = vpack.c.b16 %v3122, %v3121
      %v3161 = vpack.c.b16 %v3124, %v3123
      %v3162 = vpack.c.b16 %v3126, %v3125
      %v3163 = vpack.c.b16 %v3128, %v3127
      %v3164 = vpack.c.b16 %v3130, %v3129
      %v3165 = vpack.c.b16 %v3132, %v3131
      %v3166 = vpack.c.b16 %v3134, %v3133
      %v3167 = vpack.c.b16 %v3136, %v3135
      %v3168 = vpack.c.b16 %v3138, %v3137
      %v3169 = vpack.c.b16 %v3140, %v3139
      %v3170 = vpack.c.b16 %v3142, %v3141
      %v3171 = vpack.c.b16 %v3144, %v3143
      %v3172 = vpack.c.b16 %v3146, %v3145
      %v3173 = vpack.c.b16 %v3148, %v3147
      %v3174 = vpack.c.b16 %v3150, %v3149
      %3199 = vmatprep.subr.bf16.mxu0 0
      %3200 = vmatpush1.bf16.msra.mxu0 %v3151
      %3201 = vmatprep.subr.bf16.mxu0 0
      %3202 = vmatpush1.bf16.msra.mxu0 %v3152
      %3203 = vmatprep.subr.bf16.mxu0 0
      %3204 = vmatpush1.bf16.msra.mxu0 %v3153
      %3205 = vmatprep.subr.bf16.mxu0 0
      %3206 = vmatpush1.bf16.msra.mxu0 %v3154
      %3207 = vmatprep.subr.bf16.mxu0 0
      %3208 = vmatpush1.bf16.msra.mxu0 %v3155
      %3209 = vmatprep.subr.bf16.mxu0 0
      %3210 = vmatpush1.bf16.msra.mxu0 %v3156
      %3211 = vmatprep.subr.bf16.mxu0 0
      %3212 = vmatpush1.bf16.msra.mxu0 %v3157
      %3213 = vmatprep.subr.bf16.mxu0 0
      %3214 = vmatpush1.bf16.msra.mxu0 %v3158
      %3215 = vmatprep.subr.bf16.mxu0 0
      %3216 = vmatpush1.bf16.msra.mxu0 %v3159
      %3217 = vmatprep.subr.bf16.mxu0 0
      %3218 = vmatpush1.bf16.msra.mxu0 %v3160
      %3219 = vmatprep.subr.bf16.mxu0 0
      %3220 = vmatpush1.bf16.msra.mxu0 %v3161
      %3221 = vmatprep.subr.bf16.mxu0 0
      %3222 = vmatpush1.bf16.msra.mxu0 %v3162
      %3223 = vmatprep.subr.bf16.mxu0 0
      %3224 = vmatpush1.bf16.msra.mxu0 %v3163
      %3225 = vmatprep.subr.bf16.mxu0 0
      %3226 = vmatpush1.bf16.msra.mxu0 %v3164
      %3227 = vmatprep.subr.bf16.mxu0 0
      %3228 = vmatpush1.bf16.msra.mxu0 %v3165
      %3229 = vmatprep.subr.bf16.mxu0 0
      %3230 = vmatpush1.bf16.msra.mxu0 %v3166
      %3231 = vmatprep.mubr.bf16.mxu0 %v1006
      %3232 = vmatmul.mubr.bf16.gmra.mrb[0].mxu0 %v998
      %v3233 = vpop.f32.mrb[0].mxu0
      %v3234 = vadd.f32 %v2993, %v3233
      %v3235 = vpop.f32.mrb[0].mxu0
      %v3236 = vpop.f32.mrb[0].mxu0
      %v3237 = vadd.f32 %v2996, %v3236
      %v3238 = vpop.f32.mrb[0].mxu0
      %3239 = vmatprep.mubr.bf16.mxu0 %v1007
      %3240 = vmatmul.mubr.bf16.gmra.mrb[0].mxu0 %v999
      %v3241 = vpop.f32.mrb[0].mxu0
      %v3242 = vadd.f32 %v3001, %v3241
      %v3243 = vpop.f32.mrb[0].mxu0
      %v3244 = vpop.f32.mrb[0].mxu0
      %v3245 = vadd.f32 %v3004, %v3244
      %v3246 = vpop.f32.mrb[0].mxu0
      %3247 = vmatprep.mubr.bf16.mxu0 %v1008
      %3248 = vmatmul.mubr.bf16.gmra.mrb[0].mxu0 %v1000
      %v3249 = vpop.f32.mrb[0].mxu0
      %v3250 = vadd.f32 %v3009, %v3249
      %v3251 = vpop.f32.mrb[0].mxu0
      %v3252 = vpop.f32.mrb[0].mxu0
      %v3253 = vadd.f32 %v3012, %v3252
      %v3254 = vpop.f32.mrb[0].mxu0
      %3255 = vmatprep.mubr.bf16.mxu0 %v1009
      %3256 = vmatmul.mubr.bf16.gmra.mrb[0].mxu0 %v1001
      %v3257 = vpop.f32.mrb[0].mxu0
      %v3258 = vadd.f32 %v3017, %v3257
      %v3259 = vpop.f32.mrb[0].mxu0
      %v3260 = vpop.f32.mrb[0].mxu0
      %v3261 = vadd.f32 %v3020, %v3260
      %v3262 = vpop.f32.mrb[0].mxu0
      %3263 = vmatprep.mubr.bf16.mxu0 %v1010
      %3264 = vmatmul.mubr.bf16.gmra.mrb[0].mxu0 %v1002
      %v3265 = vpop.f32.mrb[0].mxu0
      %v3266 = vadd.f32 %v3025, %v3265
      %v3267 = vpop.f32.mrb[0].mxu0
      %v3268 = vpop.f32.mrb[0].mxu0
      %v3269 = vadd.f32 %v3028, %v3268
      %v3270 = vpop.f32.mrb[0].mxu0
      %3271 = vmatprep.mubr.bf16.mxu0 %v1011
      %3272 = vmatmul.mubr.bf16.gmra.mrb[0].mxu0 %v1003
      %v3273 = vpop.f32.mrb[0].mxu0
      %v3274 = vadd.f32 %v3033, %v3273
      %v3275 = vpop.f32.mrb[0].mxu0
      %v3276 = vpop.f32.mrb[0].mxu0
      %v3277 = vadd.f32 %v3036, %v3276
      %v3278 = vpop.f32.mrb[0].mxu0
      %3279 = vmatprep.mubr.bf16.mxu0 %v1012
      %3280 = vmatmul.mubr.bf16.gmra.mrb[0].mxu0 %v1004
      %v3281 = vpop.f32.mrb[0].mxu0
      %v3282 = vadd.f32 %v3041, %v3281
      %v3283 = vpop.f32.mrb[0].mxu0
      %v3284 = vpop.f32.mrb[0].mxu0
      %v3285 = vadd.f32 %v3044, %v3284
      %v3286 = vpop.f32.mrb[0].mxu0
      %3287 = vmatprep.mubr.bf16.mxu0 %v1013
      %3288 = vmatmul.mubr.bf16.gmra.mrb[0].mxu0 %v1005
      %v3289 = vpop.f32.mrb[0].mxu0
      %v3290 = vadd.f32 %v3049, %v3289
      %v3291 = vpop.f32.mrb[0].mxu0
      %v3292 = vpop.f32.mrb[0].mxu0
      %v3293 = vadd.f32 %v3052, %v3292
      %v3294 = vpop.f32.mrb[0].mxu0
      %3295 = vdwg.mxu0
      %3296 = vmatprep.subr.bf16.mxu0 0
      %3297 = vmatpush1.bf16.msra.mxu0 %v3167
      %3298 = vmatprep.subr.bf16.mxu0 0
      %3299 = vmatpush1.bf16.msra.mxu0 %v3168
      %3300 = vmatprep.subr.bf16.mxu0 0
      %3301 = vmatpush1.bf16.msra.mxu0 %v3169
      %3302 = vmatprep.subr.bf16.mxu0 0
      %3303 = vmatpush1.bf16.msra.mxu0 %v3170
      %3304 = vmatprep.subr.bf16.mxu0 0
      %3305 = vmatpush1.bf16.msra.mxu0 %v3171
      %3306 = vmatprep.subr.bf16.mxu0 0
      %3307 = vmatpush1.bf16.msra.mxu0 %v3172
      %3308 = vmatprep.subr.bf16.mxu0 0
      %3309 = vmatpush1.bf16.msra.mxu0 %v3173
      %3310 = vmatprep.subr.bf16.mxu0 0
      %3311 = vmatpush1.bf16.msra.mxu0 %v3174
      %3312 = vmatprep.subr.bf16.mxu0 0
      %3313 = vmatpush1.bf16.msra.mxu0 0
      %3314 = vmatprep.subr.bf16.mxu0 0
      %3315 = vmatpush1.bf16.msra.mxu0 0
      %3316 = vmatprep.subr.bf16.mxu0 0
      %3317 = vmatpush1.bf16.msra.mxu0 0
      %3318 = vmatprep.subr.bf16.mxu0 0
      %3319 = vmatpush1.bf16.msra.mxu0 0
      %3320 = vmatprep.subr.bf16.mxu0 0
      %3321 = vmatpush1.bf16.msra.mxu0 0
      %3322 = vmatprep.subr.bf16.mxu0 0
      %3323 = vmatpush1.bf16.msra.mxu0 0
      %3324 = vmatprep.subr.bf16.mxu0 0
      %3325 = vmatpush1.bf16.msra.mxu0 0
      %3326 = vmatprep.subr.bf16.mxu0 0
      %3327 = vmatpush1.bf16.msra.mxu0 0
      %3328 = vmatprep.mubr.bf16.mxu0 0
      %3329 = vmatmul.mubr.bf16.gmra.mrb[0].mxu0 %v1067
      %v3330 = vpop.f32.mrb[0].mxu0
      %v3331 = vadd.f32 %v3234, %v3330
      %v3332 = vpop.f32.mrb[0].mxu0
      %v3333 = vpop.f32.mrb[0].mxu0
      %v3334 = vadd.f32 %v3237, %v3333
      %v3335 = vpop.f32.mrb[0].mxu0
      %3336 = vmatprep.mubr.bf16.mxu0 0
      %3337 = vmatmul.mubr.bf16.gmra.mrb[0].mxu0 %v1068
      %v3338 = vpop.f32.mrb[0].mxu0
      %v3339 = vadd.f32 %v3242, %v3338
      %v3340 = vpop.f32.mrb[0].mxu0
      %v3341 = vpop.f32.mrb[0].mxu0
      %v3342 = vadd.f32 %v3245, %v3341
      %v3343 = vpop.f32.mrb[0].mxu0
      %3344 = vmatprep.mubr.bf16.mxu0 0
      %3345 = vmatmul.mubr.bf16.gmra.mrb[0].mxu0 %v1069
      %v3346 = vpop.f32.mrb[0].mxu0
      %v3347 = vadd.f32 %v3250, %v3346
      %v3348 = vpop.f32.mrb[0].mxu0
      %v3349 = vpop.f32.mrb[0].mxu0
      %v3350 = vadd.f32 %v3253, %v3349
      %v3351 = vpop.f32.mrb[0].mxu0
      %3352 = vmatprep.mubr.bf16.mxu0 0
      %3353 = vmatmul.mubr.bf16.gmra.mrb[0].mxu0 %v1070
      %v3354 = vpop.f32.mrb[0].mxu0
      %v3355 = vadd.f32 %v3258, %v3354
      %v3356 = vpop.f32.mrb[0].mxu0
      %v3357 = vpop.f32.mrb[0].mxu0
      %v3358 = vadd.f32 %v3261, %v3357
      %v3359 = vpop.f32.mrb[0].mxu0
      %3360 = vmatprep.mubr.bf16.mxu0 0
      %3361 = vmatmul.mubr.bf16.gmra.mrb[0].mxu0 %v1071
      %v3362 = vpop.f32.mrb[0].mxu0
      %v3363 = vadd.f32 %v3266, %v3362
      %v3364 = vpop.f32.mrb[0].mxu0
      %v3365 = vpop.f32.mrb[0].mxu0
      %v3366 = vadd.f32 %v3269, %v3365
      %v3367 = vpop.f32.mrb[0].mxu0
      %3368 = vmatprep.mubr.bf16.mxu0 0
      %3369 = vmatmul.mubr.bf16.gmra.mrb[0].mxu0 %v1072
      %v3370 = vpop.f32.mrb[0].mxu0
      %v3371 = vadd.f32 %v3274, %v3370
      %v3372 = vpop.f32.mrb[0].mxu0
      %v3373 = vpop.f32.mrb[0].mxu0
      %v3374 = vadd.f32 %v3277, %v3373
      %v3375 = vpop.f32.mrb[0].mxu0
      %3376 = vmatprep.mubr.bf16.mxu0 0
      %3377 = vmatmul.mubr.bf16.gmra.mrb[0].mxu0 %v1073
      %v3378 = vpop.f32.mrb[0].mxu0
      %v3379 = vadd.f32 %v3282, %v3378
      %v3380 = vpop.f32.mrb[0].mxu0
      %v3381 = vpop.f32.mrb[0].mxu0
      %v3382 = vadd.f32 %v3285, %v3381
      %v3383 = vpop.f32.mrb[0].mxu0
      %3384 = vmatprep.mubr.bf16.mxu0 0
      %3385 = vmatmul.mubr.bf16.gmra.mrb[0].mxu0 %v1074
      %v3386 = vpop.f32.mrb[0].mxu0
      %v3387 = vadd.f32 %v3290, %v3386
      %v3388 = vpop.f32.mrb[0].mxu0
      %v3389 = vpop.f32.mrb[0].mxu0
      %v3390 = vadd.f32 %v3293, %v3389
      %v3391 = vpop.f32.mrb[0].mxu0
      %3392 = vdwg.mxu0
      %v3393 = vld [vmem:[%s2040] sm:$0xf]
      %v3394 = vld [vmem:[%s2040 + $0x4] sm:$0xf]
      %v3395 = vld [vmem:[%s2040 + $0x8] sm:$0xf]
      %v3396 = vld [vmem:[%s2040 + $0xc] sm:$0xf]
      %v3397 = vld [vmem:[%s2040 + $0x10] sm:$0xf]
      %v3398 = vld [vmem:[%s2040 + $0x14] sm:$0xf]
      %v3399 = vld [vmem:[%s2040 + $0x18] sm:$0xf]
      %v3400 = vld [vmem:[%s2040 + $0x1c] sm:$0xf]
      %v3401 = vld [vmem:[%s2040 + $0x20] sm:$0xf]
      %v3402 = vld [vmem:[%s2040 + $0x24] sm:$0xf]
      %v3403 = vld [vmem:[%s2040 + $0x28] sm:$0xf]
      %v3404 = vld [vmem:[%s2040 + $0x2c] sm:$0xf]
      %v3405 = vld [vmem:[%s2040 + $0x30] sm:$0xf]
      %v3406 = vld [vmem:[%s2040 + $0x34] sm:$0xf]
      %v3407 = vld [vmem:[%s2040 + $0x38] sm:$0xf]
      %v3408 = vld [vmem:[%s2040 + $0x3c] sm:$0xf]
      %v3409 = vld [vmem:[%s2040 + $0x40] sm:$0xf]
      %v3410 = vld [vmem:[%s2040 + $0x44] sm:$0xf]
      %v3411 = vld [vmem:[%s2040 + $0x48] sm:$0xf]
      %v3412 = vld [vmem:[%s2040 + $0x4c] sm:$0xf]
      %v3413 = vld [vmem:[%s2040 + $0x50] sm:$0xf]
      %v3414 = vld [vmem:[%s2040 + $0x54] sm:$0xf]
      %v3415 = vld [vmem:[%s2040 + $0x58] sm:$0xf]
      %v3416 = vld [vmem:[%s2040 + $0x5c] sm:$0xf]
      %v3417 = vld [vmem:[%s2040 + $0x60] sm:$0xf]
      %v3418 = vld [vmem:[%s2040 + $0x64] sm:$0xf]
      %v3419 = vld [vmem:[%s2040 + $0x68] sm:$0xf]
      %v3420 = vld [vmem:[%s2040 + $0x6c] sm:$0xf]
      %v3421 = vld [vmem:[%s2040 + $0x70] sm:$0xf]
      %v3422 = vld [vmem:[%s2040 + $0x74] sm:$0xf]
      %v3423 = vld [vmem:[%s2040 + $0x78] sm:$0xf]
      %v3424 = vld [vmem:[%s2040 + $0x7c] sm:$0xf]
      %v3425 = vld [vmem:[%s2040 + $0x80] sm:$0xf]
      %v3426 = vld [vmem:[%s2040 + $0x84] sm:$0xf]
      %v3427 = vld [vmem:[%s2040 + $0x88] sm:$0xf]
      %v3428 = vld [vmem:[%s2040 + $0x8c] sm:$0xf]
      %v3429 = vld [vmem:[%s2040 + $0x90] sm:$0xf]
      %v3430 = vld [vmem:[%s2040 + $0x94] sm:$0xf]
      %v3431 = vld [vmem:[%s2040 + $0x98] sm:$0xf]
      %v3432 = vld [vmem:[%s2040 + $0x9c] sm:$0xf]
      %v3433 = vld [vmem:[%s2040 + $0xa0] sm:$0xf]
      %v3434 = vld [vmem:[%s2040 + $0xa4] sm:$0xf]
      %v3435 = vld [vmem:[%s2040 + $0xa8] sm:$0xf]
      %v3436 = vld [vmem:[%s2040 + $0xac] sm:$0xf]
      %v3437 = vld [vmem:[%s2040 + $0xb0] sm:$0xf]
      %v3438 = vld [vmem:[%s2040 + $0xb4] sm:$0xf]
      %v3439 = vld [vmem:[%s2040 + $0xb8] sm:$0xf]
      %v3440 = vld [vmem:[%s2040 + $0xbc] sm:$0xf]
      %v3489 = vunpack.c.l.b16 %v3393
      %v3490 = vunpack.c.l.b16 %v3394
      %v3491 = vunpack.c.l.b16 %v3395
      %v3492 = vunpack.c.l.b16 %v3396
      %v3493 = vunpack.c.l.b16 %v3397
      %v3494 = vunpack.c.l.b16 %v3398
      %v3495 = vunpack.c.l.b16 %v3399
      %v3496 = vunpack.c.l.b16 %v3400
      %v3497 = vunpack.c.l.b16 %v3401
      %v3498 = vunpack.c.l.b16 %v3402
      %v3499 = vunpack.c.l.b16 %v3403
      %v3500 = vunpack.c.l.b16 %v3404
      %v3501 = vunpack.c.l.b16 %v3405
      %v3502 = vunpack.c.l.b16 %v3406
      %v3503 = vunpack.c.l.b16 %v3407
      %v3504 = vunpack.c.l.b16 %v3408
      %v3505 = vunpack.c.l.b16 %v3409
      %v3506 = vunpack.c.l.b16 %v3410
      %v3507 = vunpack.c.l.b16 %v3411
      %v3508 = vunpack.c.l.b16 %v3412
      %v3509 = vunpack.c.l.b16 %v3413
      %v3510 = vunpack.c.l.b16 %v3414
      %v3511 = vunpack.c.l.b16 %v3415
      %v3512 = vunpack.c.l.b16 %v3416
      %v3513 = vunpack.c.l.b16 %v3417
      %v3514 = vunpack.c.l.b16 %v3418
      %v3515 = vunpack.c.l.b16 %v3419
      %v3516 = vunpack.c.l.b16 %v3420
      %v3517 = vunpack.c.l.b16 %v3421
      %v3518 = vunpack.c.l.b16 %v3422
      %v3519 = vunpack.c.l.b16 %v3423
      %v3520 = vunpack.c.l.b16 %v3424
      %v3521 = vunpack.c.l.b16 %v3425
      %v3522 = vunpack.c.l.b16 %v3426
      %v3523 = vunpack.c.l.b16 %v3427
      %v3524 = vunpack.c.l.b16 %v3428
      %v3525 = vunpack.c.l.b16 %v3429
      %v3526 = vunpack.c.l.b16 %v3430
      %v3527 = vunpack.c.l.b16 %v3431
      %v3528 = vunpack.c.l.b16 %v3432
      %v3529 = vunpack.c.l.b16 %v3433
      %v3530 = vunpack.c.l.b16 %v3434
      %v3531 = vunpack.c.l.b16 %v3435
      %v3532 = vunpack.c.l.b16 %v3436
      %v3533 = vunpack.c.l.b16 %v3437
      %v3534 = vunpack.c.l.b16 %v3438
      %v3535 = vunpack.c.l.b16 %v3439
      %v3536 = vunpack.c.l.b16 %v3440
      %v3537 = vpack.c.b16 %v3490, %v3489
      %v3538 = vpack.c.b16 %v3492, %v3491
      %v3539 = vpack.c.b16 %v3494, %v3493
      %v3540 = vpack.c.b16 %v3496, %v3495
      %v3541 = vpack.c.b16 %v3498, %v3497
      %v3542 = vpack.c.b16 %v3500, %v3499
      %v3543 = vpack.c.b16 %v3502, %v3501
      %v3544 = vpack.c.b16 %v3504, %v3503
      %v3545 = vpack.c.b16 %v3506, %v3505
      %v3546 = vpack.c.b16 %v3508, %v3507
      %v3547 = vpack.c.b16 %v3510, %v3509
      %v3548 = vpack.c.b16 %v3512, %v3511
      %v3549 = vpack.c.b16 %v3514, %v3513
      %v3550 = vpack.c.b16 %v3516, %v3515
      %v3551 = vpack.c.b16 %v3518, %v3517
      %v3552 = vpack.c.b16 %v3520, %v3519
      %v3553 = vpack.c.b16 %v3522, %v3521
      %v3554 = vpack.c.b16 %v3524, %v3523
      %v3555 = vpack.c.b16 %v3526, %v3525
      %v3556 = vpack.c.b16 %v3528, %v3527
      %v3557 = vpack.c.b16 %v3530, %v3529
      %v3558 = vpack.c.b16 %v3532, %v3531
      %v3559 = vpack.c.b16 %v3534, %v3533
      %v3560 = vpack.c.b16 %v3536, %v3535
      %3585 = vmatprep.subr.bf16.mxu0 0
      %3586 = vmatpush1.bf16.msra.mxu0 %v3537
      %3587 = vmatprep.subr.bf16.mxu0 0
      %3588 = vmatpush1.bf16.msra.mxu0 %v3538
      %3589 = vmatprep.subr.bf16.mxu0 0
      %3590 = vmatpush1.bf16.msra.mxu0 %v3539
      %3591 = vmatprep.subr.bf16.mxu0 0
      %3592 = vmatpush1.bf16.msra.mxu0 %v3540
      %3593 = vmatprep.subr.bf16.mxu0 0
      %3594 = vmatpush1.bf16.msra.mxu0 %v3541
      %3595 = vmatprep.subr.bf16.mxu0 0
      %3596 = vmatpush1.bf16.msra.mxu0 %v3542
      %3597 = vmatprep.subr.bf16.mxu0 0
      %3598 = vmatpush1.bf16.msra.mxu0 %v3543
      %3599 = vmatprep.subr.bf16.mxu0 0
      %3600 = vmatpush1.bf16.msra.mxu0 %v3544
      %3601 = vmatprep.subr.bf16.mxu0 0
      %3602 = vmatpush1.bf16.msra.mxu0 %v3545
      %3603 = vmatprep.subr.bf16.mxu0 0
      %3604 = vmatpush1.bf16.msra.mxu0 %v3546
      %3605 = vmatprep.subr.bf16.mxu0 0
      %3606 = vmatpush1.bf16.msra.mxu0 %v3547
      %3607 = vmatprep.subr.bf16.mxu0 0
      %3608 = vmatpush1.bf16.msra.mxu0 %v3548
      %3609 = vmatprep.subr.bf16.mxu0 0
      %3610 = vmatpush1.bf16.msra.mxu0 %v3549
      %3611 = vmatprep.subr.bf16.mxu0 0
      %3612 = vmatpush1.bf16.msra.mxu0 %v3550
      %3613 = vmatprep.subr.bf16.mxu0 0
      %3614 = vmatpush1.bf16.msra.mxu0 %v3551
      %3615 = vmatprep.subr.bf16.mxu0 0
      %3616 = vmatpush1.bf16.msra.mxu0 %v3552
      %3617 = vmatprep.mubr.bf16.mxu0 %v1007
      %3618 = vmatmul.mubr.bf16.gmra.mrb[0].mxu0 %v999
      %v3619 = vpop.f32.mrb[0].mxu0
      %v3620 = vadd.f32 0.0, %v3619
      %v3621 = vpop.f32.mrb[0].mxu0
      %v3622 = vpop.f32.mrb[0].mxu0
      %v3623 = vadd.f32 0.0, %v3622
      %v3624 = vpop.f32.mrb[0].mxu0
      %3625 = vmatprep.mubr.bf16.mxu0 %v1008
      %3626 = vmatmul.mubr.bf16.gmra.mrb[0].mxu0 %v1000
      %v3627 = vpop.f32.mrb[0].mxu0
      %v3628 = vadd.f32 0.0, %v3627
      %v3629 = vpop.f32.mrb[0].mxu0
      %v3630 = vpop.f32.mrb[0].mxu0
      %v3631 = vadd.f32 0.0, %v3630
      %v3632 = vpop.f32.mrb[0].mxu0
      %3633 = vmatprep.mubr.bf16.mxu0 %v1009
      %3634 = vmatmul.mubr.bf16.gmra.mrb[0].mxu0 %v1001
      %v3635 = vpop.f32.mrb[0].mxu0
      %v3636 = vadd.f32 0.0, %v3635
      %v3637 = vpop.f32.mrb[0].mxu0
      %v3638 = vpop.f32.mrb[0].mxu0
      %v3639 = vadd.f32 0.0, %v3638
      %v3640 = vpop.f32.mrb[0].mxu0
      %3641 = vmatprep.mubr.bf16.mxu0 %v1010
      %3642 = vmatmul.mubr.bf16.gmra.mrb[0].mxu0 %v1002
      %v3643 = vpop.f32.mrb[0].mxu0
      %v3644 = vadd.f32 0.0, %v3643
      %v3645 = vpop.f32.mrb[0].mxu0
      %v3646 = vpop.f32.mrb[0].mxu0
      %v3647 = vadd.f32 0.0, %v3646
      %v3648 = vpop.f32.mrb[0].mxu0
      %3649 = vmatprep.mubr.bf16.mxu0 %v1011
      %3650 = vmatmul.mubr.bf16.gmra.mrb[0].mxu0 %v1003
      %v3651 = vpop.f32.mrb[0].mxu0
      %v3652 = vadd.f32 0.0, %v3651
      %v3653 = vpop.f32.mrb[0].mxu0
      %v3654 = vpop.f32.mrb[0].mxu0
      %v3655 = vadd.f32 0.0, %v3654
      %v3656 = vpop.f32.mrb[0].mxu0
      %3657 = vmatprep.mubr.bf16.mxu0 %v1012
      %3658 = vmatmul.mubr.bf16.gmra.mrb[0].mxu0 %v1004
      %v3659 = vpop.f32.mrb[0].mxu0
      %v3660 = vadd.f32 0.0, %v3659
      %v3661 = vpop.f32.mrb[0].mxu0
      %v3662 = vpop.f32.mrb[0].mxu0
      %v3663 = vadd.f32 0.0, %v3662
      %v3664 = vpop.f32.mrb[0].mxu0
      %3665 = vmatprep.mubr.bf16.mxu0 %v1013
      %3666 = vmatmul.mubr.bf16.gmra.mrb[0].mxu0 %v1005
      %v3667 = vpop.f32.mrb[0].mxu0
      %v3668 = vadd.f32 0.0, %v3667
      %v3669 = vpop.f32.mrb[0].mxu0
      %v3670 = vpop.f32.mrb[0].mxu0
      %v3671 = vadd.f32 0.0, %v3670
      %v3672 = vpop.f32.mrb[0].mxu0
      %3673 = vmatprep.mubr.bf16.mxu0 %v1211
      %3674 = vmatmul.mubr.bf16.gmra.mrb[0].mxu0 %v1210
      %v3675 = vpop.f32.mrb[0].mxu0
      %v3676 = vadd.f32 0.0, %v3675
      %v3677 = vpop.f32.mrb[0].mxu0
      %v3678 = vpop.f32.mrb[0].mxu0
      %v3679 = vadd.f32 0.0, %v3678
      %v3680 = vpop.f32.mrb[0].mxu0
      %3681 = vdwg.mxu0
      %3682 = vmatprep.subr.bf16.mxu0 0
      %3683 = vmatpush1.bf16.msra.mxu0 %v3553
      %3684 = vmatprep.subr.bf16.mxu0 0
      %3685 = vmatpush1.bf16.msra.mxu0 %v3554
      %3686 = vmatprep.subr.bf16.mxu0 0
      %3687 = vmatpush1.bf16.msra.mxu0 %v3555
      %3688 = vmatprep.subr.bf16.mxu0 0
      %3689 = vmatpush1.bf16.msra.mxu0 %v3556
      %3690 = vmatprep.subr.bf16.mxu0 0
      %3691 = vmatpush1.bf16.msra.mxu0 %v3557
      %3692 = vmatprep.subr.bf16.mxu0 0
      %3693 = vmatpush1.bf16.msra.mxu0 %v3558
      %3694 = vmatprep.subr.bf16.mxu0 0
      %3695 = vmatpush1.bf16.msra.mxu0 %v3559
      %3696 = vmatprep.subr.bf16.mxu0 0
      %3697 = vmatpush1.bf16.msra.mxu0 %v3560
      %3698 = vmatprep.subr.bf16.mxu0 0
      %3699 = vmatpush1.bf16.msra.mxu0 0
      %3700 = vmatprep.subr.bf16.mxu0 0
      %3701 = vmatpush1.bf16.msra.mxu0 0
      %3702 = vmatprep.subr.bf16.mxu0 0
      %3703 = vmatpush1.bf16.msra.mxu0 0
      %3704 = vmatprep.subr.bf16.mxu0 0
      %3705 = vmatpush1.bf16.msra.mxu0 0
      %3706 = vmatprep.subr.bf16.mxu0 0
      %3707 = vmatpush1.bf16.msra.mxu0 0
      %3708 = vmatprep.subr.bf16.mxu0 0
      %3709 = vmatpush1.bf16.msra.mxu0 0
      %3710 = vmatprep.subr.bf16.mxu0 0
      %3711 = vmatpush1.bf16.msra.mxu0 0
      %3712 = vmatprep.subr.bf16.mxu0 0
      %3713 = vmatpush1.bf16.msra.mxu0 0
      %3714 = vmatprep.mubr.bf16.mxu0 0
      %3715 = vmatmul.mubr.bf16.gmra.mrb[0].mxu0 %v1068
      %v3716 = vpop.f32.mrb[0].mxu0
      %v3717 = vadd.f32 %v3620, %v3716
      %v3718 = vpop.f32.mrb[0].mxu0
      %v3719 = vpop.f32.mrb[0].mxu0
      %v3720 = vadd.f32 %v3623, %v3719
      %v3721 = vpop.f32.mrb[0].mxu0
      %3722 = vmatprep.mubr.bf16.mxu0 0
      %3723 = vmatmul.mubr.bf16.gmra.mrb[0].mxu0 %v1069
      %v3724 = vpop.f32.mrb[0].mxu0
      %v3725 = vadd.f32 %v3628, %v3724
      %v3726 = vpop.f32.mrb[0].mxu0
      %v3727 = vpop.f32.mrb[0].mxu0
      %v3728 = vadd.f32 %v3631, %v3727
      %v3729 = vpop.f32.mrb[0].mxu0
      %3730 = vmatprep.mubr.bf16.mxu0 0
      %3731 = vmatmul.mubr.bf16.gmra.mrb[0].mxu0 %v1070
      %v3732 = vpop.f32.mrb[0].mxu0
      %v3733 = vadd.f32 %v3636, %v3732
      %v3734 = vpop.f32.mrb[0].mxu0
      %v3735 = vpop.f32.mrb[0].mxu0
      %v3736 = vadd.f32 %v3639, %v3735
      %v3737 = vpop.f32.mrb[0].mxu0
      %3738 = vmatprep.mubr.bf16.mxu0 0
      %3739 = vmatmul.mubr.bf16.gmra.mrb[0].mxu0 %v1071
      %v3740 = vpop.f32.mrb[0].mxu0
      %v3741 = vadd.f32 %v3644, %v3740
      %v3742 = vpop.f32.mrb[0].mxu0
      %v3743 = vpop.f32.mrb[0].mxu0
      %v3744 = vadd.f32 %v3647, %v3743
      %v3745 = vpop.f32.mrb[0].mxu0
      %3746 = vmatprep.mubr.bf16.mxu0 0
      %3747 = vmatmul.mubr.bf16.gmra.mrb[0].mxu0 %v1072
      %v3748 = vpop.f32.mrb[0].mxu0
      %v3749 = vadd.f32 %v3652, %v3748
      %v3750 = vpop.f32.mrb[0].mxu0
      %v3751 = vpop.f32.mrb[0].mxu0
      %v3752 = vadd.f32 %v3655, %v3751
      %v3753 = vpop.f32.mrb[0].mxu0
      %3754 = vmatprep.mubr.bf16.mxu0 0
      %3755 = vmatmul.mubr.bf16.gmra.mrb[0].mxu0 %v1073
      %v3756 = vpop.f32.mrb[0].mxu0
      %v3757 = vadd.f32 %v3660, %v3756
      %v3758 = vpop.f32.mrb[0].mxu0
      %v3759 = vpop.f32.mrb[0].mxu0
      %v3760 = vadd.f32 %v3663, %v3759
      %v3761 = vpop.f32.mrb[0].mxu0
      %3762 = vmatprep.mubr.bf16.mxu0 0
      %3763 = vmatmul.mubr.bf16.gmra.mrb[0].mxu0 %v1074
      %v3764 = vpop.f32.mrb[0].mxu0
      %v3765 = vadd.f32 %v3668, %v3764
      %v3766 = vpop.f32.mrb[0].mxu0
      %v3767 = vpop.f32.mrb[0].mxu0
      %v3768 = vadd.f32 %v3671, %v3767
      %v3769 = vpop.f32.mrb[0].mxu0
      %3770 = vmatprep.mubr.bf16.mxu0 0
      %3771 = vmatmul.mubr.bf16.gmra.mrb[0].mxu0 %v1218
      %v3772 = vpop.f32.mrb[0].mxu0
      %v3773 = vadd.f32 %v3676, %v3772
      %v3774 = vpop.f32.mrb[0].mxu0
      %v3775 = vpop.f32.mrb[0].mxu0
      %v3776 = vadd.f32 %v3679, %v3775
      %v3777 = vpop.f32.mrb[0].mxu0
      %3778 = vdwg.mxu0
      %v3779 = vadd.f32 %v3331, %v3717
      %v3780 = vadd.f32 %v3334, %v3720
      %v3781 = vadd.f32 %v3339, %v3725
      %v3782 = vadd.f32 %v3342, %v3728
      %v3783 = vadd.f32 %v3347, %v3733
      %v3784 = vadd.f32 %v3350, %v3736
      %v3785 = vadd.f32 %v3355, %v3741
      %v3786 = vadd.f32 %v3358, %v3744
      %v3787 = vadd.f32 %v3363, %v3749
      %v3788 = vadd.f32 %v3366, %v3752
      %v3789 = vadd.f32 %v3371, %v3757
      %v3790 = vadd.f32 %v3374, %v3760
      %v3791 = vadd.f32 %v3379, %v3765
      %v3792 = vadd.f32 %v3382, %v3768
      %v3793 = vadd.f32 %v3387, %v3773
      %v3794 = vadd.f32 %v3390, %v3776
      %v3795 = vadd.f32 %v3779, %v1251
      %v3796 = vadd.f32 %v3780, %v1252
      %v3797 = vadd.f32 %v3781, %v1253
      %v3798 = vadd.f32 %v3782, %v1254
      %v3799 = vadd.f32 %v3783, %v1255
      %v3800 = vadd.f32 %v3784, %v1256
      %v3801 = vadd.f32 %v3785, %v1257
      %v3802 = vadd.f32 %v3786, %v1258
      %v3803 = vadd.f32 %v3787, %v1259
      %v3804 = vadd.f32 %v3788, %v1260
      %v3805 = vadd.f32 %v3789, %v1261
      %v3806 = vadd.f32 %v3790, %v1262
      %v3807 = vadd.f32 %v3791, %v1263
      %v3808 = vadd.f32 %v3792, %v1264
      %v3809 = vadd.f32 %v3793, %v1265
      %v3810 = vadd.f32 %v3794, %v1266
      %v3811 = vadd.f32 %v3795, %v3796
      %v3812 = vadd.f32 %v3811, %v3797
      %v3813 = vadd.f32 %v3812, %v3798
      %v3814 = vadd.f32 %v3813, %v3799
      %v3815 = vadd.f32 %v3814, %v3800
      %v3816 = vadd.f32 %v3815, %v3801
      %v3817 = vadd.f32 %v3816, %v3802
      %v3818 = vadd.f32 %v3817, %v3803
      %v3819 = vadd.f32 %v3818, %v3804
      %v3820 = vadd.f32 %v3819, %v3805
      %v3821 = vadd.f32 %v3820, %v3806
      %v3822 = vadd.f32 %v3821, %v3807
      %v3823 = vadd.f32 %v3822, %v3808
      %v3824 = vadd.f32 %v3823, %v3809
      %v3825 = vadd.f32 %v3824, %v3810
      %v3826 = vrot.slane %v3825, 4
      %v3827 = vadd.f32 %v3825, %v3826
      %v3828 = vrot.slane %v3827, 2
      %v3829 = vadd.f32 %v3827, %v3828
      %v3830 = vrot.slane %v3829, 1
      %v3831 = vadd.f32 %v3829, %v3830
      %v3832 = vadd.f32 %v2480, %v3831
      %v3833 = vmul.f32 %v3795, %v3795
      %v3834 = vmul.f32 %v3796, %v3796
      %v3835 = vmul.f32 %v3797, %v3797
      %v3836 = vmul.f32 %v3798, %v3798
      %v3837 = vmul.f32 %v3799, %v3799
      %v3838 = vmul.f32 %v3800, %v3800
      %v3839 = vmul.f32 %v3801, %v3801
      %v3840 = vmul.f32 %v3802, %v3802
      %v3841 = vmul.f32 %v3803, %v3803
      %v3842 = vmul.f32 %v3804, %v3804
      %v3843 = vmul.f32 %v3805, %v3805
      %v3844 = vmul.f32 %v3806, %v3806
      %v3845 = vmul.f32 %v3807, %v3807
      %v3846 = vmul.f32 %v3808, %v3808
      %v3847 = vmul.f32 %v3809, %v3809
      %v3848 = vmul.f32 %v3810, %v3810
      %v3849 = vadd.f32 %v3833, %v3834
      %v3850 = vadd.f32 %v3849, %v3835
      %v3851 = vadd.f32 %v3850, %v3836
      %v3852 = vadd.f32 %v3851, %v3837
      %v3853 = vadd.f32 %v3852, %v3838
      %v3854 = vadd.f32 %v3853, %v3839
      %v3855 = vadd.f32 %v3854, %v3840
      %v3856 = vadd.f32 %v3855, %v3841
      %v3857 = vadd.f32 %v3856, %v3842
      %v3858 = vadd.f32 %v3857, %v3843
      %v3859 = vadd.f32 %v3858, %v3844
      %v3860 = vadd.f32 %v3859, %v3845
      %v3861 = vadd.f32 %v3860, %v3846
      %v3862 = vadd.f32 %v3861, %v3847
      %v3863 = vadd.f32 %v3862, %v3848
      %v3864 = vrot.slane %v3863, 4
      %v3865 = vadd.f32 %v3863, %v3864
      %v3866 = vrot.slane %v3865, 2
      %v3867 = vadd.f32 %v3865, %v3866
      %v3868 = vrot.slane %v3867, 1
      %v3869 = vadd.f32 %v3867, %v3868
      %v3870 = vadd.f32 %v2518, %v3869
      %v3871 = vadd.f32 %v3795, %v2523
      %v3872 = vadd.f32 %v3796, %v2523
      %v3873 = vadd.f32 %v3797, %v2523
      %v3874 = vadd.f32 %v3798, %v2523
      %v3875 = vadd.f32 %v3799, %v2523
      %v3876 = vadd.f32 %v3800, %v2523
      %v3877 = vadd.f32 %v3801, %v2523
      %v3878 = vadd.f32 %v3802, %v2523
      %v3879 = vadd.f32 %v3803, %v2523
      %v3880 = vadd.f32 %v3804, %v2523
      %v3881 = vadd.f32 %v3805, %v2523
      %v3882 = vadd.f32 %v3806, %v2523
      %v3883 = vadd.f32 %v3807, %v2523
      %v3884 = vadd.f32 %v3808, %v2523
      %v3885 = vadd.f32 %v3809, %v2523
      %v3886 = vadd.f32 %v3810, %v2523
      %v3887 = vpack.c.bf16 %v3872, %v3871
      %v3888 = vpack.c.bf16 %v3874, %v3873
      %v3889 = vpack.c.bf16 %v3876, %v3875
      %v3890 = vpack.c.bf16 %v3878, %v3877
      %v3891 = vpack.c.bf16 %v3880, %v3879
      %v3892 = vpack.c.bf16 %v3882, %v3881
      %v3893 = vpack.c.bf16 %v3884, %v3883
      %v3894 = vpack.c.bf16 %v3886, %v3885
      %v3903 = vunpack.c.l.b16 %v3887
      %v3904 = vunpack.c.h.b16 %v3887
      %v3905 = vunpack.c.l.b16 %v3888
      %v3906 = vunpack.c.h.b16 %v3888
      %v3907 = vunpack.c.l.b16 %v3889
      %v3908 = vunpack.c.h.b16 %v3889
      %v3909 = vunpack.c.l.b16 %v3890
      %v3910 = vunpack.c.h.b16 %v3890
      %v3911 = vunpack.c.l.b16 %v3891
      %v3912 = vunpack.c.h.b16 %v3891
      %v3913 = vunpack.c.l.b16 %v3892
      %v3914 = vunpack.c.h.b16 %v3892
      %v3915 = vunpack.c.l.b16 %v3893
      %v3916 = vunpack.c.h.b16 %v3893
      %v3917 = vunpack.c.l.b16 %v3894
      %v3918 = vunpack.c.h.b16 %v3894
      %v3919 = vpack.c.b16 %v3903, %v3903
      %v3920 = vpack.c.b16 %v3904, %v3904
      %v3921 = vpack.c.b16 %v3905, %v3905
      %v3922 = vpack.c.b16 %v3906, %v3906
      %v3923 = vpack.c.b16 %v3907, %v3907
      %v3924 = vpack.c.b16 %v3908, %v3908
      %v3925 = vpack.c.b16 %v3909, %v3909
      %v3926 = vpack.c.b16 %v3910, %v3910
      %v3927 = vpack.c.b16 %v3911, %v3911
      %v3928 = vpack.c.b16 %v3912, %v3912
      %v3929 = vpack.c.b16 %v3913, %v3913
      %v3930 = vpack.c.b16 %v3914, %v3914
      %v3931 = vpack.c.b16 %v3915, %v3915
      %v3932 = vpack.c.b16 %v3916, %v3916
      %v3933 = vpack.c.b16 %v3917, %v3917
      %v3934 = vpack.c.b16 %v3918, %v3918
      %3951 = vst [vmem:[%s554 + $0x4] sm:$0xf] %v3919
      %3952 = vst [vmem:[%s554 + $0xc] sm:$0xf] %v3920
      %3953 = vst [vmem:[%s554 + $0x24] sm:$0xf] %v3921
      %3954 = vst [vmem:[%s554 + $0x2c] sm:$0xf] %v3922
      %3955 = vst [vmem:[%s554 + $0x44] sm:$0xf] %v3923
      %3956 = vst [vmem:[%s554 + $0x4c] sm:$0xf] %v3924
      %3957 = vst [vmem:[%s554 + $0x64] sm:$0xf] %v3925
      %3958 = vst [vmem:[%s554 + $0x6c] sm:$0xf] %v3926
      %3959 = vst [vmem:[%s554 + $0x84] sm:$0xf] %v3927
      %3960 = vst [vmem:[%s554 + $0x8c] sm:$0xf] %v3928
      %3961 = vst [vmem:[%s554 + $0xa4] sm:$0xf] %v3929
      %3962 = vst [vmem:[%s554 + $0xac] sm:$0xf] %v3930
      %3963 = vst [vmem:[%s554 + $0xc4] sm:$0xf] %v3931
      %3964 = vst [vmem:[%s554 + $0xcc] sm:$0xf] %v3932
      %3965 = vst [vmem:[%s554 + $0xe4] sm:$0xf] %v3933
      %3966 = vst [vmem:[%s554 + $0xec] sm:$0xf] %v3934
      %v3967 = vld [vmem:[%s6] sm:$0xf]
      %v3968 = vld [vmem:[%s6 + $0x4] sm:$0xf]
      %v3969 = vld [vmem:[%s6 + $0x8] sm:$0xf]
      %v3970 = vld [vmem:[%s6 + $0xc] sm:$0xf]
      %v3971 = vld [vmem:[%s6 + $0x10] sm:$0xf]
      %v3972 = vld [vmem:[%s6 + $0x14] sm:$0xf]
      %v3973 = vld [vmem:[%s6 + $0x18] sm:$0xf]
      %v3974 = vld [vmem:[%s6 + $0x1c] sm:$0xf]
      %v3975 = vld [vmem:[%s6 + $0x20] sm:$0xf]
      %v3976 = vld [vmem:[%s6 + $0x24] sm:$0xf]
      %v3977 = vld [vmem:[%s6 + $0x28] sm:$0xf]
      %v3978 = vld [vmem:[%s6 + $0x2c] sm:$0xf]
      %v3979 = vld [vmem:[%s6 + $0x30] sm:$0xf]
      %v3980 = vld [vmem:[%s6 + $0x34] sm:$0xf]
      %v3981 = vld [vmem:[%s6 + $0x38] sm:$0xf]
      %v3982 = vld [vmem:[%s6 + $0x3c] sm:$0xf]
      %v3983 = vld [vmem:[%s6 + $0x40] sm:$0xf]
      %v3984 = vld [vmem:[%s6 + $0x44] sm:$0xf]
      %v3985 = vld [vmem:[%s6 + $0x48] sm:$0xf]
      %v3986 = vld [vmem:[%s6 + $0x4c] sm:$0xf]
      %v3987 = vld [vmem:[%s6 + $0x50] sm:$0xf]
      %v3988 = vld [vmem:[%s6 + $0x54] sm:$0xf]
      %v3989 = vld [vmem:[%s6 + $0x58] sm:$0xf]
      %v3990 = vld [vmem:[%s6 + $0x5c] sm:$0xf]
      %v3991 = vld [vmem:[%s6 + $0x60] sm:$0xf]
      %v3992 = vld [vmem:[%s6 + $0x64] sm:$0xf]
      %v3993 = vld [vmem:[%s6 + $0x68] sm:$0xf]
      %v3994 = vld [vmem:[%s6 + $0x6c] sm:$0xf]
      %v3995 = vld [vmem:[%s6 + $0x70] sm:$0xf]
      %v3996 = vld [vmem:[%s6 + $0x74] sm:$0xf]
      %v3997 = vld [vmem:[%s6 + $0x78] sm:$0xf]
      %v3998 = vld [vmem:[%s6 + $0x7c] sm:$0xf]
      %v3999 = vld [vmem:[%s6 + $0x80] sm:$0xf]
      %v4000 = vld [vmem:[%s6 + $0x84] sm:$0xf]
      %v4001 = vld [vmem:[%s6 + $0x88] sm:$0xf]
      %v4002 = vld [vmem:[%s6 + $0x8c] sm:$0xf]
      %v4003 = vld [vmem:[%s6 + $0x90] sm:$0xf]
      %v4004 = vld [vmem:[%s6 + $0x94] sm:$0xf]
      %v4005 = vld [vmem:[%s6 + $0x98] sm:$0xf]
      %v4006 = vld [vmem:[%s6 + $0x9c] sm:$0xf]
      %v4007 = vld [vmem:[%s6 + $0xa0] sm:$0xf]
      %v4008 = vld [vmem:[%s6 + $0xa4] sm:$0xf]
      %v4009 = vld [vmem:[%s6 + $0xa8] sm:$0xf]
      %v4010 = vld [vmem:[%s6 + $0xac] sm:$0xf]
      %v4011 = vld [vmem:[%s6 + $0xb0] sm:$0xf]
      %v4012 = vld [vmem:[%s6 + $0xb4] sm:$0xf]
      %v4013 = vld [vmem:[%s6 + $0xb8] sm:$0xf]
      %v4014 = vld [vmem:[%s6 + $0xbc] sm:$0xf]
      %v4015 = vld [vmem:[%s1315] sm:$0xf]
      %v4016 = vld [vmem:[%s1315 + $0x4] sm:$0xf]
      %v4017 = vld [vmem:[%s1315 + $0x8] sm:$0xf]
      %v4018 = vld [vmem:[%s1315 + $0xc] sm:$0xf]
      %v4019 = vld [vmem:[%s1315 + $0x10] sm:$0xf]
      %v4020 = vld [vmem:[%s1315 + $0x14] sm:$0xf]
      %v4021 = vld [vmem:[%s1315 + $0x18] sm:$0xf]
      %v4022 = vld [vmem:[%s1315 + $0x1c] sm:$0xf]
      %v4023 = vld [vmem:[%s1315 + $0x20] sm:$0xf]
      %v4024 = vld [vmem:[%s1315 + $0x24] sm:$0xf]
      %v4025 = vld [vmem:[%s1315 + $0x28] sm:$0xf]
      %v4026 = vld [vmem:[%s1315 + $0x2c] sm:$0xf]
      %v4027 = vld [vmem:[%s1315 + $0x30] sm:$0xf]
      %v4028 = vld [vmem:[%s1315 + $0x34] sm:$0xf]
      %v4029 = vld [vmem:[%s1315 + $0x38] sm:$0xf]
      %v4030 = vld [vmem:[%s1315 + $0x3c] sm:$0xf]
      %v4031 = vld [vmem:[%s1315 + $0x40] sm:$0xf]
      %v4032 = vld [vmem:[%s1315 + $0x44] sm:$0xf]
      %v4033 = vld [vmem:[%s1315 + $0x48] sm:$0xf]
      %v4034 = vld [vmem:[%s1315 + $0x4c] sm:$0xf]
      %v4035 = vld [vmem:[%s1315 + $0x50] sm:$0xf]
      %v4036 = vld [vmem:[%s1315 + $0x54] sm:$0xf]
      %v4037 = vld [vmem:[%s1315 + $0x58] sm:$0xf]
      %v4038 = vld [vmem:[%s1315 + $0x5c] sm:$0xf]
      %v4039 = vld [vmem:[%s1315 + $0x60] sm:$0xf]
      %v4040 = vld [vmem:[%s1315 + $0x64] sm:$0xf]
      %v4041 = vld [vmem:[%s1315 + $0x68] sm:$0xf]
      %v4042 = vld [vmem:[%s1315 + $0x6c] sm:$0xf]
      %v4043 = vld [vmem:[%s1315 + $0x70] sm:$0xf]
      %v4044 = vld [vmem:[%s1315 + $0x74] sm:$0xf]
      %v4045 = vld [vmem:[%s1315 + $0x78] sm:$0xf]
      %v4046 = vld [vmem:[%s1315 + $0x7c] sm:$0xf]
      %v4047 = vld [vmem:[%s1315 + $0x80] sm:$0xf]
      %v4048 = vld [vmem:[%s1315 + $0x84] sm:$0xf]
      %v4049 = vld [vmem:[%s1315 + $0x88] sm:$0xf]
      %v4050 = vld [vmem:[%s1315 + $0x8c] sm:$0xf]
      %v4051 = vld [vmem:[%s1315 + $0x90] sm:$0xf]
      %v4052 = vld [vmem:[%s1315 + $0x94] sm:$0xf]
      %v4053 = vld [vmem:[%s1315 + $0x98] sm:$0xf]
      %v4054 = vld [vmem:[%s1315 + $0x9c] sm:$0xf]
      %v4055 = vld [vmem:[%s1315 + $0xa0] sm:$0xf]
      %v4056 = vld [vmem:[%s1315 + $0xa4] sm:$0xf]
      %v4057 = vld [vmem:[%s1315 + $0xa8] sm:$0xf]
      %v4058 = vld [vmem:[%s1315 + $0xac] sm:$0xf]
      %v4059 = vld [vmem:[%s1315 + $0xb0] sm:$0xf]
      %v4060 = vld [vmem:[%s1315 + $0xb4] sm:$0xf]
      %v4061 = vld [vmem:[%s1315 + $0xb8] sm:$0xf]
      %v4062 = vld [vmem:[%s1315 + $0xbc] sm:$0xf]
      %v4111 = vunpack.c.l.b16 %v4015
      %v4112 = vunpack.c.l.b16 %v4016
      %v4113 = vunpack.c.l.b16 %v4017
      %v4114 = vunpack.c.l.b16 %v4018
      %v4115 = vunpack.c.l.b16 %v4019
      %v4116 = vunpack.c.l.b16 %v4020
      %v4117 = vunpack.c.l.b16 %v4021
      %v4118 = vunpack.c.l.b16 %v4022
      %v4119 = vunpack.c.l.b16 %v4023
      %v4120 = vunpack.c.l.b16 %v4024
      %v4121 = vunpack.c.l.b16 %v4025
      %v4122 = vunpack.c.l.b16 %v4026
      %v4123 = vunpack.c.l.b16 %v4027
      %v4124 = vunpack.c.l.b16 %v4028
      %v4125 = vunpack.c.l.b16 %v4029
      %v4126 = vunpack.c.l.b16 %v4030
      %v4127 = vunpack.c.l.b16 %v4031
      %v4128 = vunpack.c.l.b16 %v4032
      %v4129 = vunpack.c.l.b16 %v4033
      %v4130 = vunpack.c.l.b16 %v4034
      %v4131 = vunpack.c.l.b16 %v4035
      %v4132 = vunpack.c.l.b16 %v4036
      %v4133 = vunpack.c.l.b16 %v4037
      %v4134 = vunpack.c.l.b16 %v4038
      %v4135 = vunpack.c.l.b16 %v4039
      %v4136 = vunpack.c.l.b16 %v4040
      %v4137 = vunpack.c.l.b16 %v4041
      %v4138 = vunpack.c.l.b16 %v4042
      %v4139 = vunpack.c.l.b16 %v4043
      %v4140 = vunpack.c.l.b16 %v4044
      %v4141 = vunpack.c.l.b16 %v4045
      %v4142 = vunpack.c.l.b16 %v4046
      %v4143 = vunpack.c.l.b16 %v4047
      %v4144 = vunpack.c.l.b16 %v4048
      %v4145 = vunpack.c.l.b16 %v4049
      %v4146 = vunpack.c.l.b16 %v4050
      %v4147 = vunpack.c.l.b16 %v4051
      %v4148 = vunpack.c.l.b16 %v4052
      %v4149 = vunpack.c.l.b16 %v4053
      %v4150 = vunpack.c.l.b16 %v4054
      %v4151 = vunpack.c.l.b16 %v4055
      %v4152 = vunpack.c.l.b16 %v4056
      %v4153 = vunpack.c.l.b16 %v4057
      %v4154 = vunpack.c.l.b16 %v4058
      %v4155 = vunpack.c.l.b16 %v4059
      %v4156 = vunpack.c.l.b16 %v4060
      %v4157 = vunpack.c.l.b16 %v4061
      %v4158 = vunpack.c.l.b16 %v4062
      %v4159 = vpack.c.b16 %v4112, %v4111
      %v4160 = vpack.c.b16 %v4114, %v4113
      %v4161 = vpack.c.b16 %v4116, %v4115
      %v4162 = vpack.c.b16 %v4118, %v4117
      %v4163 = vpack.c.b16 %v4120, %v4119
      %v4164 = vpack.c.b16 %v4122, %v4121
      %v4165 = vpack.c.b16 %v4124, %v4123
      %v4166 = vpack.c.b16 %v4126, %v4125
      %v4167 = vpack.c.b16 %v4128, %v4127
      %v4168 = vpack.c.b16 %v4130, %v4129
      %v4169 = vpack.c.b16 %v4132, %v4131
      %v4170 = vpack.c.b16 %v4134, %v4133
      %v4171 = vpack.c.b16 %v4136, %v4135
      %v4172 = vpack.c.b16 %v4138, %v4137
      %v4173 = vpack.c.b16 %v4140, %v4139
      %v4174 = vpack.c.b16 %v4142, %v4141
      %v4175 = vpack.c.b16 %v4144, %v4143
      %v4176 = vpack.c.b16 %v4146, %v4145
      %v4177 = vpack.c.b16 %v4148, %v4147
      %v4178 = vpack.c.b16 %v4150, %v4149
      %v4179 = vpack.c.b16 %v4152, %v4151
      %v4180 = vpack.c.b16 %v4154, %v4153
      %v4181 = vpack.c.b16 %v4156, %v4155
      %v4182 = vpack.c.b16 %v4158, %v4157
      %4207 = vmatprep.subr.bf16.mxu0 0
      %4208 = vmatpush1.bf16.msra.mxu0 %v4159
      %4209 = vmatprep.subr.bf16.mxu0 0
      %4210 = vmatpush1.bf16.msra.mxu0 %v4160
      %4211 = vmatprep.subr.bf16.mxu0 0
      %4212 = vmatpush1.bf16.msra.mxu0 %v4161
      %4213 = vmatprep.subr.bf16.mxu0 0
      %4214 = vmatpush1.bf16.msra.mxu0 %v4162
      %4215 = vmatprep.subr.bf16.mxu0 0
      %4216 = vmatpush1.bf16.msra.mxu0 %v4163
      %4217 = vmatprep.subr.bf16.mxu0 0
      %4218 = vmatpush1.bf16.msra.mxu0 %v4164
      %4219 = vmatprep.subr.bf16.mxu0 0
      %4220 = vmatpush1.bf16.msra.mxu0 %v4165
      %4221 = vmatprep.subr.bf16.mxu0 0
      %4222 = vmatpush1.bf16.msra.mxu0 %v4166
      %4223 = vmatprep.subr.bf16.mxu0 0
      %4224 = vmatpush1.bf16.msra.mxu0 %v4167
      %4225 = vmatprep.subr.bf16.mxu0 0
      %4226 = vmatpush1.bf16.msra.mxu0 %v4168
      %4227 = vmatprep.subr.bf16.mxu0 0
      %4228 = vmatpush1.bf16.msra.mxu0 %v4169
      %4229 = vmatprep.subr.bf16.mxu0 0
      %4230 = vmatpush1.bf16.msra.mxu0 %v4170
      %4231 = vmatprep.subr.bf16.mxu0 0
      %4232 = vmatpush1.bf16.msra.mxu0 %v4171
      %4233 = vmatprep.subr.bf16.mxu0 0
      %4234 = vmatpush1.bf16.msra.mxu0 %v4172
      %4235 = vmatprep.subr.bf16.mxu0 0
      %4236 = vmatpush1.bf16.msra.mxu0 %v4173
      %4237 = vmatprep.subr.bf16.mxu0 0
      %4238 = vmatpush1.bf16.msra.mxu0 %v4174
      %4239 = vmatprep.mubr.bf16.mxu0 %v999
      %4240 = vmatmul.mubr.bf16.gmra.mrb[0].mxu0 %v991
      %v4241 = vpop.f32.mrb[0].mxu0
      %v4242 = vadd.f32 0.0, %v4241
      %v4243 = vpop.f32.mrb[0].mxu0
      %v4244 = vpop.f32.mrb[0].mxu0
      %v4245 = vadd.f32 0.0, %v4244
      %v4246 = vpop.f32.mrb[0].mxu0
      %4247 = vmatprep.mubr.bf16.mxu0 %v1000
      %4248 = vmatmul.mubr.bf16.gmra.mrb[0].mxu0 %v992
      %v4249 = vpop.f32.mrb[0].mxu0
      %v4250 = vadd.f32 0.0, %v4249
      %v4251 = vpop.f32.mrb[0].mxu0
      %v4252 = vpop.f32.mrb[0].mxu0
      %v4253 = vadd.f32 0.0, %v4252
      %v4254 = vpop.f32.mrb[0].mxu0
      %4255 = vmatprep.mubr.bf16.mxu0 %v1001
      %4256 = vmatmul.mubr.bf16.gmra.mrb[0].mxu0 %v993
      %v4257 = vpop.f32.mrb[0].mxu0
      %v4258 = vadd.f32 0.0, %v4257
      %v4259 = vpop.f32.mrb[0].mxu0
      %v4260 = vpop.f32.mrb[0].mxu0
      %v4261 = vadd.f32 0.0, %v4260
      %v4262 = vpop.f32.mrb[0].mxu0
      %4263 = vmatprep.mubr.bf16.mxu0 %v1002
      %4264 = vmatmul.mubr.bf16.gmra.mrb[0].mxu0 %v994
      %v4265 = vpop.f32.mrb[0].mxu0
      %v4266 = vadd.f32 0.0, %v4265
      %v4267 = vpop.f32.mrb[0].mxu0
      %v4268 = vpop.f32.mrb[0].mxu0
      %v4269 = vadd.f32 0.0, %v4268
      %v4270 = vpop.f32.mrb[0].mxu0
      %4271 = vmatprep.mubr.bf16.mxu0 %v1003
      %4272 = vmatmul.mubr.bf16.gmra.mrb[0].mxu0 %v995
      %v4273 = vpop.f32.mrb[0].mxu0
      %v4274 = vadd.f32 0.0, %v4273
      %v4275 = vpop.f32.mrb[0].mxu0
      %v4276 = vpop.f32.mrb[0].mxu0
      %v4277 = vadd.f32 0.0, %v4276
      %v4278 = vpop.f32.mrb[0].mxu0
      %4279 = vmatprep.mubr.bf16.mxu0 %v1004
      %4280 = vmatmul.mubr.bf16.gmra.mrb[0].mxu0 %v996
      %v4281 = vpop.f32.mrb[0].mxu0
      %v4282 = vadd.f32 0.0, %v4281
      %v4283 = vpop.f32.mrb[0].mxu0
      %v4284 = vpop.f32.mrb[0].mxu0
      %v4285 = vadd.f32 0.0, %v4284
      %v4286 = vpop.f32.mrb[0].mxu0
      %4287 = vmatprep.mubr.bf16.mxu0 %v1005
      %4288 = vmatmul.mubr.bf16.gmra.mrb[0].mxu0 %v997
      %v4289 = vpop.f32.mrb[0].mxu0
      %v4290 = vadd.f32 0.0, %v4289
      %v4291 = vpop.f32.mrb[0].mxu0
      %v4292 = vpop.f32.mrb[0].mxu0
      %v4293 = vadd.f32 0.0, %v4292
      %v4294 = vpop.f32.mrb[0].mxu0
      %4295 = vmatprep.mubr.bf16.mxu0 %v1210
      %4296 = vmatmul.mubr.bf16.gmra.mrb[0].mxu0 %v1209
      %v4297 = vpop.f32.mrb[0].mxu0
      %v4298 = vadd.f32 0.0, %v4297
      %v4299 = vpop.f32.mrb[0].mxu0
      %v4300 = vpop.f32.mrb[0].mxu0
      %v4301 = vadd.f32 0.0, %v4300
      %v4302 = vpop.f32.mrb[0].mxu0
      %4303 = vdwg.mxu0
      %4304 = vmatprep.subr.bf16.mxu0 0
      %4305 = vmatpush1.bf16.msra.mxu0 %v4175
      %4306 = vmatprep.subr.bf16.mxu0 0
      %4307 = vmatpush1.bf16.msra.mxu0 %v4176
      %4308 = vmatprep.subr.bf16.mxu0 0
      %4309 = vmatpush1.bf16.msra.mxu0 %v4177
      %4310 = vmatprep.subr.bf16.mxu0 0
      %4311 = vmatpush1.bf16.msra.mxu0 %v4178
      %4312 = vmatprep.subr.bf16.mxu0 0
      %4313 = vmatpush1.bf16.msra.mxu0 %v4179
      %4314 = vmatprep.subr.bf16.mxu0 0
      %4315 = vmatpush1.bf16.msra.mxu0 %v4180
      %4316 = vmatprep.subr.bf16.mxu0 0
      %4317 = vmatpush1.bf16.msra.mxu0 %v4181
      %4318 = vmatprep.subr.bf16.mxu0 0
      %4319 = vmatpush1.bf16.msra.mxu0 %v4182
      %4320 = vmatprep.subr.bf16.mxu0 0
      %4321 = vmatpush1.bf16.msra.mxu0 0
      %4322 = vmatprep.subr.bf16.mxu0 0
      %4323 = vmatpush1.bf16.msra.mxu0 0
      %4324 = vmatprep.subr.bf16.mxu0 0
      %4325 = vmatpush1.bf16.msra.mxu0 0
      %4326 = vmatprep.subr.bf16.mxu0 0
      %4327 = vmatpush1.bf16.msra.mxu0 0
      %4328 = vmatprep.subr.bf16.mxu0 0
      %4329 = vmatpush1.bf16.msra.mxu0 0
      %4330 = vmatprep.subr.bf16.mxu0 0
      %4331 = vmatpush1.bf16.msra.mxu0 0
      %4332 = vmatprep.subr.bf16.mxu0 0
      %4333 = vmatpush1.bf16.msra.mxu0 0
      %4334 = vmatprep.subr.bf16.mxu0 0
      %4335 = vmatpush1.bf16.msra.mxu0 0
      %4336 = vmatprep.mubr.bf16.mxu0 0
      %4337 = vmatmul.mubr.bf16.gmra.mrb[0].mxu0 %v1007
      %v4338 = vpop.f32.mrb[0].mxu0
      %v4339 = vadd.f32 %v4242, %v4338
      %v4340 = vpop.f32.mrb[0].mxu0
      %v4341 = vpop.f32.mrb[0].mxu0
      %v4342 = vadd.f32 %v4245, %v4341
      %v4343 = vpop.f32.mrb[0].mxu0
      %4344 = vmatprep.mubr.bf16.mxu0 0
      %4345 = vmatmul.mubr.bf16.gmra.mrb[0].mxu0 %v1008
      %v4346 = vpop.f32.mrb[0].mxu0
      %v4347 = vadd.f32 %v4250, %v4346
      %v4348 = vpop.f32.mrb[0].mxu0
      %v4349 = vpop.f32.mrb[0].mxu0
      %v4350 = vadd.f32 %v4253, %v4349
      %v4351 = vpop.f32.mrb[0].mxu0
      %4352 = vmatprep.mubr.bf16.mxu0 0
      %4353 = vmatmul.mubr.bf16.gmra.mrb[0].mxu0 %v1009
      %v4354 = vpop.f32.mrb[0].mxu0
      %v4355 = vadd.f32 %v4258, %v4354
      %v4356 = vpop.f32.mrb[0].mxu0
      %v4357 = vpop.f32.mrb[0].mxu0
      %v4358 = vadd.f32 %v4261, %v4357
      %v4359 = vpop.f32.mrb[0].mxu0
      %4360 = vmatprep.mubr.bf16.mxu0 0
      %4361 = vmatmul.mubr.bf16.gmra.mrb[0].mxu0 %v1010
      %v4362 = vpop.f32.mrb[0].mxu0
      %v4363 = vadd.f32 %v4266, %v4362
      %v4364 = vpop.f32.mrb[0].mxu0
      %v4365 = vpop.f32.mrb[0].mxu0
      %v4366 = vadd.f32 %v4269, %v4365
      %v4367 = vpop.f32.mrb[0].mxu0
      %4368 = vmatprep.mubr.bf16.mxu0 0
      %4369 = vmatmul.mubr.bf16.gmra.mrb[0].mxu0 %v1011
      %v4370 = vpop.f32.mrb[0].mxu0
      %v4371 = vadd.f32 %v4274, %v4370
      %v4372 = vpop.f32.mrb[0].mxu0
      %v4373 = vpop.f32.mrb[0].mxu0
      %v4374 = vadd.f32 %v4277, %v4373
      %v4375 = vpop.f32.mrb[0].mxu0
      %4376 = vmatprep.mubr.bf16.mxu0 0
      %4377 = vmatmul.mubr.bf16.gmra.mrb[0].mxu0 %v1012
      %v4378 = vpop.f32.mrb[0].mxu0
      %v4379 = vadd.f32 %v4282, %v4378
      %v4380 = vpop.f32.mrb[0].mxu0
      %v4381 = vpop.f32.mrb[0].mxu0
      %v4382 = vadd.f32 %v4285, %v4381
      %v4383 = vpop.f32.mrb[0].mxu0
      %4384 = vmatprep.mubr.bf16.mxu0 0
      %4385 = vmatmul.mubr.bf16.gmra.mrb[0].mxu0 %v1013
      %v4386 = vpop.f32.mrb[0].mxu0
      %v4387 = vadd.f32 %v4290, %v4386
      %v4388 = vpop.f32.mrb[0].mxu0
      %v4389 = vpop.f32.mrb[0].mxu0
      %v4390 = vadd.f32 %v4293, %v4389
      %v4391 = vpop.f32.mrb[0].mxu0
      %4392 = vmatprep.mubr.bf16.mxu0 0
      %4393 = vmatmul.mubr.bf16.gmra.mrb[0].mxu0 %v1211
      %v4394 = vpop.f32.mrb[0].mxu0
      %v4395 = vadd.f32 %v4298, %v4394
      %v4396 = vpop.f32.mrb[0].mxu0
      %v4397 = vpop.f32.mrb[0].mxu0
      %v4398 = vadd.f32 %v4301, %v4397
      %v4399 = vpop.f32.mrb[0].mxu0
      %4400 = vdwg.mxu0
      %v4449 = vunpack.c.l.b16 %v3967
      %v4450 = vunpack.c.l.b16 %v3968
      %v4451 = vunpack.c.l.b16 %v3969
      %v4452 = vunpack.c.l.b16 %v3970
      %v4453 = vunpack.c.l.b16 %v3971
      %v4454 = vunpack.c.l.b16 %v3972
      %v4455 = vunpack.c.l.b16 %v3973
      %v4456 = vunpack.c.l.b16 %v3974
      %v4457 = vunpack.c.l.b16 %v3975
      %v4458 = vunpack.c.l.b16 %v3976
      %v4459 = vunpack.c.l.b16 %v3977
      %v4460 = vunpack.c.l.b16 %v3978
      %v4461 = vunpack.c.l.b16 %v3979
      %v4462 = vunpack.c.l.b16 %v3980
      %v4463 = vunpack.c.l.b16 %v3981
      %v4464 = vunpack.c.l.b16 %v3982
      %v4465 = vunpack.c.l.b16 %v3983
      %v4466 = vunpack.c.l.b16 %v3984
      %v4467 = vunpack.c.l.b16 %v3985
      %v4468 = vunpack.c.l.b16 %v3986
      %v4469 = vunpack.c.l.b16 %v3987
      %v4470 = vunpack.c.l.b16 %v3988
      %v4471 = vunpack.c.l.b16 %v3989
      %v4472 = vunpack.c.l.b16 %v3990
      %v4473 = vunpack.c.l.b16 %v3991
      %v4474 = vunpack.c.l.b16 %v3992
      %v4475 = vunpack.c.l.b16 %v3993
      %v4476 = vunpack.c.l.b16 %v3994
      %v4477 = vunpack.c.l.b16 %v3995
      %v4478 = vunpack.c.l.b16 %v3996
      %v4479 = vunpack.c.l.b16 %v3997
      %v4480 = vunpack.c.l.b16 %v3998
      %v4481 = vunpack.c.l.b16 %v3999
      %v4482 = vunpack.c.l.b16 %v4000
      %v4483 = vunpack.c.l.b16 %v4001
      %v4484 = vunpack.c.l.b16 %v4002
      %v4485 = vunpack.c.l.b16 %v4003
      %v4486 = vunpack.c.l.b16 %v4004
      %v4487 = vunpack.c.l.b16 %v4005
      %v4488 = vunpack.c.l.b16 %v4006
      %v4489 = vunpack.c.l.b16 %v4007
      %v4490 = vunpack.c.l.b16 %v4008
      %v4491 = vunpack.c.l.b16 %v4009
      %v4492 = vunpack.c.l.b16 %v4010
      %v4493 = vunpack.c.l.b16 %v4011
      %v4494 = vunpack.c.l.b16 %v4012
      %v4495 = vunpack.c.l.b16 %v4013
      %v4496 = vunpack.c.l.b16 %v4014
      %v4497 = vpack.c.b16 %v4450, %v4449
      %v4498 = vpack.c.b16 %v4452, %v4451
      %v4499 = vpack.c.b16 %v4454, %v4453
      %v4500 = vpack.c.b16 %v4456, %v4455
      %v4501 = vpack.c.b16 %v4458, %v4457
      %v4502 = vpack.c.b16 %v4460, %v4459
      %v4503 = vpack.c.b16 %v4462, %v4461
      %v4504 = vpack.c.b16 %v4464, %v4463
      %v4505 = vpack.c.b16 %v4466, %v4465
      %v4506 = vpack.c.b16 %v4468, %v4467
      %v4507 = vpack.c.b16 %v4470, %v4469
      %v4508 = vpack.c.b16 %v4472, %v4471
      %v4509 = vpack.c.b16 %v4474, %v4473
      %v4510 = vpack.c.b16 %v4476, %v4475
      %v4511 = vpack.c.b16 %v4478, %v4477
      %v4512 = vpack.c.b16 %v4480, %v4479
      %v4513 = vpack.c.b16 %v4482, %v4481
      %v4514 = vpack.c.b16 %v4484, %v4483
      %v4515 = vpack.c.b16 %v4486, %v4485
      %v4516 = vpack.c.b16 %v4488, %v4487
      %v4517 = vpack.c.b16 %v4490, %v4489
      %v4518 = vpack.c.b16 %v4492, %v4491
      %v4519 = vpack.c.b16 %v4494, %v4493
      %v4520 = vpack.c.b16 %v4496, %v4495
      %4545 = vmatprep.subr.bf16.mxu0 0
      %4546 = vmatpush1.bf16.msra.mxu0 %v4497
      %4547 = vmatprep.subr.bf16.mxu0 0
      %4548 = vmatpush1.bf16.msra.mxu0 %v4498
      %4549 = vmatprep.subr.bf16.mxu0 0
      %4550 = vmatpush1.bf16.msra.mxu0 %v4499
      %4551 = vmatprep.subr.bf16.mxu0 0
      %4552 = vmatpush1.bf16.msra.mxu0 %v4500
      %4553 = vmatprep.subr.bf16.mxu0 0
      %4554 = vmatpush1.bf16.msra.mxu0 %v4501
      %4555 = vmatprep.subr.bf16.mxu0 0
      %4556 = vmatpush1.bf16.msra.mxu0 %v4502
      %4557 = vmatprep.subr.bf16.mxu0 0
      %4558 = vmatpush1.bf16.msra.mxu0 %v4503
      %4559 = vmatprep.subr.bf16.mxu0 0
      %4560 = vmatpush1.bf16.msra.mxu0 %v4504
      %4561 = vmatprep.subr.bf16.mxu0 0
      %4562 = vmatpush1.bf16.msra.mxu0 %v4505
      %4563 = vmatprep.subr.bf16.mxu0 0
      %4564 = vmatpush1.bf16.msra.mxu0 %v4506
      %4565 = vmatprep.subr.bf16.mxu0 0
      %4566 = vmatpush1.bf16.msra.mxu0 %v4507
      %4567 = vmatprep.subr.bf16.mxu0 0
      %4568 = vmatpush1.bf16.msra.mxu0 %v4508
      %4569 = vmatprep.subr.bf16.mxu0 0
      %4570 = vmatpush1.bf16.msra.mxu0 %v4509
      %4571 = vmatprep.subr.bf16.mxu0 0
      %4572 = vmatpush1.bf16.msra.mxu0 %v4510
      %4573 = vmatprep.subr.bf16.mxu0 0
      %4574 = vmatpush1.bf16.msra.mxu0 %v4511
      %4575 = vmatprep.subr.bf16.mxu0 0
      %4576 = vmatpush1.bf16.msra.mxu0 %v4512
      %4577 = vmatprep.mubr.bf16.mxu0 %v1131
      %4578 = vmatmul.mubr.bf16.gmra.mrb[0].mxu0 %v1123
      %v4579 = vpop.f32.mrb[0].mxu0
      %v4580 = vadd.f32 %v4339, %v4579
      %v4581 = vpop.f32.mrb[0].mxu0
      %v4582 = vpop.f32.mrb[0].mxu0
      %v4583 = vadd.f32 %v4342, %v4582
      %v4584 = vpop.f32.mrb[0].mxu0
      %4585 = vmatprep.mubr.bf16.mxu0 %v1132
      %4586 = vmatmul.mubr.bf16.gmra.mrb[0].mxu0 %v1124
      %v4587 = vpop.f32.mrb[0].mxu0
      %v4588 = vadd.f32 %v4347, %v4587
      %v4589 = vpop.f32.mrb[0].mxu0
      %v4590 = vpop.f32.mrb[0].mxu0
      %v4591 = vadd.f32 %v4350, %v4590
      %v4592 = vpop.f32.mrb[0].mxu0
      %4593 = vmatprep.mubr.bf16.mxu0 %v1133
      %4594 = vmatmul.mubr.bf16.gmra.mrb[0].mxu0 %v1125
      %v4595 = vpop.f32.mrb[0].mxu0
      %v4596 = vadd.f32 %v4355, %v4595
      %v4597 = vpop.f32.mrb[0].mxu0
      %v4598 = vpop.f32.mrb[0].mxu0
      %v4599 = vadd.f32 %v4358, %v4598
      %v4600 = vpop.f32.mrb[0].mxu0
      %4601 = vmatprep.mubr.bf16.mxu0 %v1134
      %4602 = vmatmul.mubr.bf16.gmra.mrb[0].mxu0 %v1126
      %v4603 = vpop.f32.mrb[0].mxu0
      %v4604 = vadd.f32 %v4363, %v4603
      %v4605 = vpop.f32.mrb[0].mxu0
      %v4606 = vpop.f32.mrb[0].mxu0
      %v4607 = vadd.f32 %v4366, %v4606
      %v4608 = vpop.f32.mrb[0].mxu0
      %4609 = vmatprep.mubr.bf16.mxu0 %v1135
      %4610 = vmatmul.mubr.bf16.gmra.mrb[0].mxu0 %v1127
      %v4611 = vpop.f32.mrb[0].mxu0
      %v4612 = vadd.f32 %v4371, %v4611
      %v4613 = vpop.f32.mrb[0].mxu0
      %v4614 = vpop.f32.mrb[0].mxu0
      %v4615 = vadd.f32 %v4374, %v4614
      %v4616 = vpop.f32.mrb[0].mxu0
      %4617 = vmatprep.mubr.bf16.mxu0 %v1136
      %4618 = vmatmul.mubr.bf16.gmra.mrb[0].mxu0 %v1128
      %v4619 = vpop.f32.mrb[0].mxu0
      %v4620 = vadd.f32 %v4379, %v4619
      %v4621 = vpop.f32.mrb[0].mxu0
      %v4622 = vpop.f32.mrb[0].mxu0
      %v4623 = vadd.f32 %v4382, %v4622
      %v4624 = vpop.f32.mrb[0].mxu0
      %4625 = vmatprep.mubr.bf16.mxu0 %v1137
      %4626 = vmatmul.mubr.bf16.gmra.mrb[0].mxu0 %v1129
      %v4627 = vpop.f32.mrb[0].mxu0
      %v4628 = vadd.f32 %v4387, %v4627
      %v4629 = vpop.f32.mrb[0].mxu0
      %v4630 = vpop.f32.mrb[0].mxu0
      %v4631 = vadd.f32 %v4390, %v4630
      %v4632 = vpop.f32.mrb[0].mxu0
      %4633 = vmatprep.mubr.bf16.mxu0 %v1138
      %4634 = vmatmul.mubr.bf16.gmra.mrb[0].mxu0 %v1130
      %v4635 = vpop.f32.mrb[0].mxu0
      %v4636 = vadd.f32 %v4395, %v4635
      %v4637 = vpop.f32.mrb[0].mxu0
      %v4638 = vpop.f32.mrb[0].mxu0
      %v4639 = vadd.f32 %v4398, %v4638
      %v4640 = vpop.f32.mrb[0].mxu0
      %4641 = vdwg.mxu0
      %4642 = vmatprep.subr.bf16.mxu0 0
      %4643 = vmatpush1.bf16.msra.mxu0 %v4513
      %4644 = vmatprep.subr.bf16.mxu0 0
      %4645 = vmatpush1.bf16.msra.mxu0 %v4514
      %4646 = vmatprep.subr.bf16.mxu0 0
      %4647 = vmatpush1.bf16.msra.mxu0 %v4515
      %4648 = vmatprep.subr.bf16.mxu0 0
      %4649 = vmatpush1.bf16.msra.mxu0 %v4516
      %4650 = vmatprep.subr.bf16.mxu0 0
      %4651 = vmatpush1.bf16.msra.mxu0 %v4517
      %4652 = vmatprep.subr.bf16.mxu0 0
      %4653 = vmatpush1.bf16.msra.mxu0 %v4518
      %4654 = vmatprep.subr.bf16.mxu0 0
      %4655 = vmatpush1.bf16.msra.mxu0 %v4519
      %4656 = vmatprep.subr.bf16.mxu0 0
      %4657 = vmatpush1.bf16.msra.mxu0 %v4520
      %4658 = vmatprep.subr.bf16.mxu0 0
      %4659 = vmatpush1.bf16.msra.mxu0 0
      %4660 = vmatprep.subr.bf16.mxu0 0
      %4661 = vmatpush1.bf16.msra.mxu0 0
      %4662 = vmatprep.subr.bf16.mxu0 0
      %4663 = vmatpush1.bf16.msra.mxu0 0
      %4664 = vmatprep.subr.bf16.mxu0 0
      %4665 = vmatpush1.bf16.msra.mxu0 0
      %4666 = vmatprep.subr.bf16.mxu0 0
      %4667 = vmatpush1.bf16.msra.mxu0 0
      %4668 = vmatprep.subr.bf16.mxu0 0
      %4669 = vmatpush1.bf16.msra.mxu0 0
      %4670 = vmatprep.subr.bf16.mxu0 0
      %4671 = vmatpush1.bf16.msra.mxu0 0
      %4672 = vmatprep.subr.bf16.mxu0 0
      %4673 = vmatpush1.bf16.msra.mxu0 0
      %4674 = vmatprep.mubr.bf16.mxu0 0
      %4675 = vmatmul.mubr.bf16.gmra.mrb[0].mxu0 %v1139
      %v4676 = vpop.f32.mrb[0].mxu0
      %v4677 = vadd.f32 %v4580, %v4676
      %v4678 = vpop.f32.mrb[0].mxu0
      %v4679 = vpop.f32.mrb[0].mxu0
      %v4680 = vadd.f32 %v4583, %v4679
      %v4681 = vpop.f32.mrb[0].mxu0
      %4682 = vmatprep.mubr.bf16.mxu0 0
      %4683 = vmatmul.mubr.bf16.gmra.mrb[0].mxu0 %v1140
      %v4684 = vpop.f32.mrb[0].mxu0
      %v4685 = vadd.f32 %v4588, %v4684
      %v4686 = vpop.f32.mrb[0].mxu0
      %v4687 = vpop.f32.mrb[0].mxu0
      %v4688 = vadd.f32 %v4591, %v4687
      %v4689 = vpop.f32.mrb[0].mxu0
      %4690 = vmatprep.mubr.bf16.mxu0 0
      %4691 = vmatmul.mubr.bf16.gmra.mrb[0].mxu0 %v1141
      %v4692 = vpop.f32.mrb[0].mxu0
      %v4693 = vadd.f32 %v4596, %v4692
      %v4694 = vpop.f32.mrb[0].mxu0
      %v4695 = vpop.f32.mrb[0].mxu0
      %v4696 = vadd.f32 %v4599, %v4695
      %v4697 = vpop.f32.mrb[0].mxu0
      %4698 = vmatprep.mubr.bf16.mxu0 0
      %4699 = vmatmul.mubr.bf16.gmra.mrb[0].mxu0 %v1142
      %v4700 = vpop.f32.mrb[0].mxu0
      %v4701 = vadd.f32 %v4604, %v4700
      %v4702 = vpop.f32.mrb[0].mxu0
      %v4703 = vpop.f32.mrb[0].mxu0
      %v4704 = vadd.f32 %v4607, %v4703
      %v4705 = vpop.f32.mrb[0].mxu0
      %4706 = vmatprep.mubr.bf16.mxu0 0
      %4707 = vmatmul.mubr.bf16.gmra.mrb[0].mxu0 %v1143
      %v4708 = vpop.f32.mrb[0].mxu0
      %v4709 = vadd.f32 %v4612, %v4708
      %v4710 = vpop.f32.mrb[0].mxu0
      %v4711 = vpop.f32.mrb[0].mxu0
      %v4712 = vadd.f32 %v4615, %v4711
      %v4713 = vpop.f32.mrb[0].mxu0
      %4714 = vmatprep.mubr.bf16.mxu0 0
      %4715 = vmatmul.mubr.bf16.gmra.mrb[0].mxu0 %v1144
      %v4716 = vpop.f32.mrb[0].mxu0
      %v4717 = vadd.f32 %v4620, %v4716
      %v4718 = vpop.f32.mrb[0].mxu0
      %v4719 = vpop.f32.mrb[0].mxu0
      %v4720 = vadd.f32 %v4623, %v4719
      %v4721 = vpop.f32.mrb[0].mxu0
      %4722 = vmatprep.mubr.bf16.mxu0 0
      %4723 = vmatmul.mubr.bf16.gmra.mrb[0].mxu0 %v1145
      %v4724 = vpop.f32.mrb[0].mxu0
      %v4725 = vadd.f32 %v4628, %v4724
      %v4726 = vpop.f32.mrb[0].mxu0
      %v4727 = vpop.f32.mrb[0].mxu0
      %v4728 = vadd.f32 %v4631, %v4727
      %v4729 = vpop.f32.mrb[0].mxu0
      %4730 = vmatprep.mubr.bf16.mxu0 0
      %4731 = vmatmul.mubr.bf16.gmra.mrb[0].mxu0 %v1146
      %v4732 = vpop.f32.mrb[0].mxu0
      %v4733 = vadd.f32 %v4636, %v4732
      %v4734 = vpop.f32.mrb[0].mxu0
      %v4735 = vpop.f32.mrb[0].mxu0
      %v4736 = vadd.f32 %v4639, %v4735
      %v4737 = vpop.f32.mrb[0].mxu0
      %4738 = vdwg.mxu0
      %v4739 = vld [vmem:[%s2040] sm:$0xf]
      %v4740 = vld [vmem:[%s2040 + $0x4] sm:$0xf]
      %v4741 = vld [vmem:[%s2040 + $0x8] sm:$0xf]
      %v4742 = vld [vmem:[%s2040 + $0xc] sm:$0xf]
      %v4743 = vld [vmem:[%s2040 + $0x10] sm:$0xf]
      %v4744 = vld [vmem:[%s2040 + $0x14] sm:$0xf]
      %v4745 = vld [vmem:[%s2040 + $0x18] sm:$0xf]
      %v4746 = vld [vmem:[%s2040 + $0x1c] sm:$0xf]
      %v4747 = vld [vmem:[%s2040 + $0x20] sm:$0xf]
      %v4748 = vld [vmem:[%s2040 + $0x24] sm:$0xf]
      %v4749 = vld [vmem:[%s2040 + $0x28] sm:$0xf]
      %v4750 = vld [vmem:[%s2040 + $0x2c] sm:$0xf]
      %v4751 = vld [vmem:[%s2040 + $0x30] sm:$0xf]
      %v4752 = vld [vmem:[%s2040 + $0x34] sm:$0xf]
      %v4753 = vld [vmem:[%s2040 + $0x38] sm:$0xf]
      %v4754 = vld [vmem:[%s2040 + $0x3c] sm:$0xf]
      %v4755 = vld [vmem:[%s2040 + $0x40] sm:$0xf]
      %v4756 = vld [vmem:[%s2040 + $0x44] sm:$0xf]
      %v4757 = vld [vmem:[%s2040 + $0x48] sm:$0xf]
      %v4758 = vld [vmem:[%s2040 + $0x4c] sm:$0xf]
      %v4759 = vld [vmem:[%s2040 + $0x50] sm:$0xf]
      %v4760 = vld [vmem:[%s2040 + $0x54] sm:$0xf]
      %v4761 = vld [vmem:[%s2040 + $0x58] sm:$0xf]
      %v4762 = vld [vmem:[%s2040 + $0x5c] sm:$0xf]
      %v4763 = vld [vmem:[%s2040 + $0x60] sm:$0xf]
      %v4764 = vld [vmem:[%s2040 + $0x64] sm:$0xf]
      %v4765 = vld [vmem:[%s2040 + $0x68] sm:$0xf]
      %v4766 = vld [vmem:[%s2040 + $0x6c] sm:$0xf]
      %v4767 = vld [vmem:[%s2040 + $0x70] sm:$0xf]
      %v4768 = vld [vmem:[%s2040 + $0x74] sm:$0xf]
      %v4769 = vld [vmem:[%s2040 + $0x78] sm:$0xf]
      %v4770 = vld [vmem:[%s2040 + $0x7c] sm:$0xf]
      %v4771 = vld [vmem:[%s2040 + $0x80] sm:$0xf]
      %v4772 = vld [vmem:[%s2040 + $0x84] sm:$0xf]
      %v4773 = vld [vmem:[%s2040 + $0x88] sm:$0xf]
      %v4774 = vld [vmem:[%s2040 + $0x8c] sm:$0xf]
      %v4775 = vld [vmem:[%s2040 + $0x90] sm:$0xf]
      %v4776 = vld [vmem:[%s2040 + $0x94] sm:$0xf]
      %v4777 = vld [vmem:[%s2040 + $0x98] sm:$0xf]
      %v4778 = vld [vmem:[%s2040 + $0x9c] sm:$0xf]
      %v4779 = vld [vmem:[%s2040 + $0xa0] sm:$0xf]
      %v4780 = vld [vmem:[%s2040 + $0xa4] sm:$0xf]
      %v4781 = vld [vmem:[%s2040 + $0xa8] sm:$0xf]
      %v4782 = vld [vmem:[%s2040 + $0xac] sm:$0xf]
      %v4783 = vld [vmem:[%s2040 + $0xb0] sm:$0xf]
      %v4784 = vld [vmem:[%s2040 + $0xb4] sm:$0xf]
      %v4785 = vld [vmem:[%s2040 + $0xb8] sm:$0xf]
      %v4786 = vld [vmem:[%s2040 + $0xbc] sm:$0xf]
      %v4835 = vunpack.c.l.b16 %v4739
      %v4836 = vunpack.c.l.b16 %v4740
      %v4837 = vunpack.c.l.b16 %v4741
      %v4838 = vunpack.c.l.b16 %v4742
      %v4839 = vunpack.c.l.b16 %v4743
      %v4840 = vunpack.c.l.b16 %v4744
      %v4841 = vunpack.c.l.b16 %v4745
      %v4842 = vunpack.c.l.b16 %v4746
      %v4843 = vunpack.c.l.b16 %v4747
      %v4844 = vunpack.c.l.b16 %v4748
      %v4845 = vunpack.c.l.b16 %v4749
      %v4846 = vunpack.c.l.b16 %v4750
      %v4847 = vunpack.c.l.b16 %v4751
      %v4848 = vunpack.c.l.b16 %v4752
      %v4849 = vunpack.c.l.b16 %v4753
      %v4850 = vunpack.c.l.b16 %v4754
      %v4851 = vunpack.c.l.b16 %v4755
      %v4852 = vunpack.c.l.b16 %v4756
      %v4853 = vunpack.c.l.b16 %v4757
      %v4854 = vunpack.c.l.b16 %v4758
      %v4855 = vunpack.c.l.b16 %v4759
      %v4856 = vunpack.c.l.b16 %v4760
      %v4857 = vunpack.c.l.b16 %v4761
      %v4858 = vunpack.c.l.b16 %v4762
      %v4859 = vunpack.c.l.b16 %v4763
      %v4860 = vunpack.c.l.b16 %v4764
      %v4861 = vunpack.c.l.b16 %v4765
      %v4862 = vunpack.c.l.b16 %v4766
      %v4863 = vunpack.c.l.b16 %v4767
      %v4864 = vunpack.c.l.b16 %v4768
      %v4865 = vunpack.c.l.b16 %v4769
      %v4866 = vunpack.c.l.b16 %v4770
      %v4867 = vunpack.c.l.b16 %v4771
      %v4868 = vunpack.c.l.b16 %v4772
      %v4869 = vunpack.c.l.b16 %v4773
      %v4870 = vunpack.c.l.b16 %v4774
      %v4871 = vunpack.c.l.b16 %v4775
      %v4872 = vunpack.c.l.b16 %v4776
      %v4873 = vunpack.c.l.b16 %v4777
      %v4874 = vunpack.c.l.b16 %v4778
      %v4875 = vunpack.c.l.b16 %v4779
      %v4876 = vunpack.c.l.b16 %v4780
      %v4877 = vunpack.c.l.b16 %v4781
      %v4878 = vunpack.c.l.b16 %v4782
      %v4879 = vunpack.c.l.b16 %v4783
      %v4880 = vunpack.c.l.b16 %v4784
      %v4881 = vunpack.c.l.b16 %v4785
      %v4882 = vunpack.c.l.b16 %v4786
      %v4883 = vpack.c.b16 %v4836, %v4835
      %v4884 = vpack.c.b16 %v4838, %v4837
      %v4885 = vpack.c.b16 %v4840, %v4839
      %v4886 = vpack.c.b16 %v4842, %v4841
      %v4887 = vpack.c.b16 %v4844, %v4843
      %v4888 = vpack.c.b16 %v4846, %v4845
      %v4889 = vpack.c.b16 %v4848, %v4847
      %v4890 = vpack.c.b16 %v4850, %v4849
      %v4891 = vpack.c.b16 %v4852, %v4851
      %v4892 = vpack.c.b16 %v4854, %v4853
      %v4893 = vpack.c.b16 %v4856, %v4855
      %v4894 = vpack.c.b16 %v4858, %v4857
      %v4895 = vpack.c.b16 %v4860, %v4859
      %v4896 = vpack.c.b16 %v4862, %v4861
      %v4897 = vpack.c.b16 %v4864, %v4863
      %v4898 = vpack.c.b16 %v4866, %v4865
      %v4899 = vpack.c.b16 %v4868, %v4867
      %v4900 = vpack.c.b16 %v4870, %v4869
      %v4901 = vpack.c.b16 %v4872, %v4871
      %v4902 = vpack.c.b16 %v4874, %v4873
      %v4903 = vpack.c.b16 %v4876, %v4875
      %v4904 = vpack.c.b16 %v4878, %v4877
      %v4905 = vpack.c.b16 %v4880, %v4879
      %v4906 = vpack.c.b16 %v4882, %v4881
      %4931 = vmatprep.subr.bf16.mxu0 0
      %4932 = vmatpush1.bf16.msra.mxu0 %v4883
      %4933 = vmatprep.subr.bf16.mxu0 0
      %4934 = vmatpush1.bf16.msra.mxu0 %v4884
      %4935 = vmatprep.subr.bf16.mxu0 0
      %4936 = vmatpush1.bf16.msra.mxu0 %v4885
      %4937 = vmatprep.subr.bf16.mxu0 0
      %4938 = vmatpush1.bf16.msra.mxu0 %v4886
      %4939 = vmatprep.subr.bf16.mxu0 0
      %4940 = vmatpush1.bf16.msra.mxu0 %v4887
      %4941 = vmatprep.subr.bf16.mxu0 0
      %4942 = vmatpush1.bf16.msra.mxu0 %v4888
      %4943 = vmatprep.subr.bf16.mxu0 0
      %4944 = vmatpush1.bf16.msra.mxu0 %v4889
      %4945 = vmatprep.subr.bf16.mxu0 0
      %4946 = vmatpush1.bf16.msra.mxu0 %v4890
      %4947 = vmatprep.subr.bf16.mxu0 0
      %4948 = vmatpush1.bf16.msra.mxu0 %v4891
      %4949 = vmatprep.subr.bf16.mxu0 0
      %4950 = vmatpush1.bf16.msra.mxu0 %v4892
      %4951 = vmatprep.subr.bf16.mxu0 0
      %4952 = vmatpush1.bf16.msra.mxu0 %v4893
      %4953 = vmatprep.subr.bf16.mxu0 0
      %4954 = vmatpush1.bf16.msra.mxu0 %v4894
      %4955 = vmatprep.subr.bf16.mxu0 0
      %4956 = vmatpush1.bf16.msra.mxu0 %v4895
      %4957 = vmatprep.subr.bf16.mxu0 0
      %4958 = vmatpush1.bf16.msra.mxu0 %v4896
      %4959 = vmatprep.subr.bf16.mxu0 0
      %4960 = vmatpush1.bf16.msra.mxu0 %v4897
      %4961 = vmatprep.subr.bf16.mxu0 0
      %4962 = vmatpush1.bf16.msra.mxu0 %v4898
      %4963 = vmatprep.mubr.bf16.mxu0 %v1132
      %4964 = vmatmul.mubr.bf16.gmra.mrb[0].mxu0 %v1124
      %v4965 = vpop.f32.mrb[0].mxu0
      %v4966 = vadd.f32 0.0, %v4965
      %v4967 = vpop.f32.mrb[0].mxu0
      %v4968 = vpop.f32.mrb[0].mxu0
      %v4969 = vadd.f32 0.0, %v4968
      %v4970 = vpop.f32.mrb[0].mxu0
      %4971 = vmatprep.mubr.bf16.mxu0 %v1133
      %4972 = vmatmul.mubr.bf16.gmra.mrb[0].mxu0 %v1125
      %v4973 = vpop.f32.mrb[0].mxu0
      %v4974 = vadd.f32 0.0, %v4973
      %v4975 = vpop.f32.mrb[0].mxu0
      %v4976 = vpop.f32.mrb[0].mxu0
      %v4977 = vadd.f32 0.0, %v4976
      %v4978 = vpop.f32.mrb[0].mxu0
      %4979 = vmatprep.mubr.bf16.mxu0 %v1134
      %4980 = vmatmul.mubr.bf16.gmra.mrb[0].mxu0 %v1126
      %v4981 = vpop.f32.mrb[0].mxu0
      %v4982 = vadd.f32 0.0, %v4981
      %v4983 = vpop.f32.mrb[0].mxu0
      %v4984 = vpop.f32.mrb[0].mxu0
      %v4985 = vadd.f32 0.0, %v4984
      %v4986 = vpop.f32.mrb[0].mxu0
      %4987 = vmatprep.mubr.bf16.mxu0 %v1135
      %4988 = vmatmul.mubr.bf16.gmra.mrb[0].mxu0 %v1127
      %v4989 = vpop.f32.mrb[0].mxu0
      %v4990 = vadd.f32 0.0, %v4989
      %v4991 = vpop.f32.mrb[0].mxu0
      %v4992 = vpop.f32.mrb[0].mxu0
      %v4993 = vadd.f32 0.0, %v4992
      %v4994 = vpop.f32.mrb[0].mxu0
      %4995 = vmatprep.mubr.bf16.mxu0 %v1136
      %4996 = vmatmul.mubr.bf16.gmra.mrb[0].mxu0 %v1128
      %v4997 = vpop.f32.mrb[0].mxu0
      %v4998 = vadd.f32 0.0, %v4997
      %v4999 = vpop.f32.mrb[0].mxu0
      %v5000 = vpop.f32.mrb[0].mxu0
      %v5001 = vadd.f32 0.0, %v5000
      %v5002 = vpop.f32.mrb[0].mxu0
      %5003 = vmatprep.mubr.bf16.mxu0 %v1137
      %5004 = vmatmul.mubr.bf16.gmra.mrb[0].mxu0 %v1129
      %v5005 = vpop.f32.mrb[0].mxu0
      %v5006 = vadd.f32 0.0, %v5005
      %v5007 = vpop.f32.mrb[0].mxu0
      %v5008 = vpop.f32.mrb[0].mxu0
      %v5009 = vadd.f32 0.0, %v5008
      %v5010 = vpop.f32.mrb[0].mxu0
      %5011 = vmatprep.mubr.bf16.mxu0 %v1138
      %5012 = vmatmul.mubr.bf16.gmra.mrb[0].mxu0 %v1130
      %v5013 = vpop.f32.mrb[0].mxu0
      %v5014 = vadd.f32 0.0, %v5013
      %v5015 = vpop.f32.mrb[0].mxu0
      %v5016 = vpop.f32.mrb[0].mxu0
      %v5017 = vadd.f32 0.0, %v5016
      %v5018 = vpop.f32.mrb[0].mxu0
      %5019 = vmatprep.mubr.bf16.mxu0 %v1226
      %5020 = vmatmul.mubr.bf16.gmra.mrb[0].mxu0 %v1225
      %v5021 = vpop.f32.mrb[0].mxu0
      %v5022 = vadd.f32 0.0, %v5021
      %v5023 = vpop.f32.mrb[0].mxu0
      %v5024 = vpop.f32.mrb[0].mxu0
      %v5025 = vadd.f32 0.0, %v5024
      %v5026 = vpop.f32.mrb[0].mxu0
      %5027 = vdwg.mxu0
      %5028 = vmatprep.subr.bf16.mxu0 0
      %5029 = vmatpush1.bf16.msra.mxu0 %v4899
      %5030 = vmatprep.subr.bf16.mxu0 0
      %5031 = vmatpush1.bf16.msra.mxu0 %v4900
      %5032 = vmatprep.subr.bf16.mxu0 0
      %5033 = vmatpush1.bf16.msra.mxu0 %v4901
      %5034 = vmatprep.subr.bf16.mxu0 0
      %5035 = vmatpush1.bf16.msra.mxu0 %v4902
      %5036 = vmatprep.subr.bf16.mxu0 0
      %5037 = vmatpush1.bf16.msra.mxu0 %v4903
      %5038 = vmatprep.subr.bf16.mxu0 0
      %5039 = vmatpush1.bf16.msra.mxu0 %v4904
      %5040 = vmatprep.subr.bf16.mxu0 0
      %5041 = vmatpush1.bf16.msra.mxu0 %v4905
      %5042 = vmatprep.subr.bf16.mxu0 0
      %5043 = vmatpush1.bf16.msra.mxu0 %v4906
      %5044 = vmatprep.subr.bf16.mxu0 0
      %5045 = vmatpush1.bf16.msra.mxu0 0
      %5046 = vmatprep.subr.bf16.mxu0 0
      %5047 = vmatpush1.bf16.msra.mxu0 0
      %5048 = vmatprep.subr.bf16.mxu0 0
      %5049 = vmatpush1.bf16.msra.mxu0 0
      %5050 = vmatprep.subr.bf16.mxu0 0
      %5051 = vmatpush1.bf16.msra.mxu0 0
      %5052 = vmatprep.subr.bf16.mxu0 0
      %5053 = vmatpush1.bf16.msra.mxu0 0
      %5054 = vmatprep.subr.bf16.mxu0 0
      %5055 = vmatpush1.bf16.msra.mxu0 0
      %5056 = vmatprep.subr.bf16.mxu0 0
      %5057 = vmatpush1.bf16.msra.mxu0 0
      %5058 = vmatprep.subr.bf16.mxu0 0
      %5059 = vmatpush1.bf16.msra.mxu0 0
      %5060 = vmatprep.mubr.bf16.mxu0 0
      %5061 = vmatmul.mubr.bf16.gmra.mrb[0].mxu0 %v1140
      %v5062 = vpop.f32.mrb[0].mxu0
      %v5063 = vadd.f32 %v4966, %v5062
      %v5064 = vpop.f32.mrb[0].mxu0
      %v5065 = vpop.f32.mrb[0].mxu0
      %v5066 = vadd.f32 %v4969, %v5065
      %v5067 = vpop.f32.mrb[0].mxu0
      %5068 = vmatprep.mubr.bf16.mxu0 0
      %5069 = vmatmul.mubr.bf16.gmra.mrb[0].mxu0 %v1141
      %v5070 = vpop.f32.mrb[0].mxu0
      %v5071 = vadd.f32 %v4974, %v5070
      %v5072 = vpop.f32.mrb[0].mxu0
      %v5073 = vpop.f32.mrb[0].mxu0
      %v5074 = vadd.f32 %v4977, %v5073
      %v5075 = vpop.f32.mrb[0].mxu0
      %5076 = vmatprep.mubr.bf16.mxu0 0
      %5077 = vmatmul.mubr.bf16.gmra.mrb[0].mxu0 %v1142
      %v5078 = vpop.f32.mrb[0].mxu0
      %v5079 = vadd.f32 %v4982, %v5078
      %v5080 = vpop.f32.mrb[0].mxu0
      %v5081 = vpop.f32.mrb[0].mxu0
      %v5082 = vadd.f32 %v4985, %v5081
      %v5083 = vpop.f32.mrb[0].mxu0
      %5084 = vmatprep.mubr.bf16.mxu0 0
      %5085 = vmatmul.mubr.bf16.gmra.mrb[0].mxu0 %v1143
      %v5086 = vpop.f32.mrb[0].mxu0
      %v5087 = vadd.f32 %v4990, %v5086
      %v5088 = vpop.f32.mrb[0].mxu0
      %v5089 = vpop.f32.mrb[0].mxu0
      %v5090 = vadd.f32 %v4993, %v5089
      %v5091 = vpop.f32.mrb[0].mxu0
      %5092 = vmatprep.mubr.bf16.mxu0 0
      %5093 = vmatmul.mubr.bf16.gmra.mrb[0].mxu0 %v1144
      %v5094 = vpop.f32.mrb[0].mxu0
      %v5095 = vadd.f32 %v4998, %v5094
      %v5096 = vpop.f32.mrb[0].mxu0
      %v5097 = vpop.f32.mrb[0].mxu0
      %v5098 = vadd.f32 %v5001, %v5097
      %v5099 = vpop.f32.mrb[0].mxu0
      %5100 = vmatprep.mubr.bf16.mxu0 0
      %5101 = vmatmul.mubr.bf16.gmra.mrb[0].mxu0 %v1145
      %v5102 = vpop.f32.mrb[0].mxu0
      %v5103 = vadd.f32 %v5006, %v5102
      %v5104 = vpop.f32.mrb[0].mxu0
      %v5105 = vpop.f32.mrb[0].mxu0
      %v5106 = vadd.f32 %v5009, %v5105
      %v5107 = vpop.f32.mrb[0].mxu0
      %5108 = vmatprep.mubr.bf16.mxu0 0
      %5109 = vmatmul.mubr.bf16.gmra.mrb[0].mxu0 %v1146
      %v5110 = vpop.f32.mrb[0].mxu0
      %v5111 = vadd.f32 %v5014, %v5110
      %v5112 = vpop.f32.mrb[0].mxu0
      %v5113 = vpop.f32.mrb[0].mxu0
      %v5114 = vadd.f32 %v5017, %v5113
      %v5115 = vpop.f32.mrb[0].mxu0
      %5116 = vmatprep.mubr.bf16.mxu0 0
      %5117 = vmatmul.mubr.bf16.gmra.mrb[0].mxu0 %v1227
      %v5118 = vpop.f32.mrb[0].mxu0
      %v5119 = vadd.f32 %v5022, %v5118
      %v5120 = vpop.f32.mrb[0].mxu0
      %v5121 = vpop.f32.mrb[0].mxu0
      %v5122 = vadd.f32 %v5025, %v5121
      %v5123 = vpop.f32.mrb[0].mxu0
      %5124 = vdwg.mxu0
      %v5125 = vadd.f32 %v4677, %v5063
      %v5126 = vadd.f32 %v4680, %v5066
      %v5127 = vadd.f32 %v4685, %v5071
      %v5128 = vadd.f32 %v4688, %v5074
      %v5129 = vadd.f32 %v4693, %v5079
      %v5130 = vadd.f32 %v4696, %v5082
      %v5131 = vadd.f32 %v4701, %v5087
      %v5132 = vadd.f32 %v4704, %v5090
      %v5133 = vadd.f32 %v4709, %v5095
      %v5134 = vadd.f32 %v4712, %v5098
      %v5135 = vadd.f32 %v4717, %v5103
      %v5136 = vadd.f32 %v4720, %v5106
      %v5137 = vadd.f32 %v4725, %v5111
      %v5138 = vadd.f32 %v4728, %v5114
      %v5139 = vadd.f32 %v4733, %v5119
      %v5140 = vadd.f32 %v4736, %v5122
      %v5141 = vadd.f32 %v5125, %v1251
      %v5142 = vadd.f32 %v5126, %v1252
      %v5143 = vadd.f32 %v5127, %v1253
      %v5144 = vadd.f32 %v5128, %v1254
      %v5145 = vadd.f32 %v5129, %v1255
      %v5146 = vadd.f32 %v5130, %v1256
      %v5147 = vadd.f32 %v5131, %v1257
      %v5148 = vadd.f32 %v5132, %v1258
      %v5149 = vadd.f32 %v5133, %v1259
      %v5150 = vadd.f32 %v5134, %v1260
      %v5151 = vadd.f32 %v5135, %v1261
      %v5152 = vadd.f32 %v5136, %v1262
      %v5153 = vadd.f32 %v5137, %v1263
      %v5154 = vadd.f32 %v5138, %v1264
      %v5155 = vadd.f32 %v5139, %v1265
      %v5156 = vadd.f32 %v5140, %v1266
      %v5157 = vadd.f32 %v5141, %v5142
      %v5158 = vadd.f32 %v5157, %v5143
      %v5159 = vadd.f32 %v5158, %v5144
      %v5160 = vadd.f32 %v5159, %v5145
      %v5161 = vadd.f32 %v5160, %v5146
      %v5162 = vadd.f32 %v5161, %v5147
      %v5163 = vadd.f32 %v5162, %v5148
      %v5164 = vadd.f32 %v5163, %v5149
      %v5165 = vadd.f32 %v5164, %v5150
      %v5166 = vadd.f32 %v5165, %v5151
      %v5167 = vadd.f32 %v5166, %v5152
      %v5168 = vadd.f32 %v5167, %v5153
      %v5169 = vadd.f32 %v5168, %v5154
      %v5170 = vadd.f32 %v5169, %v5155
      %v5171 = vadd.f32 %v5170, %v5156
      %v5172 = vrot.slane %v5171, 4
      %v5173 = vadd.f32 %v5171, %v5172
      %v5174 = vrot.slane %v5173, 2
      %v5175 = vadd.f32 %v5173, %v5174
      %v5176 = vrot.slane %v5175, 1
      %v5177 = vadd.f32 %v5175, %v5176
      %v5178 = vadd.f32 %v3832, %v5177
      %v5179 = vmul.f32 %v5141, %v5141
      %v5180 = vmul.f32 %v5142, %v5142
      %v5181 = vmul.f32 %v5143, %v5143
      %v5182 = vmul.f32 %v5144, %v5144
      %v5183 = vmul.f32 %v5145, %v5145
      %v5184 = vmul.f32 %v5146, %v5146
      %v5185 = vmul.f32 %v5147, %v5147
      %v5186 = vmul.f32 %v5148, %v5148
      %v5187 = vmul.f32 %v5149, %v5149
      %v5188 = vmul.f32 %v5150, %v5150
      %v5189 = vmul.f32 %v5151, %v5151
      %v5190 = vmul.f32 %v5152, %v5152
      %v5191 = vmul.f32 %v5153, %v5153
      %v5192 = vmul.f32 %v5154, %v5154
      %v5193 = vmul.f32 %v5155, %v5155
      %v5194 = vmul.f32 %v5156, %v5156
      %v5195 = vadd.f32 %v5179, %v5180
      %v5196 = vadd.f32 %v5195, %v5181
      %v5197 = vadd.f32 %v5196, %v5182
      %v5198 = vadd.f32 %v5197, %v5183
      %v5199 = vadd.f32 %v5198, %v5184
      %v5200 = vadd.f32 %v5199, %v5185
      %v5201 = vadd.f32 %v5200, %v5186
      %v5202 = vadd.f32 %v5201, %v5187
      %v5203 = vadd.f32 %v5202, %v5188
      %v5204 = vadd.f32 %v5203, %v5189
      %v5205 = vadd.f32 %v5204, %v5190
      %v5206 = vadd.f32 %v5205, %v5191
      %v5207 = vadd.f32 %v5206, %v5192
      %v5208 = vadd.f32 %v5207, %v5193
      %v5209 = vadd.f32 %v5208, %v5194
      %v5210 = vrot.slane %v5209, 4
      %v5211 = vadd.f32 %v5209, %v5210
      %v5212 = vrot.slane %v5211, 2
      %v5213 = vadd.f32 %v5211, %v5212
      %v5214 = vrot.slane %v5213, 1
      %v5215 = vadd.f32 %v5213, %v5214
      %v5216 = vadd.f32 %v3870, %v5215
      %v5217 = vadd.f32 %v5141, %v2523
      %v5218 = vadd.f32 %v5142, %v2523
      %v5219 = vadd.f32 %v5143, %v2523
      %v5220 = vadd.f32 %v5144, %v2523
      %v5221 = vadd.f32 %v5145, %v2523
      %v5222 = vadd.f32 %v5146, %v2523
      %v5223 = vadd.f32 %v5147, %v2523
      %v5224 = vadd.f32 %v5148, %v2523
      %v5225 = vadd.f32 %v5149, %v2523
      %v5226 = vadd.f32 %v5150, %v2523
      %v5227 = vadd.f32 %v5151, %v2523
      %v5228 = vadd.f32 %v5152, %v2523
      %v5229 = vadd.f32 %v5153, %v2523
      %v5230 = vadd.f32 %v5154, %v2523
      %v5231 = vadd.f32 %v5155, %v2523
      %v5232 = vadd.f32 %v5156, %v2523
      %v5233 = vpack.c.bf16 %v5218, %v5217
      %v5234 = vpack.c.bf16 %v5220, %v5219
      %v5235 = vpack.c.bf16 %v5222, %v5221
      %v5236 = vpack.c.bf16 %v5224, %v5223
      %v5237 = vpack.c.bf16 %v5226, %v5225
      %v5238 = vpack.c.bf16 %v5228, %v5227
      %v5239 = vpack.c.bf16 %v5230, %v5229
      %v5240 = vpack.c.bf16 %v5232, %v5231
      %v5249 = vunpack.c.l.b16 %v5233
      %v5250 = vunpack.c.h.b16 %v5233
      %v5251 = vunpack.c.l.b16 %v5234
      %v5252 = vunpack.c.h.b16 %v5234
      %v5253 = vunpack.c.l.b16 %v5235
      %v5254 = vunpack.c.h.b16 %v5235
      %v5255 = vunpack.c.l.b16 %v5236
      %v5256 = vunpack.c.h.b16 %v5236
      %v5257 = vunpack.c.l.b16 %v5237
      %v5258 = vunpack.c.h.b16 %v5237
      %v5259 = vunpack.c.l.b16 %v5238
      %v5260 = vunpack.c.h.b16 %v5238
      %v5261 = vunpack.c.l.b16 %v5239
      %v5262 = vunpack.c.h.b16 %v5239
      %v5263 = vunpack.c.l.b16 %v5240
      %v5264 = vunpack.c.h.b16 %v5240
      %v5265 = vpack.c.b16 %v5249, %v5249
      %v5266 = vpack.c.b16 %v5250, %v5250
      %v5267 = vpack.c.b16 %v5251, %v5251
      %v5268 = vpack.c.b16 %v5252, %v5252
      %v5269 = vpack.c.b16 %v5253, %v5253
      %v5270 = vpack.c.b16 %v5254, %v5254
      %v5271 = vpack.c.b16 %v5255, %v5255
      %v5272 = vpack.c.b16 %v5256, %v5256
      %v5273 = vpack.c.b16 %v5257, %v5257
      %v5274 = vpack.c.b16 %v5258, %v5258
      %v5275 = vpack.c.b16 %v5259, %v5259
      %v5276 = vpack.c.b16 %v5260, %v5260
      %v5277 = vpack.c.b16 %v5261, %v5261
      %v5278 = vpack.c.b16 %v5262, %v5262
      %v5279 = vpack.c.b16 %v5263, %v5263
      %v5280 = vpack.c.b16 %v5264, %v5264
      %s5297 = scalar_lea.vmem %s554, 16
      %5298 = vst [vmem:[%s5297] sm:$0xf] %v5265
      %5299 = vst [vmem:[%s5297 + $0x8] sm:$0xf] %v5266
      %5300 = vst [vmem:[%s5297 + $0x20] sm:$0xf] %v5267
      %5301 = vst [vmem:[%s5297 + $0x28] sm:$0xf] %v5268
      %5302 = vst [vmem:[%s5297 + $0x40] sm:$0xf] %v5269
      %5303 = vst [vmem:[%s5297 + $0x48] sm:$0xf] %v5270
      %5304 = vst [vmem:[%s5297 + $0x60] sm:$0xf] %v5271
      %5305 = vst [vmem:[%s5297 + $0x68] sm:$0xf] %v5272
      %5306 = vst [vmem:[%s5297 + $0x80] sm:$0xf] %v5273
      %5307 = vst [vmem:[%s5297 + $0x88] sm:$0xf] %v5274
      %5308 = vst [vmem:[%s5297 + $0xa0] sm:$0xf] %v5275
      %5309 = vst [vmem:[%s5297 + $0xa8] sm:$0xf] %v5276
      %5310 = vst [vmem:[%s5297 + $0xc0] sm:$0xf] %v5277
      %5311 = vst [vmem:[%s5297 + $0xc8] sm:$0xf] %v5278
      %5312 = vst [vmem:[%s5297 + $0xe0] sm:$0xf] %v5279
      %5313 = vst [vmem:[%s5297 + $0xe8] sm:$0xf] %v5280
      %v5314 = vld [vmem:[%s6] sm:$0xf]
      %v5315 = vld [vmem:[%s6 + $0x4] sm:$0xf]
      %v5316 = vld [vmem:[%s6 + $0x8] sm:$0xf]
      %v5317 = vld [vmem:[%s6 + $0xc] sm:$0xf]
      %v5318 = vld [vmem:[%s6 + $0x10] sm:$0xf]
      %v5319 = vld [vmem:[%s6 + $0x14] sm:$0xf]
      %v5320 = vld [vmem:[%s6 + $0x18] sm:$0xf]
      %v5321 = vld [vmem:[%s6 + $0x1c] sm:$0xf]
      %v5322 = vld [vmem:[%s6 + $0x20] sm:$0xf]
      %v5323 = vld [vmem:[%s6 + $0x24] sm:$0xf]
      %v5324 = vld [vmem:[%s6 + $0x28] sm:$0xf]
      %v5325 = vld [vmem:[%s6 + $0x2c] sm:$0xf]
      %v5326 = vld [vmem:[%s6 + $0x30] sm:$0xf]
      %v5327 = vld [vmem:[%s6 + $0x34] sm:$0xf]
      %v5328 = vld [vmem:[%s6 + $0x38] sm:$0xf]
      %v5329 = vld [vmem:[%s6 + $0x3c] sm:$0xf]
      %v5330 = vld [vmem:[%s6 + $0x40] sm:$0xf]
      %v5331 = vld [vmem:[%s6 + $0x44] sm:$0xf]
      %v5332 = vld [vmem:[%s6 + $0x48] sm:$0xf]
      %v5333 = vld [vmem:[%s6 + $0x4c] sm:$0xf]
      %v5334 = vld [vmem:[%s6 + $0x50] sm:$0xf]
      %v5335 = vld [vmem:[%s6 + $0x54] sm:$0xf]
      %v5336 = vld [vmem:[%s6 + $0x58] sm:$0xf]
      %v5337 = vld [vmem:[%s6 + $0x5c] sm:$0xf]
      %v5338 = vld [vmem:[%s6 + $0x60] sm:$0xf]
      %v5339 = vld [vmem:[%s6 + $0x64] sm:$0xf]
      %v5340 = vld [vmem:[%s6 + $0x68] sm:$0xf]
      %v5341 = vld [vmem:[%s6 + $0x6c] sm:$0xf]
      %v5342 = vld [vmem:[%s6 + $0x70] sm:$0xf]
      %v5343 = vld [vmem:[%s6 + $0x74] sm:$0xf]
      %v5344 = vld [vmem:[%s6 + $0x78] sm:$0xf]
      %v5345 = vld [vmem:[%s6 + $0x7c] sm:$0xf]
      %v5346 = vld [vmem:[%s6 + $0x80] sm:$0xf]
      %v5347 = vld [vmem:[%s6 + $0x84] sm:$0xf]
      %v5348 = vld [vmem:[%s6 + $0x88] sm:$0xf]
      %v5349 = vld [vmem:[%s6 + $0x8c] sm:$0xf]
      %v5350 = vld [vmem:[%s6 + $0x90] sm:$0xf]
      %v5351 = vld [vmem:[%s6 + $0x94] sm:$0xf]
      %v5352 = vld [vmem:[%s6 + $0x98] sm:$0xf]
      %v5353 = vld [vmem:[%s6 + $0x9c] sm:$0xf]
      %v5354 = vld [vmem:[%s6 + $0xa0] sm:$0xf]
      %v5355 = vld [vmem:[%s6 + $0xa4] sm:$0xf]
      %v5356 = vld [vmem:[%s6 + $0xa8] sm:$0xf]
      %v5357 = vld [vmem:[%s6 + $0xac] sm:$0xf]
      %v5358 = vld [vmem:[%s6 + $0xb0] sm:$0xf]
      %v5359 = vld [vmem:[%s6 + $0xb4] sm:$0xf]
      %v5360 = vld [vmem:[%s6 + $0xb8] sm:$0xf]
      %v5361 = vld [vmem:[%s6 + $0xbc] sm:$0xf]
      %v5362 = vld [vmem:[%s1315] sm:$0xf]
      %v5363 = vld [vmem:[%s1315 + $0x4] sm:$0xf]
      %v5364 = vld [vmem:[%s1315 + $0x8] sm:$0xf]
      %v5365 = vld [vmem:[%s1315 + $0xc] sm:$0xf]
      %v5366 = vld [vmem:[%s1315 + $0x10] sm:$0xf]
      %v5367 = vld [vmem:[%s1315 + $0x14] sm:$0xf]
      %v5368 = vld [vmem:[%s1315 + $0x18] sm:$0xf]
      %v5369 = vld [vmem:[%s1315 + $0x1c] sm:$0xf]
      %v5370 = vld [vmem:[%s1315 + $0x20] sm:$0xf]
      %v5371 = vld [vmem:[%s1315 + $0x24] sm:$0xf]
      %v5372 = vld [vmem:[%s1315 + $0x28] sm:$0xf]
      %v5373 = vld [vmem:[%s1315 + $0x2c] sm:$0xf]
      %v5374 = vld [vmem:[%s1315 + $0x30] sm:$0xf]
      %v5375 = vld [vmem:[%s1315 + $0x34] sm:$0xf]
      %v5376 = vld [vmem:[%s1315 + $0x38] sm:$0xf]
      %v5377 = vld [vmem:[%s1315 + $0x3c] sm:$0xf]
      %v5378 = vld [vmem:[%s1315 + $0x40] sm:$0xf]
      %v5379 = vld [vmem:[%s1315 + $0x44] sm:$0xf]
      %v5380 = vld [vmem:[%s1315 + $0x48] sm:$0xf]
      %v5381 = vld [vmem:[%s1315 + $0x4c] sm:$0xf]
      %v5382 = vld [vmem:[%s1315 + $0x50] sm:$0xf]
      %v5383 = vld [vmem:[%s1315 + $0x54] sm:$0xf]
      %v5384 = vld [vmem:[%s1315 + $0x58] sm:$0xf]
      %v5385 = vld [vmem:[%s1315 + $0x5c] sm:$0xf]
      %v5386 = vld [vmem:[%s1315 + $0x60] sm:$0xf]
      %v5387 = vld [vmem:[%s1315 + $0x64] sm:$0xf]
      %v5388 = vld [vmem:[%s1315 + $0x68] sm:$0xf]
      %v5389 = vld [vmem:[%s1315 + $0x6c] sm:$0xf]
      %v5390 = vld [vmem:[%s1315 + $0x70] sm:$0xf]
      %v5391 = vld [vmem:[%s1315 + $0x74] sm:$0xf]
      %v5392 = vld [vmem:[%s1315 + $0x78] sm:$0xf]
      %v5393 = vld [vmem:[%s1315 + $0x7c] sm:$0xf]
      %v5394 = vld [vmem:[%s1315 + $0x80] sm:$0xf]
      %v5395 = vld [vmem:[%s1315 + $0x84] sm:$0xf]
      %v5396 = vld [vmem:[%s1315 + $0x88] sm:$0xf]
      %v5397 = vld [vmem:[%s1315 + $0x8c] sm:$0xf]
      %v5398 = vld [vmem:[%s1315 + $0x90] sm:$0xf]
      %v5399 = vld [vmem:[%s1315 + $0x94] sm:$0xf]
      %v5400 = vld [vmem:[%s1315 + $0x98] sm:$0xf]
      %v5401 = vld [vmem:[%s1315 + $0x9c] sm:$0xf]
      %v5402 = vld [vmem:[%s1315 + $0xa0] sm:$0xf]
      %v5403 = vld [vmem:[%s1315 + $0xa4] sm:$0xf]
      %v5404 = vld [vmem:[%s1315 + $0xa8] sm:$0xf]
      %v5405 = vld [vmem:[%s1315 + $0xac] sm:$0xf]
      %v5406 = vld [vmem:[%s1315 + $0xb0] sm:$0xf]
      %v5407 = vld [vmem:[%s1315 + $0xb4] sm:$0xf]
      %v5408 = vld [vmem:[%s1315 + $0xb8] sm:$0xf]
      %v5409 = vld [vmem:[%s1315 + $0xbc] sm:$0xf]
      %v5458 = vunpack.c.l.b16 %v5362
      %v5459 = vunpack.c.l.b16 %v5363
      %v5460 = vunpack.c.l.b16 %v5364
      %v5461 = vunpack.c.l.b16 %v5365
      %v5462 = vunpack.c.l.b16 %v5366
      %v5463 = vunpack.c.l.b16 %v5367
      %v5464 = vunpack.c.l.b16 %v5368
      %v5465 = vunpack.c.l.b16 %v5369
      %v5466 = vunpack.c.l.b16 %v5370
      %v5467 = vunpack.c.l.b16 %v5371
      %v5468 = vunpack.c.l.b16 %v5372
      %v5469 = vunpack.c.l.b16 %v5373
      %v5470 = vunpack.c.l.b16 %v5374
      %v5471 = vunpack.c.l.b16 %v5375
      %v5472 = vunpack.c.l.b16 %v5376
      %v5473 = vunpack.c.l.b16 %v5377
      %v5474 = vunpack.c.l.b16 %v5378
      %v5475 = vunpack.c.l.b16 %v5379
      %v5476 = vunpack.c.l.b16 %v5380
      %v5477 = vunpack.c.l.b16 %v5381
      %v5478 = vunpack.c.l.b16 %v5382
      %v5479 = vunpack.c.l.b16 %v5383
      %v5480 = vunpack.c.l.b16 %v5384
      %v5481 = vunpack.c.l.b16 %v5385
      %v5482 = vunpack.c.l.b16 %v5386
      %v5483 = vunpack.c.l.b16 %v5387
      %v5484 = vunpack.c.l.b16 %v5388
      %v5485 = vunpack.c.l.b16 %v5389
      %v5486 = vunpack.c.l.b16 %v5390
      %v5487 = vunpack.c.l.b16 %v5391
      %v5488 = vunpack.c.l.b16 %v5392
      %v5489 = vunpack.c.l.b16 %v5393
      %v5490 = vunpack.c.l.b16 %v5394
      %v5491 = vunpack.c.l.b16 %v5395
      %v5492 = vunpack.c.l.b16 %v5396
      %v5493 = vunpack.c.l.b16 %v5397
      %v5494 = vunpack.c.l.b16 %v5398
      %v5495 = vunpack.c.l.b16 %v5399
      %v5496 = vunpack.c.l.b16 %v5400
      %v5497 = vunpack.c.l.b16 %v5401
      %v5498 = vunpack.c.l.b16 %v5402
      %v5499 = vunpack.c.l.b16 %v5403
      %v5500 = vunpack.c.l.b16 %v5404
      %v5501 = vunpack.c.l.b16 %v5405
      %v5502 = vunpack.c.l.b16 %v5406
      %v5503 = vunpack.c.l.b16 %v5407
      %v5504 = vunpack.c.l.b16 %v5408
      %v5505 = vunpack.c.l.b16 %v5409
      %v5506 = vpack.c.b16 %v5459, %v5458
      %v5507 = vpack.c.b16 %v5461, %v5460
      %v5508 = vpack.c.b16 %v5463, %v5462
      %v5509 = vpack.c.b16 %v5465, %v5464
      %v5510 = vpack.c.b16 %v5467, %v5466
      %v5511 = vpack.c.b16 %v5469, %v5468
      %v5512 = vpack.c.b16 %v5471, %v5470
      %v5513 = vpack.c.b16 %v5473, %v5472
      %v5514 = vpack.c.b16 %v5475, %v5474
      %v5515 = vpack.c.b16 %v5477, %v5476
      %v5516 = vpack.c.b16 %v5479, %v5478
      %v5517 = vpack.c.b16 %v5481, %v5480
      %v5518 = vpack.c.b16 %v5483, %v5482
      %v5519 = vpack.c.b16 %v5485, %v5484
      %v5520 = vpack.c.b16 %v5487, %v5486
      %v5521 = vpack.c.b16 %v5489, %v5488
      %v5522 = vpack.c.b16 %v5491, %v5490
      %v5523 = vpack.c.b16 %v5493, %v5492
      %v5524 = vpack.c.b16 %v5495, %v5494
      %v5525 = vpack.c.b16 %v5497, %v5496
      %v5526 = vpack.c.b16 %v5499, %v5498
      %v5527 = vpack.c.b16 %v5501, %v5500
      %v5528 = vpack.c.b16 %v5503, %v5502
      %v5529 = vpack.c.b16 %v5505, %v5504
      %5554 = vmatprep.subr.bf16.mxu0 0
      %5555 = vmatpush1.bf16.msra.mxu0 %v5506
      %5556 = vmatprep.subr.bf16.mxu0 0
      %5557 = vmatpush1.bf16.msra.mxu0 %v5507
      %5558 = vmatprep.subr.bf16.mxu0 0
      %5559 = vmatpush1.bf16.msra.mxu0 %v5508
      %5560 = vmatprep.subr.bf16.mxu0 0
      %5561 = vmatpush1.bf16.msra.mxu0 %v5509
      %5562 = vmatprep.subr.bf16.mxu0 0
      %5563 = vmatpush1.bf16.msra.mxu0 %v5510
      %5564 = vmatprep.subr.bf16.mxu0 0
      %5565 = vmatpush1.bf16.msra.mxu0 %v5511
      %5566 = vmatprep.subr.bf16.mxu0 0
      %5567 = vmatpush1.bf16.msra.mxu0 %v5512
      %5568 = vmatprep.subr.bf16.mxu0 0
      %5569 = vmatpush1.bf16.msra.mxu0 %v5513
      %5570 = vmatprep.subr.bf16.mxu0 0
      %5571 = vmatpush1.bf16.msra.mxu0 %v5514
      %5572 = vmatprep.subr.bf16.mxu0 0
      %5573 = vmatpush1.bf16.msra.mxu0 %v5515
      %5574 = vmatprep.subr.bf16.mxu0 0
      %5575 = vmatpush1.bf16.msra.mxu0 %v5516
      %5576 = vmatprep.subr.bf16.mxu0 0
      %5577 = vmatpush1.bf16.msra.mxu0 %v5517
      %5578 = vmatprep.subr.bf16.mxu0 0
      %5579 = vmatpush1.bf16.msra.mxu0 %v5518
      %5580 = vmatprep.subr.bf16.mxu0 0
      %5581 = vmatpush1.bf16.msra.mxu0 %v5519
      %5582 = vmatprep.subr.bf16.mxu0 0
      %5583 = vmatpush1.bf16.msra.mxu0 %v5520
      %5584 = vmatprep.subr.bf16.mxu0 0
      %5585 = vmatpush1.bf16.msra.mxu0 %v5521
      %5586 = vmatprep.mubr.bf16.mxu0 %v1007
      %5587 = vmatmul.mubr.bf16.gmra.mrb[0].mxu0 %v999
      %v5588 = vpop.f32.mrb[0].mxu0
      %v5589 = vadd.f32 0.0, %v5588
      %v5590 = vpop.f32.mrb[0].mxu0
      %v5591 = vpop.f32.mrb[0].mxu0
      %v5592 = vadd.f32 0.0, %v5591
      %v5593 = vpop.f32.mrb[0].mxu0
      %5594 = vmatprep.mubr.bf16.mxu0 %v1008
      %5595 = vmatmul.mubr.bf16.gmra.mrb[0].mxu0 %v1000
      %v5596 = vpop.f32.mrb[0].mxu0
      %v5597 = vadd.f32 0.0, %v5596
      %v5598 = vpop.f32.mrb[0].mxu0
      %v5599 = vpop.f32.mrb[0].mxu0
      %v5600 = vadd.f32 0.0, %v5599
      %v5601 = vpop.f32.mrb[0].mxu0
      %5602 = vmatprep.mubr.bf16.mxu0 %v1009
      %5603 = vmatmul.mubr.bf16.gmra.mrb[0].mxu0 %v1001
      %v5604 = vpop.f32.mrb[0].mxu0
      %v5605 = vadd.f32 0.0, %v5604
      %v5606 = vpop.f32.mrb[0].mxu0
      %v5607 = vpop.f32.mrb[0].mxu0
      %v5608 = vadd.f32 0.0, %v5607
      %v5609 = vpop.f32.mrb[0].mxu0
      %5610 = vmatprep.mubr.bf16.mxu0 %v1010
      %5611 = vmatmul.mubr.bf16.gmra.mrb[0].mxu0 %v1002
      %v5612 = vpop.f32.mrb[0].mxu0
      %v5613 = vadd.f32 0.0, %v5612
      %v5614 = vpop.f32.mrb[0].mxu0
      %v5615 = vpop.f32.mrb[0].mxu0
      %v5616 = vadd.f32 0.0, %v5615
      %v5617 = vpop.f32.mrb[0].mxu0
      %5618 = vmatprep.mubr.bf16.mxu0 %v1011
      %5619 = vmatmul.mubr.bf16.gmra.mrb[0].mxu0 %v1003
      %v5620 = vpop.f32.mrb[0].mxu0
      %v5621 = vadd.f32 0.0, %v5620
      %v5622 = vpop.f32.mrb[0].mxu0
      %v5623 = vpop.f32.mrb[0].mxu0
      %v5624 = vadd.f32 0.0, %v5623
      %v5625 = vpop.f32.mrb[0].mxu0
      %5626 = vmatprep.mubr.bf16.mxu0 %v1012
      %5627 = vmatmul.mubr.bf16.gmra.mrb[0].mxu0 %v1004
      %v5628 = vpop.f32.mrb[0].mxu0
      %v5629 = vadd.f32 0.0, %v5628
      %v5630 = vpop.f32.mrb[0].mxu0
      %v5631 = vpop.f32.mrb[0].mxu0
      %v5632 = vadd.f32 0.0, %v5631
      %v5633 = vpop.f32.mrb[0].mxu0
      %5634 = vmatprep.mubr.bf16.mxu0 %v1013
      %5635 = vmatmul.mubr.bf16.gmra.mrb[0].mxu0 %v1005
      %v5636 = vpop.f32.mrb[0].mxu0
      %v5637 = vadd.f32 0.0, %v5636
      %v5638 = vpop.f32.mrb[0].mxu0
      %v5639 = vpop.f32.mrb[0].mxu0
      %v5640 = vadd.f32 0.0, %v5639
      %v5641 = vpop.f32.mrb[0].mxu0
      %5642 = vmatprep.mubr.bf16.mxu0 %v1211
      %5643 = vmatmul.mubr.bf16.gmra.mrb[0].mxu0 %v1210
      %v5644 = vpop.f32.mrb[0].mxu0
      %v5645 = vadd.f32 0.0, %v5644
      %v5646 = vpop.f32.mrb[0].mxu0
      %v5647 = vpop.f32.mrb[0].mxu0
      %v5648 = vadd.f32 0.0, %v5647
      %v5649 = vpop.f32.mrb[0].mxu0
      %5650 = vdwg.mxu0
      %5651 = vmatprep.subr.bf16.mxu0 0
      %5652 = vmatpush1.bf16.msra.mxu0 %v5522
      %5653 = vmatprep.subr.bf16.mxu0 0
      %5654 = vmatpush1.bf16.msra.mxu0 %v5523
      %5655 = vmatprep.subr.bf16.mxu0 0
      %5656 = vmatpush1.bf16.msra.mxu0 %v5524
      %5657 = vmatprep.subr.bf16.mxu0 0
      %5658 = vmatpush1.bf16.msra.mxu0 %v5525
      %5659 = vmatprep.subr.bf16.mxu0 0
      %5660 = vmatpush1.bf16.msra.mxu0 %v5526
      %5661 = vmatprep.subr.bf16.mxu0 0
      %5662 = vmatpush1.bf16.msra.mxu0 %v5527
      %5663 = vmatprep.subr.bf16.mxu0 0
      %5664 = vmatpush1.bf16.msra.mxu0 %v5528
      %5665 = vmatprep.subr.bf16.mxu0 0
      %5666 = vmatpush1.bf16.msra.mxu0 %v5529
      %5667 = vmatprep.subr.bf16.mxu0 0
      %5668 = vmatpush1.bf16.msra.mxu0 0
      %5669 = vmatprep.subr.bf16.mxu0 0
      %5670 = vmatpush1.bf16.msra.mxu0 0
      %5671 = vmatprep.subr.bf16.mxu0 0
      %5672 = vmatpush1.bf16.msra.mxu0 0
      %5673 = vmatprep.subr.bf16.mxu0 0
      %5674 = vmatpush1.bf16.msra.mxu0 0
      %5675 = vmatprep.subr.bf16.mxu0 0
      %5676 = vmatpush1.bf16.msra.mxu0 0
      %5677 = vmatprep.subr.bf16.mxu0 0
      %5678 = vmatpush1.bf16.msra.mxu0 0
      %5679 = vmatprep.subr.bf16.mxu0 0
      %5680 = vmatpush1.bf16.msra.mxu0 0
      %5681 = vmatprep.subr.bf16.mxu0 0
      %5682 = vmatpush1.bf16.msra.mxu0 0
      %5683 = vmatprep.mubr.bf16.mxu0 0
      %5684 = vmatmul.mubr.bf16.gmra.mrb[0].mxu0 %v1068
      %v5685 = vpop.f32.mrb[0].mxu0
      %v5686 = vadd.f32 %v5589, %v5685
      %v5687 = vpop.f32.mrb[0].mxu0
      %v5688 = vpop.f32.mrb[0].mxu0
      %v5689 = vadd.f32 %v5592, %v5688
      %v5690 = vpop.f32.mrb[0].mxu0
      %5691 = vmatprep.mubr.bf16.mxu0 0
      %5692 = vmatmul.mubr.bf16.gmra.mrb[0].mxu0 %v1069
      %v5693 = vpop.f32.mrb[0].mxu0
      %v5694 = vadd.f32 %v5597, %v5693
      %v5695 = vpop.f32.mrb[0].mxu0
      %v5696 = vpop.f32.mrb[0].mxu0
      %v5697 = vadd.f32 %v5600, %v5696
      %v5698 = vpop.f32.mrb[0].mxu0
      %5699 = vmatprep.mubr.bf16.mxu0 0
      %5700 = vmatmul.mubr.bf16.gmra.mrb[0].mxu0 %v1070
      %v5701 = vpop.f32.mrb[0].mxu0
      %v5702 = vadd.f32 %v5605, %v5701
      %v5703 = vpop.f32.mrb[0].mxu0
      %v5704 = vpop.f32.mrb[0].mxu0
      %v5705 = vadd.f32 %v5608, %v5704
      %v5706 = vpop.f32.mrb[0].mxu0
      %5707 = vmatprep.mubr.bf16.mxu0 0
      %5708 = vmatmul.mubr.bf16.gmra.mrb[0].mxu0 %v1071
      %v5709 = vpop.f32.mrb[0].mxu0
      %v5710 = vadd.f32 %v5613, %v5709
      %v5711 = vpop.f32.mrb[0].mxu0
      %v5712 = vpop.f32.mrb[0].mxu0
      %v5713 = vadd.f32 %v5616, %v5712
      %v5714 = vpop.f32.mrb[0].mxu0
      %5715 = vmatprep.mubr.bf16.mxu0 0
      %5716 = vmatmul.mubr.bf16.gmra.mrb[0].mxu0 %v1072
      %v5717 = vpop.f32.mrb[0].mxu0
      %v5718 = vadd.f32 %v5621, %v5717
      %v5719 = vpop.f32.mrb[0].mxu0
      %v5720 = vpop.f32.mrb[0].mxu0
      %v5721 = vadd.f32 %v5624, %v5720
      %v5722 = vpop.f32.mrb[0].mxu0
      %5723 = vmatprep.mubr.bf16.mxu0 0
      %5724 = vmatmul.mubr.bf16.gmra.mrb[0].mxu0 %v1073
      %v5725 = vpop.f32.mrb[0].mxu0
      %v5726 = vadd.f32 %v5629, %v5725
      %v5727 = vpop.f32.mrb[0].mxu0
      %v5728 = vpop.f32.mrb[0].mxu0
      %v5729 = vadd.f32 %v5632, %v5728
      %v5730 = vpop.f32.mrb[0].mxu0
      %5731 = vmatprep.mubr.bf16.mxu0 0
      %5732 = vmatmul.mubr.bf16.gmra.mrb[0].mxu0 %v1074
      %v5733 = vpop.f32.mrb[0].mxu0
      %v5734 = vadd.f32 %v5637, %v5733
      %v5735 = vpop.f32.mrb[0].mxu0
      %v5736 = vpop.f32.mrb[0].mxu0
      %v5737 = vadd.f32 %v5640, %v5736
      %v5738 = vpop.f32.mrb[0].mxu0
      %5739 = vmatprep.mubr.bf16.mxu0 0
      %5740 = vmatmul.mubr.bf16.gmra.mrb[0].mxu0 %v1218
      %v5741 = vpop.f32.mrb[0].mxu0
      %v5742 = vadd.f32 %v5645, %v5741
      %v5743 = vpop.f32.mrb[0].mxu0
      %v5744 = vpop.f32.mrb[0].mxu0
      %v5745 = vadd.f32 %v5648, %v5744
      %v5746 = vpop.f32.mrb[0].mxu0
      %5747 = vdwg.mxu0
      %v5796 = vunpack.c.l.b16 %v5314
      %v5797 = vunpack.c.l.b16 %v5315
      %v5798 = vunpack.c.l.b16 %v5316
      %v5799 = vunpack.c.l.b16 %v5317
      %v5800 = vunpack.c.l.b16 %v5318
      %v5801 = vunpack.c.l.b16 %v5319
      %v5802 = vunpack.c.l.b16 %v5320
      %v5803 = vunpack.c.l.b16 %v5321
      %v5804 = vunpack.c.l.b16 %v5322
      %v5805 = vunpack.c.l.b16 %v5323
      %v5806 = vunpack.c.l.b16 %v5324
      %v5807 = vunpack.c.l.b16 %v5325
      %v5808 = vunpack.c.l.b16 %v5326
      %v5809 = vunpack.c.l.b16 %v5327
      %v5810 = vunpack.c.l.b16 %v5328
      %v5811 = vunpack.c.l.b16 %v5329
      %v5812 = vunpack.c.l.b16 %v5330
      %v5813 = vunpack.c.l.b16 %v5331
      %v5814 = vunpack.c.l.b16 %v5332
      %v5815 = vunpack.c.l.b16 %v5333
      %v5816 = vunpack.c.l.b16 %v5334
      %v5817 = vunpack.c.l.b16 %v5335
      %v5818 = vunpack.c.l.b16 %v5336
      %v5819 = vunpack.c.l.b16 %v5337
      %v5820 = vunpack.c.l.b16 %v5338
      %v5821 = vunpack.c.l.b16 %v5339
      %v5822 = vunpack.c.l.b16 %v5340
      %v5823 = vunpack.c.l.b16 %v5341
      %v5824 = vunpack.c.l.b16 %v5342
      %v5825 = vunpack.c.l.b16 %v5343
      %v5826 = vunpack.c.l.b16 %v5344
      %v5827 = vunpack.c.l.b16 %v5345
      %v5828 = vunpack.c.l.b16 %v5346
      %v5829 = vunpack.c.l.b16 %v5347
      %v5830 = vunpack.c.l.b16 %v5348
      %v5831 = vunpack.c.l.b16 %v5349
      %v5832 = vunpack.c.l.b16 %v5350
      %v5833 = vunpack.c.l.b16 %v5351
      %v5834 = vunpack.c.l.b16 %v5352
      %v5835 = vunpack.c.l.b16 %v5353
      %v5836 = vunpack.c.l.b16 %v5354
      %v5837 = vunpack.c.l.b16 %v5355
      %v5838 = vunpack.c.l.b16 %v5356
      %v5839 = vunpack.c.l.b16 %v5357
      %v5840 = vunpack.c.l.b16 %v5358
      %v5841 = vunpack.c.l.b16 %v5359
      %v5842 = vunpack.c.l.b16 %v5360
      %v5843 = vunpack.c.l.b16 %v5361
      %v5844 = vpack.c.b16 %v5797, %v5796
      %v5845 = vpack.c.b16 %v5799, %v5798
      %v5846 = vpack.c.b16 %v5801, %v5800
      %v5847 = vpack.c.b16 %v5803, %v5802
      %v5848 = vpack.c.b16 %v5805, %v5804
      %v5849 = vpack.c.b16 %v5807, %v5806
      %v5850 = vpack.c.b16 %v5809, %v5808
      %v5851 = vpack.c.b16 %v5811, %v5810
      %v5852 = vpack.c.b16 %v5813, %v5812
      %v5853 = vpack.c.b16 %v5815, %v5814
      %v5854 = vpack.c.b16 %v5817, %v5816
      %v5855 = vpack.c.b16 %v5819, %v5818
      %v5856 = vpack.c.b16 %v5821, %v5820
      %v5857 = vpack.c.b16 %v5823, %v5822
      %v5858 = vpack.c.b16 %v5825, %v5824
      %v5859 = vpack.c.b16 %v5827, %v5826
      %v5860 = vpack.c.b16 %v5829, %v5828
      %v5861 = vpack.c.b16 %v5831, %v5830
      %v5862 = vpack.c.b16 %v5833, %v5832
      %v5863 = vpack.c.b16 %v5835, %v5834
      %v5864 = vpack.c.b16 %v5837, %v5836
      %v5865 = vpack.c.b16 %v5839, %v5838
      %v5866 = vpack.c.b16 %v5841, %v5840
      %v5867 = vpack.c.b16 %v5843, %v5842
      %5892 = vmatprep.subr.bf16.mxu0 0
      %5893 = vmatpush1.bf16.msra.mxu0 %v5844
      %5894 = vmatprep.subr.bf16.mxu0 0
      %5895 = vmatpush1.bf16.msra.mxu0 %v5845
      %5896 = vmatprep.subr.bf16.mxu0 0
      %5897 = vmatpush1.bf16.msra.mxu0 %v5846
      %5898 = vmatprep.subr.bf16.mxu0 0
      %5899 = vmatpush1.bf16.msra.mxu0 %v5847
      %5900 = vmatprep.subr.bf16.mxu0 0
      %5901 = vmatpush1.bf16.msra.mxu0 %v5848
      %5902 = vmatprep.subr.bf16.mxu0 0
      %5903 = vmatpush1.bf16.msra.mxu0 %v5849
      %5904 = vmatprep.subr.bf16.mxu0 0
      %5905 = vmatpush1.bf16.msra.mxu0 %v5850
      %5906 = vmatprep.subr.bf16.mxu0 0
      %5907 = vmatpush1.bf16.msra.mxu0 %v5851
      %5908 = vmatprep.subr.bf16.mxu0 0
      %5909 = vmatpush1.bf16.msra.mxu0 %v5852
      %5910 = vmatprep.subr.bf16.mxu0 0
      %5911 = vmatpush1.bf16.msra.mxu0 %v5853
      %5912 = vmatprep.subr.bf16.mxu0 0
      %5913 = vmatpush1.bf16.msra.mxu0 %v5854
      %5914 = vmatprep.subr.bf16.mxu0 0
      %5915 = vmatpush1.bf16.msra.mxu0 %v5855
      %5916 = vmatprep.subr.bf16.mxu0 0
      %5917 = vmatpush1.bf16.msra.mxu0 %v5856
      %5918 = vmatprep.subr.bf16.mxu0 0
      %5919 = vmatpush1.bf16.msra.mxu0 %v5857
      %5920 = vmatprep.subr.bf16.mxu0 0
      %5921 = vmatpush1.bf16.msra.mxu0 %v5858
      %5922 = vmatprep.subr.bf16.mxu0 0
      %5923 = vmatpush1.bf16.msra.mxu0 %v5859
      %5924 = vmatprep.mubr.bf16.mxu0 %v1139
      %5925 = vmatmul.mubr.bf16.gmra.mrb[0].mxu0 %v1131
      %v5926 = vpop.f32.mrb[0].mxu0
      %v5927 = vadd.f32 %v5686, %v5926
      %v5928 = vpop.f32.mrb[0].mxu0
      %v5929 = vpop.f32.mrb[0].mxu0
      %v5930 = vadd.f32 %v5689, %v5929
      %v5931 = vpop.f32.mrb[0].mxu0
      %5932 = vmatprep.mubr.bf16.mxu0 %v1140
      %5933 = vmatmul.mubr.bf16.gmra.mrb[0].mxu0 %v1132
      %v5934 = vpop.f32.mrb[0].mxu0
      %v5935 = vadd.f32 %v5694, %v5934
      %v5936 = vpop.f32.mrb[0].mxu0
      %v5937 = vpop.f32.mrb[0].mxu0
      %v5938 = vadd.f32 %v5697, %v5937
      %v5939 = vpop.f32.mrb[0].mxu0
      %5940 = vmatprep.mubr.bf16.mxu0 %v1141
      %5941 = vmatmul.mubr.bf16.gmra.mrb[0].mxu0 %v1133
      %v5942 = vpop.f32.mrb[0].mxu0
      %v5943 = vadd.f32 %v5702, %v5942
      %v5944 = vpop.f32.mrb[0].mxu0
      %v5945 = vpop.f32.mrb[0].mxu0
      %v5946 = vadd.f32 %v5705, %v5945
      %v5947 = vpop.f32.mrb[0].mxu0
      %5948 = vmatprep.mubr.bf16.mxu0 %v1142
      %5949 = vmatmul.mubr.bf16.gmra.mrb[0].mxu0 %v1134
      %v5950 = vpop.f32.mrb[0].mxu0
      %v5951 = vadd.f32 %v5710, %v5950
      %v5952 = vpop.f32.mrb[0].mxu0
      %v5953 = vpop.f32.mrb[0].mxu0
      %v5954 = vadd.f32 %v5713, %v5953
      %v5955 = vpop.f32.mrb[0].mxu0
      %5956 = vmatprep.mubr.bf16.mxu0 %v1143
      %5957 = vmatmul.mubr.bf16.gmra.mrb[0].mxu0 %v1135
      %v5958 = vpop.f32.mrb[0].mxu0
      %v5959 = vadd.f32 %v5718, %v5958
      %v5960 = vpop.f32.mrb[0].mxu0
      %v5961 = vpop.f32.mrb[0].mxu0
      %v5962 = vadd.f32 %v5721, %v5961
      %v5963 = vpop.f32.mrb[0].mxu0
      %5964 = vmatprep.mubr.bf16.mxu0 %v1144
      %5965 = vmatmul.mubr.bf16.gmra.mrb[0].mxu0 %v1136
      %v5966 = vpop.f32.mrb[0].mxu0
      %v5967 = vadd.f32 %v5726, %v5966
      %v5968 = vpop.f32.mrb[0].mxu0
      %v5969 = vpop.f32.mrb[0].mxu0
      %v5970 = vadd.f32 %v5729, %v5969
      %v5971 = vpop.f32.mrb[0].mxu0
      %5972 = vmatprep.mubr.bf16.mxu0 %v1145
      %5973 = vmatmul.mubr.bf16.gmra.mrb[0].mxu0 %v1137
      %v5974 = vpop.f32.mrb[0].mxu0
      %v5975 = vadd.f32 %v5734, %v5974
      %v5976 = vpop.f32.mrb[0].mxu0
      %v5977 = vpop.f32.mrb[0].mxu0
      %v5978 = vadd.f32 %v5737, %v5977
      %v5979 = vpop.f32.mrb[0].mxu0
      %5980 = vmatprep.mubr.bf16.mxu0 %v1146
      %5981 = vmatmul.mubr.bf16.gmra.mrb[0].mxu0 %v1138
      %v5982 = vpop.f32.mrb[0].mxu0
      %v5983 = vadd.f32 %v5742, %v5982
      %v5984 = vpop.f32.mrb[0].mxu0
      %v5985 = vpop.f32.mrb[0].mxu0
      %v5986 = vadd.f32 %v5745, %v5985
      %v5987 = vpop.f32.mrb[0].mxu0
      %5988 = vdwg.mxu0
      %5989 = vmatprep.subr.bf16.mxu0 0
      %5990 = vmatpush1.bf16.msra.mxu0 %v5860
      %5991 = vmatprep.subr.bf16.mxu0 0
      %5992 = vmatpush1.bf16.msra.mxu0 %v5861
      %5993 = vmatprep.subr.bf16.mxu0 0
      %5994 = vmatpush1.bf16.msra.mxu0 %v5862
      %5995 = vmatprep.subr.bf16.mxu0 0
      %5996 = vmatpush1.bf16.msra.mxu0 %v5863
      %5997 = vmatprep.subr.bf16.mxu0 0
      %5998 = vmatpush1.bf16.msra.mxu0 %v5864
      %5999 = vmatprep.subr.bf16.mxu0 0
      %6000 = vmatpush1.bf16.msra.mxu0 %v5865
      %6001 = vmatprep.subr.bf16.mxu0 0
      %6002 = vmatpush1.bf16.msra.mxu0 %v5866
      %6003 = vmatprep.subr.bf16.mxu0 0
      %6004 = vmatpush1.bf16.msra.mxu0 %v5867
      %6005 = vmatprep.subr.bf16.mxu0 0
      %6006 = vmatpush1.bf16.msra.mxu0 0
      %6007 = vmatprep.subr.bf16.mxu0 0
      %6008 = vmatpush1.bf16.msra.mxu0 0
      %6009 = vmatprep.subr.bf16.mxu0 0
      %6010 = vmatpush1.bf16.msra.mxu0 0
      %6011 = vmatprep.subr.bf16.mxu0 0
      %6012 = vmatpush1.bf16.msra.mxu0 0
      %6013 = vmatprep.subr.bf16.mxu0 0
      %6014 = vmatpush1.bf16.msra.mxu0 0
      %6015 = vmatprep.subr.bf16.mxu0 0
      %6016 = vmatpush1.bf16.msra.mxu0 0
      %6017 = vmatprep.subr.bf16.mxu0 0
      %6018 = vmatpush1.bf16.msra.mxu0 0
      %6019 = vmatprep.subr.bf16.mxu0 0
      %6020 = vmatpush1.bf16.msra.mxu0 0
      %6021 = vmatprep.mubr.bf16.mxu0 0
      %6022 = vmatmul.mubr.bf16.gmra.mrb[0].mxu0 %v1195
      %v6023 = vpop.f32.mrb[0].mxu0
      %v6024 = vadd.f32 %v5927, %v6023
      %v6025 = vpop.f32.mrb[0].mxu0
      %v6026 = vpop.f32.mrb[0].mxu0
      %v6027 = vadd.f32 %v5930, %v6026
      %v6028 = vpop.f32.mrb[0].mxu0
      %6029 = vmatprep.mubr.bf16.mxu0 0
      %6030 = vmatmul.mubr.bf16.gmra.mrb[0].mxu0 %v1196
      %v6031 = vpop.f32.mrb[0].mxu0
      %v6032 = vadd.f32 %v5935, %v6031
      %v6033 = vpop.f32.mrb[0].mxu0
      %v6034 = vpop.f32.mrb[0].mxu0
      %v6035 = vadd.f32 %v5938, %v6034
      %v6036 = vpop.f32.mrb[0].mxu0
      %6037 = vmatprep.mubr.bf16.mxu0 0
      %6038 = vmatmul.mubr.bf16.gmra.mrb[0].mxu0 %v1197
      %v6039 = vpop.f32.mrb[0].mxu0
      %v6040 = vadd.f32 %v5943, %v6039
      %v6041 = vpop.f32.mrb[0].mxu0
      %v6042 = vpop.f32.mrb[0].mxu0
      %v6043 = vadd.f32 %v5946, %v6042
      %v6044 = vpop.f32.mrb[0].mxu0
      %6045 = vmatprep.mubr.bf16.mxu0 0
      %6046 = vmatmul.mubr.bf16.gmra.mrb[0].mxu0 %v1198
      %v6047 = vpop.f32.mrb[0].mxu0
      %v6048 = vadd.f32 %v5951, %v6047
      %v6049 = vpop.f32.mrb[0].mxu0
      %v6050 = vpop.f32.mrb[0].mxu0
      %v6051 = vadd.f32 %v5954, %v6050
      %v6052 = vpop.f32.mrb[0].mxu0
      %6053 = vmatprep.mubr.bf16.mxu0 0
      %6054 = vmatmul.mubr.bf16.gmra.mrb[0].mxu0 %v1199
      %v6055 = vpop.f32.mrb[0].mxu0
      %v6056 = vadd.f32 %v5959, %v6055
      %v6057 = vpop.f32.mrb[0].mxu0
      %v6058 = vpop.f32.mrb[0].mxu0
      %v6059 = vadd.f32 %v5962, %v6058
      %v6060 = vpop.f32.mrb[0].mxu0
      %6061 = vmatprep.mubr.bf16.mxu0 0
      %6062 = vmatmul.mubr.bf16.gmra.mrb[0].mxu0 %v1200
      %v6063 = vpop.f32.mrb[0].mxu0
      %v6064 = vadd.f32 %v5967, %v6063
      %v6065 = vpop.f32.mrb[0].mxu0
      %v6066 = vpop.f32.mrb[0].mxu0
      %v6067 = vadd.f32 %v5970, %v6066
      %v6068 = vpop.f32.mrb[0].mxu0
      %6069 = vmatprep.mubr.bf16.mxu0 0
      %6070 = vmatmul.mubr.bf16.gmra.mrb[0].mxu0 %v1201
      %v6071 = vpop.f32.mrb[0].mxu0
      %v6072 = vadd.f32 %v5975, %v6071
      %v6073 = vpop.f32.mrb[0].mxu0
      %v6074 = vpop.f32.mrb[0].mxu0
      %v6075 = vadd.f32 %v5978, %v6074
      %v6076 = vpop.f32.mrb[0].mxu0
      %6077 = vmatprep.mubr.bf16.mxu0 0
      %6078 = vmatmul.mubr.bf16.gmra.mrb[0].mxu0 %v1202
      %v6079 = vpop.f32.mrb[0].mxu0
      %v6080 = vadd.f32 %v5983, %v6079
      %v6081 = vpop.f32.mrb[0].mxu0
      %v6082 = vpop.f32.mrb[0].mxu0
      %v6083 = vadd.f32 %v5986, %v6082
      %v6084 = vpop.f32.mrb[0].mxu0
      %6085 = vdwg.mxu0
      %v6086 = vld [vmem:[%s2040] sm:$0xf]
      %v6087 = vld [vmem:[%s2040 + $0x4] sm:$0xf]
      %v6088 = vld [vmem:[%s2040 + $0x8] sm:$0xf]
      %v6089 = vld [vmem:[%s2040 + $0xc] sm:$0xf]
      %v6090 = vld [vmem:[%s2040 + $0x10] sm:$0xf]
      %v6091 = vld [vmem:[%s2040 + $0x14] sm:$0xf]
      %v6092 = vld [vmem:[%s2040 + $0x18] sm:$0xf]
      %v6093 = vld [vmem:[%s2040 + $0x1c] sm:$0xf]
      %v6094 = vld [vmem:[%s2040 + $0x20] sm:$0xf]
      %v6095 = vld [vmem:[%s2040 + $0x24] sm:$0xf]
      %v6096 = vld [vmem:[%s2040 + $0x28] sm:$0xf]
      %v6097 = vld [vmem:[%s2040 + $0x2c] sm:$0xf]
      %v6098 = vld [vmem:[%s2040 + $0x30] sm:$0xf]
      %v6099 = vld [vmem:[%s2040 + $0x34] sm:$0xf]
      %v6100 = vld [vmem:[%s2040 + $0x38] sm:$0xf]
      %v6101 = vld [vmem:[%s2040 + $0x3c] sm:$0xf]
      %v6102 = vld [vmem:[%s2040 + $0x40] sm:$0xf]
      %v6103 = vld [vmem:[%s2040 + $0x44] sm:$0xf]
      %v6104 = vld [vmem:[%s2040 + $0x48] sm:$0xf]
      %v6105 = vld [vmem:[%s2040 + $0x4c] sm:$0xf]
      %v6106 = vld [vmem:[%s2040 + $0x50] sm:$0xf]
      %v6107 = vld [vmem:[%s2040 + $0x54] sm:$0xf]
      %v6108 = vld [vmem:[%s2040 + $0x58] sm:$0xf]
      %v6109 = vld [vmem:[%s2040 + $0x5c] sm:$0xf]
      %v6110 = vld [vmem:[%s2040 + $0x60] sm:$0xf]
      %v6111 = vld [vmem:[%s2040 + $0x64] sm:$0xf]
      %v6112 = vld [vmem:[%s2040 + $0x68] sm:$0xf]
      %v6113 = vld [vmem:[%s2040 + $0x6c] sm:$0xf]
      %v6114 = vld [vmem:[%s2040 + $0x70] sm:$0xf]
      %v6115 = vld [vmem:[%s2040 + $0x74] sm:$0xf]
      %v6116 = vld [vmem:[%s2040 + $0x78] sm:$0xf]
      %v6117 = vld [vmem:[%s2040 + $0x7c] sm:$0xf]
      %v6118 = vld [vmem:[%s2040 + $0x80] sm:$0xf]
      %v6119 = vld [vmem:[%s2040 + $0x84] sm:$0xf]
      %v6120 = vld [vmem:[%s2040 + $0x88] sm:$0xf]
      %v6121 = vld [vmem:[%s2040 + $0x8c] sm:$0xf]
      %v6122 = vld [vmem:[%s2040 + $0x90] sm:$0xf]
      %v6123 = vld [vmem:[%s2040 + $0x94] sm:$0xf]
      %v6124 = vld [vmem:[%s2040 + $0x98] sm:$0xf]
      %v6125 = vld [vmem:[%s2040 + $0x9c] sm:$0xf]
      %v6126 = vld [vmem:[%s2040 + $0xa0] sm:$0xf]
      %v6127 = vld [vmem:[%s2040 + $0xa4] sm:$0xf]
      %v6128 = vld [vmem:[%s2040 + $0xa8] sm:$0xf]
      %v6129 = vld [vmem:[%s2040 + $0xac] sm:$0xf]
      %v6130 = vld [vmem:[%s2040 + $0xb0] sm:$0xf]
      %v6131 = vld [vmem:[%s2040 + $0xb4] sm:$0xf]
      %v6132 = vld [vmem:[%s2040 + $0xb8] sm:$0xf]
      %v6133 = vld [vmem:[%s2040 + $0xbc] sm:$0xf]
      %v6182 = vunpack.c.l.b16 %v6086
      %v6183 = vunpack.c.l.b16 %v6087
      %v6184 = vunpack.c.l.b16 %v6088
      %v6185 = vunpack.c.l.b16 %v6089
      %v6186 = vunpack.c.l.b16 %v6090
      %v6187 = vunpack.c.l.b16 %v6091
      %v6188 = vunpack.c.l.b16 %v6092
      %v6189 = vunpack.c.l.b16 %v6093
      %v6190 = vunpack.c.l.b16 %v6094
      %v6191 = vunpack.c.l.b16 %v6095
      %v6192 = vunpack.c.l.b16 %v6096
      %v6193 = vunpack.c.l.b16 %v6097
      %v6194 = vunpack.c.l.b16 %v6098
      %v6195 = vunpack.c.l.b16 %v6099
      %v6196 = vunpack.c.l.b16 %v6100
      %v6197 = vunpack.c.l.b16 %v6101
      %v6198 = vunpack.c.l.b16 %v6102
      %v6199 = vunpack.c.l.b16 %v6103
      %v6200 = vunpack.c.l.b16 %v6104
      %v6201 = vunpack.c.l.b16 %v6105
      %v6202 = vunpack.c.l.b16 %v6106
      %v6203 = vunpack.c.l.b16 %v6107
      %v6204 = vunpack.c.l.b16 %v6108
      %v6205 = vunpack.c.l.b16 %v6109
      %v6206 = vunpack.c.l.b16 %v6110
      %v6207 = vunpack.c.l.b16 %v6111
      %v6208 = vunpack.c.l.b16 %v6112
      %v6209 = vunpack.c.l.b16 %v6113
      %v6210 = vunpack.c.l.b16 %v6114
      %v6211 = vunpack.c.l.b16 %v6115
      %v6212 = vunpack.c.l.b16 %v6116
      %v6213 = vunpack.c.l.b16 %v6117
      %v6214 = vunpack.c.l.b16 %v6118
      %v6215 = vunpack.c.l.b16 %v6119
      %v6216 = vunpack.c.l.b16 %v6120
      %v6217 = vunpack.c.l.b16 %v6121
      %v6218 = vunpack.c.l.b16 %v6122
      %v6219 = vunpack.c.l.b16 %v6123
      %v6220 = vunpack.c.l.b16 %v6124
      %v6221 = vunpack.c.l.b16 %v6125
      %v6222 = vunpack.c.l.b16 %v6126
      %v6223 = vunpack.c.l.b16 %v6127
      %v6224 = vunpack.c.l.b16 %v6128
      %v6225 = vunpack.c.l.b16 %v6129
      %v6226 = vunpack.c.l.b16 %v6130
      %v6227 = vunpack.c.l.b16 %v6131
      %v6228 = vunpack.c.l.b16 %v6132
      %v6229 = vunpack.c.l.b16 %v6133
      %v6230 = vpack.c.b16 %v6183, %v6182
      %v6231 = vpack.c.b16 %v6185, %v6184
      %v6232 = vpack.c.b16 %v6187, %v6186
      %v6233 = vpack.c.b16 %v6189, %v6188
      %v6234 = vpack.c.b16 %v6191, %v6190
      %v6235 = vpack.c.b16 %v6193, %v6192
      %v6236 = vpack.c.b16 %v6195, %v6194
      %v6237 = vpack.c.b16 %v6197, %v6196
      %v6238 = vpack.c.b16 %v6199, %v6198
      %v6239 = vpack.c.b16 %v6201, %v6200
      %v6240 = vpack.c.b16 %v6203, %v6202
      %v6241 = vpack.c.b16 %v6205, %v6204
      %v6242 = vpack.c.b16 %v6207, %v6206
      %v6243 = vpack.c.b16 %v6209, %v6208
      %v6244 = vpack.c.b16 %v6211, %v6210
      %v6245 = vpack.c.b16 %v6213, %v6212
      %v6246 = vpack.c.b16 %v6215, %v6214
      %v6247 = vpack.c.b16 %v6217, %v6216
      %v6248 = vpack.c.b16 %v6219, %v6218
      %v6249 = vpack.c.b16 %v6221, %v6220
      %v6250 = vpack.c.b16 %v6223, %v6222
      %v6251 = vpack.c.b16 %v6225, %v6224
      %v6252 = vpack.c.b16 %v6227, %v6226
      %v6253 = vpack.c.b16 %v6229, %v6228
      %6278 = vmatprep.subr.bf16.mxu0 0
      %6279 = vmatpush1.bf16.msra.mxu0 %v6230
      %6280 = vmatprep.subr.bf16.mxu0 0
      %6281 = vmatpush1.bf16.msra.mxu0 %v6231
      %6282 = vmatprep.subr.bf16.mxu0 0
      %6283 = vmatpush1.bf16.msra.mxu0 %v6232
      %6284 = vmatprep.subr.bf16.mxu0 0
      %6285 = vmatpush1.bf16.msra.mxu0 %v6233
      %6286 = vmatprep.subr.bf16.mxu0 0
      %6287 = vmatpush1.bf16.msra.mxu0 %v6234
      %6288 = vmatprep.subr.bf16.mxu0 0
      %6289 = vmatpush1.bf16.msra.mxu0 %v6235
      %6290 = vmatprep.subr.bf16.mxu0 0
      %6291 = vmatpush1.bf16.msra.mxu0 %v6236
      %6292 = vmatprep.subr.bf16.mxu0 0
      %6293 = vmatpush1.bf16.msra.mxu0 %v6237
      %6294 = vmatprep.subr.bf16.mxu0 0
      %6295 = vmatpush1.bf16.msra.mxu0 %v6238
      %6296 = vmatprep.subr.bf16.mxu0 0
      %6297 = vmatpush1.bf16.msra.mxu0 %v6239
      %6298 = vmatprep.subr.bf16.mxu0 0
      %6299 = vmatpush1.bf16.msra.mxu0 %v6240
      %6300 = vmatprep.subr.bf16.mxu0 0
      %6301 = vmatpush1.bf16.msra.mxu0 %v6241
      %6302 = vmatprep.subr.bf16.mxu0 0
      %6303 = vmatpush1.bf16.msra.mxu0 %v6242
      %6304 = vmatprep.subr.bf16.mxu0 0
      %6305 = vmatpush1.bf16.msra.mxu0 %v6243
      %6306 = vmatprep.subr.bf16.mxu0 0
      %6307 = vmatpush1.bf16.msra.mxu0 %v6244
      %6308 = vmatprep.subr.bf16.mxu0 0
      %6309 = vmatpush1.bf16.msra.mxu0 %v6245
      %6310 = vmatprep.mubr.bf16.mxu0 %v1140
      %6311 = vmatmul.mubr.bf16.gmra.mrb[0].mxu0 %v1132
      %v6312 = vpop.f32.mrb[0].mxu0
      %v6313 = vadd.f32 0.0, %v6312
      %v6314 = vpop.f32.mrb[0].mxu0
      %v6315 = vpop.f32.mrb[0].mxu0
      %v6316 = vadd.f32 0.0, %v6315
      %v6317 = vpop.f32.mrb[0].mxu0
      %6318 = vmatprep.mubr.bf16.mxu0 %v1141
      %6319 = vmatmul.mubr.bf16.gmra.mrb[0].mxu0 %v1133
      %v6320 = vpop.f32.mrb[0].mxu0
      %v6321 = vadd.f32 0.0, %v6320
      %v6322 = vpop.f32.mrb[0].mxu0
      %v6323 = vpop.f32.mrb[0].mxu0
      %v6324 = vadd.f32 0.0, %v6323
      %v6325 = vpop.f32.mrb[0].mxu0
      %6326 = vmatprep.mubr.bf16.mxu0 %v1142
      %6327 = vmatmul.mubr.bf16.gmra.mrb[0].mxu0 %v1134
      %v6328 = vpop.f32.mrb[0].mxu0
      %v6329 = vadd.f32 0.0, %v6328
      %v6330 = vpop.f32.mrb[0].mxu0
      %v6331 = vpop.f32.mrb[0].mxu0
      %v6332 = vadd.f32 0.0, %v6331
      %v6333 = vpop.f32.mrb[0].mxu0
      %6334 = vmatprep.mubr.bf16.mxu0 %v1143
      %6335 = vmatmul.mubr.bf16.gmra.mrb[0].mxu0 %v1135
      %v6336 = vpop.f32.mrb[0].mxu0
      %v6337 = vadd.f32 0.0, %v6336
      %v6338 = vpop.f32.mrb[0].mxu0
      %v6339 = vpop.f32.mrb[0].mxu0
      %v6340 = vadd.f32 0.0, %v6339
      %v6341 = vpop.f32.mrb[0].mxu0
      %6342 = vmatprep.mubr.bf16.mxu0 %v1144
      %6343 = vmatmul.mubr.bf16.gmra.mrb[0].mxu0 %v1136
      %v6344 = vpop.f32.mrb[0].mxu0
      %v6345 = vadd.f32 0.0, %v6344
      %v6346 = vpop.f32.mrb[0].mxu0
      %v6347 = vpop.f32.mrb[0].mxu0
      %v6348 = vadd.f32 0.0, %v6347
      %v6349 = vpop.f32.mrb[0].mxu0
      %6350 = vmatprep.mubr.bf16.mxu0 %v1145
      %6351 = vmatmul.mubr.bf16.gmra.mrb[0].mxu0 %v1137
      %v6352 = vpop.f32.mrb[0].mxu0
      %v6353 = vadd.f32 0.0, %v6352
      %v6354 = vpop.f32.mrb[0].mxu0
      %v6355 = vpop.f32.mrb[0].mxu0
      %v6356 = vadd.f32 0.0, %v6355
      %v6357 = vpop.f32.mrb[0].mxu0
      %6358 = vmatprep.mubr.bf16.mxu0 %v1146
      %6359 = vmatmul.mubr.bf16.gmra.mrb[0].mxu0 %v1138
      %v6360 = vpop.f32.mrb[0].mxu0
      %v6361 = vadd.f32 0.0, %v6360
      %v6362 = vpop.f32.mrb[0].mxu0
      %v6363 = vpop.f32.mrb[0].mxu0
      %v6364 = vadd.f32 0.0, %v6363
      %v6365 = vpop.f32.mrb[0].mxu0
      %6366 = vmatprep.mubr.bf16.mxu0 %v1227
      %6367 = vmatmul.mubr.bf16.gmra.mrb[0].mxu0 %v1226
      %v6368 = vpop.f32.mrb[0].mxu0
      %v6369 = vadd.f32 0.0, %v6368
      %v6370 = vpop.f32.mrb[0].mxu0
      %v6371 = vpop.f32.mrb[0].mxu0
      %v6372 = vadd.f32 0.0, %v6371
      %v6373 = vpop.f32.mrb[0].mxu0
      %6374 = vdwg.mxu0
      %6375 = vmatprep.subr.bf16.mxu0 0
      %6376 = vmatpush1.bf16.msra.mxu0 %v6246
      %6377 = vmatprep.subr.bf16.mxu0 0
      %6378 = vmatpush1.bf16.msra.mxu0 %v6247
      %6379 = vmatprep.subr.bf16.mxu0 0
      %6380 = vmatpush1.bf16.msra.mxu0 %v6248
      %6381 = vmatprep.subr.bf16.mxu0 0
      %6382 = vmatpush1.bf16.msra.mxu0 %v6249
      %6383 = vmatprep.subr.bf16.mxu0 0
      %6384 = vmatpush1.bf16.msra.mxu0 %v6250
      %6385 = vmatprep.subr.bf16.mxu0 0
      %6386 = vmatpush1.bf16.msra.mxu0 %v6251
      %6387 = vmatprep.subr.bf16.mxu0 0
      %6388 = vmatpush1.bf16.msra.mxu0 %v6252
      %6389 = vmatprep.subr.bf16.mxu0 0
      %6390 = vmatpush1.bf16.msra.mxu0 %v6253
      %6391 = vmatprep.subr.bf16.mxu0 0
      %6392 = vmatpush1.bf16.msra.mxu0 0
      %6393 = vmatprep.subr.bf16.mxu0 0
      %6394 = vmatpush1.bf16.msra.mxu0 0
      %6395 = vmatprep.subr.bf16.mxu0 0
      %6396 = vmatpush1.bf16.msra.mxu0 0
      %6397 = vmatprep.subr.bf16.mxu0 0
      %6398 = vmatpush1.bf16.msra.mxu0 0
      %6399 = vmatprep.subr.bf16.mxu0 0
      %6400 = vmatpush1.bf16.msra.mxu0 0
      %6401 = vmatprep.subr.bf16.mxu0 0
      %6402 = vmatpush1.bf16.msra.mxu0 0
      %6403 = vmatprep.subr.bf16.mxu0 0
      %6404 = vmatpush1.bf16.msra.mxu0 0
      %6405 = vmatprep.subr.bf16.mxu0 0
      %6406 = vmatpush1.bf16.msra.mxu0 0
      %6407 = vmatprep.mubr.bf16.mxu0 0
      %6408 = vmatmul.mubr.bf16.gmra.mrb[0].mxu0 %v1196
      %v6409 = vpop.f32.mrb[0].mxu0
      %v6410 = vadd.f32 %v6313, %v6409
      %v6411 = vpop.f32.mrb[0].mxu0
      %v6412 = vpop.f32.mrb[0].mxu0
      %v6413 = vadd.f32 %v6316, %v6412
      %v6414 = vpop.f32.mrb[0].mxu0
      %6415 = vmatprep.mubr.bf16.mxu0 0
      %6416 = vmatmul.mubr.bf16.gmra.mrb[0].mxu0 %v1197
      %v6417 = vpop.f32.mrb[0].mxu0
      %v6418 = vadd.f32 %v6321, %v6417
      %v6419 = vpop.f32.mrb[0].mxu0
      %v6420 = vpop.f32.mrb[0].mxu0
      %v6421 = vadd.f32 %v6324, %v6420
      %v6422 = vpop.f32.mrb[0].mxu0
      %6423 = vmatprep.mubr.bf16.mxu0 0
      %6424 = vmatmul.mubr.bf16.gmra.mrb[0].mxu0 %v1198
      %v6425 = vpop.f32.mrb[0].mxu0
      %v6426 = vadd.f32 %v6329, %v6425
      %v6427 = vpop.f32.mrb[0].mxu0
      %v6428 = vpop.f32.mrb[0].mxu0
      %v6429 = vadd.f32 %v6332, %v6428
      %v6430 = vpop.f32.mrb[0].mxu0
      %6431 = vmatprep.mubr.bf16.mxu0 0
      %6432 = vmatmul.mubr.bf16.gmra.mrb[0].mxu0 %v1199
      %v6433 = vpop.f32.mrb[0].mxu0
      %v6434 = vadd.f32 %v6337, %v6433
      %v6435 = vpop.f32.mrb[0].mxu0
      %v6436 = vpop.f32.mrb[0].mxu0
      %v6437 = vadd.f32 %v6340, %v6436
      %v6438 = vpop.f32.mrb[0].mxu0
      %6439 = vmatprep.mubr.bf16.mxu0 0
      %6440 = vmatmul.mubr.bf16.gmra.mrb[0].mxu0 %v1200
      %v6441 = vpop.f32.mrb[0].mxu0
      %v6442 = vadd.f32 %v6345, %v6441
      %v6443 = vpop.f32.mrb[0].mxu0
      %v6444 = vpop.f32.mrb[0].mxu0
      %v6445 = vadd.f32 %v6348, %v6444
      %v6446 = vpop.f32.mrb[0].mxu0
      %6447 = vmatprep.mubr.bf16.mxu0 0
      %6448 = vmatmul.mubr.bf16.gmra.mrb[0].mxu0 %v1201
      %v6449 = vpop.f32.mrb[0].mxu0
      %v6450 = vadd.f32 %v6353, %v6449
      %v6451 = vpop.f32.mrb[0].mxu0
      %v6452 = vpop.f32.mrb[0].mxu0
      %v6453 = vadd.f32 %v6356, %v6452
      %v6454 = vpop.f32.mrb[0].mxu0
      %6455 = vmatprep.mubr.bf16.mxu0 0
      %6456 = vmatmul.mubr.bf16.gmra.mrb[0].mxu0 %v1202
      %v6457 = vpop.f32.mrb[0].mxu0
      %v6458 = vadd.f32 %v6361, %v6457
      %v6459 = vpop.f32.mrb[0].mxu0
      %v6460 = vpop.f32.mrb[0].mxu0
      %v6461 = vadd.f32 %v6364, %v6460
      %v6462 = vpop.f32.mrb[0].mxu0
      %6463 = vmatprep.mubr.bf16.mxu0 0
      %6464 = vmatmul.mubr.bf16.gmra.mrb[0].mxu0 %v1234
      %v6465 = vpop.f32.mrb[0].mxu0
      %v6466 = vadd.f32 %v6369, %v6465
      %v6467 = vpop.f32.mrb[0].mxu0
      %v6468 = vpop.f32.mrb[0].mxu0
      %v6469 = vadd.f32 %v6372, %v6468
      %v6470 = vpop.f32.mrb[0].mxu0
      %6471 = vdwg.mxu0
      %v6472 = vadd.f32 %v6024, %v6410
      %v6473 = vadd.f32 %v6027, %v6413
      %v6474 = vadd.f32 %v6032, %v6418
      %v6475 = vadd.f32 %v6035, %v6421
      %v6476 = vadd.f32 %v6040, %v6426
      %v6477 = vadd.f32 %v6043, %v6429
      %v6478 = vadd.f32 %v6048, %v6434
      %v6479 = vadd.f32 %v6051, %v6437
      %v6480 = vadd.f32 %v6056, %v6442
      %v6481 = vadd.f32 %v6059, %v6445
      %v6482 = vadd.f32 %v6064, %v6450
      %v6483 = vadd.f32 %v6067, %v6453
      %v6484 = vadd.f32 %v6072, %v6458
      %v6485 = vadd.f32 %v6075, %v6461
      %v6486 = vadd.f32 %v6080, %v6466
      %v6487 = vadd.f32 %v6083, %v6469
      %v6488 = vadd.f32 %v6472, %v1251
      %v6489 = vadd.f32 %v6473, %v1252
      %v6490 = vadd.f32 %v6474, %v1253
      %v6491 = vadd.f32 %v6475, %v1254
      %v6492 = vadd.f32 %v6476, %v1255
      %v6493 = vadd.f32 %v6477, %v1256
      %v6494 = vadd.f32 %v6478, %v1257
      %v6495 = vadd.f32 %v6479, %v1258
      %v6496 = vadd.f32 %v6480, %v1259
      %v6497 = vadd.f32 %v6481, %v1260
      %v6498 = vadd.f32 %v6482, %v1261
      %v6499 = vadd.f32 %v6483, %v1262
      %v6500 = vadd.f32 %v6484, %v1263
      %v6501 = vadd.f32 %v6485, %v1264
      %v6502 = vadd.f32 %v6486, %v1265
      %v6503 = vadd.f32 %v6487, %v1266
      %v6504 = vadd.f32 %v6488, %v6489
      %v6505 = vadd.f32 %v6504, %v6490
      %v6506 = vadd.f32 %v6505, %v6491
      %v6507 = vadd.f32 %v6506, %v6492
      %v6508 = vadd.f32 %v6507, %v6493
      %v6509 = vadd.f32 %v6508, %v6494
      %v6510 = vadd.f32 %v6509, %v6495
      %v6511 = vadd.f32 %v6510, %v6496
      %v6512 = vadd.f32 %v6511, %v6497
      %v6513 = vadd.f32 %v6512, %v6498
      %v6514 = vadd.f32 %v6513, %v6499
      %v6515 = vadd.f32 %v6514, %v6500
      %v6516 = vadd.f32 %v6515, %v6501
      %v6517 = vadd.f32 %v6516, %v6502
      %v6518 = vadd.f32 %v6517, %v6503
      %v6519 = vrot.slane %v6518, 4
      %v6520 = vadd.f32 %v6518, %v6519
      %v6521 = vrot.slane %v6520, 2
      %v6522 = vadd.f32 %v6520, %v6521
      %v6523 = vrot.slane %v6522, 1
      %v6524 = vadd.f32 %v6522, %v6523
      %v6525 = vadd.f32 %v5178, %v6524
      %v6526 = vmul.f32 %v6488, %v6488
      %v6527 = vmul.f32 %v6489, %v6489
      %v6528 = vmul.f32 %v6490, %v6490
      %v6529 = vmul.f32 %v6491, %v6491
      %v6530 = vmul.f32 %v6492, %v6492
      %v6531 = vmul.f32 %v6493, %v6493
      %v6532 = vmul.f32 %v6494, %v6494
      %v6533 = vmul.f32 %v6495, %v6495
      %v6534 = vmul.f32 %v6496, %v6496
      %v6535 = vmul.f32 %v6497, %v6497
      %v6536 = vmul.f32 %v6498, %v6498
      %v6537 = vmul.f32 %v6499, %v6499
      %v6538 = vmul.f32 %v6500, %v6500
      %v6539 = vmul.f32 %v6501, %v6501
      %v6540 = vmul.f32 %v6502, %v6502
      %v6541 = vmul.f32 %v6503, %v6503
      %v6542 = vadd.f32 %v6526, %v6527
      %v6543 = vadd.f32 %v6542, %v6528
      %v6544 = vadd.f32 %v6543, %v6529
      %v6545 = vadd.f32 %v6544, %v6530
      %v6546 = vadd.f32 %v6545, %v6531
      %v6547 = vadd.f32 %v6546, %v6532
      %v6548 = vadd.f32 %v6547, %v6533
      %v6549 = vadd.f32 %v6548, %v6534
      %v6550 = vadd.f32 %v6549, %v6535
      %v6551 = vadd.f32 %v6550, %v6536
      %v6552 = vadd.f32 %v6551, %v6537
      %v6553 = vadd.f32 %v6552, %v6538
      %v6554 = vadd.f32 %v6553, %v6539
      %v6555 = vadd.f32 %v6554, %v6540
      %v6556 = vadd.f32 %v6555, %v6541
      %v6557 = vrot.slane %v6556, 4
      %v6558 = vadd.f32 %v6556, %v6557
      %v6559 = vrot.slane %v6558, 2
      %v6560 = vadd.f32 %v6558, %v6559
      %v6561 = vrot.slane %v6560, 1
      %v6562 = vadd.f32 %v6560, %v6561
      %v6563 = vadd.f32 %v5216, %v6562
      %v6564 = vadd.f32 %v6488, %v2523
      %v6565 = vadd.f32 %v6489, %v2523
      %v6566 = vadd.f32 %v6490, %v2523
      %v6567 = vadd.f32 %v6491, %v2523
      %v6568 = vadd.f32 %v6492, %v2523
      %v6569 = vadd.f32 %v6493, %v2523
      %v6570 = vadd.f32 %v6494, %v2523
      %v6571 = vadd.f32 %v6495, %v2523
      %v6572 = vadd.f32 %v6496, %v2523
      %v6573 = vadd.f32 %v6497, %v2523
      %v6574 = vadd.f32 %v6498, %v2523
      %v6575 = vadd.f32 %v6499, %v2523
      %v6576 = vadd.f32 %v6500, %v2523
      %v6577 = vadd.f32 %v6501, %v2523
      %v6578 = vadd.f32 %v6502, %v2523
      %v6579 = vadd.f32 %v6503, %v2523
      %v6580 = vpack.c.bf16 %v6565, %v6564
      %v6581 = vpack.c.bf16 %v6567, %v6566
      %v6582 = vpack.c.bf16 %v6569, %v6568
      %v6583 = vpack.c.bf16 %v6571, %v6570
      %v6584 = vpack.c.bf16 %v6573, %v6572
      %v6585 = vpack.c.bf16 %v6575, %v6574
      %v6586 = vpack.c.bf16 %v6577, %v6576
      %v6587 = vpack.c.bf16 %v6579, %v6578
      %v6596 = vunpack.c.l.b16 %v6580
      %v6597 = vunpack.c.h.b16 %v6580
      %v6598 = vunpack.c.l.b16 %v6581
      %v6599 = vunpack.c.h.b16 %v6581
      %v6600 = vunpack.c.l.b16 %v6582
      %v6601 = vunpack.c.h.b16 %v6582
      %v6602 = vunpack.c.l.b16 %v6583
      %v6603 = vunpack.c.h.b16 %v6583
      %v6604 = vunpack.c.l.b16 %v6584
      %v6605 = vunpack.c.h.b16 %v6584
      %v6606 = vunpack.c.l.b16 %v6585
      %v6607 = vunpack.c.h.b16 %v6585
      %v6608 = vunpack.c.l.b16 %v6586
      %v6609 = vunpack.c.h.b16 %v6586
      %v6610 = vunpack.c.l.b16 %v6587
      %v6611 = vunpack.c.h.b16 %v6587
      %v6612 = vpack.c.b16 %v6596, %v6596
      %v6613 = vpack.c.b16 %v6597, %v6597
      %v6614 = vpack.c.b16 %v6598, %v6598
      %v6615 = vpack.c.b16 %v6599, %v6599
      %v6616 = vpack.c.b16 %v6600, %v6600
      %v6617 = vpack.c.b16 %v6601, %v6601
      %v6618 = vpack.c.b16 %v6602, %v6602
      %v6619 = vpack.c.b16 %v6603, %v6603
      %v6620 = vpack.c.b16 %v6604, %v6604
      %v6621 = vpack.c.b16 %v6605, %v6605
      %v6622 = vpack.c.b16 %v6606, %v6606
      %v6623 = vpack.c.b16 %v6607, %v6607
      %v6624 = vpack.c.b16 %v6608, %v6608
      %v6625 = vpack.c.b16 %v6609, %v6609
      %v6626 = vpack.c.b16 %v6610, %v6610
      %v6627 = vpack.c.b16 %v6611, %v6611
      %6644 = vst [vmem:[%s5297 + $0x4] sm:$0xf] %v6612
      %6645 = vst [vmem:[%s5297 + $0xc] sm:$0xf] %v6613
      %6646 = vst [vmem:[%s5297 + $0x24] sm:$0xf] %v6614
      %6647 = vst [vmem:[%s5297 + $0x2c] sm:$0xf] %v6615
      %6648 = vst [vmem:[%s5297 + $0x44] sm:$0xf] %v6616
      %6649 = vst [vmem:[%s5297 + $0x4c] sm:$0xf] %v6617
      %6650 = vst [vmem:[%s5297 + $0x64] sm:$0xf] %v6618
      %6651 = vst [vmem:[%s5297 + $0x6c] sm:$0xf] %v6619
      %6652 = vst [vmem:[%s5297 + $0x84] sm:$0xf] %v6620
      %6653 = vst [vmem:[%s5297 + $0x8c] sm:$0xf] %v6621
      %6654 = vst [vmem:[%s5297 + $0xa4] sm:$0xf] %v6622
      %6655 = vst [vmem:[%s5297 + $0xac] sm:$0xf] %v6623
      %6656 = vst [vmem:[%s5297 + $0xc4] sm:$0xf] %v6624
      %6657 = vst [vmem:[%s5297 + $0xcc] sm:$0xf] %v6625
      %6658 = vst [vmem:[%s5297 + $0xe4] sm:$0xf] %v6626
      %6659 = vst [vmem:[%s5297 + $0xec] sm:$0xf] %v6627
      %v6662 = vcombine.low %v6525, %v6563
      %v6664 = vunpack.c.l.s4 1966171168
      %v6665 = vunpack.c.0.s8 %v6664
      %v6666 = vlaneseq
      %v6667 = vshrl.u32 %v6666, 7
      %v6668 = vsub.s32 %v6665, %v6667
      %v6669 = vrot.slane %v6662, %v6668
      %v6671 = vunpack.c.l.s4 1966171168
      %v6672 = vunpack.c.0.s8 %v6671
      %v6673 = vlaneseq
      %v6674 = vshrl.u32 %v6673, 7
      %v6675 = vsub.s32 %v6672, %v6674
      %v6676 = vrot.slane %v6669, %v6675
      %v6678 = vlaneseq
      %vm6679 = vcmp.ge.s32.totalorder %v6678, 0
      %vm6680 = vcmp.lt.s32.totalorder %v6678, 256
      %vm6681 = vmand %vm6679, %vm6680
      %6682 = vst.msk [vmem:[%s563] sm:$0x3] %vm6681, %v6676
      %s6683 = smul.u32 8, %s26
      %p6684 = scmp.lt.s32.totalorder %s25, 1
      %s6685 = scalar_select %p6684, %s25, 1
      %p6686 = scmp.lt.s32.totalorder %s6683, 15
      %s6687 = scalar_select %p6686, %s6683, 15
      %s6688 = smul.addr %s6687, 8
      %s6689 = smul.addr %s6685, 128
      %s6690 = sadd.s32 %s6688, %s6689
      %s6691 = smul.addr %s6690, 4
      %s6692 = scalar_lea.vmem %s8, %s6691
      %p6693 = scmp.lt.s32.totalorder %s25, 1
      %s6694 = scalar_select %p6693, %s25, 1
      %p6695 = scmp.lt.s32.totalorder %s26, 1
      %s6696 = scalar_select %p6695, %s26, 1
      %s6697 = smul.addr %s6696, 2
      %s6698 = smul.addr %s6694, 4
      %s6699 = sadd.s32 %s6697, %s6698
      %s6700 = scalar_lea.vmem %s9, %s6699
      // Predicated region
      $region53: #{deconv_res_block_forward.3} parent=51 // pred_check
        %p6701 = pneg %p265
      $region54: #{deconv_res_block_forward.3} parent=51 // pred_check_branch
        %6703 = sbr.rel (%p6701) target = $region56
      $region55: #{deconv_res_block_forward.3} parent=51 // pred_region
        %s6704 = smul.u32 8, %s26
      $region56: #{deconv_res_block_forward.3} parent=51 // pred_fallthru
        _
      // Predicated region
      $region57: #{deconv_res_block_forward.3} parent=51 // pred_check
        %p6705 = pneg %p293
      $region58: #{deconv_res_block_forward.3} parent=51 // pred_check_branch
        %6707 = sbr.rel (%p6705) target = $region60
      $region59: #{deconv_res_block_forward.3} parent=51 // pred_region
        _
      $region60: #{deconv_res_block_forward.3} parent=51 // pred_fallthru
        _
    $region52: #{deconv_res_block_forward.3} parent=5 // pred_fallthru
      _
    %p6708 = scmp.le.s32.totalorder 2, %s16
    // Predicated region
    $region61: #{deconv_res_block_forward.3} parent=5 // pred_check
      %p6709 = pneg %p6708
    $region62: #{deconv_res_block_forward.3} parent=5 // pred_check_branch
      %6711 = sbr.rel (%p6709) target = $region64
    $region63: #{deconv_res_block_forward.3} parent=5 // pred_region
      %s6712 = ssub.s32 %s16, 2
      // Predicated region
      $region65: #{deconv_res_block_forward.3} parent=63 // pred_check
        %p6713 = pneg %p271
      $region66: #{deconv_res_block_forward.3} parent=63 // pred_check_branch
        %6715 = sbr.rel (%p6713) target = $region68
      $region67: #{deconv_res_block_forward.3} parent=63 // pred_region
        %s6716 = smul.u32 8, %s28
        %p6717 = scmp.lt.s32.totalorder %s27, 1
        %s6718 = scalar_select %p6717, %s27, 1
        %p6719 = scmp.lt.s32.totalorder %s6716, 15
        %s6720 = scalar_select %p6719, %s6716, 15
        %s6721 = smul.addr %s6720, 8
        %s6722 = smul.addr %s6718, 128
        %s6723 = sadd.s32 %s6721, %s6722
        %s6724 = smul.addr %s6723, 4
        %s6725 = scalar_lea.vmem %s8, %s6724
      $region68: #{deconv_res_block_forward.3} parent=63 // pred_fallthru
        _
      // Predicated region
      $region69: #{deconv_res_block_forward.3} parent=63 // pred_check
        %p6726 = pneg %p299
      $region70: #{deconv_res_block_forward.3} parent=63 // pred_check_branch
        %6728 = sbr.rel (%p6726) target = $region72
      $region71: #{deconv_res_block_forward.3} parent=63 // pred_region
        %p6729 = scmp.lt.s32.totalorder %s27, 1
        %s6730 = scalar_select %p6729, %s27, 1
        %p6731 = scmp.lt.s32.totalorder %s28, 1
        %s6732 = scalar_select %p6731, %s28, 1
        %s6733 = smul.addr %s6732, 2
        %s6734 = smul.addr %s6730, 4
        %s6735 = sadd.s32 %s6733, %s6734
        %s6736 = scalar_lea.vmem %s9, %s6735
      $region72: #{deconv_res_block_forward.3} parent=63 // pred_fallthru
        _
    $region64: #{deconv_res_block_forward.3} parent=5 // pred_fallthru
      _
  $region6: #{deconv_res_block_forward.3} parent=0 // loop_footer
    %s20 = sadd.s32 1, %s16
  $region7: #{deconv_res_block_forward.3} parent=0 // loop_footer_branch
    %15 = sbr.rel target = $region3
  $region8: #{deconv_res_block_forward.3} parent=0 // loop_exit
    _

</llo_original>
